<compile_context>
chip_gen: v7x
topology: tpu7x:2x2x1
jax: 0.10.0
libtpu: 0.0.40
codegen_flags: <defaults>
</compile_context>

<pallas_src>
import numpy as np
import jax
import jax.numpy as jnp
from jax import lax
from jax.experimental import pallas as pl
from jax.experimental.pallas import tpu as pltpu

BN_EPS = 1e-5
CHUNK = 256  # samples per grid step; 25*CHUNK = 6400 lanes per conv matmul
# TODO(synk): BatchNorm is implemented in eval mode (running stats of a freshly
# constructed module: mean=0, var=1, gamma=1, beta=0); training-mode batch
# statistics are not reproduced.


# ----------------------------- Pallas kernel -------------------------------

def fused_forward_kernel(xp_ref, mk_ref, chan_ref, w2f_ref, wl1_ref,
                         tail_ref, brs_ref, out_ref):
    """Whole MyModel forward for one chunk of samples.

    xp_ref:   (9, 25*CHUNK)  im2col taps of raw x; lane = p*CHUNK + n
    mk_ref:   (9, 25*CHUNK)  conv2 zero-padding validity mask (same every chunk)
    chan_ref: (7, 5)         cols: [alpha1, beta1, bn2_shift, w3_folded, bl1]
    w2f_ref:  (7, 63)        conv2 weights with BN2 scale folded in
    wl1_ref:  (7, 25)        Linear(25->7) weight
    tail_ref: (out_dim, 8)   cols 0..6: Linear(7->out) weight, col 7: its bias
    brs_ref:  (1, 2)         [branch scale (sb*Wb), bn3_shift + branch bn shift]
    out_ref:  (out_dim, CHUNK)  channel-major output slab (lane-dense store)
    """
    L = xp_ref.shape[1]
    npad = L // 25                      # samples in this chunk (static, mult of 128)
    xp = xp_ref[...]                    # (9, L)
    mk = mk_ref[...]                    # (9, L)

    # conv1 (1x1) + BN1 + ReLU applied directly on the im2col'd taps.
    # Masked (zero-padded) taps stay exactly 0 because xp==0 there and the BN
    # shift is multiplied by the mask before the ReLU.
    pieces = []
    for c in range(7):
        a = chan_ref[c:c + 1, 0:1]      # (1,1) alpha_c = bn1_scale * W1[c]
        b = chan_ref[c:c + 1, 1:2]      # (1,1) beta_c  = bn1_shift
        pieces.append(jnp.maximum(xp * a + b * mk, 0.0))
    y1p = jnp.concatenate(pieces, axis=0)                                  # (63, L)

    # conv2 (3x3, stride 2, pad 1) + BN2 + ReLU as one lane-dense MXU matmul.
    c2 = jnp.dot(w2f_ref[...], y1p, preferred_element_type=jnp.float32)    # (7, L)
    c2 = jnp.maximum(c2 + chan_ref[:, 2:3], 0.0)

    # conv3 (1x1, 7->1) with BN3 scale folded into the weights.
    c3 = jnp.sum(c2 * chan_ref[:, 3:4], axis=0, keepdims=True)             # (1, L)

    # branch conv (1x1, stride 2) + BN on the center tap of x (== x[:, ::2, ::2]),
    # BN3 shift + branch BN shift are pre-summed into brs[0,1]; residual + ReLU.
    xc = xp[4:5, :]                                                        # (1, L)
    f = jnp.maximum(c3 + xc * brs_ref[0:1, 0:1] + brs_ref[0:1, 1:2], 0.0)  # (1, L)

    # Linear(25 -> 7) + ReLU: accumulate over the 25 position slabs
    # (each slab is `npad` lanes, 128-aligned static slices).
    acc = jnp.zeros((7, npad), jnp.float32)
    for p in range(25):
        acc = acc + wl1_ref[:, p:p + 1] * f[:, p * npad:(p + 1) * npad]
    h = jnp.maximum(acc + chan_ref[:, 4:5], 0.0)                           # (7, npad)

    # Linear(7 -> out_dim); keep result channel-major -> lane-dense output store.
    out = jnp.dot(tail_ref[:, 0:7], h, preferred_element_type=jnp.float32)
    out_ref[...] = out + tail_ref[:, 7:8]                                  # (out_dim, npad)


# ----------------------------- wrapper --------------------------------------

def bn_fold(gamma, beta, mean, var):
    scale = gamma / jnp.sqrt(var + BN_EPS)
    shift = beta - mean * scale
    return scale, shift


def _conv2_pad_mask(chunk):
    """Validity of tap (kh,kw) at output (oh,ow) for a 3x3/stride-2/pad-1 conv
    on a 10x10 map. Constant, broadcast over the sample lanes."""
    mk = np.zeros((3, 3, 5, 5), np.float32)
    for kh in range(3):
        for kw in range(3):
            for oh in range(5):
                for ow in range(5):
                    ih, iw = 2 * oh + kh - 1, 2 * ow + kw - 1
                    mk[kh, kw, oh, ow] = 1.0 if (0 <= ih < 10 and 0 <= iw < 10) else 0.0
    mk = np.ascontiguousarray(
        np.broadcast_to(mk.reshape(9, 25, 1), (9, 25, chunk))).reshape(9, 25 * chunk)
    return jnp.asarray(mk)


def mymodel_forward(x, P, chunk=CHUNK):
    """x: (N, 1, 10, 10) float32 -> (N, out_dim) float32."""
    N = x.shape[0]
    assert x.shape[1:] == (1, 10, 10), x.shape
    out_dim = P["Wl2"].shape[0]

    nchunks = pl.cdiv(N, chunk)
    npad_total = nchunks * chunk
    L = 25 * chunk

    # ---- host-side im2col of the RAW input (pure data movement, no math) ----
    xpad = jnp.pad(x[:, 0], ((0, 0), (1, 1), (1, 1)))                        # (N,12,12)
    taps = jnp.stack([xpad[:, kh:kh + 10:2, kw:kw + 10:2]
                      for kh in range(3) for kw in range(3)], axis=0)        # (9,N,5,5)
    taps = taps.reshape(9, N, 25)
    taps = jnp.pad(taps, ((0, 0), (0, npad_total - N), (0, 0)))              # (9,Npad,25)
    # lane layout per chunk: position-major, sample-minor  -> lane = p*chunk + n
    xpatch = (taps.reshape(9, nchunks, chunk, 25)
                  .transpose(0, 1, 3, 2)
                  .reshape(9, nchunks * 25 * chunk))

    mask = _conv2_pad_mask(chunk)                                            # (9, 25*chunk)

    # ---- fold BN (eval mode) into conv weights / biases ----
    s1, sh1 = bn_fold(P["g1"], P["b1"], P["m1"], P["v1"])
    s2, sh2 = bn_fold(P["g2"], P["b2"], P["m2"], P["v2"])
    s3, sh3 = bn_fold(P["g3"], P["b3"], P["m3"], P["v3"])
    sb, shb = bn_fold(P["gb"], P["bb"], P["mb"], P["vb"])

    alpha1 = s1 * P["W1"].reshape(7)                       # conv1 * bn1 scale
    w2f = s2[:, None] * P["W2"].reshape(7, 63)             # bn2 folded into conv2
    w3f = s3[0] * P["W3"].reshape(7)                       # bn3 scale folded into conv3
    chan = jnp.stack([alpha1, sh1, sh2, w3f, P["bl1"]], axis=1)              # (7,5)

    alpha_b = sb[0] * P["Wb"].reshape(())
    brs = jnp.stack([alpha_b, sh3[0] + shb[0]]).reshape(1, 2)                # (1,2)
    tail = jnp.concatenate([P["Wl2"], P["bl2"][:, None]], axis=1)            # (out_dim,8)
    wl1 = P["Wl1"]                                                           # (7,25)

    out_t = pl.pallas_call(
        fused_forward_kernel,
        out_shape=jax.ShapeDtypeStruct((out_dim, npad_total), jnp.float32),
        grid=(nchunks,),
        in_specs=[
            pl.BlockSpec((9, L), lambda i: (0, i)),          # xpatch (per chunk)
            pl.BlockSpec((9, L), lambda i: (0, 0)),          # mask (shared)
            pl.BlockSpec((7, 5), lambda i: (0, 0)),          # packed per-channel params
            pl.BlockSpec((7, 63), lambda i: (0, 0)),         # conv2 weights (BN folded)
            pl.BlockSpec((7, 25), lambda i: (0, 0)),         # linear1 weights
            pl.BlockSpec((out_dim, 8), lambda i: (0, 0)),    # linear2 weights + bias
            pl.BlockSpec((1, 2), lambda i: (0, 0)),          # branch scale / shifts
        ],
        out_specs=pl.BlockSpec((out_dim, chunk), lambda i: (0, i)),
        compiler_params=pltpu.CompilerParams(
            dimension_semantics=("parallel",)),
    )(xpatch, mask, chan, w2f, wl1, tail, brs)

    return out_t[:, :N].T                                   # (N, out_dim)


# ----------------------------- reference (pure JAX) -------------------------

def bn_ref(x, g, b, m, v):
    g, b, m, v = (a[None, :, None, None] for a in (g, b, m, v))
    return (x - m) / jnp.sqrt(v + BN_EPS) * g + b


def reference_forward(x, P):
    dn = ("NCHW", "OIHW", "NCHW")
    y = lax.conv_general_dilated(x, P["W1"], (1, 1), "VALID", dimension_numbers=dn)
    y = jax.nn.relu(bn_ref(y, P["g1"], P["b1"], P["m1"], P["v1"]))
    y = lax.conv_general_dilated(y, P["W2"], (2, 2), ((1, 1), (1, 1)), dimension_numbers=dn)
    y = jax.nn.relu(bn_ref(y, P["g2"], P["b2"], P["m2"], P["v2"]))
    y = lax.conv_general_dilated(y, P["W3"], (1, 1), "VALID", dimension_numbers=dn)
    y = bn_ref(y, P["g3"], P["b3"], P["m3"], P["v3"])
    br = lax.conv_general_dilated(x, P["Wb"], (2, 2), "VALID", dimension_numbers=dn)
    br = bn_ref(br, P["gb"], P["bb"], P["mb"], P["vb"])
    out = jax.nn.relu(y + br)
    f = out.reshape(out.shape[0], -1)
    h = jax.nn.relu(f @ P["Wl1"].T + P["bl1"])
    return h @ P["Wl2"].T + P["bl2"]


# ----------------------------- main ------------------------------------------

if __name__ == "__main__":
    key = jax.random.PRNGKey(0)
    ks = jax.random.split(key, 8)
    out_dim = 4
    N = 2

    # MyModel(inp_channels=1, out_dim=4); input must be (N, 1, 10, 10)
    P = {
        "W1": jax.random.normal(ks[0], (7, 1, 1, 1), jnp.float32) * 0.5,
        "g1": jnp.ones((7,), jnp.float32), "b1": jnp.zeros((7,), jnp.float32),
        "m1": jnp.zeros((7,), jnp.float32), "v1": jnp.ones((7,), jnp.float32),

        "W2": jax.random.normal(ks[1], (7, 7, 3, 3), jnp.float32) * 0.2,
        "g2": jnp.ones((7,), jnp.float32), "b2": jnp.zeros((7,), jnp.float32),
        "m2": jnp.zeros((7,), jnp.float32), "v2": jnp.ones((7,), jnp.float32),

        "W3": jax.random.normal(ks[2], (1, 7, 1, 1), jnp.float32) * 0.5,
        "g3": jnp.ones((1,), jnp.float32), "b3": jnp.zeros((1,), jnp.float32),
        "m3": jnp.zeros((1,), jnp.float32), "v3": jnp.ones((1,), jnp.float32),

        "Wb": jax.random.normal(ks[3], (1, 1, 1, 1), jnp.float32) * 0.5,
        "gb": jnp.ones((1,), jnp.float32), "bb": jnp.zeros((1,), jnp.float32),
        "mb": jnp.zeros((1,), jnp.float32), "vb": jnp.ones((1,), jnp.float32),

        "Wl1": jax.random.normal(ks[4], (7, 25), jnp.float32) * 0.2,
        "bl1": jax.random.normal(ks[5], (7,), jnp.float32) * 0.1,
        "Wl2": jax.random.normal(ks[6], (out_dim, 7), jnp.float32) * 0.3,
        "bl2": jax.random.normal(ks[7], (out_dim,), jnp.float32) * 0.1,
    }

    x = jax.random.normal(jax.random.PRNGKey(42), (N, 1, 10, 10), jnp.float32)

    out = jax.block_until_ready(mymodel_forward(x, P))
    ref = jax.block_until_ready(reference_forward(x, P))

    assert out.shape == (N, out_dim), out.shape
    np.testing.assert_allclose(np.asarray(out), np.asarray(ref), rtol=1e-4, atol=1e-4)
    print("KERNEL_OK")
</pallas_src>

<mosaic_0001>
module attributes {stable_mosaic.version = 11 : i64} {
  func.func @fused_forward_kernel(%arg0: i32, %arg1: memref<9x6400xf32, #tpu.memory_space<vmem>>, %arg2: memref<9x6400xf32, #tpu.memory_space<vmem>>, %arg3: memref<7x5xf32, #tpu.memory_space<vmem>>, %arg4: memref<7x63xf32, #tpu.memory_space<vmem>>, %arg5: memref<7x25xf32, #tpu.memory_space<vmem>>, %arg6: memref<4x8xf32, #tpu.memory_space<vmem>>, %arg7: memref<1x2xf32, #tpu.memory_space<vmem>>, %arg8: memref<4x256xf32, #tpu.memory_space<vmem>>) attributes {dimension_semantics = [#tpu.dimension_semantics<parallel>], iteration_bounds = array<i64: 1>, scalar_prefetch = 0 : i64, scratch_operands = 0 : i64, tpu.core_type = #tpu.core_type<tc>, window_params = [{transform_indices = @transform_0, window_bounds = array<i64: 9, 6400>}, {pipeline_mode = #tpu.pipeline_mode<synchronous>, transform_indices = @transform_1, window_bounds = array<i64: 9, 6400>}, {pipeline_mode = #tpu.pipeline_mode<synchronous>, transform_indices = @transform_2, window_bounds = array<i64: 7, 5>}, {pipeline_mode = #tpu.pipeline_mode<synchronous>, transform_indices = @transform_3, window_bounds = array<i64: 7, 63>}, {pipeline_mode = #tpu.pipeline_mode<synchronous>, transform_indices = @transform_4, window_bounds = array<i64: 7, 25>}, {pipeline_mode = #tpu.pipeline_mode<synchronous>, transform_indices = @transform_5, window_bounds = array<i64: 4, 8>}, {pipeline_mode = #tpu.pipeline_mode<synchronous>, transform_indices = @transform_6, window_bounds = array<i64: 1, 2>}, {transform_indices = @transform_7, window_bounds = array<i64: 4, 256>}]} {
    %c0 = arith.constant 0 : index
    %c0_0 = arith.constant 0 : index
    %0 = vector.load %arg1[%c0, %c0_0] : memref<9x6400xf32, #tpu.memory_space<vmem>>, vector<9x6400xf32>
    %c0_1 = arith.constant 0 : index
    %c0_2 = arith.constant 0 : index
    %1 = vector.load %arg2[%c0_1, %c0_2] : memref<9x6400xf32, #tpu.memory_space<vmem>>, vector<9x6400xf32>
    %c0_3 = arith.constant 0 : index
    %c0_4 = arith.constant 0 : index
    %2 = vector.load %arg3[%c0_3, %c0_4] : memref<7x5xf32, #tpu.memory_space<vmem>>, vector<1x1xf32>
    %c0_5 = arith.constant 0 : index
    %c1 = arith.constant 1 : index
    %3 = vector.load %arg3[%c0_5, %c1] : memref<7x5xf32, #tpu.memory_space<vmem>>, vector<1x1xf32>
    %4 = vector.broadcast %2 : vector<1x1xf32> to vector<9x6400xf32>
    %5 = arith.mulf %0, %4 : vector<9x6400xf32>
    %6 = vector.broadcast %3 : vector<1x1xf32> to vector<9x6400xf32>
    %7 = arith.mulf %6, %1 : vector<9x6400xf32>
    %8 = arith.addf %5, %7 : vector<9x6400xf32>
    %cst = arith.constant 0.000000e+00 : f32
    %9 = vector.broadcast %cst : f32 to vector<9x6400xf32>
    %10 = arith.maximumf %8, %9 : vector<9x6400xf32>
    %c1_6 = arith.constant 1 : index
    %c0_7 = arith.constant 0 : index
    %11 = vector.load %arg3[%c1_6, %c0_7] : memref<7x5xf32, #tpu.memory_space<vmem>>, vector<1x1xf32>
    %c1_8 = arith.constant 1 : index
    %c1_9 = arith.constant 1 : index
    %12 = vector.load %arg3[%c1_8, %c1_9] : memref<7x5xf32, #tpu.memory_space<vmem>>, vector<1x1xf32>
    %13 = vector.broadcast %11 : vector<1x1xf32> to vector<9x6400xf32>
    %14 = arith.mulf %0, %13 : vector<9x6400xf32>
    %15 = vector.broadcast %12 : vector<1x1xf32> to vector<9x6400xf32>
    %16 = arith.mulf %15, %1 : vector<9x6400xf32>
    %17 = arith.addf %14, %16 : vector<9x6400xf32>
    %cst_10 = arith.constant 0.000000e+00 : f32
    %18 = vector.broadcast %cst_10 : f32 to vector<9x6400xf32>
    %19 = arith.maximumf %17, %18 : vector<9x6400xf32>
    %c2 = arith.constant 2 : index
    %c0_11 = arith.constant 0 : index
    %20 = vector.load %arg3[%c2, %c0_11] : memref<7x5xf32, #tpu.memory_space<vmem>>, vector<1x1xf32>
    %c2_12 = arith.constant 2 : index
    %c1_13 = arith.constant 1 : index
    %21 = vector.load %arg3[%c2_12, %c1_13] : memref<7x5xf32, #tpu.memory_space<vmem>>, vector<1x1xf32>
    %22 = vector.broadcast %20 : vector<1x1xf32> to vector<9x6400xf32>
    %23 = arith.mulf %0, %22 : vector<9x6400xf32>
    %24 = vector.broadcast %21 : vector<1x1xf32> to vector<9x6400xf32>
    %25 = arith.mulf %24, %1 : vector<9x6400xf32>
    %26 = arith.addf %23, %25 : vector<9x6400xf32>
    %cst_14 = arith.constant 0.000000e+00 : f32
    %27 = vector.broadcast %cst_14 : f32 to vector<9x6400xf32>
    %28 = arith.maximumf %26, %27 : vector<9x6400xf32>
    %c3 = arith.constant 3 : index
    %c0_15 = arith.constant 0 : index
    %29 = vector.load %arg3[%c3, %c0_15] : memref<7x5xf32, #tpu.memory_space<vmem>>, vector<1x1xf32>
    %c3_16 = arith.constant 3 : index
    %c1_17 = arith.constant 1 : index
    %30 = vector.load %arg3[%c3_16, %c1_17] : memref<7x5xf32, #tpu.memory_space<vmem>>, vector<1x1xf32>
    %31 = vector.broadcast %29 : vector<1x1xf32> to vector<9x6400xf32>
    %32 = arith.mulf %0, %31 : vector<9x6400xf32>
    %33 = vector.broadcast %30 : vector<1x1xf32> to vector<9x6400xf32>
    %34 = arith.mulf %33, %1 : vector<9x6400xf32>
    %35 = arith.addf %32, %34 : vector<9x6400xf32>
    %cst_18 = arith.constant 0.000000e+00 : f32
    %36 = vector.broadcast %cst_18 : f32 to vector<9x6400xf32>
    %37 = arith.maximumf %35, %36 : vector<9x6400xf32>
    %c4 = arith.constant 4 : index
    %c0_19 = arith.constant 0 : index
    %38 = vector.load %arg3[%c4, %c0_19] : memref<7x5xf32, #tpu.memory_space<vmem>>, vector<1x1xf32>
    %c4_20 = arith.constant 4 : index
    %c1_21 = arith.constant 1 : index
    %39 = vector.load %arg3[%c4_20, %c1_21] : memref<7x5xf32, #tpu.memory_space<vmem>>, vector<1x1xf32>
    %40 = vector.broadcast %38 : vector<1x1xf32> to vector<9x6400xf32>
    %41 = arith.mulf %0, %40 : vector<9x6400xf32>
    %42 = vector.broadcast %39 : vector<1x1xf32> to vector<9x6400xf32>
    %43 = arith.mulf %42, %1 : vector<9x6400xf32>
    %44 = arith.addf %41, %43 : vector<9x6400xf32>
    %cst_22 = arith.constant 0.000000e+00 : f32
    %45 = vector.broadcast %cst_22 : f32 to vector<9x6400xf32>
    %46 = arith.maximumf %44, %45 : vector<9x6400xf32>
    %c5 = arith.constant 5 : index
    %c0_23 = arith.constant 0 : index
    %47 = vector.load %arg3[%c5, %c0_23] : memref<7x5xf32, #tpu.memory_space<vmem>>, vector<1x1xf32>
    %c5_24 = arith.constant 5 : index
    %c1_25 = arith.constant 1 : index
    %48 = vector.load %arg3[%c5_24, %c1_25] : memref<7x5xf32, #tpu.memory_space<vmem>>, vector<1x1xf32>
    %49 = vector.broadcast %47 : vector<1x1xf32> to vector<9x6400xf32>
    %50 = arith.mulf %0, %49 : vector<9x6400xf32>
    %51 = vector.broadcast %48 : vector<1x1xf32> to vector<9x6400xf32>
    %52 = arith.mulf %51, %1 : vector<9x6400xf32>
    %53 = arith.addf %50, %52 : vector<9x6400xf32>
    %cst_26 = arith.constant 0.000000e+00 : f32
    %54 = vector.broadcast %cst_26 : f32 to vector<9x6400xf32>
    %55 = arith.maximumf %53, %54 : vector<9x6400xf32>
    %c6 = arith.constant 6 : index
    %c0_27 = arith.constant 0 : index
    %56 = vector.load %arg3[%c6, %c0_27] : memref<7x5xf32, #tpu.memory_space<vmem>>, vector<1x1xf32>
    %c6_28 = arith.constant 6 : index
    %c1_29 = arith.constant 1 : index
    %57 = vector.load %arg3[%c6_28, %c1_29] : memref<7x5xf32, #tpu.memory_space<vmem>>, vector<1x1xf32>
    %58 = vector.broadcast %56 : vector<1x1xf32> to vector<9x6400xf32>
    %59 = arith.mulf %0, %58 : vector<9x6400xf32>
    %60 = vector.broadcast %57 : vector<1x1xf32> to vector<9x6400xf32>
    %61 = arith.mulf %60, %1 : vector<9x6400xf32>
    %62 = arith.addf %59, %61 : vector<9x6400xf32>
    %cst_30 = arith.constant 0.000000e+00 : f32
    %63 = vector.broadcast %cst_30 : f32 to vector<9x6400xf32>
    %64 = arith.maximumf %62, %63 : vector<9x6400xf32>
    %65 = tpu.concatenate %10, %19, %28, %37, %46, %55, %64 in 0 : vector<9x6400xf32>, vector<9x6400xf32>, vector<9x6400xf32>, vector<9x6400xf32>, vector<9x6400xf32>, vector<9x6400xf32>, vector<9x6400xf32> -> vector<63x6400xf32>
    %c0_31 = arith.constant 0 : index
    %c0_32 = arith.constant 0 : index
    %66 = vector.load %arg4[%c0_31, %c0_32] : memref<7x63xf32, #tpu.memory_space<vmem>>, vector<7x63xf32>
    %cst_33 = arith.constant dense<0.000000e+00> : vector<7x6400xf32>
    %67 = tpu.matmul %66, %65, %cst_33 {dimension_numbers = #tpu.dot_dimension_numbers<[1], [0], [0], [1], [0, 0, 1, 1], [], []>} : vector<7x63xf32>, vector<63x6400xf32>, vector<7x6400xf32> -> vector<7x6400xf32>
    %c0_34 = arith.constant 0 : index
    %c2_35 = arith.constant 2 : index
    %68 = vector.load %arg3[%c0_34, %c2_35] : memref<7x5xf32, #tpu.memory_space<vmem>>, vector<7x1xf32>
    %69 = vector.broadcast %68 : vector<7x1xf32> to vector<7x6400xf32>
    %70 = arith.addf %67, %69 : vector<7x6400xf32>
    %cst_36 = arith.constant 0.000000e+00 : f32
    %71 = vector.broadcast %cst_36 : f32 to vector<7x6400xf32>
    %72 = arith.maximumf %70, %71 : vector<7x6400xf32>
    %c0_37 = arith.constant 0 : index
    %c3_38 = arith.constant 3 : index
    %73 = vector.load %arg3[%c0_37, %c3_38] : memref<7x5xf32, #tpu.memory_space<vmem>>, vector<7x1xf32>
    %74 = vector.broadcast %73 : vector<7x1xf32> to vector<7x6400xf32>
    %75 = arith.mulf %72, %74 : vector<7x6400xf32>
    %cst_39 = arith.constant dense<0.000000e+00> : vector<6400xf32>
    %76 = vector.multi_reduction <add>, %75, %cst_39 [0] : vector<7x6400xf32> to vector<6400xf32>
    %77 = vector.shape_cast %76 : vector<6400xf32> to vector<1x6400xf32>
    %78 = vector.extract_strided_slice %0 {offsets = [4, 0], sizes = [1, 6400], strides = [1, 1]} : vector<9x6400xf32> to vector<1x6400xf32>
    %c0_40 = arith.constant 0 : index
    %c0_41 = arith.constant 0 : index
    %79 = vector.load %arg7[%c0_40, %c0_41] : memref<1x2xf32, #tpu.memory_space<vmem>>, vector<1x1xf32>
    %80 = vector.broadcast %79 : vector<1x1xf32> to vector<1x6400xf32>
    %81 = arith.mulf %78, %80 : vector<1x6400xf32>
    %82 = arith.addf %77, %81 : vector<1x6400xf32>
    %c0_42 = arith.constant 0 : index
    %c1_43 = arith.constant 1 : index
    %83 = vector.load %arg7[%c0_42, %c1_43] : memref<1x2xf32, #tpu.memory_space<vmem>>, vector<1x1xf32>
    %84 = vector.broadcast %83 : vector<1x1xf32> to vector<1x6400xf32>
    %85 = arith.addf %82, %84 : vector<1x6400xf32>
    %cst_44 = arith.constant 0.000000e+00 : f32
    %86 = vector.broadcast %cst_44 : f32 to vector<1x6400xf32>
    %87 = arith.maximumf %85, %86 : vector<1x6400xf32>
    %cst_45 = arith.constant 0.000000e+00 : f32
    %88 = vector.broadcast %cst_45 : f32 to vector<7x256xf32>
    %c0_46 = arith.constant 0 : index
    %c0_47 = arith.constant 0 : index
    %89 = vector.load %arg5[%c0_46, %c0_47] : memref<7x25xf32, #tpu.memory_space<vmem>>, vector<7x1xf32>
    %90 = vector.extract_strided_slice %87 {offsets = [0, 0], sizes = [1, 256], strides = [1, 1]} : vector<1x6400xf32> to vector<1x256xf32>
    %91 = vector.broadcast %89 : vector<7x1xf32> to vector<7x256xf32>
    %92 = vector.broadcast %90 : vector<1x256xf32> to vector<7x256xf32>
    %93 = arith.mulf %91, %92 : vector<7x256xf32>
    %94 = arith.addf %88, %93 : vector<7x256xf32>
    %c0_48 = arith.constant 0 : index
    %c1_49 = arith.constant 1 : index
    %95 = vector.load %arg5[%c0_48, %c1_49] : memref<7x25xf32, #tpu.memory_space<vmem>>, vector<7x1xf32>
    %96 = vector.extract_strided_slice %87 {offsets = [0, 256], sizes = [1, 256], strides = [1, 1]} : vector<1x6400xf32> to vector<1x256xf32>
    %97 = vector.broadcast %95 : vector<7x1xf32> to vector<7x256xf32>
    %98 = vector.broadcast %96 : vector<1x256xf32> to vector<7x256xf32>
    %99 = arith.mulf %97, %98 : vector<7x256xf32>
    %100 = arith.addf %94, %99 : vector<7x256xf32>
    %c0_50 = arith.constant 0 : index
    %c2_51 = arith.constant 2 : index
    %101 = vector.load %arg5[%c0_50, %c2_51] : memref<7x25xf32, #tpu.memory_space<vmem>>, vector<7x1xf32>
    %102 = vector.extract_strided_slice %87 {offsets = [0, 512], sizes = [1, 256], strides = [1, 1]} : vector<1x6400xf32> to vector<1x256xf32>
    %103 = vector.broadcast %101 : vector<7x1xf32> to vector<7x256xf32>
    %104 = vector.broadcast %102 : vector<1x256xf32> to vector<7x256xf32>
    %105 = arith.mulf %103, %104 : vector<7x256xf32>
    %106 = arith.addf %100, %105 : vector<7x256xf32>
    %c0_52 = arith.constant 0 : index
    %c3_53 = arith.constant 3 : index
    %107 = vector.load %arg5[%c0_52, %c3_53] : memref<7x25xf32, #tpu.memory_space<vmem>>, vector<7x1xf32>
    %108 = vector.extract_strided_slice %87 {offsets = [0, 768], sizes = [1, 256], strides = [1, 1]} : vector<1x6400xf32> to vector<1x256xf32>
    %109 = vector.broadcast %107 : vector<7x1xf32> to vector<7x256xf32>
    %110 = vector.broadcast %108 : vector<1x256xf32> to vector<7x256xf32>
    %111 = arith.mulf %109, %110 : vector<7x256xf32>
    %112 = arith.addf %106, %111 : vector<7x256xf32>
    %c0_54 = arith.constant 0 : index
    %c4_55 = arith.constant 4 : index
    %113 = vector.load %arg5[%c0_54, %c4_55] : memref<7x25xf32, #tpu.memory_space<vmem>>, vector<7x1xf32>
    %114 = vector.extract_strided_slice %87 {offsets = [0, 1024], sizes = [1, 256], strides = [1, 1]} : vector<1x6400xf32> to vector<1x256xf32>
    %115 = vector.broadcast %113 : vector<7x1xf32> to vector<7x256xf32>
    %116 = vector.broadcast %114 : vector<1x256xf32> to vector<7x256xf32>
    %117 = arith.mulf %115, %116 : vector<7x256xf32>
    %118 = arith.addf %112, %117 : vector<7x256xf32>
    %c0_56 = arith.constant 0 : index
    %c5_57 = arith.constant 5 : index
    %119 = vector.load %arg5[%c0_56, %c5_57] : memref<7x25xf32, #tpu.memory_space<vmem>>, vector<7x1xf32>
    %120 = vector.extract_strided_slice %87 {offsets = [0, 1280], sizes = [1, 256], strides = [1, 1]} : vector<1x6400xf32> to vector<1x256xf32>
    %121 = vector.broadcast %119 : vector<7x1xf32> to vector<7x256xf32>
    %122 = vector.broadcast %120 : vector<1x256xf32> to vector<7x256xf32>
    %123 = arith.mulf %121, %122 : vector<7x256xf32>
    %124 = arith.addf %118, %123 : vector<7x256xf32>
    %c0_58 = arith.constant 0 : index
    %c6_59 = arith.constant 6 : index
    %125 = vector.load %arg5[%c0_58, %c6_59] : memref<7x25xf32, #tpu.memory_space<vmem>>, vector<7x1xf32>
    %126 = vector.extract_strided_slice %87 {offsets = [0, 1536], sizes = [1, 256], strides = [1, 1]} : vector<1x6400xf32> to vector<1x256xf32>
    %127 = vector.broadcast %125 : vector<7x1xf32> to vector<7x256xf32>
    %128 = vector.broadcast %126 : vector<1x256xf32> to vector<7x256xf32>
    %129 = arith.mulf %127, %128 : vector<7x256xf32>
    %130 = arith.addf %124, %129 : vector<7x256xf32>
    %c0_60 = arith.constant 0 : index
    %c7 = arith.constant 7 : index
    %131 = vector.load %arg5[%c0_60, %c7] : memref<7x25xf32, #tpu.memory_space<vmem>>, vector<7x1xf32>
    %132 = vector.extract_strided_slice %87 {offsets = [0, 1792], sizes = [1, 256], strides = [1, 1]} : vector<1x6400xf32> to vector<1x256xf32>
    %133 = vector.broadcast %131 : vector<7x1xf32> to vector<7x256xf32>
    %134 = vector.broadcast %132 : vector<1x256xf32> to vector<7x256xf32>
    %135 = arith.mulf %133, %134 : vector<7x256xf32>
    %136 = arith.addf %130, %135 : vector<7x256xf32>
    %c0_61 = arith.constant 0 : index
    %c8 = arith.constant 8 : index
    %137 = vector.load %arg5[%c0_61, %c8] : memref<7x25xf32, #tpu.memory_space<vmem>>, vector<7x1xf32>
    %138 = vector.extract_strided_slice %87 {offsets = [0, 2048], sizes = [1, 256], strides = [1, 1]} : vector<1x6400xf32> to vector<1x256xf32>
    %139 = vector.broadcast %137 : vector<7x1xf32> to vector<7x256xf32>
    %140 = vector.broadcast %138 : vector<1x256xf32> to vector<7x256xf32>
    %141 = arith.mulf %139, %140 : vector<7x256xf32>
    %142 = arith.addf %136, %141 : vector<7x256xf32>
    %c0_62 = arith.constant 0 : index
    %c9 = arith.constant 9 : index
    %143 = vector.load %arg5[%c0_62, %c9] : memref<7x25xf32, #tpu.memory_space<vmem>>, vector<7x1xf32>
    %144 = vector.extract_strided_slice %87 {offsets = [0, 2304], sizes = [1, 256], strides = [1, 1]} : vector<1x6400xf32> to vector<1x256xf32>
    %145 = vector.broadcast %143 : vector<7x1xf32> to vector<7x256xf32>
    %146 = vector.broadcast %144 : vector<1x256xf32> to vector<7x256xf32>
    %147 = arith.mulf %145, %146 : vector<7x256xf32>
    %148 = arith.addf %142, %147 : vector<7x256xf32>
    %c0_63 = arith.constant 0 : index
    %c10 = arith.constant 10 : index
    %149 = vector.load %arg5[%c0_63, %c10] : memref<7x25xf32, #tpu.memory_space<vmem>>, vector<7x1xf32>
    %150 = vector.extract_strided_slice %87 {offsets = [0, 2560], sizes = [1, 256], strides = [1, 1]} : vector<1x6400xf32> to vector<1x256xf32>
    %151 = vector.broadcast %149 : vector<7x1xf32> to vector<7x256xf32>
    %152 = vector.broadcast %150 : vector<1x256xf32> to vector<7x256xf32>
    %153 = arith.mulf %151, %152 : vector<7x256xf32>
    %154 = arith.addf %148, %153 : vector<7x256xf32>
    %c0_64 = arith.constant 0 : index
    %c11 = arith.constant 11 : index
    %155 = vector.load %arg5[%c0_64, %c11] : memref<7x25xf32, #tpu.memory_space<vmem>>, vector<7x1xf32>
    %156 = vector.extract_strided_slice %87 {offsets = [0, 2816], sizes = [1, 256], strides = [1, 1]} : vector<1x6400xf32> to vector<1x256xf32>
    %157 = vector.broadcast %155 : vector<7x1xf32> to vector<7x256xf32>
    %158 = vector.broadcast %156 : vector<1x256xf32> to vector<7x256xf32>
    %159 = arith.mulf %157, %158 : vector<7x256xf32>
    %160 = arith.addf %154, %159 : vector<7x256xf32>
    %c0_65 = arith.constant 0 : index
    %c12 = arith.constant 12 : index
    %161 = vector.load %arg5[%c0_65, %c12] : memref<7x25xf32, #tpu.memory_space<vmem>>, vector<7x1xf32>
    %162 = vector.extract_strided_slice %87 {offsets = [0, 3072], sizes = [1, 256], strides = [1, 1]} : vector<1x6400xf32> to vector<1x256xf32>
    %163 = vector.broadcast %161 : vector<7x1xf32> to vector<7x256xf32>
    %164 = vector.broadcast %162 : vector<1x256xf32> to vector<7x256xf32>
    %165 = arith.mulf %163, %164 : vector<7x256xf32>
    %166 = arith.addf %160, %165 : vector<7x256xf32>
    %c0_66 = arith.constant 0 : index
    %c13 = arith.constant 13 : index
    %167 = vector.load %arg5[%c0_66, %c13] : memref<7x25xf32, #tpu.memory_space<vmem>>, vector<7x1xf32>
    %168 = vector.extract_strided_slice %87 {offsets = [0, 3328], sizes = [1, 256], strides = [1, 1]} : vector<1x6400xf32> to vector<1x256xf32>
    %169 = vector.broadcast %167 : vector<7x1xf32> to vector<7x256xf32>
    %170 = vector.broadcast %168 : vector<1x256xf32> to vector<7x256xf32>
    %171 = arith.mulf %169, %170 : vector<7x256xf32>
    %172 = arith.addf %166, %171 : vector<7x256xf32>
    %c0_67 = arith.constant 0 : index
    %c14 = arith.constant 14 : index
    %173 = vector.load %arg5[%c0_67, %c14] : memref<7x25xf32, #tpu.memory_space<vmem>>, vector<7x1xf32>
    %174 = vector.extract_strided_slice %87 {offsets = [0, 3584], sizes = [1, 256], strides = [1, 1]} : vector<1x6400xf32> to vector<1x256xf32>
    %175 = vector.broadcast %173 : vector<7x1xf32> to vector<7x256xf32>
    %176 = vector.broadcast %174 : vector<1x256xf32> to vector<7x256xf32>
    %177 = arith.mulf %175, %176 : vector<7x256xf32>
    %178 = arith.addf %172, %177 : vector<7x256xf32>
    %c0_68 = arith.constant 0 : index
    %c15 = arith.constant 15 : index
    %179 = vector.load %arg5[%c0_68, %c15] : memref<7x25xf32, #tpu.memory_space<vmem>>, vector<7x1xf32>
    %180 = vector.extract_strided_slice %87 {offsets = [0, 3840], sizes = [1, 256], strides = [1, 1]} : vector<1x6400xf32> to vector<1x256xf32>
    %181 = vector.broadcast %179 : vector<7x1xf32> to vector<7x256xf32>
    %182 = vector.broadcast %180 : vector<1x256xf32> to vector<7x256xf32>
    %183 = arith.mulf %181, %182 : vector<7x256xf32>
    %184 = arith.addf %178, %183 : vector<7x256xf32>
    %c0_69 = arith.constant 0 : index
    %c16 = arith.constant 16 : index
    %185 = vector.load %arg5[%c0_69, %c16] : memref<7x25xf32, #tpu.memory_space<vmem>>, vector<7x1xf32>
    %186 = vector.extract_strided_slice %87 {offsets = [0, 4096], sizes = [1, 256], strides = [1, 1]} : vector<1x6400xf32> to vector<1x256xf32>
    %187 = vector.broadcast %185 : vector<7x1xf32> to vector<7x256xf32>
    %188 = vector.broadcast %186 : vector<1x256xf32> to vector<7x256xf32>
    %189 = arith.mulf %187, %188 : vector<7x256xf32>
    %190 = arith.addf %184, %189 : vector<7x256xf32>
    %c0_70 = arith.constant 0 : index
    %c17 = arith.constant 17 : index
    %191 = vector.load %arg5[%c0_70, %c17] : memref<7x25xf32, #tpu.memory_space<vmem>>, vector<7x1xf32>
    %192 = vector.extract_strided_slice %87 {offsets = [0, 4352], sizes = [1, 256], strides = [1, 1]} : vector<1x6400xf32> to vector<1x256xf32>
    %193 = vector.broadcast %191 : vector<7x1xf32> to vector<7x256xf32>
    %194 = vector.broadcast %192 : vector<1x256xf32> to vector<7x256xf32>
    %195 = arith.mulf %193, %194 : vector<7x256xf32>
    %196 = arith.addf %190, %195 : vector<7x256xf32>
    %c0_71 = arith.constant 0 : index
    %c18 = arith.constant 18 : index
    %197 = vector.load %arg5[%c0_71, %c18] : memref<7x25xf32, #tpu.memory_space<vmem>>, vector<7x1xf32>
    %198 = vector.extract_strided_slice %87 {offsets = [0, 4608], sizes = [1, 256], strides = [1, 1]} : vector<1x6400xf32> to vector<1x256xf32>
    %199 = vector.broadcast %197 : vector<7x1xf32> to vector<7x256xf32>
    %200 = vector.broadcast %198 : vector<1x256xf32> to vector<7x256xf32>
    %201 = arith.mulf %199, %200 : vector<7x256xf32>
    %202 = arith.addf %196, %201 : vector<7x256xf32>
    %c0_72 = arith.constant 0 : index
    %c19 = arith.constant 19 : index
    %203 = vector.load %arg5[%c0_72, %c19] : memref<7x25xf32, #tpu.memory_space<vmem>>, vector<7x1xf32>
    %204 = vector.extract_strided_slice %87 {offsets = [0, 4864], sizes = [1, 256], strides = [1, 1]} : vector<1x6400xf32> to vector<1x256xf32>
    %205 = vector.broadcast %203 : vector<7x1xf32> to vector<7x256xf32>
    %206 = vector.broadcast %204 : vector<1x256xf32> to vector<7x256xf32>
    %207 = arith.mulf %205, %206 : vector<7x256xf32>
    %208 = arith.addf %202, %207 : vector<7x256xf32>
    %c0_73 = arith.constant 0 : index
    %c20 = arith.constant 20 : index
    %209 = vector.load %arg5[%c0_73, %c20] : memref<7x25xf32, #tpu.memory_space<vmem>>, vector<7x1xf32>
    %210 = vector.extract_strided_slice %87 {offsets = [0, 5120], sizes = [1, 256], strides = [1, 1]} : vector<1x6400xf32> to vector<1x256xf32>
    %211 = vector.broadcast %209 : vector<7x1xf32> to vector<7x256xf32>
    %212 = vector.broadcast %210 : vector<1x256xf32> to vector<7x256xf32>
    %213 = arith.mulf %211, %212 : vector<7x256xf32>
    %214 = arith.addf %208, %213 : vector<7x256xf32>
    %c0_74 = arith.constant 0 : index
    %c21 = arith.constant 21 : index
    %215 = vector.load %arg5[%c0_74, %c21] : memref<7x25xf32, #tpu.memory_space<vmem>>, vector<7x1xf32>
    %216 = vector.extract_strided_slice %87 {offsets = [0, 5376], sizes = [1, 256], strides = [1, 1]} : vector<1x6400xf32> to vector<1x256xf32>
    %217 = vector.broadcast %215 : vector<7x1xf32> to vector<7x256xf32>
    %218 = vector.broadcast %216 : vector<1x256xf32> to vector<7x256xf32>
    %219 = arith.mulf %217, %218 : vector<7x256xf32>
    %220 = arith.addf %214, %219 : vector<7x256xf32>
    %c0_75 = arith.constant 0 : index
    %c22 = arith.constant 22 : index
    %221 = vector.load %arg5[%c0_75, %c22] : memref<7x25xf32, #tpu.memory_space<vmem>>, vector<7x1xf32>
    %222 = vector.extract_strided_slice %87 {offsets = [0, 5632], sizes = [1, 256], strides = [1, 1]} : vector<1x6400xf32> to vector<1x256xf32>
    %223 = vector.broadcast %221 : vector<7x1xf32> to vector<7x256xf32>
    %224 = vector.broadcast %222 : vector<1x256xf32> to vector<7x256xf32>
    %225 = arith.mulf %223, %224 : vector<7x256xf32>
    %226 = arith.addf %220, %225 : vector<7x256xf32>
    %c0_76 = arith.constant 0 : index
    %c23 = arith.constant 23 : index
    %227 = vector.load %arg5[%c0_76, %c23] : memref<7x25xf32, #tpu.memory_space<vmem>>, vector<7x1xf32>
    %228 = vector.extract_strided_slice %87 {offsets = [0, 5888], sizes = [1, 256], strides = [1, 1]} : vector<1x6400xf32> to vector<1x256xf32>
    %229 = vector.broadcast %227 : vector<7x1xf32> to vector<7x256xf32>
    %230 = vector.broadcast %228 : vector<1x256xf32> to vector<7x256xf32>
    %231 = arith.mulf %229, %230 : vector<7x256xf32>
    %232 = arith.addf %226, %231 : vector<7x256xf32>
    %c0_77 = arith.constant 0 : index
    %c24 = arith.constant 24 : index
    %233 = vector.load %arg5[%c0_77, %c24] : memref<7x25xf32, #tpu.memory_space<vmem>>, vector<7x1xf32>
    %234 = vector.extract_strided_slice %87 {offsets = [0, 6144], sizes = [1, 256], strides = [1, 1]} : vector<1x6400xf32> to vector<1x256xf32>
    %235 = vector.broadcast %233 : vector<7x1xf32> to vector<7x256xf32>
    %236 = vector.broadcast %234 : vector<1x256xf32> to vector<7x256xf32>
    %237 = arith.mulf %235, %236 : vector<7x256xf32>
    %238 = arith.addf %232, %237 : vector<7x256xf32>
    %c0_78 = arith.constant 0 : index
    %c4_79 = arith.constant 4 : index
    %239 = vector.load %arg3[%c0_78, %c4_79] : memref<7x5xf32, #tpu.memory_space<vmem>>, vector<7x1xf32>
    %240 = vector.broadcast %239 : vector<7x1xf32> to vector<7x256xf32>
    %241 = arith.addf %238, %240 : vector<7x256xf32>
    %cst_80 = arith.constant 0.000000e+00 : f32
    %242 = vector.broadcast %cst_80 : f32 to vector<7x256xf32>
    %243 = arith.maximumf %241, %242 : vector<7x256xf32>
    %c0_81 = arith.constant 0 : index
    %c0_82 = arith.constant 0 : index
    %244 = vector.load %arg6[%c0_81, %c0_82] : memref<4x8xf32, #tpu.memory_space<vmem>>, vector<4x7xf32>
    %cst_83 = arith.constant dense<0.000000e+00> : vector<4x256xf32>
    %245 = tpu.matmul %244, %243, %cst_83 {dimension_numbers = #tpu.dot_dimension_numbers<[1], [0], [0], [1], [0, 0, 1, 1], [], []>} : vector<4x7xf32>, vector<7x256xf32>, vector<4x256xf32> -> vector<4x256xf32>
    %c0_84 = arith.constant 0 : index
    %c7_85 = arith.constant 7 : index
    %246 = vector.load %arg6[%c0_84, %c7_85] : memref<4x8xf32, #tpu.memory_space<vmem>>, vector<4x1xf32>
    %247 = vector.broadcast %246 : vector<4x1xf32> to vector<4x256xf32>
    %248 = arith.addf %245, %247 : vector<4x256xf32>
    %c0_86 = arith.constant 0 : index
    %c0_87 = arith.constant 0 : index
    %249 = vector.load %arg8[%c0_86, %c0_87] : memref<4x256xf32, #tpu.memory_space<vmem>>, vector<4x256xf32>
    tpu.vector_store %arg8[%c0_86, %c0_87], %248 {strides = array<i32>} : memref<4x256xf32, #tpu.memory_space<vmem>>, vector<4x256xf32>,
    return
  }
  func.func @transform_0(%arg0: i32) -> (i32, i32) {
    %c0_i32 = arith.constant 0 : i32
    %c0_i32_0 = arith.constant 0 : i32
    return %c0_i32, %arg0 : i32, i32
  }
  func.func @transform_1(%arg0: i32) -> (i32, i32) {
    %c0_i32 = arith.constant 0 : i32
    %c0_i32_0 = arith.constant 0 : i32
    %c0_i32_1 = arith.constant 0 : i32
    return %c0_i32, %c0_i32_0 : i32, i32
  }
  func.func @transform_2(%arg0: i32) -> (i32, i32) {
    %c0_i32 = arith.constant 0 : i32
    %c0_i32_0 = arith.constant 0 : i32
    %c0_i32_1 = arith.constant 0 : i32
    return %c0_i32, %c0_i32_0 : i32, i32
  }
  func.func @transform_3(%arg0: i32) -> (i32, i32) {
    %c0_i32 = arith.constant 0 : i32
    %c0_i32_0 = arith.constant 0 : i32
    %c0_i32_1 = arith.constant 0 : i32
    return %c0_i32, %c0_i32_0 : i32, i32
  }
  func.func @transform_4(%arg0: i32) -> (i32, i32) {
    %c0_i32 = arith.constant 0 : i32
    %c0_i32_0 = arith.constant 0 : i32
    %c0_i32_1 = arith.constant 0 : i32
    return %c0_i32, %c0_i32_0 : i32, i32
  }
  func.func @transform_5(%arg0: i32) -> (i32, i32) {
    %c0_i32 = arith.constant 0 : i32
    %c0_i32_0 = arith.constant 0 : i32
    %c0_i32_1 = arith.constant 0 : i32
    return %c0_i32, %c0_i32_0 : i32, i32
  }
  func.func @transform_6(%arg0: i32) -> (i32, i32) {
    %c0_i32 = arith.constant 0 : i32
    %c0_i32_0 = arith.constant 0 : i32
    %c0_i32_1 = arith.constant 0 : i32
    return %c0_i32, %c0_i32_0 : i32, i32
  }
  func.func @transform_7(%arg0: i32) -> (i32, i32) {
    %c0_i32 = arith.constant 0 : i32
    %c0_i32_0 = arith.constant 0 : i32
    return %c0_i32, %arg0 : i32, i32
  }
}

</mosaic_0001>

<llo_original>
// kernel: tpu_custom_call.1
$region0: #{tpu_custom_call.1}
  #allocation0 [shape = 'u32[]', space=smem, size = 0x4, offset = 0x4, fixed_abs, tag = 'smem constant byte address 0x4 - core index']
  #allocation1 [shape = 'u32[144,128]{1,0:T(1,128)}', space=vmem, size = 0x12000, scoped, tag = 'internal scratch']
  %s0 = inlined_call_operand.hbm [shape: f32[9,6400], index: 0, kind: input, shape index: {}]
  %s1 = inlined_call_operand.hbm [shape: f32[9,6400], index: 1, kind: input, shape index: {}]
  %s2 = inlined_call_operand.hbm [shape: f32[7,5], index: 2, kind: input, shape index: {}]
  %s3 = inlined_call_operand.vmem [shape: f32[7,63], index: 3, kind: input, shape index: {}]
  %s4 = inlined_call_operand.hbm [shape: f32[7,25], index: 4, kind: input, shape index: {}]
  %s5 = inlined_call_operand.vmem [shape: f32[4,8], index: 5, kind: input, shape index: {}]
  %s6 = inlined_call_operand.vmem [shape: f32[1,2], index: 6, kind: input, shape index: {}]
  %s7 = inlined_call_operand.hbm [shape: f32[4,256], index: 7, kind: output, shape index: {}]
  %s8 = sld [smem:[#allocation0]]
  $region54: #{tpu_custom_call.1} parent=0
    _
  %s10 = ssub.s32 1, %s8
  %s11 = scalar_select 0, %s10, %s8
  $region1: #{tpu_custom_call.1} parent=0
    #allocation2 [shape = 'u8[409600]{0}', space=vmem, size = 0x64000, scoped, tag = 'input window, operand 0, single buffered']
    #allocation3 [shape = 's32[1]{0}', space=sflag, size = 0x4, scoped, tag = 'scoped memory for tpu_custom_call.1']
    #allocation4 [shape = 's32[1]{0}', space=sflag, size = 0x4, scoped, tag = 'scoped memory for tpu_custom_call.1']
    #allocation5 [shape = 'u8[409600]{0}', space=vmem, size = 0x64000, scoped, tag = 'input window, operand 1, single buffered']
    #allocation6 [shape = 's32[1]{0}', space=sflag, size = 0x4, scoped, tag = 'scoped memory for tpu_custom_call.1']
    #allocation7 [shape = 'u8[4096]{0}', space=vmem, size = 0x1000, scoped, tag = 'input window, operand 2, single buffered']
    #allocation8 [shape = 'u8[4096]{0}', space=vmem, size = 0x1000, scoped, tag = 'input window, operand 4, single buffered']
    #allocation9 [shape = 's32[1]{0}', space=sflag, size = 0x4, scoped, tag = 'scoped memory for tpu_custom_call.1']
    #allocation10 [shape = 'u8[4096]{0}', space=vmem, size = 0x1000, scoped, tag = 'output window, operand 0, single buffered']
    %12 = vsyncpa [#allocation3], 0
    %13 = vsyncpa [#allocation6], 0
    %14 = vsyncpa [#allocation9], 0
    %15 = vsyncpa [#allocation4], 0
    // Predicated region
    $region2: #{tpu_custom_call.1} parent=1 // pred_check
      _
    $region3: #{tpu_custom_call.1} parent=1 // pred_check_branch
      %17 = sbr.rel (0) target = $region5
    $region4: #{tpu_custom_call.1} parent=1 // pred_region
      %s19 = ssub.s32 12800, 12800
      %20 = vsyncadd [#allocation3], %s19
      %s21 = sshll.u32 [#allocation2], 4
      %s22 = int_to_ptr.vmem [resolvable:$true] %s21
      %27 = dma.hbm_to_vmem [thread:$0]  %s0, 12800, %s22, [#allocation3], 6400, 6400, 400
    $region5: #{tpu_custom_call.1} parent=1 // pred_fallthru
      _
    // Predicated region
    $region6: #{tpu_custom_call.1} parent=1 // pred_check
      _
    $region7: #{tpu_custom_call.1} parent=1 // pred_check_branch
      %29 = sbr.rel (0) target = $region9
    $region8: #{tpu_custom_call.1} parent=1 // pred_region
      %s31 = ssub.s32 12800, 12800
      %32 = vsyncadd [#allocation6], %s31
      %s33 = sshll.u32 [#allocation5], 4
      %s34 = int_to_ptr.vmem [resolvable:$true] %s33
      %39 = dma.hbm_to_vmem [thread:$0]  %s1, 12800, %s34, [#allocation6], 6400, 6400, 400
    $region9: #{tpu_custom_call.1} parent=1 // pred_fallthru
      _
    // Predicated region
    $region10: #{tpu_custom_call.1} parent=1 // pred_check
      _
    $region11: #{tpu_custom_call.1} parent=1 // pred_check_branch
      %41 = sbr.rel (0) target = $region13
    $region12: #{tpu_custom_call.1} parent=1 // pred_region
      %s43 = ssub.s32 128, 128
      %44 = vsyncadd [#allocation6], %s43
      %s46 = sshll.u32 [#allocation7], 4
      %s47 = int_to_ptr.vmem [resolvable:$true] %s46
      %49 = dma.hbm_to_vmem [thread:$0]  %s2, 128, %s47, [#allocation6]
    $region13: #{tpu_custom_call.1} parent=1 // pred_fallthru
      _
    // Predicated region
    $region14: #{tpu_custom_call.1} parent=1 // pred_check
      _
    $region15: #{tpu_custom_call.1} parent=1 // pred_check_branch
      %51 = sbr.rel (0) target = $region17
    $region16: #{tpu_custom_call.1} parent=1 // pred_region
      _
    $region17: #{tpu_custom_call.1} parent=1 // pred_fallthru
      _
    // Predicated region
    $region18: #{tpu_custom_call.1} parent=1 // pred_check
      _
    $region19: #{tpu_custom_call.1} parent=1 // pred_check_branch
      %53 = sbr.rel (0) target = $region21
    $region20: #{tpu_custom_call.1} parent=1 // pred_region
      %s55 = ssub.s32 128, 128
      %56 = vsyncadd [#allocation9], %s55
      %s58 = sshll.u32 [#allocation8], 4
      %s59 = int_to_ptr.vmem [resolvable:$true] %s58
      %61 = dma.hbm_to_vmem [thread:$0]  %s4, 128, %s59, [#allocation9]
    $region21: #{tpu_custom_call.1} parent=1 // pred_fallthru
      _
    // Predicated region
    $region22: #{tpu_custom_call.1} parent=1 // pred_check
      _
    $region23: #{tpu_custom_call.1} parent=1 // pred_check_branch
      %63 = sbr.rel (0) target = $region25
    $region24: #{tpu_custom_call.1} parent=1 // pred_region
      _
    $region25: #{tpu_custom_call.1} parent=1 // pred_fallthru
      _
    // Predicated region
    $region26: #{tpu_custom_call.1} parent=1 // pred_check
      _
    $region27: #{tpu_custom_call.1} parent=1 // pred_check_branch
      %65 = sbr.rel (0) target = $region29
    $region28: #{tpu_custom_call.1} parent=1 // pred_region
      _
    $region29: #{tpu_custom_call.1} parent=1 // pred_fallthru
      _
    // Predicated region
    $region30: #{tpu_custom_call.1} parent=1 // pred_check
      _
    $region31: #{tpu_custom_call.1} parent=1 // pred_check_branch
      %67 = sbr.rel (0) target = $region33
    $region32: #{tpu_custom_call.1} parent=1 // pred_region
      %68 = dma.done [#allocation3], 12800
    $region33: #{tpu_custom_call.1} parent=1 // pred_fallthru
      _
    // Predicated region
    $region34: #{tpu_custom_call.1} parent=1 // pred_check
      _
    $region35: #{tpu_custom_call.1} parent=1 // pred_check_branch
      %70 = sbr.rel (0) target = $region37
    $region36: #{tpu_custom_call.1} parent=1 // pred_region
      %71 = dma.done [#allocation6], 12800
    $region37: #{tpu_custom_call.1} parent=1 // pred_fallthru
      _
    // Predicated region
    $region38: #{tpu_custom_call.1} parent=1 // pred_check
      _
    $region39: #{tpu_custom_call.1} parent=1 // pred_check_branch
      %73 = sbr.rel (0) target = $region41
    $region40: #{tpu_custom_call.1} parent=1 // pred_region
      %74 = dma.done [#allocation6], 128
    $region41: #{tpu_custom_call.1} parent=1 // pred_fallthru
      _
    // Predicated region
    $region42: #{tpu_custom_call.1} parent=1 // pred_check
      _
    $region43: #{tpu_custom_call.1} parent=1 // pred_check_branch
      %76 = sbr.rel (0) target = $region45
    $region44: #{tpu_custom_call.1} parent=1 // pred_region
      %77 = dma.done [#allocation9], 128
    $region45: #{tpu_custom_call.1} parent=1 // pred_fallthru
      _
    %v78 = vld [vmem:[#allocation2] sm:$0xff]
    %v79 = vld [vmem:[#allocation2 + $0x8] sm:$0xff]
    %v80 = vld [vmem:[#allocation2 + $0x10] sm:$0xff]
    %v81 = vld [vmem:[#allocation2 + $0x18] sm:$0xff]
    %v82 = vld [vmem:[#allocation2 + $0x20] sm:$0xff]
    %v83 = vld [vmem:[#allocation2 + $0x28] sm:$0xff]
    %v84 = vld [vmem:[#allocation2 + $0x30] sm:$0xff]
    %v85 = vld [vmem:[#allocation2 + $0x38] sm:$0xff]
    %v86 = vld [vmem:[#allocation2 + $0x40] sm:$0xff]
    %v87 = vld [vmem:[#allocation2 + $0x48] sm:$0xff]
    %v88 = vld [vmem:[#allocation2 + $0x50] sm:$0xff]
    %v89 = vld [vmem:[#allocation2 + $0x58] sm:$0xff]
    %v90 = vld [vmem:[#allocation2 + $0x60] sm:$0xff]
    %v91 = vld [vmem:[#allocation2 + $0x68] sm:$0xff]
    %v92 = vld [vmem:[#allocation2 + $0x70] sm:$0xff]
    %v93 = vld [vmem:[#allocation2 + $0x78] sm:$0xff]
    %v94 = vld [vmem:[#allocation2 + $0x80] sm:$0xff]
    %v95 = vld [vmem:[#allocation2 + $0x88] sm:$0xff]
    %v96 = vld [vmem:[#allocation2 + $0x90] sm:$0xff]
    %v97 = vld [vmem:[#allocation2 + $0x98] sm:$0xff]
    %v98 = vld [vmem:[#allocation2 + $0xa0] sm:$0xff]
    %v99 = vld [vmem:[#allocation2 + $0xa8] sm:$0xff]
    %v100 = vld [vmem:[#allocation2 + $0xb0] sm:$0xff]
    %v101 = vld [vmem:[#allocation2 + $0xb8] sm:$0xff]
    %v102 = vld [vmem:[#allocation2 + $0xc0] sm:$0xff]
    %v103 = vld [vmem:[#allocation2 + $0xc8] sm:$0xff]
    %v104 = vld [vmem:[#allocation2 + $0xd0] sm:$0xff]
    %v105 = vld [vmem:[#allocation2 + $0xd8] sm:$0xff]
    %v106 = vld [vmem:[#allocation2 + $0xe0] sm:$0xff]
    %v107 = vld [vmem:[#allocation2 + $0xe8] sm:$0xff]
    %v108 = vld [vmem:[#allocation2 + $0xf0] sm:$0xff]
    %v109 = vld [vmem:[#allocation2 + $0xf8] sm:$0xff]
    %v110 = vld [vmem:[#allocation2 + $0x100] sm:$0xff]
    %v111 = vld [vmem:[#allocation2 + $0x108] sm:$0xff]
    %v112 = vld [vmem:[#allocation2 + $0x110] sm:$0xff]
    %v113 = vld [vmem:[#allocation2 + $0x118] sm:$0xff]
    %v114 = vld [vmem:[#allocation2 + $0x120] sm:$0xff]
    %v115 = vld [vmem:[#allocation2 + $0x128] sm:$0xff]
    %v116 = vld [vmem:[#allocation2 + $0x130] sm:$0xff]
    %v117 = vld [vmem:[#allocation2 + $0x138] sm:$0xff]
    %v118 = vld [vmem:[#allocation2 + $0x140] sm:$0xff]
    %v119 = vld [vmem:[#allocation2 + $0x148] sm:$0xff]
    %v120 = vld [vmem:[#allocation2 + $0x150] sm:$0xff]
    %v121 = vld [vmem:[#allocation2 + $0x158] sm:$0xff]
    %v122 = vld [vmem:[#allocation2 + $0x160] sm:$0xff]
    %v123 = vld [vmem:[#allocation2 + $0x168] sm:$0xff]
    %v124 = vld [vmem:[#allocation2 + $0x170] sm:$0xff]
    %v125 = vld [vmem:[#allocation2 + $0x178] sm:$0xff]
    %v126 = vld [vmem:[#allocation2 + $0x180] sm:$0xff]
    %v127 = vld [vmem:[#allocation2 + $0x188] sm:$0xff]
    %v128 = vld [vmem:[#allocation2 + $0x190] sm:$0x1]
    %v129 = vld [vmem:[#allocation2 + $0x198] sm:$0x1]
    %v130 = vld [vmem:[#allocation2 + $0x1a0] sm:$0x1]
    %v131 = vld [vmem:[#allocation2 + $0x1a8] sm:$0x1]
    %v132 = vld [vmem:[#allocation2 + $0x1b0] sm:$0x1]
    %v133 = vld [vmem:[#allocation2 + $0x1b8] sm:$0x1]
    %v134 = vld [vmem:[#allocation2 + $0x1c0] sm:$0x1]
    %v135 = vld [vmem:[#allocation2 + $0x1c8] sm:$0x1]
    %v136 = vld [vmem:[#allocation2 + $0x1d0] sm:$0x1]
    %v137 = vld [vmem:[#allocation2 + $0x1d8] sm:$0x1]
    %v138 = vld [vmem:[#allocation2 + $0x1e0] sm:$0x1]
    %v139 = vld [vmem:[#allocation2 + $0x1e8] sm:$0x1]
    %v140 = vld [vmem:[#allocation2 + $0x1f0] sm:$0x1]
    %v141 = vld [vmem:[#allocation2 + $0x1f8] sm:$0x1]
    %v142 = vld [vmem:[#allocation2 + $0x200] sm:$0x1]
    %v143 = vld [vmem:[#allocation2 + $0x208] sm:$0x1]
    %v144 = vld [vmem:[#allocation2 + $0x210] sm:$0x1]
    %v145 = vld [vmem:[#allocation2 + $0x218] sm:$0x1]
    %v146 = vld [vmem:[#allocation2 + $0x220] sm:$0x1]
    %v147 = vld [vmem:[#allocation2 + $0x228] sm:$0x1]
    %v148 = vld [vmem:[#allocation2 + $0x230] sm:$0x1]
    %v149 = vld [vmem:[#allocation2 + $0x238] sm:$0x1]
    %v150 = vld [vmem:[#allocation2 + $0x240] sm:$0x1]
    %v151 = vld [vmem:[#allocation2 + $0x248] sm:$0x1]
    %v152 = vld [vmem:[#allocation2 + $0x250] sm:$0x1]
    %v153 = vld [vmem:[#allocation2 + $0x258] sm:$0x1]
    %v154 = vld [vmem:[#allocation2 + $0x260] sm:$0x1]
    %v155 = vld [vmem:[#allocation2 + $0x268] sm:$0x1]
    %v156 = vld [vmem:[#allocation2 + $0x270] sm:$0x1]
    %v157 = vld [vmem:[#allocation2 + $0x278] sm:$0x1]
    %v158 = vld [vmem:[#allocation2 + $0x280] sm:$0x1]
    %v159 = vld [vmem:[#allocation2 + $0x288] sm:$0x1]
    %v160 = vld [vmem:[#allocation2 + $0x290] sm:$0x1]
    %v161 = vld [vmem:[#allocation2 + $0x298] sm:$0x1]
    %v162 = vld [vmem:[#allocation2 + $0x2a0] sm:$0x1]
    %v163 = vld [vmem:[#allocation2 + $0x2a8] sm:$0x1]
    %v164 = vld [vmem:[#allocation2 + $0x2b0] sm:$0x1]
    %v165 = vld [vmem:[#allocation2 + $0x2b8] sm:$0x1]
    %v166 = vld [vmem:[#allocation2 + $0x2c0] sm:$0x1]
    %v167 = vld [vmem:[#allocation2 + $0x2c8] sm:$0x1]
    %v168 = vld [vmem:[#allocation2 + $0x2d0] sm:$0x1]
    %v169 = vld [vmem:[#allocation2 + $0x2d8] sm:$0x1]
    %v170 = vld [vmem:[#allocation2 + $0x2e0] sm:$0x1]
    %v171 = vld [vmem:[#allocation2 + $0x2e8] sm:$0x1]
    %v172 = vld [vmem:[#allocation2 + $0x2f0] sm:$0x1]
    %v173 = vld [vmem:[#allocation2 + $0x2f8] sm:$0x1]
    %v174 = vld [vmem:[#allocation2 + $0x300] sm:$0x1]
    %v175 = vld [vmem:[#allocation2 + $0x308] sm:$0x1]
    %v176 = vld [vmem:[#allocation2 + $0x310] sm:$0x1]
    %v177 = vld [vmem:[#allocation2 + $0x318] sm:$0x1]
    %v178 = vld [vmem:[#allocation5] sm:$0xff]
    %v179 = vld [vmem:[#allocation5 + $0x8] sm:$0xff]
    %v180 = vld [vmem:[#allocation5 + $0x10] sm:$0xff]
    %v181 = vld [vmem:[#allocation5 + $0x18] sm:$0xff]
    %v182 = vld [vmem:[#allocation5 + $0x20] sm:$0xff]
    %v183 = vld [vmem:[#allocation5 + $0x28] sm:$0xff]
    %v184 = vld [vmem:[#allocation5 + $0x30] sm:$0xff]
    %v185 = vld [vmem:[#allocation5 + $0x38] sm:$0xff]
    %v186 = vld [vmem:[#allocation5 + $0x40] sm:$0xff]
    %v187 = vld [vmem:[#allocation5 + $0x48] sm:$0xff]
    %v188 = vld [vmem:[#allocation5 + $0x50] sm:$0xff]
    %v189 = vld [vmem:[#allocation5 + $0x58] sm:$0xff]
    %v190 = vld [vmem:[#allocation5 + $0x60] sm:$0xff]
    %v191 = vld [vmem:[#allocation5 + $0x68] sm:$0xff]
    %v192 = vld [vmem:[#allocation5 + $0x70] sm:$0xff]
    %v193 = vld [vmem:[#allocation5 + $0x78] sm:$0xff]
    %v194 = vld [vmem:[#allocation5 + $0x80] sm:$0xff]
    %v195 = vld [vmem:[#allocation5 + $0x88] sm:$0xff]
    %v196 = vld [vmem:[#allocation5 + $0x90] sm:$0xff]
    %v197 = vld [vmem:[#allocation5 + $0x98] sm:$0xff]
    %v198 = vld [vmem:[#allocation5 + $0xa0] sm:$0xff]
    %v199 = vld [vmem:[#allocation5 + $0xa8] sm:$0xff]
    %v200 = vld [vmem:[#allocation5 + $0xb0] sm:$0xff]
    %v201 = vld [vmem:[#allocation5 + $0xb8] sm:$0xff]
    %v202 = vld [vmem:[#allocation5 + $0xc0] sm:$0xff]
    %v203 = vld [vmem:[#allocation5 + $0xc8] sm:$0xff]
    %v204 = vld [vmem:[#allocation5 + $0xd0] sm:$0xff]
    %v205 = vld [vmem:[#allocation5 + $0xd8] sm:$0xff]
    %v206 = vld [vmem:[#allocation5 + $0xe0] sm:$0xff]
    %v207 = vld [vmem:[#allocation5 + $0xe8] sm:$0xff]
    %v208 = vld [vmem:[#allocation5 + $0xf0] sm:$0xff]
    %v209 = vld [vmem:[#allocation5 + $0xf8] sm:$0xff]
    %v210 = vld [vmem:[#allocation5 + $0x100] sm:$0xff]
    %v211 = vld [vmem:[#allocation5 + $0x108] sm:$0xff]
    %v212 = vld [vmem:[#allocation5 + $0x110] sm:$0xff]
    %v213 = vld [vmem:[#allocation5 + $0x118] sm:$0xff]
    %v214 = vld [vmem:[#allocation5 + $0x120] sm:$0xff]
    %v215 = vld [vmem:[#allocation5 + $0x128] sm:$0xff]
    %v216 = vld [vmem:[#allocation5 + $0x130] sm:$0xff]
    %v217 = vld [vmem:[#allocation5 + $0x138] sm:$0xff]
    %v218 = vld [vmem:[#allocation5 + $0x140] sm:$0xff]
    %v219 = vld [vmem:[#allocation5 + $0x148] sm:$0xff]
    %v220 = vld [vmem:[#allocation5 + $0x150] sm:$0xff]
    %v221 = vld [vmem:[#allocation5 + $0x158] sm:$0xff]
    %v222 = vld [vmem:[#allocation5 + $0x160] sm:$0xff]
    %v223 = vld [vmem:[#allocation5 + $0x168] sm:$0xff]
    %v224 = vld [vmem:[#allocation5 + $0x170] sm:$0xff]
    %v225 = vld [vmem:[#allocation5 + $0x178] sm:$0xff]
    %v226 = vld [vmem:[#allocation5 + $0x180] sm:$0xff]
    %v227 = vld [vmem:[#allocation5 + $0x188] sm:$0xff]
    %v228 = vld [vmem:[#allocation5 + $0x190] sm:$0x1]
    %v229 = vld [vmem:[#allocation5 + $0x198] sm:$0x1]
    %v230 = vld [vmem:[#allocation5 + $0x1a0] sm:$0x1]
    %v231 = vld [vmem:[#allocation5 + $0x1a8] sm:$0x1]
    %v232 = vld [vmem:[#allocation5 + $0x1b0] sm:$0x1]
    %v233 = vld [vmem:[#allocation5 + $0x1b8] sm:$0x1]
    %v234 = vld [vmem:[#allocation5 + $0x1c0] sm:$0x1]
    %v235 = vld [vmem:[#allocation5 + $0x1c8] sm:$0x1]
    %v236 = vld [vmem:[#allocation5 + $0x1d0] sm:$0x1]
    %v237 = vld [vmem:[#allocation5 + $0x1d8] sm:$0x1]
    %v238 = vld [vmem:[#allocation5 + $0x1e0] sm:$0x1]
    %v239 = vld [vmem:[#allocation5 + $0x1e8] sm:$0x1]
    %v240 = vld [vmem:[#allocation5 + $0x1f0] sm:$0x1]
    %v241 = vld [vmem:[#allocation5 + $0x1f8] sm:$0x1]
    %v242 = vld [vmem:[#allocation5 + $0x200] sm:$0x1]
    %v243 = vld [vmem:[#allocation5 + $0x208] sm:$0x1]
    %v244 = vld [vmem:[#allocation5 + $0x210] sm:$0x1]
    %v245 = vld [vmem:[#allocation5 + $0x218] sm:$0x1]
    %v246 = vld [vmem:[#allocation5 + $0x220] sm:$0x1]
    %v247 = vld [vmem:[#allocation5 + $0x228] sm:$0x1]
    %v248 = vld [vmem:[#allocation5 + $0x230] sm:$0x1]
    %v249 = vld [vmem:[#allocation5 + $0x238] sm:$0x1]
    %v250 = vld [vmem:[#allocation5 + $0x240] sm:$0x1]
    %v251 = vld [vmem:[#allocation5 + $0x248] sm:$0x1]
    %v252 = vld [vmem:[#allocation5 + $0x250] sm:$0x1]
    %v253 = vld [vmem:[#allocation5 + $0x258] sm:$0x1]
    %v254 = vld [vmem:[#allocation5 + $0x260] sm:$0x1]
    %v255 = vld [vmem:[#allocation5 + $0x268] sm:$0x1]
    %v256 = vld [vmem:[#allocation5 + $0x270] sm:$0x1]
    %v257 = vld [vmem:[#allocation5 + $0x278] sm:$0x1]
    %v258 = vld [vmem:[#allocation5 + $0x280] sm:$0x1]
    %v259 = vld [vmem:[#allocation5 + $0x288] sm:$0x1]
    %v260 = vld [vmem:[#allocation5 + $0x290] sm:$0x1]
    %v261 = vld [vmem:[#allocation5 + $0x298] sm:$0x1]
    %v262 = vld [vmem:[#allocation5 + $0x2a0] sm:$0x1]
    %v263 = vld [vmem:[#allocation5 + $0x2a8] sm:$0x1]
    %v264 = vld [vmem:[#allocation5 + $0x2b0] sm:$0x1]
    %v265 = vld [vmem:[#allocation5 + $0x2b8] sm:$0x1]
    %v266 = vld [vmem:[#allocation5 + $0x2c0] sm:$0x1]
    %v267 = vld [vmem:[#allocation5 + $0x2c8] sm:$0x1]
    %v268 = vld [vmem:[#allocation5 + $0x2d0] sm:$0x1]
    %v269 = vld [vmem:[#allocation5 + $0x2d8] sm:$0x1]
    %v270 = vld [vmem:[#allocation5 + $0x2e0] sm:$0x1]
    %v271 = vld [vmem:[#allocation5 + $0x2e8] sm:$0x1]
    %v272 = vld [vmem:[#allocation5 + $0x2f0] sm:$0x1]
    %v273 = vld [vmem:[#allocation5 + $0x2f8] sm:$0x1]
    %v274 = vld [vmem:[#allocation5 + $0x300] sm:$0x1]
    %v275 = vld [vmem:[#allocation5 + $0x308] sm:$0x1]
    %v276 = vld [vmem:[#allocation5 + $0x310] sm:$0x1]
    %v277 = vld [vmem:[#allocation5 + $0x318] sm:$0x1]
    %v278 = vld [vmem:[#allocation7] sm:$0x1]
    %s280 = vtos %v278
    %v281 = vstv %s280
    %v283 = vmul.f32 %v78, %v281
    %v284 = vmul.f32 %v79, %v281
    %v285 = vmul.f32 %v80, %v281
    %v286 = vmul.f32 %v81, %v281
    %v287 = vmul.f32 %v82, %v281
    %v288 = vmul.f32 %v83, %v281
    %v289 = vmul.f32 %v84, %v281
    %v290 = vmul.f32 %v85, %v281
    %v291 = vmul.f32 %v86, %v281
    %v292 = vmul.f32 %v87, %v281
    %v293 = vmul.f32 %v88, %v281
    %v294 = vmul.f32 %v89, %v281
    %v295 = vmul.f32 %v90, %v281
    %v296 = vmul.f32 %v91, %v281
    %v297 = vmul.f32 %v92, %v281
    %v298 = vmul.f32 %v93, %v281
    %v299 = vmul.f32 %v94, %v281
    %v300 = vmul.f32 %v95, %v281
    %v301 = vmul.f32 %v96, %v281
    %v302 = vmul.f32 %v97, %v281
    %v303 = vmul.f32 %v98, %v281
    %v304 = vmul.f32 %v99, %v281
    %v305 = vmul.f32 %v100, %v281
    %v306 = vmul.f32 %v101, %v281
    %v307 = vmul.f32 %v102, %v281
    %v308 = vmul.f32 %v103, %v281
    %v309 = vmul.f32 %v104, %v281
    %v310 = vmul.f32 %v105, %v281
    %v311 = vmul.f32 %v106, %v281
    %v312 = vmul.f32 %v107, %v281
    %v313 = vmul.f32 %v108, %v281
    %v314 = vmul.f32 %v109, %v281
    %v315 = vmul.f32 %v110, %v281
    %v316 = vmul.f32 %v111, %v281
    %v317 = vmul.f32 %v112, %v281
    %v318 = vmul.f32 %v113, %v281
    %v319 = vmul.f32 %v114, %v281
    %v320 = vmul.f32 %v115, %v281
    %v321 = vmul.f32 %v116, %v281
    %v322 = vmul.f32 %v117, %v281
    %v323 = vmul.f32 %v118, %v281
    %v324 = vmul.f32 %v119, %v281
    %v325 = vmul.f32 %v120, %v281
    %v326 = vmul.f32 %v121, %v281
    %v327 = vmul.f32 %v122, %v281
    %v328 = vmul.f32 %v123, %v281
    %v329 = vmul.f32 %v124, %v281
    %v330 = vmul.f32 %v125, %v281
    %v331 = vmul.f32 %v126, %v281
    %v332 = vmul.f32 %v127, %v281
    %v333 = vmul.f32 %v128, %v281
    %v334 = vmul.f32 %v129, %v281
    %v335 = vmul.f32 %v130, %v281
    %v336 = vmul.f32 %v131, %v281
    %v337 = vmul.f32 %v132, %v281
    %v338 = vmul.f32 %v133, %v281
    %v339 = vmul.f32 %v134, %v281
    %v340 = vmul.f32 %v135, %v281
    %v341 = vmul.f32 %v136, %v281
    %v342 = vmul.f32 %v137, %v281
    %v343 = vmul.f32 %v138, %v281
    %v344 = vmul.f32 %v139, %v281
    %v345 = vmul.f32 %v140, %v281
    %v346 = vmul.f32 %v141, %v281
    %v347 = vmul.f32 %v142, %v281
    %v348 = vmul.f32 %v143, %v281
    %v349 = vmul.f32 %v144, %v281
    %v350 = vmul.f32 %v145, %v281
    %v351 = vmul.f32 %v146, %v281
    %v352 = vmul.f32 %v147, %v281
    %v353 = vmul.f32 %v148, %v281
    %v354 = vmul.f32 %v149, %v281
    %v355 = vmul.f32 %v150, %v281
    %v356 = vmul.f32 %v151, %v281
    %v357 = vmul.f32 %v152, %v281
    %v358 = vmul.f32 %v153, %v281
    %v359 = vmul.f32 %v154, %v281
    %v360 = vmul.f32 %v155, %v281
    %v361 = vmul.f32 %v156, %v281
    %v362 = vmul.f32 %v157, %v281
    %v363 = vmul.f32 %v158, %v281
    %v364 = vmul.f32 %v159, %v281
    %v365 = vmul.f32 %v160, %v281
    %v366 = vmul.f32 %v161, %v281
    %v367 = vmul.f32 %v162, %v281
    %v368 = vmul.f32 %v163, %v281
    %v369 = vmul.f32 %v164, %v281
    %v370 = vmul.f32 %v165, %v281
    %v371 = vmul.f32 %v166, %v281
    %v372 = vmul.f32 %v167, %v281
    %v373 = vmul.f32 %v168, %v281
    %v374 = vmul.f32 %v169, %v281
    %v375 = vmul.f32 %v170, %v281
    %v376 = vmul.f32 %v171, %v281
    %v377 = vmul.f32 %v172, %v281
    %v378 = vmul.f32 %v173, %v281
    %v379 = vmul.f32 %v174, %v281
    %v380 = vmul.f32 %v175, %v281
    %v381 = vmul.f32 %v176, %v281
    %v382 = vmul.f32 %v177, %v281
    %383 = vrot.lane.b32.xlu0 %v278, 127
    %v384 = vpop.permute.xlu0 %383
    %s385 = vtos %v384
    %v386 = vstv %s385
    %v388 = vmul.f32 %v386, %v178
    %v389 = vmul.f32 %v386, %v179
    %v390 = vmul.f32 %v386, %v180
    %v391 = vmul.f32 %v386, %v181
    %v392 = vmul.f32 %v386, %v182
    %v393 = vmul.f32 %v386, %v183
    %v394 = vmul.f32 %v386, %v184
    %v395 = vmul.f32 %v386, %v185
    %v396 = vmul.f32 %v386, %v186
    %v397 = vmul.f32 %v386, %v187
    %v398 = vmul.f32 %v386, %v188
    %v399 = vmul.f32 %v386, %v189
    %v400 = vmul.f32 %v386, %v190
    %v401 = vmul.f32 %v386, %v191
    %v402 = vmul.f32 %v386, %v192
    %v403 = vmul.f32 %v386, %v193
    %v404 = vmul.f32 %v386, %v194
    %v405 = vmul.f32 %v386, %v195
    %v406 = vmul.f32 %v386, %v196
    %v407 = vmul.f32 %v386, %v197
    %v408 = vmul.f32 %v386, %v198
    %v409 = vmul.f32 %v386, %v199
    %v410 = vmul.f32 %v386, %v200
    %v411 = vmul.f32 %v386, %v201
    %v412 = vmul.f32 %v386, %v202
    %v413 = vmul.f32 %v386, %v203
    %v414 = vmul.f32 %v386, %v204
    %v415 = vmul.f32 %v386, %v205
    %v416 = vmul.f32 %v386, %v206
    %v417 = vmul.f32 %v386, %v207
    %v418 = vmul.f32 %v386, %v208
    %v419 = vmul.f32 %v386, %v209
    %v420 = vmul.f32 %v386, %v210
    %v421 = vmul.f32 %v386, %v211
    %v422 = vmul.f32 %v386, %v212
    %v423 = vmul.f32 %v386, %v213
    %v424 = vmul.f32 %v386, %v214
    %v425 = vmul.f32 %v386, %v215
    %v426 = vmul.f32 %v386, %v216
    %v427 = vmul.f32 %v386, %v217
    %v428 = vmul.f32 %v386, %v218
    %v429 = vmul.f32 %v386, %v219
    %v430 = vmul.f32 %v386, %v220
    %v431 = vmul.f32 %v386, %v221
    %v432 = vmul.f32 %v386, %v222
    %v433 = vmul.f32 %v386, %v223
    %v434 = vmul.f32 %v386, %v224
    %v435 = vmul.f32 %v386, %v225
    %v436 = vmul.f32 %v386, %v226
    %v437 = vmul.f32 %v386, %v227
    %v438 = vmul.f32 %v386, %v228
    %v439 = vmul.f32 %v386, %v229
    %v440 = vmul.f32 %v386, %v230
    %v441 = vmul.f32 %v386, %v231
    %v442 = vmul.f32 %v386, %v232
    %v443 = vmul.f32 %v386, %v233
    %v444 = vmul.f32 %v386, %v234
    %v445 = vmul.f32 %v386, %v235
    %v446 = vmul.f32 %v386, %v236
    %v447 = vmul.f32 %v386, %v237
    %v448 = vmul.f32 %v386, %v238
    %v449 = vmul.f32 %v386, %v239
    %v450 = vmul.f32 %v386, %v240
    %v451 = vmul.f32 %v386, %v241
    %v452 = vmul.f32 %v386, %v242
    %v453 = vmul.f32 %v386, %v243
    %v454 = vmul.f32 %v386, %v244
    %v455 = vmul.f32 %v386, %v245
    %v456 = vmul.f32 %v386, %v246
    %v457 = vmul.f32 %v386, %v247
    %v458 = vmul.f32 %v386, %v248
    %v459 = vmul.f32 %v386, %v249
    %v460 = vmul.f32 %v386, %v250
    %v461 = vmul.f32 %v386, %v251
    %v462 = vmul.f32 %v386, %v252
    %v463 = vmul.f32 %v386, %v253
    %v464 = vmul.f32 %v386, %v254
    %v465 = vmul.f32 %v386, %v255
    %v466 = vmul.f32 %v386, %v256
    %v467 = vmul.f32 %v386, %v257
    %v468 = vmul.f32 %v386, %v258
    %v469 = vmul.f32 %v386, %v259
    %v470 = vmul.f32 %v386, %v260
    %v471 = vmul.f32 %v386, %v261
    %v472 = vmul.f32 %v386, %v262
    %v473 = vmul.f32 %v386, %v263
    %v474 = vmul.f32 %v386, %v264
    %v475 = vmul.f32 %v386, %v265
    %v476 = vmul.f32 %v386, %v266
    %v477 = vmul.f32 %v386, %v267
    %v478 = vmul.f32 %v386, %v268
    %v479 = vmul.f32 %v386, %v269
    %v480 = vmul.f32 %v386, %v270
    %v481 = vmul.f32 %v386, %v271
    %v482 = vmul.f32 %v386, %v272
    %v483 = vmul.f32 %v386, %v273
    %v484 = vmul.f32 %v386, %v274
    %v485 = vmul.f32 %v386, %v275
    %v486 = vmul.f32 %v386, %v276
    %v487 = vmul.f32 %v386, %v277
    %v488 = vadd.f32 %v283, %v388
    %v489 = vadd.f32 %v284, %v389
    %v490 = vadd.f32 %v285, %v390
    %v491 = vadd.f32 %v286, %v391
    %v492 = vadd.f32 %v287, %v392
    %v493 = vadd.f32 %v288, %v393
    %v494 = vadd.f32 %v289, %v394
    %v495 = vadd.f32 %v290, %v395
    %v496 = vadd.f32 %v291, %v396
    %v497 = vadd.f32 %v292, %v397
    %v498 = vadd.f32 %v293, %v398
    %v499 = vadd.f32 %v294, %v399
    %v500 = vadd.f32 %v295, %v400
    %v501 = vadd.f32 %v296, %v401
    %v502 = vadd.f32 %v297, %v402
    %v503 = vadd.f32 %v298, %v403
    %v504 = vadd.f32 %v299, %v404
    %v505 = vadd.f32 %v300, %v405
    %v506 = vadd.f32 %v301, %v406
    %v507 = vadd.f32 %v302, %v407
    %v508 = vadd.f32 %v303, %v408
    %v509 = vadd.f32 %v304, %v409
    %v510 = vadd.f32 %v305, %v410
    %v511 = vadd.f32 %v306, %v411
    %v512 = vadd.f32 %v307, %v412
    %v513 = vadd.f32 %v308, %v413
    %v514 = vadd.f32 %v309, %v414
    %v515 = vadd.f32 %v310, %v415
    %v516 = vadd.f32 %v311, %v416
    %v517 = vadd.f32 %v312, %v417
    %v518 = vadd.f32 %v313, %v418
    %v519 = vadd.f32 %v314, %v419
    %v520 = vadd.f32 %v315, %v420
    %v521 = vadd.f32 %v316, %v421
    %v522 = vadd.f32 %v317, %v422
    %v523 = vadd.f32 %v318, %v423
    %v524 = vadd.f32 %v319, %v424
    %v525 = vadd.f32 %v320, %v425
    %v526 = vadd.f32 %v321, %v426
    %v527 = vadd.f32 %v322, %v427
    %v528 = vadd.f32 %v323, %v428
    %v529 = vadd.f32 %v324, %v429
    %v530 = vadd.f32 %v325, %v430
    %v531 = vadd.f32 %v326, %v431
    %v532 = vadd.f32 %v327, %v432
    %v533 = vadd.f32 %v328, %v433
    %v534 = vadd.f32 %v329, %v434
    %v535 = vadd.f32 %v330, %v435
    %v536 = vadd.f32 %v331, %v436
    %v537 = vadd.f32 %v332, %v437
    %v538 = vadd.f32 %v333, %v438
    %v539 = vadd.f32 %v334, %v439
    %v540 = vadd.f32 %v335, %v440
    %v541 = vadd.f32 %v336, %v441
    %v542 = vadd.f32 %v337, %v442
    %v543 = vadd.f32 %v338, %v443
    %v544 = vadd.f32 %v339, %v444
    %v545 = vadd.f32 %v340, %v445
    %v546 = vadd.f32 %v341, %v446
    %v547 = vadd.f32 %v342, %v447
    %v548 = vadd.f32 %v343, %v448
    %v549 = vadd.f32 %v344, %v449
    %v550 = vadd.f32 %v345, %v450
    %v551 = vadd.f32 %v346, %v451
    %v552 = vadd.f32 %v347, %v452
    %v553 = vadd.f32 %v348, %v453
    %v554 = vadd.f32 %v349, %v454
    %v555 = vadd.f32 %v350, %v455
    %v556 = vadd.f32 %v351, %v456
    %v557 = vadd.f32 %v352, %v457
    %v558 = vadd.f32 %v353, %v458
    %v559 = vadd.f32 %v354, %v459
    %v560 = vadd.f32 %v355, %v460
    %v561 = vadd.f32 %v356, %v461
    %v562 = vadd.f32 %v357, %v462
    %v563 = vadd.f32 %v358, %v463
    %v564 = vadd.f32 %v359, %v464
    %v565 = vadd.f32 %v360, %v465
    %v566 = vadd.f32 %v361, %v466
    %v567 = vadd.f32 %v362, %v467
    %v568 = vadd.f32 %v363, %v468
    %v569 = vadd.f32 %v364, %v469
    %v570 = vadd.f32 %v365, %v470
    %v571 = vadd.f32 %v366, %v471
    %v572 = vadd.f32 %v367, %v472
    %v573 = vadd.f32 %v368, %v473
    %v574 = vadd.f32 %v369, %v474
    %v575 = vadd.f32 %v370, %v475
    %v576 = vadd.f32 %v371, %v476
    %v577 = vadd.f32 %v372, %v477
    %v578 = vadd.f32 %v373, %v478
    %v579 = vadd.f32 %v374, %v479
    %v580 = vadd.f32 %v375, %v480
    %v581 = vadd.f32 %v376, %v481
    %v582 = vadd.f32 %v377, %v482
    %v583 = vadd.f32 %v378, %v483
    %v584 = vadd.f32 %v379, %v484
    %v585 = vadd.f32 %v380, %v485
    %v586 = vadd.f32 %v381, %v486
    %v587 = vadd.f32 %v382, %v487
    %v588 = vmax.f32 %v488, 0.0
    %v589 = vmax.f32 %v489, 0.0
    %v590 = vmax.f32 %v490, 0.0
    %v591 = vmax.f32 %v491, 0.0
    %v592 = vmax.f32 %v492, 0.0
    %v593 = vmax.f32 %v493, 0.0
    %v594 = vmax.f32 %v494, 0.0
    %v595 = vmax.f32 %v495, 0.0
    %v596 = vmax.f32 %v496, 0.0
    %v597 = vmax.f32 %v497, 0.0
    %v598 = vmax.f32 %v498, 0.0
    %v599 = vmax.f32 %v499, 0.0
    %v600 = vmax.f32 %v500, 0.0
    %v601 = vmax.f32 %v501, 0.0
    %v602 = vmax.f32 %v502, 0.0
    %v603 = vmax.f32 %v503, 0.0
    %v604 = vmax.f32 %v504, 0.0
    %v605 = vmax.f32 %v505, 0.0
    %v606 = vmax.f32 %v506, 0.0
    %v607 = vmax.f32 %v507, 0.0
    %v608 = vmax.f32 %v508, 0.0
    %v609 = vmax.f32 %v509, 0.0
    %v610 = vmax.f32 %v510, 0.0
    %v611 = vmax.f32 %v511, 0.0
    %v612 = vmax.f32 %v512, 0.0
    %v613 = vmax.f32 %v513, 0.0
    %v614 = vmax.f32 %v514, 0.0
    %v615 = vmax.f32 %v515, 0.0
    %v616 = vmax.f32 %v516, 0.0
    %v617 = vmax.f32 %v517, 0.0
    %v618 = vmax.f32 %v518, 0.0
    %v619 = vmax.f32 %v519, 0.0
    %v620 = vmax.f32 %v520, 0.0
    %v621 = vmax.f32 %v521, 0.0
    %v622 = vmax.f32 %v522, 0.0
    %v623 = vmax.f32 %v523, 0.0
    %v624 = vmax.f32 %v524, 0.0
    %v625 = vmax.f32 %v525, 0.0
    %v626 = vmax.f32 %v526, 0.0
    %v627 = vmax.f32 %v527, 0.0
    %v628 = vmax.f32 %v528, 0.0
    %v629 = vmax.f32 %v529, 0.0
    %v630 = vmax.f32 %v530, 0.0
    %v631 = vmax.f32 %v531, 0.0
    %v632 = vmax.f32 %v532, 0.0
    %v633 = vmax.f32 %v533, 0.0
    %v634 = vmax.f32 %v534, 0.0
    %v635 = vmax.f32 %v535, 0.0
    %v636 = vmax.f32 %v536, 0.0
    %v637 = vmax.f32 %v537, 0.0
    %v638 = vmax.f32 %v538, 0.0
    %v639 = vmax.f32 %v539, 0.0
    %v640 = vmax.f32 %v540, 0.0
    %v641 = vmax.f32 %v541, 0.0
    %v642 = vmax.f32 %v542, 0.0
    %v643 = vmax.f32 %v543, 0.0
    %v644 = vmax.f32 %v544, 0.0
    %v645 = vmax.f32 %v545, 0.0
    %v646 = vmax.f32 %v546, 0.0
    %v647 = vmax.f32 %v547, 0.0
    %v648 = vmax.f32 %v548, 0.0
    %v649 = vmax.f32 %v549, 0.0
    %v650 = vmax.f32 %v550, 0.0
    %v651 = vmax.f32 %v551, 0.0
    %v652 = vmax.f32 %v552, 0.0
    %v653 = vmax.f32 %v553, 0.0
    %v654 = vmax.f32 %v554, 0.0
    %v655 = vmax.f32 %v555, 0.0
    %v656 = vmax.f32 %v556, 0.0
    %v657 = vmax.f32 %v557, 0.0
    %v658 = vmax.f32 %v558, 0.0
    %v659 = vmax.f32 %v559, 0.0
    %v660 = vmax.f32 %v560, 0.0
    %v661 = vmax.f32 %v561, 0.0
    %v662 = vmax.f32 %v562, 0.0
    %v663 = vmax.f32 %v563, 0.0
    %v664 = vmax.f32 %v564, 0.0
    %v665 = vmax.f32 %v565, 0.0
    %v666 = vmax.f32 %v566, 0.0
    %v667 = vmax.f32 %v567, 0.0
    %v668 = vmax.f32 %v568, 0.0
    %v669 = vmax.f32 %v569, 0.0
    %v670 = vmax.f32 %v570, 0.0
    %v671 = vmax.f32 %v571, 0.0
    %v672 = vmax.f32 %v572, 0.0
    %v673 = vmax.f32 %v573, 0.0
    %v674 = vmax.f32 %v574, 0.0
    %v675 = vmax.f32 %v575, 0.0
    %v676 = vmax.f32 %v576, 0.0
    %v677 = vmax.f32 %v577, 0.0
    %v678 = vmax.f32 %v578, 0.0
    %v679 = vmax.f32 %v579, 0.0
    %v680 = vmax.f32 %v580, 0.0
    %v681 = vmax.f32 %v581, 0.0
    %v682 = vmax.f32 %v582, 0.0
    %v683 = vmax.f32 %v583, 0.0
    %v684 = vmax.f32 %v584, 0.0
    %v685 = vmax.f32 %v585, 0.0
    %v686 = vmax.f32 %v586, 0.0
    %v687 = vmax.f32 %v587, 0.0
    %v688 = vld [vmem:[#allocation7 + $0x1] sm:$0x1]
    %s690 = vtos %v688
    %v691 = vstv %s690
    %v693 = vmul.f32 %v78, %v691
    %v694 = vmul.f32 %v79, %v691
    %v695 = vmul.f32 %v80, %v691
    %v696 = vmul.f32 %v81, %v691
    %v697 = vmul.f32 %v82, %v691
    %v698 = vmul.f32 %v83, %v691
    %v699 = vmul.f32 %v84, %v691
    %v700 = vmul.f32 %v85, %v691
    %v701 = vmul.f32 %v86, %v691
    %v702 = vmul.f32 %v87, %v691
    %v703 = vmul.f32 %v88, %v691
    %v704 = vmul.f32 %v89, %v691
    %v705 = vmul.f32 %v90, %v691
    %v706 = vmul.f32 %v91, %v691
    %v707 = vmul.f32 %v92, %v691
    %v708 = vmul.f32 %v93, %v691
    %v709 = vmul.f32 %v94, %v691
    %v710 = vmul.f32 %v95, %v691
    %v711 = vmul.f32 %v96, %v691
    %v712 = vmul.f32 %v97, %v691
    %v713 = vmul.f32 %v98, %v691
    %v714 = vmul.f32 %v99, %v691
    %v715 = vmul.f32 %v100, %v691
    %v716 = vmul.f32 %v101, %v691
    %v717 = vmul.f32 %v102, %v691
    %v718 = vmul.f32 %v103, %v691
    %v719 = vmul.f32 %v104, %v691
    %v720 = vmul.f32 %v105, %v691
    %v721 = vmul.f32 %v106, %v691
    %v722 = vmul.f32 %v107, %v691
    %v723 = vmul.f32 %v108, %v691
    %v724 = vmul.f32 %v109, %v691
    %v725 = vmul.f32 %v110, %v691
    %v726 = vmul.f32 %v111, %v691
    %v727 = vmul.f32 %v112, %v691
    %v728 = vmul.f32 %v113, %v691
    %v729 = vmul.f32 %v114, %v691
    %v730 = vmul.f32 %v115, %v691
    %v731 = vmul.f32 %v116, %v691
    %v732 = vmul.f32 %v117, %v691
    %v733 = vmul.f32 %v118, %v691
    %v734 = vmul.f32 %v119, %v691
    %v735 = vmul.f32 %v120, %v691
    %v736 = vmul.f32 %v121, %v691
    %v737 = vmul.f32 %v122, %v691
    %v738 = vmul.f32 %v123, %v691
    %v739 = vmul.f32 %v124, %v691
    %v740 = vmul.f32 %v125, %v691
    %v741 = vmul.f32 %v126, %v691
    %v742 = vmul.f32 %v127, %v691
    %v743 = vmul.f32 %v128, %v691
    %v744 = vmul.f32 %v129, %v691
    %v745 = vmul.f32 %v130, %v691
    %v746 = vmul.f32 %v131, %v691
    %v747 = vmul.f32 %v132, %v691
    %v748 = vmul.f32 %v133, %v691
    %v749 = vmul.f32 %v134, %v691
    %v750 = vmul.f32 %v135, %v691
    %v751 = vmul.f32 %v136, %v691
    %v752 = vmul.f32 %v137, %v691
    %v753 = vmul.f32 %v138, %v691
    %v754 = vmul.f32 %v139, %v691
    %v755 = vmul.f32 %v140, %v691
    %v756 = vmul.f32 %v141, %v691
    %v757 = vmul.f32 %v142, %v691
    %v758 = vmul.f32 %v143, %v691
    %v759 = vmul.f32 %v144, %v691
    %v760 = vmul.f32 %v145, %v691
    %v761 = vmul.f32 %v146, %v691
    %v762 = vmul.f32 %v147, %v691
    %v763 = vmul.f32 %v148, %v691
    %v764 = vmul.f32 %v149, %v691
    %v765 = vmul.f32 %v150, %v691
    %v766 = vmul.f32 %v151, %v691
    %v767 = vmul.f32 %v152, %v691
    %v768 = vmul.f32 %v153, %v691
    %v769 = vmul.f32 %v154, %v691
    %v770 = vmul.f32 %v155, %v691
    %v771 = vmul.f32 %v156, %v691
    %v772 = vmul.f32 %v157, %v691
    %v773 = vmul.f32 %v158, %v691
    %v774 = vmul.f32 %v159, %v691
    %v775 = vmul.f32 %v160, %v691
    %v776 = vmul.f32 %v161, %v691
    %v777 = vmul.f32 %v162, %v691
    %v778 = vmul.f32 %v163, %v691
    %v779 = vmul.f32 %v164, %v691
    %v780 = vmul.f32 %v165, %v691
    %v781 = vmul.f32 %v166, %v691
    %v782 = vmul.f32 %v167, %v691
    %v783 = vmul.f32 %v168, %v691
    %v784 = vmul.f32 %v169, %v691
    %v785 = vmul.f32 %v170, %v691
    %v786 = vmul.f32 %v171, %v691
    %v787 = vmul.f32 %v172, %v691
    %v788 = vmul.f32 %v173, %v691
    %v789 = vmul.f32 %v174, %v691
    %v790 = vmul.f32 %v175, %v691
    %v791 = vmul.f32 %v176, %v691
    %v792 = vmul.f32 %v177, %v691
    %793 = vrot.lane.b32.xlu0 %v688, 127
    %v794 = vpop.permute.xlu0 %793
    %s795 = vtos %v794
    %v796 = vstv %s795
    %v798 = vmul.f32 %v796, %v178
    %v799 = vmul.f32 %v796, %v179
    %v800 = vmul.f32 %v796, %v180
    %v801 = vmul.f32 %v796, %v181
    %v802 = vmul.f32 %v796, %v182
    %v803 = vmul.f32 %v796, %v183
    %v804 = vmul.f32 %v796, %v184
    %v805 = vmul.f32 %v796, %v185
    %v806 = vmul.f32 %v796, %v186
    %v807 = vmul.f32 %v796, %v187
    %v808 = vmul.f32 %v796, %v188
    %v809 = vmul.f32 %v796, %v189
    %v810 = vmul.f32 %v796, %v190
    %v811 = vmul.f32 %v796, %v191
    %v812 = vmul.f32 %v796, %v192
    %v813 = vmul.f32 %v796, %v193
    %v814 = vmul.f32 %v796, %v194
    %v815 = vmul.f32 %v796, %v195
    %v816 = vmul.f32 %v796, %v196
    %v817 = vmul.f32 %v796, %v197
    %v818 = vmul.f32 %v796, %v198
    %v819 = vmul.f32 %v796, %v199
    %v820 = vmul.f32 %v796, %v200
    %v821 = vmul.f32 %v796, %v201
    %v822 = vmul.f32 %v796, %v202
    %v823 = vmul.f32 %v796, %v203
    %v824 = vmul.f32 %v796, %v204
    %v825 = vmul.f32 %v796, %v205
    %v826 = vmul.f32 %v796, %v206
    %v827 = vmul.f32 %v796, %v207
    %v828 = vmul.f32 %v796, %v208
    %v829 = vmul.f32 %v796, %v209
    %v830 = vmul.f32 %v796, %v210
    %v831 = vmul.f32 %v796, %v211
    %v832 = vmul.f32 %v796, %v212
    %v833 = vmul.f32 %v796, %v213
    %v834 = vmul.f32 %v796, %v214
    %v835 = vmul.f32 %v796, %v215
    %v836 = vmul.f32 %v796, %v216
    %v837 = vmul.f32 %v796, %v217
    %v838 = vmul.f32 %v796, %v218
    %v839 = vmul.f32 %v796, %v219
    %v840 = vmul.f32 %v796, %v220
    %v841 = vmul.f32 %v796, %v221
    %v842 = vmul.f32 %v796, %v222
    %v843 = vmul.f32 %v796, %v223
    %v844 = vmul.f32 %v796, %v224
    %v845 = vmul.f32 %v796, %v225
    %v846 = vmul.f32 %v796, %v226
    %v847 = vmul.f32 %v796, %v227
    %v848 = vmul.f32 %v796, %v228
    %v849 = vmul.f32 %v796, %v229
    %v850 = vmul.f32 %v796, %v230
    %v851 = vmul.f32 %v796, %v231
    %v852 = vmul.f32 %v796, %v232
    %v853 = vmul.f32 %v796, %v233
    %v854 = vmul.f32 %v796, %v234
    %v855 = vmul.f32 %v796, %v235
    %v856 = vmul.f32 %v796, %v236
    %v857 = vmul.f32 %v796, %v237
    %v858 = vmul.f32 %v796, %v238
    %v859 = vmul.f32 %v796, %v239
    %v860 = vmul.f32 %v796, %v240
    %v861 = vmul.f32 %v796, %v241
    %v862 = vmul.f32 %v796, %v242
    %v863 = vmul.f32 %v796, %v243
    %v864 = vmul.f32 %v796, %v244
    %v865 = vmul.f32 %v796, %v245
    %v866 = vmul.f32 %v796, %v246
    %v867 = vmul.f32 %v796, %v247
    %v868 = vmul.f32 %v796, %v248
    %v869 = vmul.f32 %v796, %v249
    %v870 = vmul.f32 %v796, %v250
    %v871 = vmul.f32 %v796, %v251
    %v872 = vmul.f32 %v796, %v252
    %v873 = vmul.f32 %v796, %v253
    %v874 = vmul.f32 %v796, %v254
    %v875 = vmul.f32 %v796, %v255
    %v876 = vmul.f32 %v796, %v256
    %v877 = vmul.f32 %v796, %v257
    %v878 = vmul.f32 %v796, %v258
    %v879 = vmul.f32 %v796, %v259
    %v880 = vmul.f32 %v796, %v260
    %v881 = vmul.f32 %v796, %v261
    %v882 = vmul.f32 %v796, %v262
    %v883 = vmul.f32 %v796, %v263
    %v884 = vmul.f32 %v796, %v264
    %v885 = vmul.f32 %v796, %v265
    %v886 = vmul.f32 %v796, %v266
    %v887 = vmul.f32 %v796, %v267
    %v888 = vmul.f32 %v796, %v268
    %v889 = vmul.f32 %v796, %v269
    %v890 = vmul.f32 %v796, %v270
    %v891 = vmul.f32 %v796, %v271
    %v892 = vmul.f32 %v796, %v272
    %v893 = vmul.f32 %v796, %v273
    %v894 = vmul.f32 %v796, %v274
    %v895 = vmul.f32 %v796, %v275
    %v896 = vmul.f32 %v796, %v276
    %v897 = vmul.f32 %v796, %v277
    %v898 = vadd.f32 %v693, %v798
    %v899 = vadd.f32 %v694, %v799
    %v900 = vadd.f32 %v695, %v800
    %v901 = vadd.f32 %v696, %v801
    %v902 = vadd.f32 %v697, %v802
    %v903 = vadd.f32 %v698, %v803
    %v904 = vadd.f32 %v699, %v804
    %v905 = vadd.f32 %v700, %v805
    %v906 = vadd.f32 %v701, %v806
    %v907 = vadd.f32 %v702, %v807
    %v908 = vadd.f32 %v703, %v808
    %v909 = vadd.f32 %v704, %v809
    %v910 = vadd.f32 %v705, %v810
    %v911 = vadd.f32 %v706, %v811
    %v912 = vadd.f32 %v707, %v812
    %v913 = vadd.f32 %v708, %v813
    %v914 = vadd.f32 %v709, %v814
    %v915 = vadd.f32 %v710, %v815
    %v916 = vadd.f32 %v711, %v816
    %v917 = vadd.f32 %v712, %v817
    %v918 = vadd.f32 %v713, %v818
    %v919 = vadd.f32 %v714, %v819
    %v920 = vadd.f32 %v715, %v820
    %v921 = vadd.f32 %v716, %v821
    %v922 = vadd.f32 %v717, %v822
    %v923 = vadd.f32 %v718, %v823
    %v924 = vadd.f32 %v719, %v824
    %v925 = vadd.f32 %v720, %v825
    %v926 = vadd.f32 %v721, %v826
    %v927 = vadd.f32 %v722, %v827
    %v928 = vadd.f32 %v723, %v828
    %v929 = vadd.f32 %v724, %v829
    %v930 = vadd.f32 %v725, %v830
    %v931 = vadd.f32 %v726, %v831
    %v932 = vadd.f32 %v727, %v832
    %v933 = vadd.f32 %v728, %v833
    %v934 = vadd.f32 %v729, %v834
    %v935 = vadd.f32 %v730, %v835
    %v936 = vadd.f32 %v731, %v836
    %v937 = vadd.f32 %v732, %v837
    %v938 = vadd.f32 %v733, %v838
    %v939 = vadd.f32 %v734, %v839
    %v940 = vadd.f32 %v735, %v840
    %v941 = vadd.f32 %v736, %v841
    %v942 = vadd.f32 %v737, %v842
    %v943 = vadd.f32 %v738, %v843
    %v944 = vadd.f32 %v739, %v844
    %v945 = vadd.f32 %v740, %v845
    %v946 = vadd.f32 %v741, %v846
    %v947 = vadd.f32 %v742, %v847
    %v948 = vadd.f32 %v743, %v848
    %v949 = vadd.f32 %v744, %v849
    %v950 = vadd.f32 %v745, %v850
    %v951 = vadd.f32 %v746, %v851
    %v952 = vadd.f32 %v747, %v852
    %v953 = vadd.f32 %v748, %v853
    %v954 = vadd.f32 %v749, %v854
    %v955 = vadd.f32 %v750, %v855
    %v956 = vadd.f32 %v751, %v856
    %v957 = vadd.f32 %v752, %v857
    %v958 = vadd.f32 %v753, %v858
    %v959 = vadd.f32 %v754, %v859
    %v960 = vadd.f32 %v755, %v860
    %v961 = vadd.f32 %v756, %v861
    %v962 = vadd.f32 %v757, %v862
    %v963 = vadd.f32 %v758, %v863
    %v964 = vadd.f32 %v759, %v864
    %v965 = vadd.f32 %v760, %v865
    %v966 = vadd.f32 %v761, %v866
    %v967 = vadd.f32 %v762, %v867
    %v968 = vadd.f32 %v763, %v868
    %v969 = vadd.f32 %v764, %v869
    %v970 = vadd.f32 %v765, %v870
    %v971 = vadd.f32 %v766, %v871
    %v972 = vadd.f32 %v767, %v872
    %v973 = vadd.f32 %v768, %v873
    %v974 = vadd.f32 %v769, %v874
    %v975 = vadd.f32 %v770, %v875
    %v976 = vadd.f32 %v771, %v876
    %v977 = vadd.f32 %v772, %v877
    %v978 = vadd.f32 %v773, %v878
    %v979 = vadd.f32 %v774, %v879
    %v980 = vadd.f32 %v775, %v880
    %v981 = vadd.f32 %v776, %v881
    %v982 = vadd.f32 %v777, %v882
    %v983 = vadd.f32 %v778, %v883
    %v984 = vadd.f32 %v779, %v884
    %v985 = vadd.f32 %v780, %v885
    %v986 = vadd.f32 %v781, %v886
    %v987 = vadd.f32 %v782, %v887
    %v988 = vadd.f32 %v783, %v888
    %v989 = vadd.f32 %v784, %v889
    %v990 = vadd.f32 %v785, %v890
    %v991 = vadd.f32 %v786, %v891
    %v992 = vadd.f32 %v787, %v892
    %v993 = vadd.f32 %v788, %v893
    %v994 = vadd.f32 %v789, %v894
    %v995 = vadd.f32 %v790, %v895
    %v996 = vadd.f32 %v791, %v896
    %v997 = vadd.f32 %v792, %v897
    %v998 = vmax.f32 %v898, 0.0
    %v999 = vmax.f32 %v899, 0.0
    %v1000 = vmax.f32 %v900, 0.0
    %v1001 = vmax.f32 %v901, 0.0
    %v1002 = vmax.f32 %v902, 0.0
    %v1003 = vmax.f32 %v903, 0.0
    %v1004 = vmax.f32 %v904, 0.0
    %v1005 = vmax.f32 %v905, 0.0
    %v1006 = vmax.f32 %v906, 0.0
    %v1007 = vmax.f32 %v907, 0.0
    %v1008 = vmax.f32 %v908, 0.0
    %v1009 = vmax.f32 %v909, 0.0
    %v1010 = vmax.f32 %v910, 0.0
    %v1011 = vmax.f32 %v911, 0.0
    %v1012 = vmax.f32 %v912, 0.0
    %v1013 = vmax.f32 %v913, 0.0
    %v1014 = vmax.f32 %v914, 0.0
    %v1015 = vmax.f32 %v915, 0.0
    %v1016 = vmax.f32 %v916, 0.0
    %v1017 = vmax.f32 %v917, 0.0
    %v1018 = vmax.f32 %v918, 0.0
    %v1019 = vmax.f32 %v919, 0.0
    %v1020 = vmax.f32 %v920, 0.0
    %v1021 = vmax.f32 %v921, 0.0
    %v1022 = vmax.f32 %v922, 0.0
    %v1023 = vmax.f32 %v923, 0.0
    %v1024 = vmax.f32 %v924, 0.0
    %v1025 = vmax.f32 %v925, 0.0
    %v1026 = vmax.f32 %v926, 0.0
    %v1027 = vmax.f32 %v927, 0.0
    %v1028 = vmax.f32 %v928, 0.0
    %v1029 = vmax.f32 %v929, 0.0
    %v1030 = vmax.f32 %v930, 0.0
    %v1031 = vmax.f32 %v931, 0.0
    %v1032 = vmax.f32 %v932, 0.0
    %v1033 = vmax.f32 %v933, 0.0
    %v1034 = vmax.f32 %v934, 0.0
    %v1035 = vmax.f32 %v935, 0.0
    %v1036 = vmax.f32 %v936, 0.0
    %v1037 = vmax.f32 %v937, 0.0
    %v1038 = vmax.f32 %v938, 0.0
    %v1039 = vmax.f32 %v939, 0.0
    %v1040 = vmax.f32 %v940, 0.0
    %v1041 = vmax.f32 %v941, 0.0
    %v1042 = vmax.f32 %v942, 0.0
    %v1043 = vmax.f32 %v943, 0.0
    %v1044 = vmax.f32 %v944, 0.0
    %v1045 = vmax.f32 %v945, 0.0
    %v1046 = vmax.f32 %v946, 0.0
    %v1047 = vmax.f32 %v947, 0.0
    %v1048 = vmax.f32 %v948, 0.0
    %v1049 = vmax.f32 %v949, 0.0
    %v1050 = vmax.f32 %v950, 0.0
    %v1051 = vmax.f32 %v951, 0.0
    %v1052 = vmax.f32 %v952, 0.0
    %v1053 = vmax.f32 %v953, 0.0
    %v1054 = vmax.f32 %v954, 0.0
    %v1055 = vmax.f32 %v955, 0.0
    %v1056 = vmax.f32 %v956, 0.0
    %v1057 = vmax.f32 %v957, 0.0
    %v1058 = vmax.f32 %v958, 0.0
    %v1059 = vmax.f32 %v959, 0.0
    %v1060 = vmax.f32 %v960, 0.0
    %v1061 = vmax.f32 %v961, 0.0
    %v1062 = vmax.f32 %v962, 0.0
    %v1063 = vmax.f32 %v963, 0.0
    %v1064 = vmax.f32 %v964, 0.0
    %v1065 = vmax.f32 %v965, 0.0
    %v1066 = vmax.f32 %v966, 0.0
    %v1067 = vmax.f32 %v967, 0.0
    %v1068 = vmax.f32 %v968, 0.0
    %v1069 = vmax.f32 %v969, 0.0
    %v1070 = vmax.f32 %v970, 0.0
    %v1071 = vmax.f32 %v971, 0.0
    %v1072 = vmax.f32 %v972, 0.0
    %v1073 = vmax.f32 %v973, 0.0
    %v1074 = vmax.f32 %v974, 0.0
    %v1075 = vmax.f32 %v975, 0.0
    %v1076 = vmax.f32 %v976, 0.0
    %v1077 = vmax.f32 %v977, 0.0
    %v1078 = vmax.f32 %v978, 0.0
    %v1079 = vmax.f32 %v979, 0.0
    %v1080 = vmax.f32 %v980, 0.0
    %v1081 = vmax.f32 %v981, 0.0
    %v1082 = vmax.f32 %v982, 0.0
    %v1083 = vmax.f32 %v983, 0.0
    %v1084 = vmax.f32 %v984, 0.0
    %v1085 = vmax.f32 %v985, 0.0
    %v1086 = vmax.f32 %v986, 0.0
    %v1087 = vmax.f32 %v987, 0.0
    %v1088 = vmax.f32 %v988, 0.0
    %v1089 = vmax.f32 %v989, 0.0
    %v1090 = vmax.f32 %v990, 0.0
    %v1091 = vmax.f32 %v991, 0.0
    %v1092 = vmax.f32 %v992, 0.0
    %v1093 = vmax.f32 %v993, 0.0
    %v1094 = vmax.f32 %v994, 0.0
    %v1095 = vmax.f32 %v995, 0.0
    %v1096 = vmax.f32 %v996, 0.0
    %v1097 = vmax.f32 %v997, 0.0
    %v1098 = vld [vmem:[#allocation7 + $0x2] sm:$0x1]
    %s1100 = vtos %v1098
    %v1101 = vstv %s1100
    %v1103 = vmul.f32 %v78, %v1101
    %v1104 = vmul.f32 %v79, %v1101
    %v1105 = vmul.f32 %v80, %v1101
    %v1106 = vmul.f32 %v81, %v1101
    %v1107 = vmul.f32 %v82, %v1101
    %v1108 = vmul.f32 %v83, %v1101
    %v1109 = vmul.f32 %v84, %v1101
    %v1110 = vmul.f32 %v85, %v1101
    %v1111 = vmul.f32 %v86, %v1101
    %v1112 = vmul.f32 %v87, %v1101
    %v1113 = vmul.f32 %v88, %v1101
    %v1114 = vmul.f32 %v89, %v1101
    %v1115 = vmul.f32 %v90, %v1101
    %v1116 = vmul.f32 %v91, %v1101
    %v1117 = vmul.f32 %v92, %v1101
    %v1118 = vmul.f32 %v93, %v1101
    %v1119 = vmul.f32 %v94, %v1101
    %v1120 = vmul.f32 %v95, %v1101
    %v1121 = vmul.f32 %v96, %v1101
    %v1122 = vmul.f32 %v97, %v1101
    %v1123 = vmul.f32 %v98, %v1101
    %v1124 = vmul.f32 %v99, %v1101
    %v1125 = vmul.f32 %v100, %v1101
    %v1126 = vmul.f32 %v101, %v1101
    %v1127 = vmul.f32 %v102, %v1101
    %v1128 = vmul.f32 %v103, %v1101
    %v1129 = vmul.f32 %v104, %v1101
    %v1130 = vmul.f32 %v105, %v1101
    %v1131 = vmul.f32 %v106, %v1101
    %v1132 = vmul.f32 %v107, %v1101
    %v1133 = vmul.f32 %v108, %v1101
    %v1134 = vmul.f32 %v109, %v1101
    %v1135 = vmul.f32 %v110, %v1101
    %v1136 = vmul.f32 %v111, %v1101
    %v1137 = vmul.f32 %v112, %v1101
    %v1138 = vmul.f32 %v113, %v1101
    %v1139 = vmul.f32 %v114, %v1101
    %v1140 = vmul.f32 %v115, %v1101
    %v1141 = vmul.f32 %v116, %v1101
    %v1142 = vmul.f32 %v117, %v1101
    %v1143 = vmul.f32 %v118, %v1101
    %v1144 = vmul.f32 %v119, %v1101
    %v1145 = vmul.f32 %v120, %v1101
    %v1146 = vmul.f32 %v121, %v1101
    %v1147 = vmul.f32 %v122, %v1101
    %v1148 = vmul.f32 %v123, %v1101
    %v1149 = vmul.f32 %v124, %v1101
    %v1150 = vmul.f32 %v125, %v1101
    %v1151 = vmul.f32 %v126, %v1101
    %v1152 = vmul.f32 %v127, %v1101
    %v1153 = vmul.f32 %v128, %v1101
    %v1154 = vmul.f32 %v129, %v1101
    %v1155 = vmul.f32 %v130, %v1101
    %v1156 = vmul.f32 %v131, %v1101
    %v1157 = vmul.f32 %v132, %v1101
    %v1158 = vmul.f32 %v133, %v1101
    %v1159 = vmul.f32 %v134, %v1101
    %v1160 = vmul.f32 %v135, %v1101
    %v1161 = vmul.f32 %v136, %v1101
    %v1162 = vmul.f32 %v137, %v1101
    %v1163 = vmul.f32 %v138, %v1101
    %v1164 = vmul.f32 %v139, %v1101
    %v1165 = vmul.f32 %v140, %v1101
    %v1166 = vmul.f32 %v141, %v1101
    %v1167 = vmul.f32 %v142, %v1101
    %v1168 = vmul.f32 %v143, %v1101
    %v1169 = vmul.f32 %v144, %v1101
    %v1170 = vmul.f32 %v145, %v1101
    %v1171 = vmul.f32 %v146, %v1101
    %v1172 = vmul.f32 %v147, %v1101
    %v1173 = vmul.f32 %v148, %v1101
    %v1174 = vmul.f32 %v149, %v1101
    %v1175 = vmul.f32 %v150, %v1101
    %v1176 = vmul.f32 %v151, %v1101
    %v1177 = vmul.f32 %v152, %v1101
    %v1178 = vmul.f32 %v153, %v1101
    %v1179 = vmul.f32 %v154, %v1101
    %v1180 = vmul.f32 %v155, %v1101
    %v1181 = vmul.f32 %v156, %v1101
    %v1182 = vmul.f32 %v157, %v1101
    %v1183 = vmul.f32 %v158, %v1101
    %v1184 = vmul.f32 %v159, %v1101
    %v1185 = vmul.f32 %v160, %v1101
    %v1186 = vmul.f32 %v161, %v1101
    %v1187 = vmul.f32 %v162, %v1101
    %v1188 = vmul.f32 %v163, %v1101
    %v1189 = vmul.f32 %v164, %v1101
    %v1190 = vmul.f32 %v165, %v1101
    %v1191 = vmul.f32 %v166, %v1101
    %v1192 = vmul.f32 %v167, %v1101
    %v1193 = vmul.f32 %v168, %v1101
    %v1194 = vmul.f32 %v169, %v1101
    %v1195 = vmul.f32 %v170, %v1101
    %v1196 = vmul.f32 %v171, %v1101
    %v1197 = vmul.f32 %v172, %v1101
    %v1198 = vmul.f32 %v173, %v1101
    %v1199 = vmul.f32 %v174, %v1101
    %v1200 = vmul.f32 %v175, %v1101
    %v1201 = vmul.f32 %v176, %v1101
    %v1202 = vmul.f32 %v177, %v1101
    %1203 = vrot.lane.b32.xlu0 %v1098, 127
    %v1204 = vpop.permute.xlu0 %1203
    %s1205 = vtos %v1204
    %v1206 = vstv %s1205
    %v1208 = vmul.f32 %v1206, %v178
    %v1209 = vmul.f32 %v1206, %v179
    %v1210 = vmul.f32 %v1206, %v180
    %v1211 = vmul.f32 %v1206, %v181
    %v1212 = vmul.f32 %v1206, %v182
    %v1213 = vmul.f32 %v1206, %v183
    %v1214 = vmul.f32 %v1206, %v184
    %v1215 = vmul.f32 %v1206, %v185
    %v1216 = vmul.f32 %v1206, %v186
    %v1217 = vmul.f32 %v1206, %v187
    %v1218 = vmul.f32 %v1206, %v188
    %v1219 = vmul.f32 %v1206, %v189
    %v1220 = vmul.f32 %v1206, %v190
    %v1221 = vmul.f32 %v1206, %v191
    %v1222 = vmul.f32 %v1206, %v192
    %v1223 = vmul.f32 %v1206, %v193
    %v1224 = vmul.f32 %v1206, %v194
    %v1225 = vmul.f32 %v1206, %v195
    %v1226 = vmul.f32 %v1206, %v196
    %v1227 = vmul.f32 %v1206, %v197
    %v1228 = vmul.f32 %v1206, %v198
    %v1229 = vmul.f32 %v1206, %v199
    %v1230 = vmul.f32 %v1206, %v200
    %v1231 = vmul.f32 %v1206, %v201
    %v1232 = vmul.f32 %v1206, %v202
    %v1233 = vmul.f32 %v1206, %v203
    %v1234 = vmul.f32 %v1206, %v204
    %v1235 = vmul.f32 %v1206, %v205
    %v1236 = vmul.f32 %v1206, %v206
    %v1237 = vmul.f32 %v1206, %v207
    %v1238 = vmul.f32 %v1206, %v208
    %v1239 = vmul.f32 %v1206, %v209
    %v1240 = vmul.f32 %v1206, %v210
    %v1241 = vmul.f32 %v1206, %v211
    %v1242 = vmul.f32 %v1206, %v212
    %v1243 = vmul.f32 %v1206, %v213
    %v1244 = vmul.f32 %v1206, %v214
    %v1245 = vmul.f32 %v1206, %v215
    %v1246 = vmul.f32 %v1206, %v216
    %v1247 = vmul.f32 %v1206, %v217
    %v1248 = vmul.f32 %v1206, %v218
    %v1249 = vmul.f32 %v1206, %v219
    %v1250 = vmul.f32 %v1206, %v220
    %v1251 = vmul.f32 %v1206, %v221
    %v1252 = vmul.f32 %v1206, %v222
    %v1253 = vmul.f32 %v1206, %v223
    %v1254 = vmul.f32 %v1206, %v224
    %v1255 = vmul.f32 %v1206, %v225
    %v1256 = vmul.f32 %v1206, %v226
    %v1257 = vmul.f32 %v1206, %v227
    %v1258 = vmul.f32 %v1206, %v228
    %v1259 = vmul.f32 %v1206, %v229
    %v1260 = vmul.f32 %v1206, %v230
    %v1261 = vmul.f32 %v1206, %v231
    %v1262 = vmul.f32 %v1206, %v232
    %v1263 = vmul.f32 %v1206, %v233
    %v1264 = vmul.f32 %v1206, %v234
    %v1265 = vmul.f32 %v1206, %v235
    %v1266 = vmul.f32 %v1206, %v236
    %v1267 = vmul.f32 %v1206, %v237
    %v1268 = vmul.f32 %v1206, %v238
    %v1269 = vmul.f32 %v1206, %v239
    %v1270 = vmul.f32 %v1206, %v240
    %v1271 = vmul.f32 %v1206, %v241
    %v1272 = vmul.f32 %v1206, %v242
    %v1273 = vmul.f32 %v1206, %v243
    %v1274 = vmul.f32 %v1206, %v244
    %v1275 = vmul.f32 %v1206, %v245
    %v1276 = vmul.f32 %v1206, %v246
    %v1277 = vmul.f32 %v1206, %v247
    %v1278 = vmul.f32 %v1206, %v248
    %v1279 = vmul.f32 %v1206, %v249
    %v1280 = vmul.f32 %v1206, %v250
    %v1281 = vmul.f32 %v1206, %v251
    %v1282 = vmul.f32 %v1206, %v252
    %v1283 = vmul.f32 %v1206, %v253
    %v1284 = vmul.f32 %v1206, %v254
    %v1285 = vmul.f32 %v1206, %v255
    %v1286 = vmul.f32 %v1206, %v256
    %v1287 = vmul.f32 %v1206, %v257
    %v1288 = vmul.f32 %v1206, %v258
    %v1289 = vmul.f32 %v1206, %v259
    %v1290 = vmul.f32 %v1206, %v260
    %v1291 = vmul.f32 %v1206, %v261
    %v1292 = vmul.f32 %v1206, %v262
    %v1293 = vmul.f32 %v1206, %v263
    %v1294 = vmul.f32 %v1206, %v264
    %v1295 = vmul.f32 %v1206, %v265
    %v1296 = vmul.f32 %v1206, %v266
    %v1297 = vmul.f32 %v1206, %v267
    %v1298 = vmul.f32 %v1206, %v268
    %v1299 = vmul.f32 %v1206, %v269
    %v1300 = vmul.f32 %v1206, %v270
    %v1301 = vmul.f32 %v1206, %v271
    %v1302 = vmul.f32 %v1206, %v272
    %v1303 = vmul.f32 %v1206, %v273
    %v1304 = vmul.f32 %v1206, %v274
    %v1305 = vmul.f32 %v1206, %v275
    %v1306 = vmul.f32 %v1206, %v276
    %v1307 = vmul.f32 %v1206, %v277
    %v1308 = vadd.f32 %v1103, %v1208
    %v1309 = vadd.f32 %v1104, %v1209
    %v1310 = vadd.f32 %v1105, %v1210
    %v1311 = vadd.f32 %v1106, %v1211
    %v1312 = vadd.f32 %v1107, %v1212
    %v1313 = vadd.f32 %v1108, %v1213
    %v1314 = vadd.f32 %v1109, %v1214
    %v1315 = vadd.f32 %v1110, %v1215
    %v1316 = vadd.f32 %v1111, %v1216
    %v1317 = vadd.f32 %v1112, %v1217
    %v1318 = vadd.f32 %v1113, %v1218
    %v1319 = vadd.f32 %v1114, %v1219
    %v1320 = vadd.f32 %v1115, %v1220
    %v1321 = vadd.f32 %v1116, %v1221
    %v1322 = vadd.f32 %v1117, %v1222
    %v1323 = vadd.f32 %v1118, %v1223
    %v1324 = vadd.f32 %v1119, %v1224
    %v1325 = vadd.f32 %v1120, %v1225
    %v1326 = vadd.f32 %v1121, %v1226
    %v1327 = vadd.f32 %v1122, %v1227
    %v1328 = vadd.f32 %v1123, %v1228
    %v1329 = vadd.f32 %v1124, %v1229
    %v1330 = vadd.f32 %v1125, %v1230
    %v1331 = vadd.f32 %v1126, %v1231
    %v1332 = vadd.f32 %v1127, %v1232
    %v1333 = vadd.f32 %v1128, %v1233
    %v1334 = vadd.f32 %v1129, %v1234
    %v1335 = vadd.f32 %v1130, %v1235
    %v1336 = vadd.f32 %v1131, %v1236
    %v1337 = vadd.f32 %v1132, %v1237
    %v1338 = vadd.f32 %v1133, %v1238
    %v1339 = vadd.f32 %v1134, %v1239
    %v1340 = vadd.f32 %v1135, %v1240
    %v1341 = vadd.f32 %v1136, %v1241
    %v1342 = vadd.f32 %v1137, %v1242
    %v1343 = vadd.f32 %v1138, %v1243
    %v1344 = vadd.f32 %v1139, %v1244
    %v1345 = vadd.f32 %v1140, %v1245
    %v1346 = vadd.f32 %v1141, %v1246
    %v1347 = vadd.f32 %v1142, %v1247
    %v1348 = vadd.f32 %v1143, %v1248
    %v1349 = vadd.f32 %v1144, %v1249
    %v1350 = vadd.f32 %v1145, %v1250
    %v1351 = vadd.f32 %v1146, %v1251
    %v1352 = vadd.f32 %v1147, %v1252
    %v1353 = vadd.f32 %v1148, %v1253
    %v1354 = vadd.f32 %v1149, %v1254
    %v1355 = vadd.f32 %v1150, %v1255
    %v1356 = vadd.f32 %v1151, %v1256
    %v1357 = vadd.f32 %v1152, %v1257
    %v1358 = vadd.f32 %v1153, %v1258
    %v1359 = vadd.f32 %v1154, %v1259
    %v1360 = vadd.f32 %v1155, %v1260
    %v1361 = vadd.f32 %v1156, %v1261
    %v1362 = vadd.f32 %v1157, %v1262
    %v1363 = vadd.f32 %v1158, %v1263
    %v1364 = vadd.f32 %v1159, %v1264
    %v1365 = vadd.f32 %v1160, %v1265
    %v1366 = vadd.f32 %v1161, %v1266
    %v1367 = vadd.f32 %v1162, %v1267
    %v1368 = vadd.f32 %v1163, %v1268
    %v1369 = vadd.f32 %v1164, %v1269
    %v1370 = vadd.f32 %v1165, %v1270
    %v1371 = vadd.f32 %v1166, %v1271
    %v1372 = vadd.f32 %v1167, %v1272
    %v1373 = vadd.f32 %v1168, %v1273
    %v1374 = vadd.f32 %v1169, %v1274
    %v1375 = vadd.f32 %v1170, %v1275
    %v1376 = vadd.f32 %v1171, %v1276
    %v1377 = vadd.f32 %v1172, %v1277
    %v1378 = vadd.f32 %v1173, %v1278
    %v1379 = vadd.f32 %v1174, %v1279
    %v1380 = vadd.f32 %v1175, %v1280
    %v1381 = vadd.f32 %v1176, %v1281
    %v1382 = vadd.f32 %v1177, %v1282
    %v1383 = vadd.f32 %v1178, %v1283
    %v1384 = vadd.f32 %v1179, %v1284
    %v1385 = vadd.f32 %v1180, %v1285
    %v1386 = vadd.f32 %v1181, %v1286
    %v1387 = vadd.f32 %v1182, %v1287
    %v1388 = vadd.f32 %v1183, %v1288
    %v1389 = vadd.f32 %v1184, %v1289
    %v1390 = vadd.f32 %v1185, %v1290
    %v1391 = vadd.f32 %v1186, %v1291
    %v1392 = vadd.f32 %v1187, %v1292
    %v1393 = vadd.f32 %v1188, %v1293
    %v1394 = vadd.f32 %v1189, %v1294
    %v1395 = vadd.f32 %v1190, %v1295
    %v1396 = vadd.f32 %v1191, %v1296
    %v1397 = vadd.f32 %v1192, %v1297
    %v1398 = vadd.f32 %v1193, %v1298
    %v1399 = vadd.f32 %v1194, %v1299
    %v1400 = vadd.f32 %v1195, %v1300
    %v1401 = vadd.f32 %v1196, %v1301
    %v1402 = vadd.f32 %v1197, %v1302
    %v1403 = vadd.f32 %v1198, %v1303
    %v1404 = vadd.f32 %v1199, %v1304
    %v1405 = vadd.f32 %v1200, %v1305
    %v1406 = vadd.f32 %v1201, %v1306
    %v1407 = vadd.f32 %v1202, %v1307
    %v1408 = vmax.f32 %v1308, 0.0
    %v1409 = vmax.f32 %v1309, 0.0
    %v1410 = vmax.f32 %v1310, 0.0
    %v1411 = vmax.f32 %v1311, 0.0
    %v1412 = vmax.f32 %v1312, 0.0
    %v1413 = vmax.f32 %v1313, 0.0
    %v1414 = vmax.f32 %v1314, 0.0
    %v1415 = vmax.f32 %v1315, 0.0
    %v1416 = vmax.f32 %v1316, 0.0
    %v1417 = vmax.f32 %v1317, 0.0
    %v1418 = vmax.f32 %v1318, 0.0
    %v1419 = vmax.f32 %v1319, 0.0
    %v1420 = vmax.f32 %v1320, 0.0
    %v1421 = vmax.f32 %v1321, 0.0
    %v1422 = vmax.f32 %v1322, 0.0
    %v1423 = vmax.f32 %v1323, 0.0
    %v1424 = vmax.f32 %v1324, 0.0
    %v1425 = vmax.f32 %v1325, 0.0
    %v1426 = vmax.f32 %v1326, 0.0
    %v1427 = vmax.f32 %v1327, 0.0
    %v1428 = vmax.f32 %v1328, 0.0
    %v1429 = vmax.f32 %v1329, 0.0
    %v1430 = vmax.f32 %v1330, 0.0
    %v1431 = vmax.f32 %v1331, 0.0
    %v1432 = vmax.f32 %v1332, 0.0
    %v1433 = vmax.f32 %v1333, 0.0
    %v1434 = vmax.f32 %v1334, 0.0
    %v1435 = vmax.f32 %v1335, 0.0
    %v1436 = vmax.f32 %v1336, 0.0
    %v1437 = vmax.f32 %v1337, 0.0
    %v1438 = vmax.f32 %v1338, 0.0
    %v1439 = vmax.f32 %v1339, 0.0
    %v1440 = vmax.f32 %v1340, 0.0
    %v1441 = vmax.f32 %v1341, 0.0
    %v1442 = vmax.f32 %v1342, 0.0
    %v1443 = vmax.f32 %v1343, 0.0
    %v1444 = vmax.f32 %v1344, 0.0
    %v1445 = vmax.f32 %v1345, 0.0
    %v1446 = vmax.f32 %v1346, 0.0
    %v1447 = vmax.f32 %v1347, 0.0
    %v1448 = vmax.f32 %v1348, 0.0
    %v1449 = vmax.f32 %v1349, 0.0
    %v1450 = vmax.f32 %v1350, 0.0
    %v1451 = vmax.f32 %v1351, 0.0
    %v1452 = vmax.f32 %v1352, 0.0
    %v1453 = vmax.f32 %v1353, 0.0
    %v1454 = vmax.f32 %v1354, 0.0
    %v1455 = vmax.f32 %v1355, 0.0
    %v1456 = vmax.f32 %v1356, 0.0
    %v1457 = vmax.f32 %v1357, 0.0
    %v1458 = vmax.f32 %v1358, 0.0
    %v1459 = vmax.f32 %v1359, 0.0
    %v1460 = vmax.f32 %v1360, 0.0
    %v1461 = vmax.f32 %v1361, 0.0
    %v1462 = vmax.f32 %v1362, 0.0
    %v1463 = vmax.f32 %v1363, 0.0
    %v1464 = vmax.f32 %v1364, 0.0
    %v1465 = vmax.f32 %v1365, 0.0
    %v1466 = vmax.f32 %v1366, 0.0
    %v1467 = vmax.f32 %v1367, 0.0
    %v1468 = vmax.f32 %v1368, 0.0
    %v1469 = vmax.f32 %v1369, 0.0
    %v1470 = vmax.f32 %v1370, 0.0
    %v1471 = vmax.f32 %v1371, 0.0
    %v1472 = vmax.f32 %v1372, 0.0
    %v1473 = vmax.f32 %v1373, 0.0
    %v1474 = vmax.f32 %v1374, 0.0
    %v1475 = vmax.f32 %v1375, 0.0
    %v1476 = vmax.f32 %v1376, 0.0
    %v1477 = vmax.f32 %v1377, 0.0
    %v1478 = vmax.f32 %v1378, 0.0
    %v1479 = vmax.f32 %v1379, 0.0
    %v1480 = vmax.f32 %v1380, 0.0
    %v1481 = vmax.f32 %v1381, 0.0
    %v1482 = vmax.f32 %v1382, 0.0
    %v1483 = vmax.f32 %v1383, 0.0
    %v1484 = vmax.f32 %v1384, 0.0
    %v1485 = vmax.f32 %v1385, 0.0
    %v1486 = vmax.f32 %v1386, 0.0
    %v1487 = vmax.f32 %v1387, 0.0
    %v1488 = vmax.f32 %v1388, 0.0
    %v1489 = vmax.f32 %v1389, 0.0
    %v1490 = vmax.f32 %v1390, 0.0
    %v1491 = vmax.f32 %v1391, 0.0
    %v1492 = vmax.f32 %v1392, 0.0
    %v1493 = vmax.f32 %v1393, 0.0
    %v1494 = vmax.f32 %v1394, 0.0
    %v1495 = vmax.f32 %v1395, 0.0
    %v1496 = vmax.f32 %v1396, 0.0
    %v1497 = vmax.f32 %v1397, 0.0
    %v1498 = vmax.f32 %v1398, 0.0
    %v1499 = vmax.f32 %v1399, 0.0
    %v1500 = vmax.f32 %v1400, 0.0
    %v1501 = vmax.f32 %v1401, 0.0
    %v1502 = vmax.f32 %v1402, 0.0
    %v1503 = vmax.f32 %v1403, 0.0
    %v1504 = vmax.f32 %v1404, 0.0
    %v1505 = vmax.f32 %v1405, 0.0
    %v1506 = vmax.f32 %v1406, 0.0
    %v1507 = vmax.f32 %v1407, 0.0
    %v1508 = vld [vmem:[#allocation7 + $0x3] sm:$0x1]
    %s1510 = vtos %v1508
    %v1511 = vstv %s1510
    %v1513 = vmul.f32 %v78, %v1511
    %v1514 = vmul.f32 %v79, %v1511
    %v1515 = vmul.f32 %v80, %v1511
    %v1516 = vmul.f32 %v81, %v1511
    %v1517 = vmul.f32 %v82, %v1511
    %v1518 = vmul.f32 %v83, %v1511
    %v1519 = vmul.f32 %v84, %v1511
    %v1520 = vmul.f32 %v85, %v1511
    %v1521 = vmul.f32 %v86, %v1511
    %v1522 = vmul.f32 %v87, %v1511
    %v1523 = vmul.f32 %v88, %v1511
    %v1524 = vmul.f32 %v89, %v1511
    %v1525 = vmul.f32 %v90, %v1511
    %v1526 = vmul.f32 %v91, %v1511
    %v1527 = vmul.f32 %v92, %v1511
    %v1528 = vmul.f32 %v93, %v1511
    %v1529 = vmul.f32 %v94, %v1511
    %v1530 = vmul.f32 %v95, %v1511
    %v1531 = vmul.f32 %v96, %v1511
    %v1532 = vmul.f32 %v97, %v1511
    %v1533 = vmul.f32 %v98, %v1511
    %v1534 = vmul.f32 %v99, %v1511
    %v1535 = vmul.f32 %v100, %v1511
    %v1536 = vmul.f32 %v101, %v1511
    %v1537 = vmul.f32 %v102, %v1511
    %v1538 = vmul.f32 %v103, %v1511
    %v1539 = vmul.f32 %v104, %v1511
    %v1540 = vmul.f32 %v105, %v1511
    %v1541 = vmul.f32 %v106, %v1511
    %v1542 = vmul.f32 %v107, %v1511
    %v1543 = vmul.f32 %v108, %v1511
    %v1544 = vmul.f32 %v109, %v1511
    %v1545 = vmul.f32 %v110, %v1511
    %v1546 = vmul.f32 %v111, %v1511
    %v1547 = vmul.f32 %v112, %v1511
    %v1548 = vmul.f32 %v113, %v1511
    %v1549 = vmul.f32 %v114, %v1511
    %v1550 = vmul.f32 %v115, %v1511
    %v1551 = vmul.f32 %v116, %v1511
    %v1552 = vmul.f32 %v117, %v1511
    %v1553 = vmul.f32 %v118, %v1511
    %v1554 = vmul.f32 %v119, %v1511
    %v1555 = vmul.f32 %v120, %v1511
    %v1556 = vmul.f32 %v121, %v1511
    %v1557 = vmul.f32 %v122, %v1511
    %v1558 = vmul.f32 %v123, %v1511
    %v1559 = vmul.f32 %v124, %v1511
    %v1560 = vmul.f32 %v125, %v1511
    %v1561 = vmul.f32 %v126, %v1511
    %v1562 = vmul.f32 %v127, %v1511
    %v1563 = vmul.f32 %v128, %v1511
    %v1564 = vmul.f32 %v129, %v1511
    %v1565 = vmul.f32 %v130, %v1511
    %v1566 = vmul.f32 %v131, %v1511
    %v1567 = vmul.f32 %v132, %v1511
    %v1568 = vmul.f32 %v133, %v1511
    %v1569 = vmul.f32 %v134, %v1511
    %v1570 = vmul.f32 %v135, %v1511
    %v1571 = vmul.f32 %v136, %v1511
    %v1572 = vmul.f32 %v137, %v1511
    %v1573 = vmul.f32 %v138, %v1511
    %v1574 = vmul.f32 %v139, %v1511
    %v1575 = vmul.f32 %v140, %v1511
    %v1576 = vmul.f32 %v141, %v1511
    %v1577 = vmul.f32 %v142, %v1511
    %v1578 = vmul.f32 %v143, %v1511
    %v1579 = vmul.f32 %v144, %v1511
    %v1580 = vmul.f32 %v145, %v1511
    %v1581 = vmul.f32 %v146, %v1511
    %v1582 = vmul.f32 %v147, %v1511
    %v1583 = vmul.f32 %v148, %v1511
    %v1584 = vmul.f32 %v149, %v1511
    %v1585 = vmul.f32 %v150, %v1511
    %v1586 = vmul.f32 %v151, %v1511
    %v1587 = vmul.f32 %v152, %v1511
    %v1588 = vmul.f32 %v153, %v1511
    %v1589 = vmul.f32 %v154, %v1511
    %v1590 = vmul.f32 %v155, %v1511
    %v1591 = vmul.f32 %v156, %v1511
    %v1592 = vmul.f32 %v157, %v1511
    %v1593 = vmul.f32 %v158, %v1511
    %v1594 = vmul.f32 %v159, %v1511
    %v1595 = vmul.f32 %v160, %v1511
    %v1596 = vmul.f32 %v161, %v1511
    %v1597 = vmul.f32 %v162, %v1511
    %v1598 = vmul.f32 %v163, %v1511
    %v1599 = vmul.f32 %v164, %v1511
    %v1600 = vmul.f32 %v165, %v1511
    %v1601 = vmul.f32 %v166, %v1511
    %v1602 = vmul.f32 %v167, %v1511
    %v1603 = vmul.f32 %v168, %v1511
    %v1604 = vmul.f32 %v169, %v1511
    %v1605 = vmul.f32 %v170, %v1511
    %v1606 = vmul.f32 %v171, %v1511
    %v1607 = vmul.f32 %v172, %v1511
    %v1608 = vmul.f32 %v173, %v1511
    %v1609 = vmul.f32 %v174, %v1511
    %v1610 = vmul.f32 %v175, %v1511
    %v1611 = vmul.f32 %v176, %v1511
    %v1612 = vmul.f32 %v177, %v1511
    %1613 = vrot.lane.b32.xlu0 %v1508, 127
    %v1614 = vpop.permute.xlu0 %1613
    %s1615 = vtos %v1614
    %v1616 = vstv %s1615
    %v1618 = vmul.f32 %v1616, %v178
    %v1619 = vmul.f32 %v1616, %v179
    %v1620 = vmul.f32 %v1616, %v180
    %v1621 = vmul.f32 %v1616, %v181
    %v1622 = vmul.f32 %v1616, %v182
    %v1623 = vmul.f32 %v1616, %v183
    %v1624 = vmul.f32 %v1616, %v184
    %v1625 = vmul.f32 %v1616, %v185
    %v1626 = vmul.f32 %v1616, %v186
    %v1627 = vmul.f32 %v1616, %v187
    %v1628 = vmul.f32 %v1616, %v188
    %v1629 = vmul.f32 %v1616, %v189
    %v1630 = vmul.f32 %v1616, %v190
    %v1631 = vmul.f32 %v1616, %v191
    %v1632 = vmul.f32 %v1616, %v192
    %v1633 = vmul.f32 %v1616, %v193
    %v1634 = vmul.f32 %v1616, %v194
    %v1635 = vmul.f32 %v1616, %v195
    %v1636 = vmul.f32 %v1616, %v196
    %v1637 = vmul.f32 %v1616, %v197
    %v1638 = vmul.f32 %v1616, %v198
    %v1639 = vmul.f32 %v1616, %v199
    %v1640 = vmul.f32 %v1616, %v200
    %v1641 = vmul.f32 %v1616, %v201
    %v1642 = vmul.f32 %v1616, %v202
    %v1643 = vmul.f32 %v1616, %v203
    %v1644 = vmul.f32 %v1616, %v204
    %v1645 = vmul.f32 %v1616, %v205
    %v1646 = vmul.f32 %v1616, %v206
    %v1647 = vmul.f32 %v1616, %v207
    %v1648 = vmul.f32 %v1616, %v208
    %v1649 = vmul.f32 %v1616, %v209
    %v1650 = vmul.f32 %v1616, %v210
    %v1651 = vmul.f32 %v1616, %v211
    %v1652 = vmul.f32 %v1616, %v212
    %v1653 = vmul.f32 %v1616, %v213
    %v1654 = vmul.f32 %v1616, %v214
    %v1655 = vmul.f32 %v1616, %v215
    %v1656 = vmul.f32 %v1616, %v216
    %v1657 = vmul.f32 %v1616, %v217
    %v1658 = vmul.f32 %v1616, %v218
    %v1659 = vmul.f32 %v1616, %v219
    %v1660 = vmul.f32 %v1616, %v220
    %v1661 = vmul.f32 %v1616, %v221
    %v1662 = vmul.f32 %v1616, %v222
    %v1663 = vmul.f32 %v1616, %v223
    %v1664 = vmul.f32 %v1616, %v224
    %v1665 = vmul.f32 %v1616, %v225
    %v1666 = vmul.f32 %v1616, %v226
    %v1667 = vmul.f32 %v1616, %v227
    %v1668 = vmul.f32 %v1616, %v228
    %v1669 = vmul.f32 %v1616, %v229
    %v1670 = vmul.f32 %v1616, %v230
    %v1671 = vmul.f32 %v1616, %v231
    %v1672 = vmul.f32 %v1616, %v232
    %v1673 = vmul.f32 %v1616, %v233
    %v1674 = vmul.f32 %v1616, %v234
    %v1675 = vmul.f32 %v1616, %v235
    %v1676 = vmul.f32 %v1616, %v236
    %v1677 = vmul.f32 %v1616, %v237
    %v1678 = vmul.f32 %v1616, %v238
    %v1679 = vmul.f32 %v1616, %v239
    %v1680 = vmul.f32 %v1616, %v240
    %v1681 = vmul.f32 %v1616, %v241
    %v1682 = vmul.f32 %v1616, %v242
    %v1683 = vmul.f32 %v1616, %v243
    %v1684 = vmul.f32 %v1616, %v244
    %v1685 = vmul.f32 %v1616, %v245
    %v1686 = vmul.f32 %v1616, %v246
    %v1687 = vmul.f32 %v1616, %v247
    %v1688 = vmul.f32 %v1616, %v248
    %v1689 = vmul.f32 %v1616, %v249
    %v1690 = vmul.f32 %v1616, %v250
    %v1691 = vmul.f32 %v1616, %v251
    %v1692 = vmul.f32 %v1616, %v252
    %v1693 = vmul.f32 %v1616, %v253
    %v1694 = vmul.f32 %v1616, %v254
    %v1695 = vmul.f32 %v1616, %v255
    %v1696 = vmul.f32 %v1616, %v256
    %v1697 = vmul.f32 %v1616, %v257
    %v1698 = vmul.f32 %v1616, %v258
    %v1699 = vmul.f32 %v1616, %v259
    %v1700 = vmul.f32 %v1616, %v260
    %v1701 = vmul.f32 %v1616, %v261
    %v1702 = vmul.f32 %v1616, %v262
    %v1703 = vmul.f32 %v1616, %v263
    %v1704 = vmul.f32 %v1616, %v264
    %v1705 = vmul.f32 %v1616, %v265
    %v1706 = vmul.f32 %v1616, %v266
    %v1707 = vmul.f32 %v1616, %v267
    %v1708 = vmul.f32 %v1616, %v268
    %v1709 = vmul.f32 %v1616, %v269
    %v1710 = vmul.f32 %v1616, %v270
    %v1711 = vmul.f32 %v1616, %v271
    %v1712 = vmul.f32 %v1616, %v272
    %v1713 = vmul.f32 %v1616, %v273
    %v1714 = vmul.f32 %v1616, %v274
    %v1715 = vmul.f32 %v1616, %v275
    %v1716 = vmul.f32 %v1616, %v276
    %v1717 = vmul.f32 %v1616, %v277
    %v1718 = vadd.f32 %v1513, %v1618
    %v1719 = vadd.f32 %v1514, %v1619
    %v1720 = vadd.f32 %v1515, %v1620
    %v1721 = vadd.f32 %v1516, %v1621
    %v1722 = vadd.f32 %v1517, %v1622
    %v1723 = vadd.f32 %v1518, %v1623
    %v1724 = vadd.f32 %v1519, %v1624
    %v1725 = vadd.f32 %v1520, %v1625
    %v1726 = vadd.f32 %v1521, %v1626
    %v1727 = vadd.f32 %v1522, %v1627
    %v1728 = vadd.f32 %v1523, %v1628
    %v1729 = vadd.f32 %v1524, %v1629
    %v1730 = vadd.f32 %v1525, %v1630
    %v1731 = vadd.f32 %v1526, %v1631
    %v1732 = vadd.f32 %v1527, %v1632
    %v1733 = vadd.f32 %v1528, %v1633
    %v1734 = vadd.f32 %v1529, %v1634
    %v1735 = vadd.f32 %v1530, %v1635
    %v1736 = vadd.f32 %v1531, %v1636
    %v1737 = vadd.f32 %v1532, %v1637
    %v1738 = vadd.f32 %v1533, %v1638
    %v1739 = vadd.f32 %v1534, %v1639
    %v1740 = vadd.f32 %v1535, %v1640
    %v1741 = vadd.f32 %v1536, %v1641
    %v1742 = vadd.f32 %v1537, %v1642
    %v1743 = vadd.f32 %v1538, %v1643
    %v1744 = vadd.f32 %v1539, %v1644
    %v1745 = vadd.f32 %v1540, %v1645
    %v1746 = vadd.f32 %v1541, %v1646
    %v1747 = vadd.f32 %v1542, %v1647
    %v1748 = vadd.f32 %v1543, %v1648
    %v1749 = vadd.f32 %v1544, %v1649
    %v1750 = vadd.f32 %v1545, %v1650
    %v1751 = vadd.f32 %v1546, %v1651
    %v1752 = vadd.f32 %v1547, %v1652
    %v1753 = vadd.f32 %v1548, %v1653
    %v1754 = vadd.f32 %v1549, %v1654
    %v1755 = vadd.f32 %v1550, %v1655
    %v1756 = vadd.f32 %v1551, %v1656
    %v1757 = vadd.f32 %v1552, %v1657
    %v1758 = vadd.f32 %v1553, %v1658
    %v1759 = vadd.f32 %v1554, %v1659
    %v1760 = vadd.f32 %v1555, %v1660
    %v1761 = vadd.f32 %v1556, %v1661
    %v1762 = vadd.f32 %v1557, %v1662
    %v1763 = vadd.f32 %v1558, %v1663
    %v1764 = vadd.f32 %v1559, %v1664
    %v1765 = vadd.f32 %v1560, %v1665
    %v1766 = vadd.f32 %v1561, %v1666
    %v1767 = vadd.f32 %v1562, %v1667
    %v1768 = vadd.f32 %v1563, %v1668
    %v1769 = vadd.f32 %v1564, %v1669
    %v1770 = vadd.f32 %v1565, %v1670
    %v1771 = vadd.f32 %v1566, %v1671
    %v1772 = vadd.f32 %v1567, %v1672
    %v1773 = vadd.f32 %v1568, %v1673
    %v1774 = vadd.f32 %v1569, %v1674
    %v1775 = vadd.f32 %v1570, %v1675
    %v1776 = vadd.f32 %v1571, %v1676
    %v1777 = vadd.f32 %v1572, %v1677
    %v1778 = vadd.f32 %v1573, %v1678
    %v1779 = vadd.f32 %v1574, %v1679
    %v1780 = vadd.f32 %v1575, %v1680
    %v1781 = vadd.f32 %v1576, %v1681
    %v1782 = vadd.f32 %v1577, %v1682
    %v1783 = vadd.f32 %v1578, %v1683
    %v1784 = vadd.f32 %v1579, %v1684
    %v1785 = vadd.f32 %v1580, %v1685
    %v1786 = vadd.f32 %v1581, %v1686
    %v1787 = vadd.f32 %v1582, %v1687
    %v1788 = vadd.f32 %v1583, %v1688
    %v1789 = vadd.f32 %v1584, %v1689
    %v1790 = vadd.f32 %v1585, %v1690
    %v1791 = vadd.f32 %v1586, %v1691
    %v1792 = vadd.f32 %v1587, %v1692
    %v1793 = vadd.f32 %v1588, %v1693
    %v1794 = vadd.f32 %v1589, %v1694
    %v1795 = vadd.f32 %v1590, %v1695
    %v1796 = vadd.f32 %v1591, %v1696
    %v1797 = vadd.f32 %v1592, %v1697
    %v1798 = vadd.f32 %v1593, %v1698
    %v1799 = vadd.f32 %v1594, %v1699
    %v1800 = vadd.f32 %v1595, %v1700
    %v1801 = vadd.f32 %v1596, %v1701
    %v1802 = vadd.f32 %v1597, %v1702
    %v1803 = vadd.f32 %v1598, %v1703
    %v1804 = vadd.f32 %v1599, %v1704
    %v1805 = vadd.f32 %v1600, %v1705
    %v1806 = vadd.f32 %v1601, %v1706
    %v1807 = vadd.f32 %v1602, %v1707
    %v1808 = vadd.f32 %v1603, %v1708
    %v1809 = vadd.f32 %v1604, %v1709
    %v1810 = vadd.f32 %v1605, %v1710
    %v1811 = vadd.f32 %v1606, %v1711
    %v1812 = vadd.f32 %v1607, %v1712
    %v1813 = vadd.f32 %v1608, %v1713
    %v1814 = vadd.f32 %v1609, %v1714
    %v1815 = vadd.f32 %v1610, %v1715
    %v1816 = vadd.f32 %v1611, %v1716
    %v1817 = vadd.f32 %v1612, %v1717
    %v1818 = vmax.f32 %v1718, 0.0
    %v1819 = vmax.f32 %v1719, 0.0
    %v1820 = vmax.f32 %v1720, 0.0
    %v1821 = vmax.f32 %v1721, 0.0
    %v1822 = vmax.f32 %v1722, 0.0
    %v1823 = vmax.f32 %v1723, 0.0
    %v1824 = vmax.f32 %v1724, 0.0
    %v1825 = vmax.f32 %v1725, 0.0
    %v1826 = vmax.f32 %v1726, 0.0
    %v1827 = vmax.f32 %v1727, 0.0
    %v1828 = vmax.f32 %v1728, 0.0
    %v1829 = vmax.f32 %v1729, 0.0
    %v1830 = vmax.f32 %v1730, 0.0
    %v1831 = vmax.f32 %v1731, 0.0
    %v1832 = vmax.f32 %v1732, 0.0
    %v1833 = vmax.f32 %v1733, 0.0
    %v1834 = vmax.f32 %v1734, 0.0
    %v1835 = vmax.f32 %v1735, 0.0
    %v1836 = vmax.f32 %v1736, 0.0
    %v1837 = vmax.f32 %v1737, 0.0
    %v1838 = vmax.f32 %v1738, 0.0
    %v1839 = vmax.f32 %v1739, 0.0
    %v1840 = vmax.f32 %v1740, 0.0
    %v1841 = vmax.f32 %v1741, 0.0
    %v1842 = vmax.f32 %v1742, 0.0
    %v1843 = vmax.f32 %v1743, 0.0
    %v1844 = vmax.f32 %v1744, 0.0
    %v1845 = vmax.f32 %v1745, 0.0
    %v1846 = vmax.f32 %v1746, 0.0
    %v1847 = vmax.f32 %v1747, 0.0
    %v1848 = vmax.f32 %v1748, 0.0
    %v1849 = vmax.f32 %v1749, 0.0
    %v1850 = vmax.f32 %v1750, 0.0
    %v1851 = vmax.f32 %v1751, 0.0
    %v1852 = vmax.f32 %v1752, 0.0
    %v1853 = vmax.f32 %v1753, 0.0
    %v1854 = vmax.f32 %v1754, 0.0
    %v1855 = vmax.f32 %v1755, 0.0
    %v1856 = vmax.f32 %v1756, 0.0
    %v1857 = vmax.f32 %v1757, 0.0
    %v1858 = vmax.f32 %v1758, 0.0
    %v1859 = vmax.f32 %v1759, 0.0
    %v1860 = vmax.f32 %v1760, 0.0
    %v1861 = vmax.f32 %v1761, 0.0
    %v1862 = vmax.f32 %v1762, 0.0
    %v1863 = vmax.f32 %v1763, 0.0
    %v1864 = vmax.f32 %v1764, 0.0
    %v1865 = vmax.f32 %v1765, 0.0
    %v1866 = vmax.f32 %v1766, 0.0
    %v1867 = vmax.f32 %v1767, 0.0
    %v1868 = vmax.f32 %v1768, 0.0
    %v1869 = vmax.f32 %v1769, 0.0
    %v1870 = vmax.f32 %v1770, 0.0
    %v1871 = vmax.f32 %v1771, 0.0
    %v1872 = vmax.f32 %v1772, 0.0
    %v1873 = vmax.f32 %v1773, 0.0
    %v1874 = vmax.f32 %v1774, 0.0
    %v1875 = vmax.f32 %v1775, 0.0
    %v1876 = vmax.f32 %v1776, 0.0
    %v1877 = vmax.f32 %v1777, 0.0
    %v1878 = vmax.f32 %v1778, 0.0
    %v1879 = vmax.f32 %v1779, 0.0
    %v1880 = vmax.f32 %v1780, 0.0
    %v1881 = vmax.f32 %v1781, 0.0
    %v1882 = vmax.f32 %v1782, 0.0
    %v1883 = vmax.f32 %v1783, 0.0
    %v1884 = vmax.f32 %v1784, 0.0
    %v1885 = vmax.f32 %v1785, 0.0
    %v1886 = vmax.f32 %v1786, 0.0
    %v1887 = vmax.f32 %v1787, 0.0
    %v1888 = vmax.f32 %v1788, 0.0
    %v1889 = vmax.f32 %v1789, 0.0
    %v1890 = vmax.f32 %v1790, 0.0
    %v1891 = vmax.f32 %v1791, 0.0
    %v1892 = vmax.f32 %v1792, 0.0
    %v1893 = vmax.f32 %v1793, 0.0
    %v1894 = vmax.f32 %v1794, 0.0
    %v1895 = vmax.f32 %v1795, 0.0
    %v1896 = vmax.f32 %v1796, 0.0
    %v1897 = vmax.f32 %v1797, 0.0
    %v1898 = vmax.f32 %v1798, 0.0
    %v1899 = vmax.f32 %v1799, 0.0
    %v1900 = vmax.f32 %v1800, 0.0
    %v1901 = vmax.f32 %v1801, 0.0
    %v1902 = vmax.f32 %v1802, 0.0
    %v1903 = vmax.f32 %v1803, 0.0
    %v1904 = vmax.f32 %v1804, 0.0
    %v1905 = vmax.f32 %v1805, 0.0
    %v1906 = vmax.f32 %v1806, 0.0
    %v1907 = vmax.f32 %v1807, 0.0
    %v1908 = vmax.f32 %v1808, 0.0
    %v1909 = vmax.f32 %v1809, 0.0
    %v1910 = vmax.f32 %v1810, 0.0
    %v1911 = vmax.f32 %v1811, 0.0
    %v1912 = vmax.f32 %v1812, 0.0
    %v1913 = vmax.f32 %v1813, 0.0
    %v1914 = vmax.f32 %v1814, 0.0
    %v1915 = vmax.f32 %v1815, 0.0
    %v1916 = vmax.f32 %v1816, 0.0
    %v1917 = vmax.f32 %v1817, 0.0
    %v1918 = vld [vmem:[#allocation7 + $0x4] sm:$0x1]
    %s1920 = vtos %v1918
    %v1921 = vstv %s1920
    %v1923 = vmul.f32 %v78, %v1921
    %v1924 = vmul.f32 %v79, %v1921
    %v1925 = vmul.f32 %v80, %v1921
    %v1926 = vmul.f32 %v81, %v1921
    %v1927 = vmul.f32 %v82, %v1921
    %v1928 = vmul.f32 %v83, %v1921
    %v1929 = vmul.f32 %v84, %v1921
    %v1930 = vmul.f32 %v85, %v1921
    %v1931 = vmul.f32 %v86, %v1921
    %v1932 = vmul.f32 %v87, %v1921
    %v1933 = vmul.f32 %v88, %v1921
    %v1934 = vmul.f32 %v89, %v1921
    %v1935 = vmul.f32 %v90, %v1921
    %v1936 = vmul.f32 %v91, %v1921
    %v1937 = vmul.f32 %v92, %v1921
    %v1938 = vmul.f32 %v93, %v1921
    %v1939 = vmul.f32 %v94, %v1921
    %v1940 = vmul.f32 %v95, %v1921
    %v1941 = vmul.f32 %v96, %v1921
    %v1942 = vmul.f32 %v97, %v1921
    %v1943 = vmul.f32 %v98, %v1921
    %v1944 = vmul.f32 %v99, %v1921
    %v1945 = vmul.f32 %v100, %v1921
    %v1946 = vmul.f32 %v101, %v1921
    %v1947 = vmul.f32 %v102, %v1921
    %v1948 = vmul.f32 %v103, %v1921
    %v1949 = vmul.f32 %v104, %v1921
    %v1950 = vmul.f32 %v105, %v1921
    %v1951 = vmul.f32 %v106, %v1921
    %v1952 = vmul.f32 %v107, %v1921
    %v1953 = vmul.f32 %v108, %v1921
    %v1954 = vmul.f32 %v109, %v1921
    %v1955 = vmul.f32 %v110, %v1921
    %v1956 = vmul.f32 %v111, %v1921
    %v1957 = vmul.f32 %v112, %v1921
    %v1958 = vmul.f32 %v113, %v1921
    %v1959 = vmul.f32 %v114, %v1921
    %v1960 = vmul.f32 %v115, %v1921
    %v1961 = vmul.f32 %v116, %v1921
    %v1962 = vmul.f32 %v117, %v1921
    %v1963 = vmul.f32 %v118, %v1921
    %v1964 = vmul.f32 %v119, %v1921
    %v1965 = vmul.f32 %v120, %v1921
    %v1966 = vmul.f32 %v121, %v1921
    %v1967 = vmul.f32 %v122, %v1921
    %v1968 = vmul.f32 %v123, %v1921
    %v1969 = vmul.f32 %v124, %v1921
    %v1970 = vmul.f32 %v125, %v1921
    %v1971 = vmul.f32 %v126, %v1921
    %v1972 = vmul.f32 %v127, %v1921
    %v1973 = vmul.f32 %v128, %v1921
    %v1974 = vmul.f32 %v129, %v1921
    %v1975 = vmul.f32 %v130, %v1921
    %v1976 = vmul.f32 %v131, %v1921
    %v1977 = vmul.f32 %v132, %v1921
    %v1978 = vmul.f32 %v133, %v1921
    %v1979 = vmul.f32 %v134, %v1921
    %v1980 = vmul.f32 %v135, %v1921
    %v1981 = vmul.f32 %v136, %v1921
    %v1982 = vmul.f32 %v137, %v1921
    %v1983 = vmul.f32 %v138, %v1921
    %v1984 = vmul.f32 %v139, %v1921
    %v1985 = vmul.f32 %v140, %v1921
    %v1986 = vmul.f32 %v141, %v1921
    %v1987 = vmul.f32 %v142, %v1921
    %v1988 = vmul.f32 %v143, %v1921
    %v1989 = vmul.f32 %v144, %v1921
    %v1990 = vmul.f32 %v145, %v1921
    %v1991 = vmul.f32 %v146, %v1921
    %v1992 = vmul.f32 %v147, %v1921
    %v1993 = vmul.f32 %v148, %v1921
    %v1994 = vmul.f32 %v149, %v1921
    %v1995 = vmul.f32 %v150, %v1921
    %v1996 = vmul.f32 %v151, %v1921
    %v1997 = vmul.f32 %v152, %v1921
    %v1998 = vmul.f32 %v153, %v1921
    %v1999 = vmul.f32 %v154, %v1921
    %v2000 = vmul.f32 %v155, %v1921
    %v2001 = vmul.f32 %v156, %v1921
    %v2002 = vmul.f32 %v157, %v1921
    %v2003 = vmul.f32 %v158, %v1921
    %v2004 = vmul.f32 %v159, %v1921
    %v2005 = vmul.f32 %v160, %v1921
    %v2006 = vmul.f32 %v161, %v1921
    %v2007 = vmul.f32 %v162, %v1921
    %v2008 = vmul.f32 %v163, %v1921
    %v2009 = vmul.f32 %v164, %v1921
    %v2010 = vmul.f32 %v165, %v1921
    %v2011 = vmul.f32 %v166, %v1921
    %v2012 = vmul.f32 %v167, %v1921
    %v2013 = vmul.f32 %v168, %v1921
    %v2014 = vmul.f32 %v169, %v1921
    %v2015 = vmul.f32 %v170, %v1921
    %v2016 = vmul.f32 %v171, %v1921
    %v2017 = vmul.f32 %v172, %v1921
    %v2018 = vmul.f32 %v173, %v1921
    %v2019 = vmul.f32 %v174, %v1921
    %v2020 = vmul.f32 %v175, %v1921
    %v2021 = vmul.f32 %v176, %v1921
    %v2022 = vmul.f32 %v177, %v1921
    %2023 = vrot.lane.b32.xlu0 %v1918, 127
    %v2024 = vpop.permute.xlu0 %2023
    %s2025 = vtos %v2024
    %v2026 = vstv %s2025
    %v2028 = vmul.f32 %v2026, %v178
    %v2029 = vmul.f32 %v2026, %v179
    %v2030 = vmul.f32 %v2026, %v180
    %v2031 = vmul.f32 %v2026, %v181
    %v2032 = vmul.f32 %v2026, %v182
    %v2033 = vmul.f32 %v2026, %v183
    %v2034 = vmul.f32 %v2026, %v184
    %v2035 = vmul.f32 %v2026, %v185
    %v2036 = vmul.f32 %v2026, %v186
    %v2037 = vmul.f32 %v2026, %v187
    %v2038 = vmul.f32 %v2026, %v188
    %v2039 = vmul.f32 %v2026, %v189
    %v2040 = vmul.f32 %v2026, %v190
    %v2041 = vmul.f32 %v2026, %v191
    %v2042 = vmul.f32 %v2026, %v192
    %v2043 = vmul.f32 %v2026, %v193
    %v2044 = vmul.f32 %v2026, %v194
    %v2045 = vmul.f32 %v2026, %v195
    %v2046 = vmul.f32 %v2026, %v196
    %v2047 = vmul.f32 %v2026, %v197
    %v2048 = vmul.f32 %v2026, %v198
    %v2049 = vmul.f32 %v2026, %v199
    %v2050 = vmul.f32 %v2026, %v200
    %v2051 = vmul.f32 %v2026, %v201
    %v2052 = vmul.f32 %v2026, %v202
    %v2053 = vmul.f32 %v2026, %v203
    %v2054 = vmul.f32 %v2026, %v204
    %v2055 = vmul.f32 %v2026, %v205
    %v2056 = vmul.f32 %v2026, %v206
    %v2057 = vmul.f32 %v2026, %v207
    %v2058 = vmul.f32 %v2026, %v208
    %v2059 = vmul.f32 %v2026, %v209
    %v2060 = vmul.f32 %v2026, %v210
    %v2061 = vmul.f32 %v2026, %v211
    %v2062 = vmul.f32 %v2026, %v212
    %v2063 = vmul.f32 %v2026, %v213
    %v2064 = vmul.f32 %v2026, %v214
    %v2065 = vmul.f32 %v2026, %v215
    %v2066 = vmul.f32 %v2026, %v216
    %v2067 = vmul.f32 %v2026, %v217
    %v2068 = vmul.f32 %v2026, %v218
    %v2069 = vmul.f32 %v2026, %v219
    %v2070 = vmul.f32 %v2026, %v220
    %v2071 = vmul.f32 %v2026, %v221
    %v2072 = vmul.f32 %v2026, %v222
    %v2073 = vmul.f32 %v2026, %v223
    %v2074 = vmul.f32 %v2026, %v224
    %v2075 = vmul.f32 %v2026, %v225
    %v2076 = vmul.f32 %v2026, %v226
    %v2077 = vmul.f32 %v2026, %v227
    %v2078 = vmul.f32 %v2026, %v228
    %v2079 = vmul.f32 %v2026, %v229
    %v2080 = vmul.f32 %v2026, %v230
    %v2081 = vmul.f32 %v2026, %v231
    %v2082 = vmul.f32 %v2026, %v232
    %v2083 = vmul.f32 %v2026, %v233
    %v2084 = vmul.f32 %v2026, %v234
    %v2085 = vmul.f32 %v2026, %v235
    %v2086 = vmul.f32 %v2026, %v236
    %v2087 = vmul.f32 %v2026, %v237
    %v2088 = vmul.f32 %v2026, %v238
    %v2089 = vmul.f32 %v2026, %v239
    %v2090 = vmul.f32 %v2026, %v240
    %v2091 = vmul.f32 %v2026, %v241
    %v2092 = vmul.f32 %v2026, %v242
    %v2093 = vmul.f32 %v2026, %v243
    %v2094 = vmul.f32 %v2026, %v244
    %v2095 = vmul.f32 %v2026, %v245
    %v2096 = vmul.f32 %v2026, %v246
    %v2097 = vmul.f32 %v2026, %v247
    %v2098 = vmul.f32 %v2026, %v248
    %v2099 = vmul.f32 %v2026, %v249
    %v2100 = vmul.f32 %v2026, %v250
    %v2101 = vmul.f32 %v2026, %v251
    %v2102 = vmul.f32 %v2026, %v252
    %v2103 = vmul.f32 %v2026, %v253
    %v2104 = vmul.f32 %v2026, %v254
    %v2105 = vmul.f32 %v2026, %v255
    %v2106 = vmul.f32 %v2026, %v256
    %v2107 = vmul.f32 %v2026, %v257
    %v2108 = vmul.f32 %v2026, %v258
    %v2109 = vmul.f32 %v2026, %v259
    %v2110 = vmul.f32 %v2026, %v260
    %v2111 = vmul.f32 %v2026, %v261
    %v2112 = vmul.f32 %v2026, %v262
    %v2113 = vmul.f32 %v2026, %v263
    %v2114 = vmul.f32 %v2026, %v264
    %v2115 = vmul.f32 %v2026, %v265
    %v2116 = vmul.f32 %v2026, %v266
    %v2117 = vmul.f32 %v2026, %v267
    %v2118 = vmul.f32 %v2026, %v268
    %v2119 = vmul.f32 %v2026, %v269
    %v2120 = vmul.f32 %v2026, %v270
    %v2121 = vmul.f32 %v2026, %v271
    %v2122 = vmul.f32 %v2026, %v272
    %v2123 = vmul.f32 %v2026, %v273
    %v2124 = vmul.f32 %v2026, %v274
    %v2125 = vmul.f32 %v2026, %v275
    %v2126 = vmul.f32 %v2026, %v276
    %v2127 = vmul.f32 %v2026, %v277
    %v2128 = vadd.f32 %v1923, %v2028
    %v2129 = vadd.f32 %v1924, %v2029
    %v2130 = vadd.f32 %v1925, %v2030
    %v2131 = vadd.f32 %v1926, %v2031
    %v2132 = vadd.f32 %v1927, %v2032
    %v2133 = vadd.f32 %v1928, %v2033
    %v2134 = vadd.f32 %v1929, %v2034
    %v2135 = vadd.f32 %v1930, %v2035
    %v2136 = vadd.f32 %v1931, %v2036
    %v2137 = vadd.f32 %v1932, %v2037
    %v2138 = vadd.f32 %v1933, %v2038
    %v2139 = vadd.f32 %v1934, %v2039
    %v2140 = vadd.f32 %v1935, %v2040
    %v2141 = vadd.f32 %v1936, %v2041
    %v2142 = vadd.f32 %v1937, %v2042
    %v2143 = vadd.f32 %v1938, %v2043
    %v2144 = vadd.f32 %v1939, %v2044
    %v2145 = vadd.f32 %v1940, %v2045
    %v2146 = vadd.f32 %v1941, %v2046
    %v2147 = vadd.f32 %v1942, %v2047
    %v2148 = vadd.f32 %v1943, %v2048
    %v2149 = vadd.f32 %v1944, %v2049
    %v2150 = vadd.f32 %v1945, %v2050
    %v2151 = vadd.f32 %v1946, %v2051
    %v2152 = vadd.f32 %v1947, %v2052
    %v2153 = vadd.f32 %v1948, %v2053
    %v2154 = vadd.f32 %v1949, %v2054
    %v2155 = vadd.f32 %v1950, %v2055
    %v2156 = vadd.f32 %v1951, %v2056
    %v2157 = vadd.f32 %v1952, %v2057
    %v2158 = vadd.f32 %v1953, %v2058
    %v2159 = vadd.f32 %v1954, %v2059
    %v2160 = vadd.f32 %v1955, %v2060
    %v2161 = vadd.f32 %v1956, %v2061
    %v2162 = vadd.f32 %v1957, %v2062
    %v2163 = vadd.f32 %v1958, %v2063
    %v2164 = vadd.f32 %v1959, %v2064
    %v2165 = vadd.f32 %v1960, %v2065
    %v2166 = vadd.f32 %v1961, %v2066
    %v2167 = vadd.f32 %v1962, %v2067
    %v2168 = vadd.f32 %v1963, %v2068
    %v2169 = vadd.f32 %v1964, %v2069
    %v2170 = vadd.f32 %v1965, %v2070
    %v2171 = vadd.f32 %v1966, %v2071
    %v2172 = vadd.f32 %v1967, %v2072
    %v2173 = vadd.f32 %v1968, %v2073
    %v2174 = vadd.f32 %v1969, %v2074
    %v2175 = vadd.f32 %v1970, %v2075
    %v2176 = vadd.f32 %v1971, %v2076
    %v2177 = vadd.f32 %v1972, %v2077
    %v2178 = vadd.f32 %v1973, %v2078
    %v2179 = vadd.f32 %v1974, %v2079
    %v2180 = vadd.f32 %v1975, %v2080
    %v2181 = vadd.f32 %v1976, %v2081
    %v2182 = vadd.f32 %v1977, %v2082
    %v2183 = vadd.f32 %v1978, %v2083
    %v2184 = vadd.f32 %v1979, %v2084
    %v2185 = vadd.f32 %v1980, %v2085
    %v2186 = vadd.f32 %v1981, %v2086
    %v2187 = vadd.f32 %v1982, %v2087
    %v2188 = vadd.f32 %v1983, %v2088
    %v2189 = vadd.f32 %v1984, %v2089
    %v2190 = vadd.f32 %v1985, %v2090
    %v2191 = vadd.f32 %v1986, %v2091
    %v2192 = vadd.f32 %v1987, %v2092
    %v2193 = vadd.f32 %v1988, %v2093
    %v2194 = vadd.f32 %v1989, %v2094
    %v2195 = vadd.f32 %v1990, %v2095
    %v2196 = vadd.f32 %v1991, %v2096
    %v2197 = vadd.f32 %v1992, %v2097
    %v2198 = vadd.f32 %v1993, %v2098
    %v2199 = vadd.f32 %v1994, %v2099
    %v2200 = vadd.f32 %v1995, %v2100
    %v2201 = vadd.f32 %v1996, %v2101
    %v2202 = vadd.f32 %v1997, %v2102
    %v2203 = vadd.f32 %v1998, %v2103
    %v2204 = vadd.f32 %v1999, %v2104
    %v2205 = vadd.f32 %v2000, %v2105
    %v2206 = vadd.f32 %v2001, %v2106
    %v2207 = vadd.f32 %v2002, %v2107
    %v2208 = vadd.f32 %v2003, %v2108
    %v2209 = vadd.f32 %v2004, %v2109
    %v2210 = vadd.f32 %v2005, %v2110
    %v2211 = vadd.f32 %v2006, %v2111
    %v2212 = vadd.f32 %v2007, %v2112
    %v2213 = vadd.f32 %v2008, %v2113
    %v2214 = vadd.f32 %v2009, %v2114
    %v2215 = vadd.f32 %v2010, %v2115
    %v2216 = vadd.f32 %v2011, %v2116
    %v2217 = vadd.f32 %v2012, %v2117
    %v2218 = vadd.f32 %v2013, %v2118
    %v2219 = vadd.f32 %v2014, %v2119
    %v2220 = vadd.f32 %v2015, %v2120
    %v2221 = vadd.f32 %v2016, %v2121
    %v2222 = vadd.f32 %v2017, %v2122
    %v2223 = vadd.f32 %v2018, %v2123
    %v2224 = vadd.f32 %v2019, %v2124
    %v2225 = vadd.f32 %v2020, %v2125
    %v2226 = vadd.f32 %v2021, %v2126
    %v2227 = vadd.f32 %v2022, %v2127
    %v2228 = vmax.f32 %v2128, 0.0
    %v2229 = vmax.f32 %v2129, 0.0
    %v2230 = vmax.f32 %v2130, 0.0
    %v2231 = vmax.f32 %v2131, 0.0
    %v2232 = vmax.f32 %v2132, 0.0
    %v2233 = vmax.f32 %v2133, 0.0
    %v2234 = vmax.f32 %v2134, 0.0
    %v2235 = vmax.f32 %v2135, 0.0
    %v2236 = vmax.f32 %v2136, 0.0
    %v2237 = vmax.f32 %v2137, 0.0
    %v2238 = vmax.f32 %v2138, 0.0
    %v2239 = vmax.f32 %v2139, 0.0
    %v2240 = vmax.f32 %v2140, 0.0
    %v2241 = vmax.f32 %v2141, 0.0
    %v2242 = vmax.f32 %v2142, 0.0
    %v2243 = vmax.f32 %v2143, 0.0
    %v2244 = vmax.f32 %v2144, 0.0
    %v2245 = vmax.f32 %v2145, 0.0
    %v2246 = vmax.f32 %v2146, 0.0
    %v2247 = vmax.f32 %v2147, 0.0
    %v2248 = vmax.f32 %v2148, 0.0
    %v2249 = vmax.f32 %v2149, 0.0
    %v2250 = vmax.f32 %v2150, 0.0
    %v2251 = vmax.f32 %v2151, 0.0
    %v2252 = vmax.f32 %v2152, 0.0
    %v2253 = vmax.f32 %v2153, 0.0
    %v2254 = vmax.f32 %v2154, 0.0
    %v2255 = vmax.f32 %v2155, 0.0
    %v2256 = vmax.f32 %v2156, 0.0
    %v2257 = vmax.f32 %v2157, 0.0
    %v2258 = vmax.f32 %v2158, 0.0
    %v2259 = vmax.f32 %v2159, 0.0
    %v2260 = vmax.f32 %v2160, 0.0
    %v2261 = vmax.f32 %v2161, 0.0
    %v2262 = vmax.f32 %v2162, 0.0
    %v2263 = vmax.f32 %v2163, 0.0
    %v2264 = vmax.f32 %v2164, 0.0
    %v2265 = vmax.f32 %v2165, 0.0
    %v2266 = vmax.f32 %v2166, 0.0
    %v2267 = vmax.f32 %v2167, 0.0
    %v2268 = vmax.f32 %v2168, 0.0
    %v2269 = vmax.f32 %v2169, 0.0
    %v2270 = vmax.f32 %v2170, 0.0
    %v2271 = vmax.f32 %v2171, 0.0
    %v2272 = vmax.f32 %v2172, 0.0
    %v2273 = vmax.f32 %v2173, 0.0
    %v2274 = vmax.f32 %v2174, 0.0
    %v2275 = vmax.f32 %v2175, 0.0
    %v2276 = vmax.f32 %v2176, 0.0
    %v2277 = vmax.f32 %v2177, 0.0
    %v2278 = vmax.f32 %v2178, 0.0
    %v2279 = vmax.f32 %v2179, 0.0
    %v2280 = vmax.f32 %v2180, 0.0
    %v2281 = vmax.f32 %v2181, 0.0
    %v2282 = vmax.f32 %v2182, 0.0
    %v2283 = vmax.f32 %v2183, 0.0
    %v2284 = vmax.f32 %v2184, 0.0
    %v2285 = vmax.f32 %v2185, 0.0
    %v2286 = vmax.f32 %v2186, 0.0
    %v2287 = vmax.f32 %v2187, 0.0
    %v2288 = vmax.f32 %v2188, 0.0
    %v2289 = vmax.f32 %v2189, 0.0
    %v2290 = vmax.f32 %v2190, 0.0
    %v2291 = vmax.f32 %v2191, 0.0
    %v2292 = vmax.f32 %v2192, 0.0
    %v2293 = vmax.f32 %v2193, 0.0
    %v2294 = vmax.f32 %v2194, 0.0
    %v2295 = vmax.f32 %v2195, 0.0
    %v2296 = vmax.f32 %v2196, 0.0
    %v2297 = vmax.f32 %v2197, 0.0
    %v2298 = vmax.f32 %v2198, 0.0
    %v2299 = vmax.f32 %v2199, 0.0
    %v2300 = vmax.f32 %v2200, 0.0
    %v2301 = vmax.f32 %v2201, 0.0
    %v2302 = vmax.f32 %v2202, 0.0
    %v2303 = vmax.f32 %v2203, 0.0
    %v2304 = vmax.f32 %v2204, 0.0
    %v2305 = vmax.f32 %v2205, 0.0
    %v2306 = vmax.f32 %v2206, 0.0
    %v2307 = vmax.f32 %v2207, 0.0
    %v2308 = vmax.f32 %v2208, 0.0
    %v2309 = vmax.f32 %v2209, 0.0
    %v2310 = vmax.f32 %v2210, 0.0
    %v2311 = vmax.f32 %v2211, 0.0
    %v2312 = vmax.f32 %v2212, 0.0
    %v2313 = vmax.f32 %v2213, 0.0
    %v2314 = vmax.f32 %v2214, 0.0
    %v2315 = vmax.f32 %v2215, 0.0
    %v2316 = vmax.f32 %v2216, 0.0
    %v2317 = vmax.f32 %v2217, 0.0
    %v2318 = vmax.f32 %v2218, 0.0
    %v2319 = vmax.f32 %v2219, 0.0
    %v2320 = vmax.f32 %v2220, 0.0
    %v2321 = vmax.f32 %v2221, 0.0
    %v2322 = vmax.f32 %v2222, 0.0
    %v2323 = vmax.f32 %v2223, 0.0
    %v2324 = vmax.f32 %v2224, 0.0
    %v2325 = vmax.f32 %v2225, 0.0
    %v2326 = vmax.f32 %v2226, 0.0
    %v2327 = vmax.f32 %v2227, 0.0
    %v2328 = vld [vmem:[#allocation7 + $0x5] sm:$0x1]
    %s2330 = vtos %v2328
    %v2331 = vstv %s2330
    %v2333 = vmul.f32 %v78, %v2331
    %v2334 = vmul.f32 %v79, %v2331
    %v2335 = vmul.f32 %v80, %v2331
    %v2336 = vmul.f32 %v81, %v2331
    %v2337 = vmul.f32 %v82, %v2331
    %v2338 = vmul.f32 %v83, %v2331
    %v2339 = vmul.f32 %v84, %v2331
    %v2340 = vmul.f32 %v85, %v2331
    %v2341 = vmul.f32 %v86, %v2331
    %v2342 = vmul.f32 %v87, %v2331
    %v2343 = vmul.f32 %v88, %v2331
    %v2344 = vmul.f32 %v89, %v2331
    %v2345 = vmul.f32 %v90, %v2331
    %v2346 = vmul.f32 %v91, %v2331
    %v2347 = vmul.f32 %v92, %v2331
    %v2348 = vmul.f32 %v93, %v2331
    %v2349 = vmul.f32 %v94, %v2331
    %v2350 = vmul.f32 %v95, %v2331
    %v2351 = vmul.f32 %v96, %v2331
    %v2352 = vmul.f32 %v97, %v2331
    %v2353 = vmul.f32 %v98, %v2331
    %v2354 = vmul.f32 %v99, %v2331
    %v2355 = vmul.f32 %v100, %v2331
    %v2356 = vmul.f32 %v101, %v2331
    %v2357 = vmul.f32 %v102, %v2331
    %v2358 = vmul.f32 %v103, %v2331
    %v2359 = vmul.f32 %v104, %v2331
    %v2360 = vmul.f32 %v105, %v2331
    %v2361 = vmul.f32 %v106, %v2331
    %v2362 = vmul.f32 %v107, %v2331
    %v2363 = vmul.f32 %v108, %v2331
    %v2364 = vmul.f32 %v109, %v2331
    %v2365 = vmul.f32 %v110, %v2331
    %v2366 = vmul.f32 %v111, %v2331
    %v2367 = vmul.f32 %v112, %v2331
    %v2368 = vmul.f32 %v113, %v2331
    %v2369 = vmul.f32 %v114, %v2331
    %v2370 = vmul.f32 %v115, %v2331
    %v2371 = vmul.f32 %v116, %v2331
    %v2372 = vmul.f32 %v117, %v2331
    %v2373 = vmul.f32 %v118, %v2331
    %v2374 = vmul.f32 %v119, %v2331
    %v2375 = vmul.f32 %v120, %v2331
    %v2376 = vmul.f32 %v121, %v2331
    %v2377 = vmul.f32 %v122, %v2331
    %v2378 = vmul.f32 %v123, %v2331
    %v2379 = vmul.f32 %v124, %v2331
    %v2380 = vmul.f32 %v125, %v2331
    %v2381 = vmul.f32 %v126, %v2331
    %v2382 = vmul.f32 %v127, %v2331
    %v2383 = vmul.f32 %v128, %v2331
    %v2384 = vmul.f32 %v129, %v2331
    %v2385 = vmul.f32 %v130, %v2331
    %v2386 = vmul.f32 %v131, %v2331
    %v2387 = vmul.f32 %v132, %v2331
    %v2388 = vmul.f32 %v133, %v2331
    %v2389 = vmul.f32 %v134, %v2331
    %v2390 = vmul.f32 %v135, %v2331
    %v2391 = vmul.f32 %v136, %v2331
    %v2392 = vmul.f32 %v137, %v2331
    %v2393 = vmul.f32 %v138, %v2331
    %v2394 = vmul.f32 %v139, %v2331
    %v2395 = vmul.f32 %v140, %v2331
    %v2396 = vmul.f32 %v141, %v2331
    %v2397 = vmul.f32 %v142, %v2331
    %v2398 = vmul.f32 %v143, %v2331
    %v2399 = vmul.f32 %v144, %v2331
    %v2400 = vmul.f32 %v145, %v2331
    %v2401 = vmul.f32 %v146, %v2331
    %v2402 = vmul.f32 %v147, %v2331
    %v2403 = vmul.f32 %v148, %v2331
    %v2404 = vmul.f32 %v149, %v2331
    %v2405 = vmul.f32 %v150, %v2331
    %v2406 = vmul.f32 %v151, %v2331
    %v2407 = vmul.f32 %v152, %v2331
    %v2408 = vmul.f32 %v153, %v2331
    %v2409 = vmul.f32 %v154, %v2331
    %v2410 = vmul.f32 %v155, %v2331
    %v2411 = vmul.f32 %v156, %v2331
    %v2412 = vmul.f32 %v157, %v2331
    %v2413 = vmul.f32 %v158, %v2331
    %v2414 = vmul.f32 %v159, %v2331
    %v2415 = vmul.f32 %v160, %v2331
    %v2416 = vmul.f32 %v161, %v2331
    %v2417 = vmul.f32 %v162, %v2331
    %v2418 = vmul.f32 %v163, %v2331
    %v2419 = vmul.f32 %v164, %v2331
    %v2420 = vmul.f32 %v165, %v2331
    %v2421 = vmul.f32 %v166, %v2331
    %v2422 = vmul.f32 %v167, %v2331
    %v2423 = vmul.f32 %v168, %v2331
    %v2424 = vmul.f32 %v169, %v2331
    %v2425 = vmul.f32 %v170, %v2331
    %v2426 = vmul.f32 %v171, %v2331
    %v2427 = vmul.f32 %v172, %v2331
    %v2428 = vmul.f32 %v173, %v2331
    %v2429 = vmul.f32 %v174, %v2331
    %v2430 = vmul.f32 %v175, %v2331
    %v2431 = vmul.f32 %v176, %v2331
    %v2432 = vmul.f32 %v177, %v2331
    %2433 = vrot.lane.b32.xlu0 %v2328, 127
    %v2434 = vpop.permute.xlu0 %2433
    %s2435 = vtos %v2434
    %v2436 = vstv %s2435
    %v2438 = vmul.f32 %v2436, %v178
    %v2439 = vmul.f32 %v2436, %v179
    %v2440 = vmul.f32 %v2436, %v180
    %v2441 = vmul.f32 %v2436, %v181
    %v2442 = vmul.f32 %v2436, %v182
    %v2443 = vmul.f32 %v2436, %v183
    %v2444 = vmul.f32 %v2436, %v184
    %v2445 = vmul.f32 %v2436, %v185
    %v2446 = vmul.f32 %v2436, %v186
    %v2447 = vmul.f32 %v2436, %v187
    %v2448 = vmul.f32 %v2436, %v188
    %v2449 = vmul.f32 %v2436, %v189
    %v2450 = vmul.f32 %v2436, %v190
    %v2451 = vmul.f32 %v2436, %v191
    %v2452 = vmul.f32 %v2436, %v192
    %v2453 = vmul.f32 %v2436, %v193
    %v2454 = vmul.f32 %v2436, %v194
    %v2455 = vmul.f32 %v2436, %v195
    %v2456 = vmul.f32 %v2436, %v196
    %v2457 = vmul.f32 %v2436, %v197
    %v2458 = vmul.f32 %v2436, %v198
    %v2459 = vmul.f32 %v2436, %v199
    %v2460 = vmul.f32 %v2436, %v200
    %v2461 = vmul.f32 %v2436, %v201
    %v2462 = vmul.f32 %v2436, %v202
    %v2463 = vmul.f32 %v2436, %v203
    %v2464 = vmul.f32 %v2436, %v204
    %v2465 = vmul.f32 %v2436, %v205
    %v2466 = vmul.f32 %v2436, %v206
    %v2467 = vmul.f32 %v2436, %v207
    %v2468 = vmul.f32 %v2436, %v208
    %v2469 = vmul.f32 %v2436, %v209
    %v2470 = vmul.f32 %v2436, %v210
    %v2471 = vmul.f32 %v2436, %v211
    %v2472 = vmul.f32 %v2436, %v212
    %v2473 = vmul.f32 %v2436, %v213
    %v2474 = vmul.f32 %v2436, %v214
    %v2475 = vmul.f32 %v2436, %v215
    %v2476 = vmul.f32 %v2436, %v216
    %v2477 = vmul.f32 %v2436, %v217
    %v2478 = vmul.f32 %v2436, %v218
    %v2479 = vmul.f32 %v2436, %v219
    %v2480 = vmul.f32 %v2436, %v220
    %v2481 = vmul.f32 %v2436, %v221
    %v2482 = vmul.f32 %v2436, %v222
    %v2483 = vmul.f32 %v2436, %v223
    %v2484 = vmul.f32 %v2436, %v224
    %v2485 = vmul.f32 %v2436, %v225
    %v2486 = vmul.f32 %v2436, %v226
    %v2487 = vmul.f32 %v2436, %v227
    %v2488 = vmul.f32 %v2436, %v228
    %v2489 = vmul.f32 %v2436, %v229
    %v2490 = vmul.f32 %v2436, %v230
    %v2491 = vmul.f32 %v2436, %v231
    %v2492 = vmul.f32 %v2436, %v232
    %v2493 = vmul.f32 %v2436, %v233
    %v2494 = vmul.f32 %v2436, %v234
    %v2495 = vmul.f32 %v2436, %v235
    %v2496 = vmul.f32 %v2436, %v236
    %v2497 = vmul.f32 %v2436, %v237
    %v2498 = vmul.f32 %v2436, %v238
    %v2499 = vmul.f32 %v2436, %v239
    %v2500 = vmul.f32 %v2436, %v240
    %v2501 = vmul.f32 %v2436, %v241
    %v2502 = vmul.f32 %v2436, %v242
    %v2503 = vmul.f32 %v2436, %v243
    %v2504 = vmul.f32 %v2436, %v244
    %v2505 = vmul.f32 %v2436, %v245
    %v2506 = vmul.f32 %v2436, %v246
    %v2507 = vmul.f32 %v2436, %v247
    %v2508 = vmul.f32 %v2436, %v248
    %v2509 = vmul.f32 %v2436, %v249
    %v2510 = vmul.f32 %v2436, %v250
    %v2511 = vmul.f32 %v2436, %v251
    %v2512 = vmul.f32 %v2436, %v252
    %v2513 = vmul.f32 %v2436, %v253
    %v2514 = vmul.f32 %v2436, %v254
    %v2515 = vmul.f32 %v2436, %v255
    %v2516 = vmul.f32 %v2436, %v256
    %v2517 = vmul.f32 %v2436, %v257
    %v2518 = vmul.f32 %v2436, %v258
    %v2519 = vmul.f32 %v2436, %v259
    %v2520 = vmul.f32 %v2436, %v260
    %v2521 = vmul.f32 %v2436, %v261
    %v2522 = vmul.f32 %v2436, %v262
    %v2523 = vmul.f32 %v2436, %v263
    %v2524 = vmul.f32 %v2436, %v264
    %v2525 = vmul.f32 %v2436, %v265
    %v2526 = vmul.f32 %v2436, %v266
    %v2527 = vmul.f32 %v2436, %v267
    %v2528 = vmul.f32 %v2436, %v268
    %v2529 = vmul.f32 %v2436, %v269
    %v2530 = vmul.f32 %v2436, %v270
    %v2531 = vmul.f32 %v2436, %v271
    %v2532 = vmul.f32 %v2436, %v272
    %v2533 = vmul.f32 %v2436, %v273
    %v2534 = vmul.f32 %v2436, %v274
    %v2535 = vmul.f32 %v2436, %v275
    %v2536 = vmul.f32 %v2436, %v276
    %v2537 = vmul.f32 %v2436, %v277
    %v2538 = vadd.f32 %v2333, %v2438
    %v2539 = vadd.f32 %v2334, %v2439
    %v2540 = vadd.f32 %v2335, %v2440
    %v2541 = vadd.f32 %v2336, %v2441
    %v2542 = vadd.f32 %v2337, %v2442
    %v2543 = vadd.f32 %v2338, %v2443
    %v2544 = vadd.f32 %v2339, %v2444
    %v2545 = vadd.f32 %v2340, %v2445
    %v2546 = vadd.f32 %v2341, %v2446
    %v2547 = vadd.f32 %v2342, %v2447
    %v2548 = vadd.f32 %v2343, %v2448
    %v2549 = vadd.f32 %v2344, %v2449
    %v2550 = vadd.f32 %v2345, %v2450
    %v2551 = vadd.f32 %v2346, %v2451
    %v2552 = vadd.f32 %v2347, %v2452
    %v2553 = vadd.f32 %v2348, %v2453
    %v2554 = vadd.f32 %v2349, %v2454
    %v2555 = vadd.f32 %v2350, %v2455
    %v2556 = vadd.f32 %v2351, %v2456
    %v2557 = vadd.f32 %v2352, %v2457
    %v2558 = vadd.f32 %v2353, %v2458
    %v2559 = vadd.f32 %v2354, %v2459
    %v2560 = vadd.f32 %v2355, %v2460
    %v2561 = vadd.f32 %v2356, %v2461
    %v2562 = vadd.f32 %v2357, %v2462
    %v2563 = vadd.f32 %v2358, %v2463
    %v2564 = vadd.f32 %v2359, %v2464
    %v2565 = vadd.f32 %v2360, %v2465
    %v2566 = vadd.f32 %v2361, %v2466
    %v2567 = vadd.f32 %v2362, %v2467
    %v2568 = vadd.f32 %v2363, %v2468
    %v2569 = vadd.f32 %v2364, %v2469
    %v2570 = vadd.f32 %v2365, %v2470
    %v2571 = vadd.f32 %v2366, %v2471
    %v2572 = vadd.f32 %v2367, %v2472
    %v2573 = vadd.f32 %v2368, %v2473
    %v2574 = vadd.f32 %v2369, %v2474
    %v2575 = vadd.f32 %v2370, %v2475
    %v2576 = vadd.f32 %v2371, %v2476
    %v2577 = vadd.f32 %v2372, %v2477
    %v2578 = vadd.f32 %v2373, %v2478
    %v2579 = vadd.f32 %v2374, %v2479
    %v2580 = vadd.f32 %v2375, %v2480
    %v2581 = vadd.f32 %v2376, %v2481
    %v2582 = vadd.f32 %v2377, %v2482
    %v2583 = vadd.f32 %v2378, %v2483
    %v2584 = vadd.f32 %v2379, %v2484
    %v2585 = vadd.f32 %v2380, %v2485
    %v2586 = vadd.f32 %v2381, %v2486
    %v2587 = vadd.f32 %v2382, %v2487
    %v2588 = vadd.f32 %v2383, %v2488
    %v2589 = vadd.f32 %v2384, %v2489
    %v2590 = vadd.f32 %v2385, %v2490
    %v2591 = vadd.f32 %v2386, %v2491
    %v2592 = vadd.f32 %v2387, %v2492
    %v2593 = vadd.f32 %v2388, %v2493
    %v2594 = vadd.f32 %v2389, %v2494
    %v2595 = vadd.f32 %v2390, %v2495
    %v2596 = vadd.f32 %v2391, %v2496
    %v2597 = vadd.f32 %v2392, %v2497
    %v2598 = vadd.f32 %v2393, %v2498
    %v2599 = vadd.f32 %v2394, %v2499
    %v2600 = vadd.f32 %v2395, %v2500
    %v2601 = vadd.f32 %v2396, %v2501
    %v2602 = vadd.f32 %v2397, %v2502
    %v2603 = vadd.f32 %v2398, %v2503
    %v2604 = vadd.f32 %v2399, %v2504
    %v2605 = vadd.f32 %v2400, %v2505
    %v2606 = vadd.f32 %v2401, %v2506
    %v2607 = vadd.f32 %v2402, %v2507
    %v2608 = vadd.f32 %v2403, %v2508
    %v2609 = vadd.f32 %v2404, %v2509
    %v2610 = vadd.f32 %v2405, %v2510
    %v2611 = vadd.f32 %v2406, %v2511
    %v2612 = vadd.f32 %v2407, %v2512
    %v2613 = vadd.f32 %v2408, %v2513
    %v2614 = vadd.f32 %v2409, %v2514
    %v2615 = vadd.f32 %v2410, %v2515
    %v2616 = vadd.f32 %v2411, %v2516
    %v2617 = vadd.f32 %v2412, %v2517
    %v2618 = vadd.f32 %v2413, %v2518
    %v2619 = vadd.f32 %v2414, %v2519
    %v2620 = vadd.f32 %v2415, %v2520
    %v2621 = vadd.f32 %v2416, %v2521
    %v2622 = vadd.f32 %v2417, %v2522
    %v2623 = vadd.f32 %v2418, %v2523
    %v2624 = vadd.f32 %v2419, %v2524
    %v2625 = vadd.f32 %v2420, %v2525
    %v2626 = vadd.f32 %v2421, %v2526
    %v2627 = vadd.f32 %v2422, %v2527
    %v2628 = vadd.f32 %v2423, %v2528
    %v2629 = vadd.f32 %v2424, %v2529
    %v2630 = vadd.f32 %v2425, %v2530
    %v2631 = vadd.f32 %v2426, %v2531
    %v2632 = vadd.f32 %v2427, %v2532
    %v2633 = vadd.f32 %v2428, %v2533
    %v2634 = vadd.f32 %v2429, %v2534
    %v2635 = vadd.f32 %v2430, %v2535
    %v2636 = vadd.f32 %v2431, %v2536
    %v2637 = vadd.f32 %v2432, %v2537
    %v2638 = vmax.f32 %v2538, 0.0
    %v2639 = vmax.f32 %v2539, 0.0
    %v2640 = vmax.f32 %v2540, 0.0
    %v2641 = vmax.f32 %v2541, 0.0
    %v2642 = vmax.f32 %v2542, 0.0
    %v2643 = vmax.f32 %v2543, 0.0
    %v2644 = vmax.f32 %v2544, 0.0
    %v2645 = vmax.f32 %v2545, 0.0
    %v2646 = vmax.f32 %v2546, 0.0
    %v2647 = vmax.f32 %v2547, 0.0
    %v2648 = vmax.f32 %v2548, 0.0
    %v2649 = vmax.f32 %v2549, 0.0
    %v2650 = vmax.f32 %v2550, 0.0
    %v2651 = vmax.f32 %v2551, 0.0
    %v2652 = vmax.f32 %v2552, 0.0
    %v2653 = vmax.f32 %v2553, 0.0
    %v2654 = vmax.f32 %v2554, 0.0
    %v2655 = vmax.f32 %v2555, 0.0
    %v2656 = vmax.f32 %v2556, 0.0
    %v2657 = vmax.f32 %v2557, 0.0
    %v2658 = vmax.f32 %v2558, 0.0
    %v2659 = vmax.f32 %v2559, 0.0
    %v2660 = vmax.f32 %v2560, 0.0
    %v2661 = vmax.f32 %v2561, 0.0
    %v2662 = vmax.f32 %v2562, 0.0
    %v2663 = vmax.f32 %v2563, 0.0
    %v2664 = vmax.f32 %v2564, 0.0
    %v2665 = vmax.f32 %v2565, 0.0
    %v2666 = vmax.f32 %v2566, 0.0
    %v2667 = vmax.f32 %v2567, 0.0
    %v2668 = vmax.f32 %v2568, 0.0
    %v2669 = vmax.f32 %v2569, 0.0
    %v2670 = vmax.f32 %v2570, 0.0
    %v2671 = vmax.f32 %v2571, 0.0
    %v2672 = vmax.f32 %v2572, 0.0
    %v2673 = vmax.f32 %v2573, 0.0
    %v2674 = vmax.f32 %v2574, 0.0
    %v2675 = vmax.f32 %v2575, 0.0
    %v2676 = vmax.f32 %v2576, 0.0
    %v2677 = vmax.f32 %v2577, 0.0
    %v2678 = vmax.f32 %v2578, 0.0
    %v2679 = vmax.f32 %v2579, 0.0
    %v2680 = vmax.f32 %v2580, 0.0
    %v2681 = vmax.f32 %v2581, 0.0
    %v2682 = vmax.f32 %v2582, 0.0
    %v2683 = vmax.f32 %v2583, 0.0
    %v2684 = vmax.f32 %v2584, 0.0
    %v2685 = vmax.f32 %v2585, 0.0
    %v2686 = vmax.f32 %v2586, 0.0
    %v2687 = vmax.f32 %v2587, 0.0
    %v2688 = vmax.f32 %v2588, 0.0
    %v2689 = vmax.f32 %v2589, 0.0
    %v2690 = vmax.f32 %v2590, 0.0
    %v2691 = vmax.f32 %v2591, 0.0
    %v2692 = vmax.f32 %v2592, 0.0
    %v2693 = vmax.f32 %v2593, 0.0
    %v2694 = vmax.f32 %v2594, 0.0
    %v2695 = vmax.f32 %v2595, 0.0
    %v2696 = vmax.f32 %v2596, 0.0
    %v2697 = vmax.f32 %v2597, 0.0
    %v2698 = vmax.f32 %v2598, 0.0
    %v2699 = vmax.f32 %v2599, 0.0
    %v2700 = vmax.f32 %v2600, 0.0
    %v2701 = vmax.f32 %v2601, 0.0
    %v2702 = vmax.f32 %v2602, 0.0
    %v2703 = vmax.f32 %v2603, 0.0
    %v2704 = vmax.f32 %v2604, 0.0
    %v2705 = vmax.f32 %v2605, 0.0
    %v2706 = vmax.f32 %v2606, 0.0
    %v2707 = vmax.f32 %v2607, 0.0
    %v2708 = vmax.f32 %v2608, 0.0
    %v2709 = vmax.f32 %v2609, 0.0
    %v2710 = vmax.f32 %v2610, 0.0
    %v2711 = vmax.f32 %v2611, 0.0
    %v2712 = vmax.f32 %v2612, 0.0
    %v2713 = vmax.f32 %v2613, 0.0
    %v2714 = vmax.f32 %v2614, 0.0
    %v2715 = vmax.f32 %v2615, 0.0
    %v2716 = vmax.f32 %v2616, 0.0
    %v2717 = vmax.f32 %v2617, 0.0
    %v2718 = vmax.f32 %v2618, 0.0
    %v2719 = vmax.f32 %v2619, 0.0
    %v2720 = vmax.f32 %v2620, 0.0
    %v2721 = vmax.f32 %v2621, 0.0
    %v2722 = vmax.f32 %v2622, 0.0
    %v2723 = vmax.f32 %v2623, 0.0
    %v2724 = vmax.f32 %v2624, 0.0
    %v2725 = vmax.f32 %v2625, 0.0
    %v2726 = vmax.f32 %v2626, 0.0
    %v2727 = vmax.f32 %v2627, 0.0
    %v2728 = vmax.f32 %v2628, 0.0
    %v2729 = vmax.f32 %v2629, 0.0
    %v2730 = vmax.f32 %v2630, 0.0
    %v2731 = vmax.f32 %v2631, 0.0
    %v2732 = vmax.f32 %v2632, 0.0
    %v2733 = vmax.f32 %v2633, 0.0
    %v2734 = vmax.f32 %v2634, 0.0
    %v2735 = vmax.f32 %v2635, 0.0
    %v2736 = vmax.f32 %v2636, 0.0
    %v2737 = vmax.f32 %v2637, 0.0
    %v2738 = vld [vmem:[#allocation7 + $0x6] sm:$0x1]
    %s2740 = vtos %v2738
    %v2741 = vstv %s2740
    %v2743 = vmul.f32 %v78, %v2741
    %v2744 = vmul.f32 %v79, %v2741
    %v2745 = vmul.f32 %v80, %v2741
    %v2746 = vmul.f32 %v81, %v2741
    %v2747 = vmul.f32 %v82, %v2741
    %v2748 = vmul.f32 %v83, %v2741
    %v2749 = vmul.f32 %v84, %v2741
    %v2750 = vmul.f32 %v85, %v2741
    %v2751 = vmul.f32 %v86, %v2741
    %v2752 = vmul.f32 %v87, %v2741
    %v2753 = vmul.f32 %v88, %v2741
    %v2754 = vmul.f32 %v89, %v2741
    %v2755 = vmul.f32 %v90, %v2741
    %v2756 = vmul.f32 %v91, %v2741
    %v2757 = vmul.f32 %v92, %v2741
    %v2758 = vmul.f32 %v93, %v2741
    %v2759 = vmul.f32 %v94, %v2741
    %v2760 = vmul.f32 %v95, %v2741
    %v2761 = vmul.f32 %v96, %v2741
    %v2762 = vmul.f32 %v97, %v2741
    %v2763 = vmul.f32 %v98, %v2741
    %v2764 = vmul.f32 %v99, %v2741
    %v2765 = vmul.f32 %v100, %v2741
    %v2766 = vmul.f32 %v101, %v2741
    %v2767 = vmul.f32 %v102, %v2741
    %v2768 = vmul.f32 %v103, %v2741
    %v2769 = vmul.f32 %v104, %v2741
    %v2770 = vmul.f32 %v105, %v2741
    %v2771 = vmul.f32 %v106, %v2741
    %v2772 = vmul.f32 %v107, %v2741
    %v2773 = vmul.f32 %v108, %v2741
    %v2774 = vmul.f32 %v109, %v2741
    %v2775 = vmul.f32 %v110, %v2741
    %v2776 = vmul.f32 %v111, %v2741
    %v2777 = vmul.f32 %v112, %v2741
    %v2778 = vmul.f32 %v113, %v2741
    %v2779 = vmul.f32 %v114, %v2741
    %v2780 = vmul.f32 %v115, %v2741
    %v2781 = vmul.f32 %v116, %v2741
    %v2782 = vmul.f32 %v117, %v2741
    %v2783 = vmul.f32 %v118, %v2741
    %v2784 = vmul.f32 %v119, %v2741
    %v2785 = vmul.f32 %v120, %v2741
    %v2786 = vmul.f32 %v121, %v2741
    %v2787 = vmul.f32 %v122, %v2741
    %v2788 = vmul.f32 %v123, %v2741
    %v2789 = vmul.f32 %v124, %v2741
    %v2790 = vmul.f32 %v125, %v2741
    %v2791 = vmul.f32 %v126, %v2741
    %v2792 = vmul.f32 %v127, %v2741
    %v2793 = vmul.f32 %v128, %v2741
    %v2794 = vmul.f32 %v129, %v2741
    %v2795 = vmul.f32 %v130, %v2741
    %v2796 = vmul.f32 %v131, %v2741
    %v2797 = vmul.f32 %v132, %v2741
    %v2798 = vmul.f32 %v133, %v2741
    %v2799 = vmul.f32 %v134, %v2741
    %v2800 = vmul.f32 %v135, %v2741
    %v2801 = vmul.f32 %v136, %v2741
    %v2802 = vmul.f32 %v137, %v2741
    %v2803 = vmul.f32 %v138, %v2741
    %v2804 = vmul.f32 %v139, %v2741
    %v2805 = vmul.f32 %v140, %v2741
    %v2806 = vmul.f32 %v141, %v2741
    %v2807 = vmul.f32 %v142, %v2741
    %v2808 = vmul.f32 %v143, %v2741
    %v2809 = vmul.f32 %v144, %v2741
    %v2810 = vmul.f32 %v145, %v2741
    %v2811 = vmul.f32 %v146, %v2741
    %v2812 = vmul.f32 %v147, %v2741
    %v2813 = vmul.f32 %v148, %v2741
    %v2814 = vmul.f32 %v149, %v2741
    %v2815 = vmul.f32 %v150, %v2741
    %v2816 = vmul.f32 %v151, %v2741
    %v2817 = vmul.f32 %v152, %v2741
    %v2818 = vmul.f32 %v153, %v2741
    %v2819 = vmul.f32 %v154, %v2741
    %v2820 = vmul.f32 %v155, %v2741
    %v2821 = vmul.f32 %v156, %v2741
    %v2822 = vmul.f32 %v157, %v2741
    %v2823 = vmul.f32 %v158, %v2741
    %v2824 = vmul.f32 %v159, %v2741
    %v2825 = vmul.f32 %v160, %v2741
    %v2826 = vmul.f32 %v161, %v2741
    %v2827 = vmul.f32 %v162, %v2741
    %v2828 = vmul.f32 %v163, %v2741
    %v2829 = vmul.f32 %v164, %v2741
    %v2830 = vmul.f32 %v165, %v2741
    %v2831 = vmul.f32 %v166, %v2741
    %v2832 = vmul.f32 %v167, %v2741
    %v2833 = vmul.f32 %v168, %v2741
    %v2834 = vmul.f32 %v169, %v2741
    %v2835 = vmul.f32 %v170, %v2741
    %v2836 = vmul.f32 %v171, %v2741
    %v2837 = vmul.f32 %v172, %v2741
    %v2838 = vmul.f32 %v173, %v2741
    %v2839 = vmul.f32 %v174, %v2741
    %v2840 = vmul.f32 %v175, %v2741
    %v2841 = vmul.f32 %v176, %v2741
    %v2842 = vmul.f32 %v177, %v2741
    %2843 = vrot.lane.b32.xlu0 %v2738, 127
    %v2844 = vpop.permute.xlu0 %2843
    %s2845 = vtos %v2844
    %v2846 = vstv %s2845
    %v2848 = vmul.f32 %v2846, %v178
    %v2849 = vmul.f32 %v2846, %v179
    %v2850 = vmul.f32 %v2846, %v180
    %v2851 = vmul.f32 %v2846, %v181
    %v2852 = vmul.f32 %v2846, %v182
    %v2853 = vmul.f32 %v2846, %v183
    %v2854 = vmul.f32 %v2846, %v184
    %v2855 = vmul.f32 %v2846, %v185
    %v2856 = vmul.f32 %v2846, %v186
    %v2857 = vmul.f32 %v2846, %v187
    %v2858 = vmul.f32 %v2846, %v188
    %v2859 = vmul.f32 %v2846, %v189
    %v2860 = vmul.f32 %v2846, %v190
    %v2861 = vmul.f32 %v2846, %v191
    %v2862 = vmul.f32 %v2846, %v192
    %v2863 = vmul.f32 %v2846, %v193
    %v2864 = vmul.f32 %v2846, %v194
    %v2865 = vmul.f32 %v2846, %v195
    %v2866 = vmul.f32 %v2846, %v196
    %v2867 = vmul.f32 %v2846, %v197
    %v2868 = vmul.f32 %v2846, %v198
    %v2869 = vmul.f32 %v2846, %v199
    %v2870 = vmul.f32 %v2846, %v200
    %v2871 = vmul.f32 %v2846, %v201
    %v2872 = vmul.f32 %v2846, %v202
    %v2873 = vmul.f32 %v2846, %v203
    %v2874 = vmul.f32 %v2846, %v204
    %v2875 = vmul.f32 %v2846, %v205
    %v2876 = vmul.f32 %v2846, %v206
    %v2877 = vmul.f32 %v2846, %v207
    %v2878 = vmul.f32 %v2846, %v208
    %v2879 = vmul.f32 %v2846, %v209
    %v2880 = vmul.f32 %v2846, %v210
    %v2881 = vmul.f32 %v2846, %v211
    %v2882 = vmul.f32 %v2846, %v212
    %v2883 = vmul.f32 %v2846, %v213
    %v2884 = vmul.f32 %v2846, %v214
    %v2885 = vmul.f32 %v2846, %v215
    %v2886 = vmul.f32 %v2846, %v216
    %v2887 = vmul.f32 %v2846, %v217
    %v2888 = vmul.f32 %v2846, %v218
    %v2889 = vmul.f32 %v2846, %v219
    %v2890 = vmul.f32 %v2846, %v220
    %v2891 = vmul.f32 %v2846, %v221
    %v2892 = vmul.f32 %v2846, %v222
    %v2893 = vmul.f32 %v2846, %v223
    %v2894 = vmul.f32 %v2846, %v224
    %v2895 = vmul.f32 %v2846, %v225
    %v2896 = vmul.f32 %v2846, %v226
    %v2897 = vmul.f32 %v2846, %v227
    %v2898 = vmul.f32 %v2846, %v228
    %v2899 = vmul.f32 %v2846, %v229
    %v2900 = vmul.f32 %v2846, %v230
    %v2901 = vmul.f32 %v2846, %v231
    %v2902 = vmul.f32 %v2846, %v232
    %v2903 = vmul.f32 %v2846, %v233
    %v2904 = vmul.f32 %v2846, %v234
    %v2905 = vmul.f32 %v2846, %v235
    %v2906 = vmul.f32 %v2846, %v236
    %v2907 = vmul.f32 %v2846, %v237
    %v2908 = vmul.f32 %v2846, %v238
    %v2909 = vmul.f32 %v2846, %v239
    %v2910 = vmul.f32 %v2846, %v240
    %v2911 = vmul.f32 %v2846, %v241
    %v2912 = vmul.f32 %v2846, %v242
    %v2913 = vmul.f32 %v2846, %v243
    %v2914 = vmul.f32 %v2846, %v244
    %v2915 = vmul.f32 %v2846, %v245
    %v2916 = vmul.f32 %v2846, %v246
    %v2917 = vmul.f32 %v2846, %v247
    %v2918 = vmul.f32 %v2846, %v248
    %v2919 = vmul.f32 %v2846, %v249
    %v2920 = vmul.f32 %v2846, %v250
    %v2921 = vmul.f32 %v2846, %v251
    %v2922 = vmul.f32 %v2846, %v252
    %v2923 = vmul.f32 %v2846, %v253
    %v2924 = vmul.f32 %v2846, %v254
    %v2925 = vmul.f32 %v2846, %v255
    %v2926 = vmul.f32 %v2846, %v256
    %v2927 = vmul.f32 %v2846, %v257
    %v2928 = vmul.f32 %v2846, %v258
    %v2929 = vmul.f32 %v2846, %v259
    %v2930 = vmul.f32 %v2846, %v260
    %v2931 = vmul.f32 %v2846, %v261
    %v2932 = vmul.f32 %v2846, %v262
    %v2933 = vmul.f32 %v2846, %v263
    %v2934 = vmul.f32 %v2846, %v264
    %v2935 = vmul.f32 %v2846, %v265
    %v2936 = vmul.f32 %v2846, %v266
    %v2937 = vmul.f32 %v2846, %v267
    %v2938 = vmul.f32 %v2846, %v268
    %v2939 = vmul.f32 %v2846, %v269
    %v2940 = vmul.f32 %v2846, %v270
    %v2941 = vmul.f32 %v2846, %v271
    %v2942 = vmul.f32 %v2846, %v272
    %v2943 = vmul.f32 %v2846, %v273
    %v2944 = vmul.f32 %v2846, %v274
    %v2945 = vmul.f32 %v2846, %v275
    %v2946 = vmul.f32 %v2846, %v276
    %v2947 = vmul.f32 %v2846, %v277
    %v2948 = vadd.f32 %v2743, %v2848
    %v2949 = vadd.f32 %v2744, %v2849
    %v2950 = vadd.f32 %v2745, %v2850
    %v2951 = vadd.f32 %v2746, %v2851
    %v2952 = vadd.f32 %v2747, %v2852
    %v2953 = vadd.f32 %v2748, %v2853
    %v2954 = vadd.f32 %v2749, %v2854
    %v2955 = vadd.f32 %v2750, %v2855
    %v2956 = vadd.f32 %v2751, %v2856
    %v2957 = vadd.f32 %v2752, %v2857
    %v2958 = vadd.f32 %v2753, %v2858
    %v2959 = vadd.f32 %v2754, %v2859
    %v2960 = vadd.f32 %v2755, %v2860
    %v2961 = vadd.f32 %v2756, %v2861
    %v2962 = vadd.f32 %v2757, %v2862
    %v2963 = vadd.f32 %v2758, %v2863
    %v2964 = vadd.f32 %v2759, %v2864
    %v2965 = vadd.f32 %v2760, %v2865
    %v2966 = vadd.f32 %v2761, %v2866
    %v2967 = vadd.f32 %v2762, %v2867
    %v2968 = vadd.f32 %v2763, %v2868
    %v2969 = vadd.f32 %v2764, %v2869
    %v2970 = vadd.f32 %v2765, %v2870
    %v2971 = vadd.f32 %v2766, %v2871
    %v2972 = vadd.f32 %v2767, %v2872
    %v2973 = vadd.f32 %v2768, %v2873
    %v2974 = vadd.f32 %v2769, %v2874
    %v2975 = vadd.f32 %v2770, %v2875
    %v2976 = vadd.f32 %v2771, %v2876
    %v2977 = vadd.f32 %v2772, %v2877
    %v2978 = vadd.f32 %v2773, %v2878
    %v2979 = vadd.f32 %v2774, %v2879
    %v2980 = vadd.f32 %v2775, %v2880
    %v2981 = vadd.f32 %v2776, %v2881
    %v2982 = vadd.f32 %v2777, %v2882
    %v2983 = vadd.f32 %v2778, %v2883
    %v2984 = vadd.f32 %v2779, %v2884
    %v2985 = vadd.f32 %v2780, %v2885
    %v2986 = vadd.f32 %v2781, %v2886
    %v2987 = vadd.f32 %v2782, %v2887
    %v2988 = vadd.f32 %v2783, %v2888
    %v2989 = vadd.f32 %v2784, %v2889
    %v2990 = vadd.f32 %v2785, %v2890
    %v2991 = vadd.f32 %v2786, %v2891
    %v2992 = vadd.f32 %v2787, %v2892
    %v2993 = vadd.f32 %v2788, %v2893
    %v2994 = vadd.f32 %v2789, %v2894
    %v2995 = vadd.f32 %v2790, %v2895
    %v2996 = vadd.f32 %v2791, %v2896
    %v2997 = vadd.f32 %v2792, %v2897
    %v2998 = vadd.f32 %v2793, %v2898
    %v2999 = vadd.f32 %v2794, %v2899
    %v3000 = vadd.f32 %v2795, %v2900
    %v3001 = vadd.f32 %v2796, %v2901
    %v3002 = vadd.f32 %v2797, %v2902
    %v3003 = vadd.f32 %v2798, %v2903
    %v3004 = vadd.f32 %v2799, %v2904
    %v3005 = vadd.f32 %v2800, %v2905
    %v3006 = vadd.f32 %v2801, %v2906
    %v3007 = vadd.f32 %v2802, %v2907
    %v3008 = vadd.f32 %v2803, %v2908
    %v3009 = vadd.f32 %v2804, %v2909
    %v3010 = vadd.f32 %v2805, %v2910
    %v3011 = vadd.f32 %v2806, %v2911
    %v3012 = vadd.f32 %v2807, %v2912
    %v3013 = vadd.f32 %v2808, %v2913
    %v3014 = vadd.f32 %v2809, %v2914
    %v3015 = vadd.f32 %v2810, %v2915
    %v3016 = vadd.f32 %v2811, %v2916
    %v3017 = vadd.f32 %v2812, %v2917
    %v3018 = vadd.f32 %v2813, %v2918
    %v3019 = vadd.f32 %v2814, %v2919
    %v3020 = vadd.f32 %v2815, %v2920
    %v3021 = vadd.f32 %v2816, %v2921
    %v3022 = vadd.f32 %v2817, %v2922
    %v3023 = vadd.f32 %v2818, %v2923
    %v3024 = vadd.f32 %v2819, %v2924
    %v3025 = vadd.f32 %v2820, %v2925
    %v3026 = vadd.f32 %v2821, %v2926
    %v3027 = vadd.f32 %v2822, %v2927
    %v3028 = vadd.f32 %v2823, %v2928
    %v3029 = vadd.f32 %v2824, %v2929
    %v3030 = vadd.f32 %v2825, %v2930
    %v3031 = vadd.f32 %v2826, %v2931
    %v3032 = vadd.f32 %v2827, %v2932
    %v3033 = vadd.f32 %v2828, %v2933
    %v3034 = vadd.f32 %v2829, %v2934
    %v3035 = vadd.f32 %v2830, %v2935
    %v3036 = vadd.f32 %v2831, %v2936
    %v3037 = vadd.f32 %v2832, %v2937
    %v3038 = vadd.f32 %v2833, %v2938
    %v3039 = vadd.f32 %v2834, %v2939
    %v3040 = vadd.f32 %v2835, %v2940
    %v3041 = vadd.f32 %v2836, %v2941
    %v3042 = vadd.f32 %v2837, %v2942
    %v3043 = vadd.f32 %v2838, %v2943
    %v3044 = vadd.f32 %v2839, %v2944
    %v3045 = vadd.f32 %v2840, %v2945
    %v3046 = vadd.f32 %v2841, %v2946
    %v3047 = vadd.f32 %v2842, %v2947
    %v3048 = vmax.f32 %v2948, 0.0
    %v3049 = vmax.f32 %v2949, 0.0
    %v3050 = vmax.f32 %v2950, 0.0
    %v3051 = vmax.f32 %v2951, 0.0
    %v3052 = vmax.f32 %v2952, 0.0
    %v3053 = vmax.f32 %v2953, 0.0
    %v3054 = vmax.f32 %v2954, 0.0
    %v3055 = vmax.f32 %v2955, 0.0
    %v3056 = vmax.f32 %v2956, 0.0
    %v3057 = vmax.f32 %v2957, 0.0
    %v3058 = vmax.f32 %v2958, 0.0
    %v3059 = vmax.f32 %v2959, 0.0
    %v3060 = vmax.f32 %v2960, 0.0
    %v3061 = vmax.f32 %v2961, 0.0
    %v3062 = vmax.f32 %v2962, 0.0
    %v3063 = vmax.f32 %v2963, 0.0
    %v3064 = vmax.f32 %v2964, 0.0
    %v3065 = vmax.f32 %v2965, 0.0
    %v3066 = vmax.f32 %v2966, 0.0
    %v3067 = vmax.f32 %v2967, 0.0
    %v3068 = vmax.f32 %v2968, 0.0
    %v3069 = vmax.f32 %v2969, 0.0
    %v3070 = vmax.f32 %v2970, 0.0
    %v3071 = vmax.f32 %v2971, 0.0
    %v3072 = vmax.f32 %v2972, 0.0
    %v3073 = vmax.f32 %v2973, 0.0
    %v3074 = vmax.f32 %v2974, 0.0
    %v3075 = vmax.f32 %v2975, 0.0
    %v3076 = vmax.f32 %v2976, 0.0
    %v3077 = vmax.f32 %v2977, 0.0
    %v3078 = vmax.f32 %v2978, 0.0
    %v3079 = vmax.f32 %v2979, 0.0
    %v3080 = vmax.f32 %v2980, 0.0
    %v3081 = vmax.f32 %v2981, 0.0
    %v3082 = vmax.f32 %v2982, 0.0
    %v3083 = vmax.f32 %v2983, 0.0
    %v3084 = vmax.f32 %v2984, 0.0
    %v3085 = vmax.f32 %v2985, 0.0
    %v3086 = vmax.f32 %v2986, 0.0
    %v3087 = vmax.f32 %v2987, 0.0
    %v3088 = vmax.f32 %v2988, 0.0
    %v3089 = vmax.f32 %v2989, 0.0
    %v3090 = vmax.f32 %v2990, 0.0
    %v3091 = vmax.f32 %v2991, 0.0
    %v3092 = vmax.f32 %v2992, 0.0
    %v3093 = vmax.f32 %v2993, 0.0
    %v3094 = vmax.f32 %v2994, 0.0
    %v3095 = vmax.f32 %v2995, 0.0
    %v3096 = vmax.f32 %v2996, 0.0
    %v3097 = vmax.f32 %v2997, 0.0
    %v3098 = vmax.f32 %v2998, 0.0
    %v3099 = vmax.f32 %v2999, 0.0
    %v3100 = vmax.f32 %v3000, 0.0
    %v3101 = vmax.f32 %v3001, 0.0
    %v3102 = vmax.f32 %v3002, 0.0
    %v3103 = vmax.f32 %v3003, 0.0
    %v3104 = vmax.f32 %v3004, 0.0
    %v3105 = vmax.f32 %v3005, 0.0
    %v3106 = vmax.f32 %v3006, 0.0
    %v3107 = vmax.f32 %v3007, 0.0
    %v3108 = vmax.f32 %v3008, 0.0
    %v3109 = vmax.f32 %v3009, 0.0
    %v3110 = vmax.f32 %v3010, 0.0
    %v3111 = vmax.f32 %v3011, 0.0
    %v3112 = vmax.f32 %v3012, 0.0
    %v3113 = vmax.f32 %v3013, 0.0
    %v3114 = vmax.f32 %v3014, 0.0
    %v3115 = vmax.f32 %v3015, 0.0
    %v3116 = vmax.f32 %v3016, 0.0
    %v3117 = vmax.f32 %v3017, 0.0
    %v3118 = vmax.f32 %v3018, 0.0
    %v3119 = vmax.f32 %v3019, 0.0
    %v3120 = vmax.f32 %v3020, 0.0
    %v3121 = vmax.f32 %v3021, 0.0
    %v3122 = vmax.f32 %v3022, 0.0
    %v3123 = vmax.f32 %v3023, 0.0
    %v3124 = vmax.f32 %v3024, 0.0
    %v3125 = vmax.f32 %v3025, 0.0
    %v3126 = vmax.f32 %v3026, 0.0
    %v3127 = vmax.f32 %v3027, 0.0
    %v3128 = vmax.f32 %v3028, 0.0
    %v3129 = vmax.f32 %v3029, 0.0
    %v3130 = vmax.f32 %v3030, 0.0
    %v3131 = vmax.f32 %v3031, 0.0
    %v3132 = vmax.f32 %v3032, 0.0
    %v3133 = vmax.f32 %v3033, 0.0
    %v3134 = vmax.f32 %v3034, 0.0
    %v3135 = vmax.f32 %v3035, 0.0
    %v3136 = vmax.f32 %v3036, 0.0
    %v3137 = vmax.f32 %v3037, 0.0
    %v3138 = vmax.f32 %v3038, 0.0
    %v3139 = vmax.f32 %v3039, 0.0
    %v3140 = vmax.f32 %v3040, 0.0
    %v3141 = vmax.f32 %v3041, 0.0
    %v3142 = vmax.f32 %v3042, 0.0
    %v3143 = vmax.f32 %v3043, 0.0
    %v3144 = vmax.f32 %v3044, 0.0
    %v3145 = vmax.f32 %v3045, 0.0
    %v3146 = vmax.f32 %v3046, 0.0
    %v3147 = vmax.f32 %v3047, 0.0
    %vm3248 = vcmask 1040384
    %v3249 = vrot.slane %v998, 7
    %v3250 = vrot.slane %v999, 7
    %v3251 = vrot.slane %v1000, 7
    %v3252 = vrot.slane %v1001, 7
    %v3253 = vrot.slane %v1002, 7
    %v3254 = vrot.slane %v1003, 7
    %v3255 = vrot.slane %v1004, 7
    %v3256 = vrot.slane %v1005, 7
    %v3257 = vrot.slane %v1006, 7
    %v3258 = vrot.slane %v1007, 7
    %v3259 = vrot.slane %v1008, 7
    %v3260 = vrot.slane %v1009, 7
    %v3261 = vrot.slane %v1010, 7
    %v3262 = vrot.slane %v1011, 7
    %v3263 = vrot.slane %v1012, 7
    %v3264 = vrot.slane %v1013, 7
    %v3265 = vrot.slane %v1014, 7
    %v3266 = vrot.slane %v1015, 7
    %v3267 = vrot.slane %v1016, 7
    %v3268 = vrot.slane %v1017, 7
    %v3269 = vrot.slane %v1018, 7
    %v3270 = vrot.slane %v1019, 7
    %v3271 = vrot.slane %v1020, 7
    %v3272 = vrot.slane %v1021, 7
    %v3273 = vrot.slane %v1022, 7
    %v3274 = vrot.slane %v1023, 7
    %v3275 = vrot.slane %v1024, 7
    %v3276 = vrot.slane %v1025, 7
    %v3277 = vrot.slane %v1026, 7
    %v3278 = vrot.slane %v1027, 7
    %v3279 = vrot.slane %v1028, 7
    %v3280 = vrot.slane %v1029, 7
    %v3281 = vrot.slane %v1030, 7
    %v3282 = vrot.slane %v1031, 7
    %v3283 = vrot.slane %v1032, 7
    %v3284 = vrot.slane %v1033, 7
    %v3285 = vrot.slane %v1034, 7
    %v3286 = vrot.slane %v1035, 7
    %v3287 = vrot.slane %v1036, 7
    %v3288 = vrot.slane %v1037, 7
    %v3289 = vrot.slane %v1038, 7
    %v3290 = vrot.slane %v1039, 7
    %v3291 = vrot.slane %v1040, 7
    %v3292 = vrot.slane %v1041, 7
    %v3293 = vrot.slane %v1042, 7
    %v3294 = vrot.slane %v1043, 7
    %v3295 = vrot.slane %v1044, 7
    %v3296 = vrot.slane %v1045, 7
    %v3297 = vrot.slane %v1046, 7
    %v3298 = vrot.slane %v1047, 7
    %v3299 = vrot.slane %v1048, 7
    %v3300 = vsel %vm3248, %v3249, %v3299
    %v3301 = vrot.slane %v1049, 7
    %v3302 = vsel %vm3248, %v3250, %v3301
    %v3303 = vrot.slane %v1050, 7
    %v3304 = vsel %vm3248, %v3251, %v3303
    %v3305 = vrot.slane %v1051, 7
    %v3306 = vsel %vm3248, %v3252, %v3305
    %v3307 = vrot.slane %v1052, 7
    %v3308 = vsel %vm3248, %v3253, %v3307
    %v3309 = vrot.slane %v1053, 7
    %v3310 = vsel %vm3248, %v3254, %v3309
    %v3311 = vrot.slane %v1054, 7
    %v3312 = vsel %vm3248, %v3255, %v3311
    %v3313 = vrot.slane %v1055, 7
    %v3314 = vsel %vm3248, %v3256, %v3313
    %v3315 = vrot.slane %v1056, 7
    %v3316 = vsel %vm3248, %v3257, %v3315
    %v3317 = vrot.slane %v1057, 7
    %v3318 = vsel %vm3248, %v3258, %v3317
    %v3319 = vrot.slane %v1058, 7
    %v3320 = vsel %vm3248, %v3259, %v3319
    %v3321 = vrot.slane %v1059, 7
    %v3322 = vsel %vm3248, %v3260, %v3321
    %v3323 = vrot.slane %v1060, 7
    %v3324 = vsel %vm3248, %v3261, %v3323
    %v3325 = vrot.slane %v1061, 7
    %v3326 = vsel %vm3248, %v3262, %v3325
    %v3327 = vrot.slane %v1062, 7
    %v3328 = vsel %vm3248, %v3263, %v3327
    %v3329 = vrot.slane %v1063, 7
    %v3330 = vsel %vm3248, %v3264, %v3329
    %v3331 = vrot.slane %v1064, 7
    %v3332 = vsel %vm3248, %v3265, %v3331
    %v3333 = vrot.slane %v1065, 7
    %v3334 = vsel %vm3248, %v3266, %v3333
    %v3335 = vrot.slane %v1066, 7
    %v3336 = vsel %vm3248, %v3267, %v3335
    %v3337 = vrot.slane %v1067, 7
    %v3338 = vsel %vm3248, %v3268, %v3337
    %v3339 = vrot.slane %v1068, 7
    %v3340 = vsel %vm3248, %v3269, %v3339
    %v3341 = vrot.slane %v1069, 7
    %v3342 = vsel %vm3248, %v3270, %v3341
    %v3343 = vrot.slane %v1070, 7
    %v3344 = vsel %vm3248, %v3271, %v3343
    %v3345 = vrot.slane %v1071, 7
    %v3346 = vsel %vm3248, %v3272, %v3345
    %v3347 = vrot.slane %v1072, 7
    %v3348 = vsel %vm3248, %v3273, %v3347
    %v3349 = vrot.slane %v1073, 7
    %v3350 = vsel %vm3248, %v3274, %v3349
    %v3351 = vrot.slane %v1074, 7
    %v3352 = vsel %vm3248, %v3275, %v3351
    %v3353 = vrot.slane %v1075, 7
    %v3354 = vsel %vm3248, %v3276, %v3353
    %v3355 = vrot.slane %v1076, 7
    %v3356 = vsel %vm3248, %v3277, %v3355
    %v3357 = vrot.slane %v1077, 7
    %v3358 = vsel %vm3248, %v3278, %v3357
    %v3359 = vrot.slane %v1078, 7
    %v3360 = vsel %vm3248, %v3279, %v3359
    %v3361 = vrot.slane %v1079, 7
    %v3362 = vsel %vm3248, %v3280, %v3361
    %v3363 = vrot.slane %v1080, 7
    %v3364 = vsel %vm3248, %v3281, %v3363
    %v3365 = vrot.slane %v1081, 7
    %v3366 = vsel %vm3248, %v3282, %v3365
    %v3367 = vrot.slane %v1082, 7
    %v3368 = vsel %vm3248, %v3283, %v3367
    %v3369 = vrot.slane %v1083, 7
    %v3370 = vsel %vm3248, %v3284, %v3369
    %v3371 = vrot.slane %v1084, 7
    %v3372 = vsel %vm3248, %v3285, %v3371
    %v3373 = vrot.slane %v1085, 7
    %v3374 = vsel %vm3248, %v3286, %v3373
    %v3375 = vrot.slane %v1086, 7
    %v3376 = vsel %vm3248, %v3287, %v3375
    %v3377 = vrot.slane %v1087, 7
    %v3378 = vsel %vm3248, %v3288, %v3377
    %v3379 = vrot.slane %v1088, 7
    %v3380 = vsel %vm3248, %v3289, %v3379
    %v3381 = vrot.slane %v1089, 7
    %v3382 = vsel %vm3248, %v3290, %v3381
    %v3383 = vrot.slane %v1090, 7
    %v3384 = vsel %vm3248, %v3291, %v3383
    %v3385 = vrot.slane %v1091, 7
    %v3386 = vsel %vm3248, %v3292, %v3385
    %v3387 = vrot.slane %v1092, 7
    %v3388 = vsel %vm3248, %v3293, %v3387
    %v3389 = vrot.slane %v1093, 7
    %v3390 = vsel %vm3248, %v3294, %v3389
    %v3391 = vrot.slane %v1094, 7
    %v3392 = vsel %vm3248, %v3295, %v3391
    %v3393 = vrot.slane %v1095, 7
    %v3394 = vsel %vm3248, %v3296, %v3393
    %v3395 = vrot.slane %v1096, 7
    %v3396 = vsel %vm3248, %v3297, %v3395
    %v3397 = vrot.slane %v1097, 7
    %v3398 = vsel %vm3248, %v3298, %v3397
    %vm3599 = vcmask 1041408
    %v3600 = vrot.slane %v1408, 6
    %v3601 = vrot.slane %v1409, 6
    %v3602 = vrot.slane %v1410, 6
    %v3603 = vrot.slane %v1411, 6
    %v3604 = vrot.slane %v1412, 6
    %v3605 = vrot.slane %v1413, 6
    %v3606 = vrot.slane %v1414, 6
    %v3607 = vrot.slane %v1415, 6
    %v3608 = vrot.slane %v1416, 6
    %v3609 = vrot.slane %v1417, 6
    %v3610 = vrot.slane %v1418, 6
    %v3611 = vrot.slane %v1419, 6
    %v3612 = vrot.slane %v1420, 6
    %v3613 = vrot.slane %v1421, 6
    %v3614 = vrot.slane %v1422, 6
    %v3615 = vrot.slane %v1423, 6
    %v3616 = vrot.slane %v1424, 6
    %v3617 = vrot.slane %v1425, 6
    %v3618 = vrot.slane %v1426, 6
    %v3619 = vrot.slane %v1427, 6
    %v3620 = vrot.slane %v1428, 6
    %v3621 = vrot.slane %v1429, 6
    %v3622 = vrot.slane %v1430, 6
    %v3623 = vrot.slane %v1431, 6
    %v3624 = vrot.slane %v1432, 6
    %v3625 = vrot.slane %v1433, 6
    %v3626 = vrot.slane %v1434, 6
    %v3627 = vrot.slane %v1435, 6
    %v3628 = vrot.slane %v1436, 6
    %v3629 = vrot.slane %v1437, 6
    %v3630 = vrot.slane %v1438, 6
    %v3631 = vrot.slane %v1439, 6
    %v3632 = vrot.slane %v1440, 6
    %v3633 = vrot.slane %v1441, 6
    %v3634 = vrot.slane %v1442, 6
    %v3635 = vrot.slane %v1443, 6
    %v3636 = vrot.slane %v1444, 6
    %v3637 = vrot.slane %v1445, 6
    %v3638 = vrot.slane %v1446, 6
    %v3639 = vrot.slane %v1447, 6
    %v3640 = vrot.slane %v1448, 6
    %v3641 = vrot.slane %v1449, 6
    %v3642 = vrot.slane %v1450, 6
    %v3643 = vrot.slane %v1451, 6
    %v3644 = vrot.slane %v1452, 6
    %v3645 = vrot.slane %v1453, 6
    %v3646 = vrot.slane %v1454, 6
    %v3647 = vrot.slane %v1455, 6
    %v3648 = vrot.slane %v1456, 6
    %v3649 = vrot.slane %v1457, 6
    %v3650 = vrot.slane %v1458, 6
    %v3651 = vsel %vm3599, %v3600, %v3650
    %v3652 = vrot.slane %v1459, 6
    %v3653 = vsel %vm3599, %v3601, %v3652
    %v3654 = vrot.slane %v1460, 6
    %v3655 = vsel %vm3599, %v3602, %v3654
    %v3656 = vrot.slane %v1461, 6
    %v3657 = vsel %vm3599, %v3603, %v3656
    %v3658 = vrot.slane %v1462, 6
    %v3659 = vsel %vm3599, %v3604, %v3658
    %v3660 = vrot.slane %v1463, 6
    %v3661 = vsel %vm3599, %v3605, %v3660
    %v3662 = vrot.slane %v1464, 6
    %v3663 = vsel %vm3599, %v3606, %v3662
    %v3664 = vrot.slane %v1465, 6
    %v3665 = vsel %vm3599, %v3607, %v3664
    %v3666 = vrot.slane %v1466, 6
    %v3667 = vsel %vm3599, %v3608, %v3666
    %v3668 = vrot.slane %v1467, 6
    %v3669 = vsel %vm3599, %v3609, %v3668
    %v3670 = vrot.slane %v1468, 6
    %v3671 = vsel %vm3599, %v3610, %v3670
    %v3672 = vrot.slane %v1469, 6
    %v3673 = vsel %vm3599, %v3611, %v3672
    %v3674 = vrot.slane %v1470, 6
    %v3675 = vsel %vm3599, %v3612, %v3674
    %v3676 = vrot.slane %v1471, 6
    %v3677 = vsel %vm3599, %v3613, %v3676
    %v3678 = vrot.slane %v1472, 6
    %v3679 = vsel %vm3599, %v3614, %v3678
    %v3680 = vrot.slane %v1473, 6
    %v3681 = vsel %vm3599, %v3615, %v3680
    %v3682 = vrot.slane %v1474, 6
    %v3683 = vsel %vm3599, %v3616, %v3682
    %v3684 = vrot.slane %v1475, 6
    %v3685 = vsel %vm3599, %v3617, %v3684
    %v3686 = vrot.slane %v1476, 6
    %v3687 = vsel %vm3599, %v3618, %v3686
    %v3688 = vrot.slane %v1477, 6
    %v3689 = vsel %vm3599, %v3619, %v3688
    %v3690 = vrot.slane %v1478, 6
    %v3691 = vsel %vm3599, %v3620, %v3690
    %v3692 = vrot.slane %v1479, 6
    %v3693 = vsel %vm3599, %v3621, %v3692
    %v3694 = vrot.slane %v1480, 6
    %v3695 = vsel %vm3599, %v3622, %v3694
    %v3696 = vrot.slane %v1481, 6
    %v3697 = vsel %vm3599, %v3623, %v3696
    %v3698 = vrot.slane %v1482, 6
    %v3699 = vsel %vm3599, %v3624, %v3698
    %v3700 = vrot.slane %v1483, 6
    %v3701 = vsel %vm3599, %v3625, %v3700
    %v3702 = vrot.slane %v1484, 6
    %v3703 = vsel %vm3599, %v3626, %v3702
    %v3704 = vrot.slane %v1485, 6
    %v3705 = vsel %vm3599, %v3627, %v3704
    %v3706 = vrot.slane %v1486, 6
    %v3707 = vsel %vm3599, %v3628, %v3706
    %v3708 = vrot.slane %v1487, 6
    %v3709 = vsel %vm3599, %v3629, %v3708
    %v3710 = vrot.slane %v1488, 6
    %v3711 = vsel %vm3599, %v3630, %v3710
    %v3712 = vrot.slane %v1489, 6
    %v3713 = vsel %vm3599, %v3631, %v3712
    %v3714 = vrot.slane %v1490, 6
    %v3715 = vsel %vm3599, %v3632, %v3714
    %v3716 = vrot.slane %v1491, 6
    %v3717 = vsel %vm3599, %v3633, %v3716
    %v3718 = vrot.slane %v1492, 6
    %v3719 = vsel %vm3599, %v3634, %v3718
    %v3720 = vrot.slane %v1493, 6
    %v3721 = vsel %vm3599, %v3635, %v3720
    %v3722 = vrot.slane %v1494, 6
    %v3723 = vsel %vm3599, %v3636, %v3722
    %v3724 = vrot.slane %v1495, 6
    %v3725 = vsel %vm3599, %v3637, %v3724
    %v3726 = vrot.slane %v1496, 6
    %v3727 = vsel %vm3599, %v3638, %v3726
    %v3728 = vrot.slane %v1497, 6
    %v3729 = vsel %vm3599, %v3639, %v3728
    %v3730 = vrot.slane %v1498, 6
    %v3731 = vsel %vm3599, %v3640, %v3730
    %v3732 = vrot.slane %v1499, 6
    %v3733 = vsel %vm3599, %v3641, %v3732
    %v3734 = vrot.slane %v1500, 6
    %v3735 = vsel %vm3599, %v3642, %v3734
    %v3736 = vrot.slane %v1501, 6
    %v3737 = vsel %vm3599, %v3643, %v3736
    %v3738 = vrot.slane %v1502, 6
    %v3739 = vsel %vm3599, %v3644, %v3738
    %v3740 = vrot.slane %v1503, 6
    %v3741 = vsel %vm3599, %v3645, %v3740
    %v3742 = vrot.slane %v1504, 6
    %v3743 = vsel %vm3599, %v3646, %v3742
    %v3744 = vrot.slane %v1505, 6
    %v3745 = vsel %vm3599, %v3647, %v3744
    %v3746 = vrot.slane %v1506, 6
    %v3747 = vsel %vm3599, %v3648, %v3746
    %v3748 = vrot.slane %v1507, 6
    %v3749 = vsel %vm3599, %v3649, %v3748
    %vm3950 = vcmask 1042432
    %v3951 = vrot.slane %v1818, 5
    %v3952 = vrot.slane %v1819, 5
    %v3953 = vrot.slane %v1820, 5
    %v3954 = vrot.slane %v1821, 5
    %v3955 = vrot.slane %v1822, 5
    %v3956 = vrot.slane %v1823, 5
    %v3957 = vrot.slane %v1824, 5
    %v3958 = vrot.slane %v1825, 5
    %v3959 = vrot.slane %v1826, 5
    %v3960 = vrot.slane %v1827, 5
    %v3961 = vrot.slane %v1828, 5
    %v3962 = vrot.slane %v1829, 5
    %v3963 = vrot.slane %v1830, 5
    %v3964 = vrot.slane %v1831, 5
    %v3965 = vrot.slane %v1832, 5
    %v3966 = vrot.slane %v1833, 5
    %v3967 = vrot.slane %v1834, 5
    %v3968 = vrot.slane %v1835, 5
    %v3969 = vrot.slane %v1836, 5
    %v3970 = vrot.slane %v1837, 5
    %v3971 = vrot.slane %v1838, 5
    %v3972 = vrot.slane %v1839, 5
    %v3973 = vrot.slane %v1840, 5
    %v3974 = vrot.slane %v1841, 5
    %v3975 = vrot.slane %v1842, 5
    %v3976 = vrot.slane %v1843, 5
    %v3977 = vrot.slane %v1844, 5
    %v3978 = vrot.slane %v1845, 5
    %v3979 = vrot.slane %v1846, 5
    %v3980 = vrot.slane %v1847, 5
    %v3981 = vrot.slane %v1848, 5
    %v3982 = vrot.slane %v1849, 5
    %v3983 = vrot.slane %v1850, 5
    %v3984 = vrot.slane %v1851, 5
    %v3985 = vrot.slane %v1852, 5
    %v3986 = vrot.slane %v1853, 5
    %v3987 = vrot.slane %v1854, 5
    %v3988 = vrot.slane %v1855, 5
    %v3989 = vrot.slane %v1856, 5
    %v3990 = vrot.slane %v1857, 5
    %v3991 = vrot.slane %v1858, 5
    %v3992 = vrot.slane %v1859, 5
    %v3993 = vrot.slane %v1860, 5
    %v3994 = vrot.slane %v1861, 5
    %v3995 = vrot.slane %v1862, 5
    %v3996 = vrot.slane %v1863, 5
    %v3997 = vrot.slane %v1864, 5
    %v3998 = vrot.slane %v1865, 5
    %v3999 = vrot.slane %v1866, 5
    %v4000 = vrot.slane %v1867, 5
    %v4001 = vrot.slane %v1868, 5
    %v4002 = vsel %vm3950, %v3951, %v4001
    %v4003 = vrot.slane %v1869, 5
    %v4004 = vsel %vm3950, %v3952, %v4003
    %v4005 = vrot.slane %v1870, 5
    %v4006 = vsel %vm3950, %v3953, %v4005
    %v4007 = vrot.slane %v1871, 5
    %v4008 = vsel %vm3950, %v3954, %v4007
    %v4009 = vrot.slane %v1872, 5
    %v4010 = vsel %vm3950, %v3955, %v4009
    %v4011 = vrot.slane %v1873, 5
    %v4012 = vsel %vm3950, %v3956, %v4011
    %v4013 = vrot.slane %v1874, 5
    %v4014 = vsel %vm3950, %v3957, %v4013
    %v4015 = vrot.slane %v1875, 5
    %v4016 = vsel %vm3950, %v3958, %v4015
    %v4017 = vrot.slane %v1876, 5
    %v4018 = vsel %vm3950, %v3959, %v4017
    %v4019 = vrot.slane %v1877, 5
    %v4020 = vsel %vm3950, %v3960, %v4019
    %v4021 = vrot.slane %v1878, 5
    %v4022 = vsel %vm3950, %v3961, %v4021
    %v4023 = vrot.slane %v1879, 5
    %v4024 = vsel %vm3950, %v3962, %v4023
    %v4025 = vrot.slane %v1880, 5
    %v4026 = vsel %vm3950, %v3963, %v4025
    %v4027 = vrot.slane %v1881, 5
    %v4028 = vsel %vm3950, %v3964, %v4027
    %v4029 = vrot.slane %v1882, 5
    %v4030 = vsel %vm3950, %v3965, %v4029
    %v4031 = vrot.slane %v1883, 5
    %v4032 = vsel %vm3950, %v3966, %v4031
    %v4033 = vrot.slane %v1884, 5
    %v4034 = vsel %vm3950, %v3967, %v4033
    %v4035 = vrot.slane %v1885, 5
    %v4036 = vsel %vm3950, %v3968, %v4035
    %v4037 = vrot.slane %v1886, 5
    %v4038 = vsel %vm3950, %v3969, %v4037
    %v4039 = vrot.slane %v1887, 5
    %v4040 = vsel %vm3950, %v3970, %v4039
    %v4041 = vrot.slane %v1888, 5
    %v4042 = vsel %vm3950, %v3971, %v4041
    %v4043 = vrot.slane %v1889, 5
    %v4044 = vsel %vm3950, %v3972, %v4043
    %v4045 = vrot.slane %v1890, 5
    %v4046 = vsel %vm3950, %v3973, %v4045
    %v4047 = vrot.slane %v1891, 5
    %v4048 = vsel %vm3950, %v3974, %v4047
    %v4049 = vrot.slane %v1892, 5
    %v4050 = vsel %vm3950, %v3975, %v4049
    %v4051 = vrot.slane %v1893, 5
    %v4052 = vsel %vm3950, %v3976, %v4051
    %v4053 = vrot.slane %v1894, 5
    %v4054 = vsel %vm3950, %v3977, %v4053
    %v4055 = vrot.slane %v1895, 5
    %v4056 = vsel %vm3950, %v3978, %v4055
    %v4057 = vrot.slane %v1896, 5
    %v4058 = vsel %vm3950, %v3979, %v4057
    %v4059 = vrot.slane %v1897, 5
    %v4060 = vsel %vm3950, %v3980, %v4059
    %v4061 = vrot.slane %v1898, 5
    %v4062 = vsel %vm3950, %v3981, %v4061
    %v4063 = vrot.slane %v1899, 5
    %v4064 = vsel %vm3950, %v3982, %v4063
    %v4065 = vrot.slane %v1900, 5
    %v4066 = vsel %vm3950, %v3983, %v4065
    %v4067 = vrot.slane %v1901, 5
    %v4068 = vsel %vm3950, %v3984, %v4067
    %v4069 = vrot.slane %v1902, 5
    %v4070 = vsel %vm3950, %v3985, %v4069
    %v4071 = vrot.slane %v1903, 5
    %v4072 = vsel %vm3950, %v3986, %v4071
    %v4073 = vrot.slane %v1904, 5
    %v4074 = vsel %vm3950, %v3987, %v4073
    %v4075 = vrot.slane %v1905, 5
    %v4076 = vsel %vm3950, %v3988, %v4075
    %v4077 = vrot.slane %v1906, 5
    %v4078 = vsel %vm3950, %v3989, %v4077
    %v4079 = vrot.slane %v1907, 5
    %v4080 = vsel %vm3950, %v3990, %v4079
    %v4081 = vrot.slane %v1908, 5
    %v4082 = vsel %vm3950, %v3991, %v4081
    %v4083 = vrot.slane %v1909, 5
    %v4084 = vsel %vm3950, %v3992, %v4083
    %v4085 = vrot.slane %v1910, 5
    %v4086 = vsel %vm3950, %v3993, %v4085
    %v4087 = vrot.slane %v1911, 5
    %v4088 = vsel %vm3950, %v3994, %v4087
    %v4089 = vrot.slane %v1912, 5
    %v4090 = vsel %vm3950, %v3995, %v4089
    %v4091 = vrot.slane %v1913, 5
    %v4092 = vsel %vm3950, %v3996, %v4091
    %v4093 = vrot.slane %v1914, 5
    %v4094 = vsel %vm3950, %v3997, %v4093
    %v4095 = vrot.slane %v1915, 5
    %v4096 = vsel %vm3950, %v3998, %v4095
    %v4097 = vrot.slane %v1916, 5
    %v4098 = vsel %vm3950, %v3999, %v4097
    %v4099 = vrot.slane %v1917, 5
    %v4100 = vsel %vm3950, %v4000, %v4099
    %vm4301 = vcmask 1043456
    %v4302 = vrot.slane %v2228, 4
    %v4303 = vrot.slane %v2229, 4
    %v4304 = vrot.slane %v2230, 4
    %v4305 = vrot.slane %v2231, 4
    %v4306 = vrot.slane %v2232, 4
    %v4307 = vrot.slane %v2233, 4
    %v4308 = vrot.slane %v2234, 4
    %v4309 = vrot.slane %v2235, 4
    %v4310 = vrot.slane %v2236, 4
    %v4311 = vrot.slane %v2237, 4
    %v4312 = vrot.slane %v2238, 4
    %v4313 = vrot.slane %v2239, 4
    %v4314 = vrot.slane %v2240, 4
    %v4315 = vrot.slane %v2241, 4
    %v4316 = vrot.slane %v2242, 4
    %v4317 = vrot.slane %v2243, 4
    %v4318 = vrot.slane %v2244, 4
    %v4319 = vrot.slane %v2245, 4
    %v4320 = vrot.slane %v2246, 4
    %v4321 = vrot.slane %v2247, 4
    %v4322 = vrot.slane %v2248, 4
    %v4323 = vrot.slane %v2249, 4
    %v4324 = vrot.slane %v2250, 4
    %v4325 = vrot.slane %v2251, 4
    %v4326 = vrot.slane %v2252, 4
    %v4327 = vrot.slane %v2253, 4
    %v4328 = vrot.slane %v2254, 4
    %v4329 = vrot.slane %v2255, 4
    %v4330 = vrot.slane %v2256, 4
    %v4331 = vrot.slane %v2257, 4
    %v4332 = vrot.slane %v2258, 4
    %v4333 = vrot.slane %v2259, 4
    %v4334 = vrot.slane %v2260, 4
    %v4335 = vrot.slane %v2261, 4
    %v4336 = vrot.slane %v2262, 4
    %v4337 = vrot.slane %v2263, 4
    %v4338 = vrot.slane %v2264, 4
    %v4339 = vrot.slane %v2265, 4
    %v4340 = vrot.slane %v2266, 4
    %v4341 = vrot.slane %v2267, 4
    %v4342 = vrot.slane %v2268, 4
    %v4343 = vrot.slane %v2269, 4
    %v4344 = vrot.slane %v2270, 4
    %v4345 = vrot.slane %v2271, 4
    %v4346 = vrot.slane %v2272, 4
    %v4347 = vrot.slane %v2273, 4
    %v4348 = vrot.slane %v2274, 4
    %v4349 = vrot.slane %v2275, 4
    %v4350 = vrot.slane %v2276, 4
    %v4351 = vrot.slane %v2277, 4
    %v4352 = vrot.slane %v2278, 4
    %v4353 = vsel %vm4301, %v4302, %v4352
    %v4354 = vrot.slane %v2279, 4
    %v4355 = vsel %vm4301, %v4303, %v4354
    %v4356 = vrot.slane %v2280, 4
    %v4357 = vsel %vm4301, %v4304, %v4356
    %v4358 = vrot.slane %v2281, 4
    %v4359 = vsel %vm4301, %v4305, %v4358
    %v4360 = vrot.slane %v2282, 4
    %v4361 = vsel %vm4301, %v4306, %v4360
    %v4362 = vrot.slane %v2283, 4
    %v4363 = vsel %vm4301, %v4307, %v4362
    %v4364 = vrot.slane %v2284, 4
    %v4365 = vsel %vm4301, %v4308, %v4364
    %v4366 = vrot.slane %v2285, 4
    %v4367 = vsel %vm4301, %v4309, %v4366
    %v4368 = vrot.slane %v2286, 4
    %v4369 = vsel %vm4301, %v4310, %v4368
    %v4370 = vrot.slane %v2287, 4
    %v4371 = vsel %vm4301, %v4311, %v4370
    %v4372 = vrot.slane %v2288, 4
    %v4373 = vsel %vm4301, %v4312, %v4372
    %v4374 = vrot.slane %v2289, 4
    %v4375 = vsel %vm4301, %v4313, %v4374
    %v4376 = vrot.slane %v2290, 4
    %v4377 = vsel %vm4301, %v4314, %v4376
    %v4378 = vrot.slane %v2291, 4
    %v4379 = vsel %vm4301, %v4315, %v4378
    %v4380 = vrot.slane %v2292, 4
    %v4381 = vsel %vm4301, %v4316, %v4380
    %v4382 = vrot.slane %v2293, 4
    %v4383 = vsel %vm4301, %v4317, %v4382
    %v4384 = vrot.slane %v2294, 4
    %v4385 = vsel %vm4301, %v4318, %v4384
    %v4386 = vrot.slane %v2295, 4
    %v4387 = vsel %vm4301, %v4319, %v4386
    %v4388 = vrot.slane %v2296, 4
    %v4389 = vsel %vm4301, %v4320, %v4388
    %v4390 = vrot.slane %v2297, 4
    %v4391 = vsel %vm4301, %v4321, %v4390
    %v4392 = vrot.slane %v2298, 4
    %v4393 = vsel %vm4301, %v4322, %v4392
    %v4394 = vrot.slane %v2299, 4
    %v4395 = vsel %vm4301, %v4323, %v4394
    %v4396 = vrot.slane %v2300, 4
    %v4397 = vsel %vm4301, %v4324, %v4396
    %v4398 = vrot.slane %v2301, 4
    %v4399 = vsel %vm4301, %v4325, %v4398
    %v4400 = vrot.slane %v2302, 4
    %v4401 = vsel %vm4301, %v4326, %v4400
    %v4402 = vrot.slane %v2303, 4
    %v4403 = vsel %vm4301, %v4327, %v4402
    %v4404 = vrot.slane %v2304, 4
    %v4405 = vsel %vm4301, %v4328, %v4404
    %v4406 = vrot.slane %v2305, 4
    %v4407 = vsel %vm4301, %v4329, %v4406
    %v4408 = vrot.slane %v2306, 4
    %v4409 = vsel %vm4301, %v4330, %v4408
    %v4410 = vrot.slane %v2307, 4
    %v4411 = vsel %vm4301, %v4331, %v4410
    %v4412 = vrot.slane %v2308, 4
    %v4413 = vsel %vm4301, %v4332, %v4412
    %v4414 = vrot.slane %v2309, 4
    %v4415 = vsel %vm4301, %v4333, %v4414
    %v4416 = vrot.slane %v2310, 4
    %v4417 = vsel %vm4301, %v4334, %v4416
    %v4418 = vrot.slane %v2311, 4
    %v4419 = vsel %vm4301, %v4335, %v4418
    %v4420 = vrot.slane %v2312, 4
    %v4421 = vsel %vm4301, %v4336, %v4420
    %v4422 = vrot.slane %v2313, 4
    %v4423 = vsel %vm4301, %v4337, %v4422
    %v4424 = vrot.slane %v2314, 4
    %v4425 = vsel %vm4301, %v4338, %v4424
    %v4426 = vrot.slane %v2315, 4
    %v4427 = vsel %vm4301, %v4339, %v4426
    %v4428 = vrot.slane %v2316, 4
    %v4429 = vsel %vm4301, %v4340, %v4428
    %v4430 = vrot.slane %v2317, 4
    %v4431 = vsel %vm4301, %v4341, %v4430
    %v4432 = vrot.slane %v2318, 4
    %v4433 = vsel %vm4301, %v4342, %v4432
    %v4434 = vrot.slane %v2319, 4
    %v4435 = vsel %vm4301, %v4343, %v4434
    %v4436 = vrot.slane %v2320, 4
    %v4437 = vsel %vm4301, %v4344, %v4436
    %v4438 = vrot.slane %v2321, 4
    %v4439 = vsel %vm4301, %v4345, %v4438
    %v4440 = vrot.slane %v2322, 4
    %v4441 = vsel %vm4301, %v4346, %v4440
    %v4442 = vrot.slane %v2323, 4
    %v4443 = vsel %vm4301, %v4347, %v4442
    %v4444 = vrot.slane %v2324, 4
    %v4445 = vsel %vm4301, %v4348, %v4444
    %v4446 = vrot.slane %v2325, 4
    %v4447 = vsel %vm4301, %v4349, %v4446
    %v4448 = vrot.slane %v2326, 4
    %v4449 = vsel %vm4301, %v4350, %v4448
    %v4450 = vrot.slane %v2327, 4
    %v4451 = vsel %vm4301, %v4351, %v4450
    %vm4652 = vcmask 1044480
    %v4653 = vrot.slane %v2638, 3
    %v4654 = vrot.slane %v2639, 3
    %v4655 = vrot.slane %v2640, 3
    %v4656 = vrot.slane %v2641, 3
    %v4657 = vrot.slane %v2642, 3
    %v4658 = vrot.slane %v2643, 3
    %v4659 = vrot.slane %v2644, 3
    %v4660 = vrot.slane %v2645, 3
    %v4661 = vrot.slane %v2646, 3
    %v4662 = vrot.slane %v2647, 3
    %v4663 = vrot.slane %v2648, 3
    %v4664 = vrot.slane %v2649, 3
    %v4665 = vrot.slane %v2650, 3
    %v4666 = vrot.slane %v2651, 3
    %v4667 = vrot.slane %v2652, 3
    %v4668 = vrot.slane %v2653, 3
    %v4669 = vrot.slane %v2654, 3
    %v4670 = vrot.slane %v2655, 3
    %v4671 = vrot.slane %v2656, 3
    %v4672 = vrot.slane %v2657, 3
    %v4673 = vrot.slane %v2658, 3
    %v4674 = vrot.slane %v2659, 3
    %v4675 = vrot.slane %v2660, 3
    %v4676 = vrot.slane %v2661, 3
    %v4677 = vrot.slane %v2662, 3
    %v4678 = vrot.slane %v2663, 3
    %v4679 = vrot.slane %v2664, 3
    %v4680 = vrot.slane %v2665, 3
    %v4681 = vrot.slane %v2666, 3
    %v4682 = vrot.slane %v2667, 3
    %v4683 = vrot.slane %v2668, 3
    %v4684 = vrot.slane %v2669, 3
    %v4685 = vrot.slane %v2670, 3
    %v4686 = vrot.slane %v2671, 3
    %v4687 = vrot.slane %v2672, 3
    %v4688 = vrot.slane %v2673, 3
    %v4689 = vrot.slane %v2674, 3
    %v4690 = vrot.slane %v2675, 3
    %v4691 = vrot.slane %v2676, 3
    %v4692 = vrot.slane %v2677, 3
    %v4693 = vrot.slane %v2678, 3
    %v4694 = vrot.slane %v2679, 3
    %v4695 = vrot.slane %v2680, 3
    %v4696 = vrot.slane %v2681, 3
    %v4697 = vrot.slane %v2682, 3
    %v4698 = vrot.slane %v2683, 3
    %v4699 = vrot.slane %v2684, 3
    %v4700 = vrot.slane %v2685, 3
    %v4701 = vrot.slane %v2686, 3
    %v4702 = vrot.slane %v2687, 3
    %v4703 = vrot.slane %v2688, 3
    %v4704 = vsel %vm4652, %v4653, %v4703
    %v4705 = vrot.slane %v2689, 3
    %v4706 = vsel %vm4652, %v4654, %v4705
    %v4707 = vrot.slane %v2690, 3
    %v4708 = vsel %vm4652, %v4655, %v4707
    %v4709 = vrot.slane %v2691, 3
    %v4710 = vsel %vm4652, %v4656, %v4709
    %v4711 = vrot.slane %v2692, 3
    %v4712 = vsel %vm4652, %v4657, %v4711
    %v4713 = vrot.slane %v2693, 3
    %v4714 = vsel %vm4652, %v4658, %v4713
    %v4715 = vrot.slane %v2694, 3
    %v4716 = vsel %vm4652, %v4659, %v4715
    %v4717 = vrot.slane %v2695, 3
    %v4718 = vsel %vm4652, %v4660, %v4717
    %v4719 = vrot.slane %v2696, 3
    %v4720 = vsel %vm4652, %v4661, %v4719
    %v4721 = vrot.slane %v2697, 3
    %v4722 = vsel %vm4652, %v4662, %v4721
    %v4723 = vrot.slane %v2698, 3
    %v4724 = vsel %vm4652, %v4663, %v4723
    %v4725 = vrot.slane %v2699, 3
    %v4726 = vsel %vm4652, %v4664, %v4725
    %v4727 = vrot.slane %v2700, 3
    %v4728 = vsel %vm4652, %v4665, %v4727
    %v4729 = vrot.slane %v2701, 3
    %v4730 = vsel %vm4652, %v4666, %v4729
    %v4731 = vrot.slane %v2702, 3
    %v4732 = vsel %vm4652, %v4667, %v4731
    %v4733 = vrot.slane %v2703, 3
    %v4734 = vsel %vm4652, %v4668, %v4733
    %v4735 = vrot.slane %v2704, 3
    %v4736 = vsel %vm4652, %v4669, %v4735
    %v4737 = vrot.slane %v2705, 3
    %v4738 = vsel %vm4652, %v4670, %v4737
    %v4739 = vrot.slane %v2706, 3
    %v4740 = vsel %vm4652, %v4671, %v4739
    %v4741 = vrot.slane %v2707, 3
    %v4742 = vsel %vm4652, %v4672, %v4741
    %v4743 = vrot.slane %v2708, 3
    %v4744 = vsel %vm4652, %v4673, %v4743
    %v4745 = vrot.slane %v2709, 3
    %v4746 = vsel %vm4652, %v4674, %v4745
    %v4747 = vrot.slane %v2710, 3
    %v4748 = vsel %vm4652, %v4675, %v4747
    %v4749 = vrot.slane %v2711, 3
    %v4750 = vsel %vm4652, %v4676, %v4749
    %v4751 = vrot.slane %v2712, 3
    %v4752 = vsel %vm4652, %v4677, %v4751
    %v4753 = vrot.slane %v2713, 3
    %v4754 = vsel %vm4652, %v4678, %v4753
    %v4755 = vrot.slane %v2714, 3
    %v4756 = vsel %vm4652, %v4679, %v4755
    %v4757 = vrot.slane %v2715, 3
    %v4758 = vsel %vm4652, %v4680, %v4757
    %v4759 = vrot.slane %v2716, 3
    %v4760 = vsel %vm4652, %v4681, %v4759
    %v4761 = vrot.slane %v2717, 3
    %v4762 = vsel %vm4652, %v4682, %v4761
    %v4763 = vrot.slane %v2718, 3
    %v4764 = vsel %vm4652, %v4683, %v4763
    %v4765 = vrot.slane %v2719, 3
    %v4766 = vsel %vm4652, %v4684, %v4765
    %v4767 = vrot.slane %v2720, 3
    %v4768 = vsel %vm4652, %v4685, %v4767
    %v4769 = vrot.slane %v2721, 3
    %v4770 = vsel %vm4652, %v4686, %v4769
    %v4771 = vrot.slane %v2722, 3
    %v4772 = vsel %vm4652, %v4687, %v4771
    %v4773 = vrot.slane %v2723, 3
    %v4774 = vsel %vm4652, %v4688, %v4773
    %v4775 = vrot.slane %v2724, 3
    %v4776 = vsel %vm4652, %v4689, %v4775
    %v4777 = vrot.slane %v2725, 3
    %v4778 = vsel %vm4652, %v4690, %v4777
    %v4779 = vrot.slane %v2726, 3
    %v4780 = vsel %vm4652, %v4691, %v4779
    %v4781 = vrot.slane %v2727, 3
    %v4782 = vsel %vm4652, %v4692, %v4781
    %v4783 = vrot.slane %v2728, 3
    %v4784 = vsel %vm4652, %v4693, %v4783
    %v4785 = vrot.slane %v2729, 3
    %v4786 = vsel %vm4652, %v4694, %v4785
    %v4787 = vrot.slane %v2730, 3
    %v4788 = vsel %vm4652, %v4695, %v4787
    %v4789 = vrot.slane %v2731, 3
    %v4790 = vsel %vm4652, %v4696, %v4789
    %v4791 = vrot.slane %v2732, 3
    %v4792 = vsel %vm4652, %v4697, %v4791
    %v4793 = vrot.slane %v2733, 3
    %v4794 = vsel %vm4652, %v4698, %v4793
    %v4795 = vrot.slane %v2734, 3
    %v4796 = vsel %vm4652, %v4699, %v4795
    %v4797 = vrot.slane %v2735, 3
    %v4798 = vsel %vm4652, %v4700, %v4797
    %v4799 = vrot.slane %v2736, 3
    %v4800 = vsel %vm4652, %v4701, %v4799
    %v4801 = vrot.slane %v2737, 3
    %v4802 = vsel %vm4652, %v4702, %v4801
    %vm5003 = vcmask 1045504
    %v5004 = vrot.slane %v3048, 2
    %v5005 = vrot.slane %v3049, 2
    %v5006 = vrot.slane %v3050, 2
    %v5007 = vrot.slane %v3051, 2
    %v5008 = vrot.slane %v3052, 2
    %v5009 = vrot.slane %v3053, 2
    %v5010 = vrot.slane %v3054, 2
    %v5011 = vrot.slane %v3055, 2
    %v5012 = vrot.slane %v3056, 2
    %v5013 = vrot.slane %v3057, 2
    %v5014 = vrot.slane %v3058, 2
    %v5015 = vrot.slane %v3059, 2
    %v5016 = vrot.slane %v3060, 2
    %v5017 = vrot.slane %v3061, 2
    %v5018 = vrot.slane %v3062, 2
    %v5019 = vrot.slane %v3063, 2
    %v5020 = vrot.slane %v3064, 2
    %v5021 = vrot.slane %v3065, 2
    %v5022 = vrot.slane %v3066, 2
    %v5023 = vrot.slane %v3067, 2
    %v5024 = vrot.slane %v3068, 2
    %v5025 = vrot.slane %v3069, 2
    %v5026 = vrot.slane %v3070, 2
    %v5027 = vrot.slane %v3071, 2
    %v5028 = vrot.slane %v3072, 2
    %v5029 = vrot.slane %v3073, 2
    %v5030 = vrot.slane %v3074, 2
    %v5031 = vrot.slane %v3075, 2
    %v5032 = vrot.slane %v3076, 2
    %v5033 = vrot.slane %v3077, 2
    %v5034 = vrot.slane %v3078, 2
    %v5035 = vrot.slane %v3079, 2
    %v5036 = vrot.slane %v3080, 2
    %v5037 = vrot.slane %v3081, 2
    %v5038 = vrot.slane %v3082, 2
    %v5039 = vrot.slane %v3083, 2
    %v5040 = vrot.slane %v3084, 2
    %v5041 = vrot.slane %v3085, 2
    %v5042 = vrot.slane %v3086, 2
    %v5043 = vrot.slane %v3087, 2
    %v5044 = vrot.slane %v3088, 2
    %v5045 = vrot.slane %v3089, 2
    %v5046 = vrot.slane %v3090, 2
    %v5047 = vrot.slane %v3091, 2
    %v5048 = vrot.slane %v3092, 2
    %v5049 = vrot.slane %v3093, 2
    %v5050 = vrot.slane %v3094, 2
    %v5051 = vrot.slane %v3095, 2
    %v5052 = vrot.slane %v3096, 2
    %v5053 = vrot.slane %v3097, 2
    %v5054 = vrot.slane %v3098, 2
    %v5055 = vsel %vm5003, %v5004, %v5054
    %v5056 = vrot.slane %v3099, 2
    %v5057 = vsel %vm5003, %v5005, %v5056
    %v5058 = vrot.slane %v3100, 2
    %v5059 = vsel %vm5003, %v5006, %v5058
    %v5060 = vrot.slane %v3101, 2
    %v5061 = vsel %vm5003, %v5007, %v5060
    %v5062 = vrot.slane %v3102, 2
    %v5063 = vsel %vm5003, %v5008, %v5062
    %v5064 = vrot.slane %v3103, 2
    %v5065 = vsel %vm5003, %v5009, %v5064
    %v5066 = vrot.slane %v3104, 2
    %v5067 = vsel %vm5003, %v5010, %v5066
    %v5068 = vrot.slane %v3105, 2
    %v5069 = vsel %vm5003, %v5011, %v5068
    %v5070 = vrot.slane %v3106, 2
    %v5071 = vsel %vm5003, %v5012, %v5070
    %v5072 = vrot.slane %v3107, 2
    %v5073 = vsel %vm5003, %v5013, %v5072
    %v5074 = vrot.slane %v3108, 2
    %v5075 = vsel %vm5003, %v5014, %v5074
    %v5076 = vrot.slane %v3109, 2
    %v5077 = vsel %vm5003, %v5015, %v5076
    %v5078 = vrot.slane %v3110, 2
    %v5079 = vsel %vm5003, %v5016, %v5078
    %v5080 = vrot.slane %v3111, 2
    %v5081 = vsel %vm5003, %v5017, %v5080
    %v5082 = vrot.slane %v3112, 2
    %v5083 = vsel %vm5003, %v5018, %v5082
    %v5084 = vrot.slane %v3113, 2
    %v5085 = vsel %vm5003, %v5019, %v5084
    %v5086 = vrot.slane %v3114, 2
    %v5087 = vsel %vm5003, %v5020, %v5086
    %v5088 = vrot.slane %v3115, 2
    %v5089 = vsel %vm5003, %v5021, %v5088
    %v5090 = vrot.slane %v3116, 2
    %v5091 = vsel %vm5003, %v5022, %v5090
    %v5092 = vrot.slane %v3117, 2
    %v5093 = vsel %vm5003, %v5023, %v5092
    %v5094 = vrot.slane %v3118, 2
    %v5095 = vsel %vm5003, %v5024, %v5094
    %v5096 = vrot.slane %v3119, 2
    %v5097 = vsel %vm5003, %v5025, %v5096
    %v5098 = vrot.slane %v3120, 2
    %v5099 = vsel %vm5003, %v5026, %v5098
    %v5100 = vrot.slane %v3121, 2
    %v5101 = vsel %vm5003, %v5027, %v5100
    %v5102 = vrot.slane %v3122, 2
    %v5103 = vsel %vm5003, %v5028, %v5102
    %v5104 = vrot.slane %v3123, 2
    %v5105 = vsel %vm5003, %v5029, %v5104
    %v5106 = vrot.slane %v3124, 2
    %v5107 = vsel %vm5003, %v5030, %v5106
    %v5108 = vrot.slane %v3125, 2
    %v5109 = vsel %vm5003, %v5031, %v5108
    %v5110 = vrot.slane %v3126, 2
    %v5111 = vsel %vm5003, %v5032, %v5110
    %v5112 = vrot.slane %v3127, 2
    %v5113 = vsel %vm5003, %v5033, %v5112
    %v5114 = vrot.slane %v3128, 2
    %v5115 = vsel %vm5003, %v5034, %v5114
    %v5116 = vrot.slane %v3129, 2
    %v5117 = vsel %vm5003, %v5035, %v5116
    %v5118 = vrot.slane %v3130, 2
    %v5119 = vsel %vm5003, %v5036, %v5118
    %v5120 = vrot.slane %v3131, 2
    %v5121 = vsel %vm5003, %v5037, %v5120
    %v5122 = vrot.slane %v3132, 2
    %v5123 = vsel %vm5003, %v5038, %v5122
    %v5124 = vrot.slane %v3133, 2
    %v5125 = vsel %vm5003, %v5039, %v5124
    %v5126 = vrot.slane %v3134, 2
    %v5127 = vsel %vm5003, %v5040, %v5126
    %v5128 = vrot.slane %v3135, 2
    %v5129 = vsel %vm5003, %v5041, %v5128
    %v5130 = vrot.slane %v3136, 2
    %v5131 = vsel %vm5003, %v5042, %v5130
    %v5132 = vrot.slane %v3137, 2
    %v5133 = vsel %vm5003, %v5043, %v5132
    %v5134 = vrot.slane %v3138, 2
    %v5135 = vsel %vm5003, %v5044, %v5134
    %v5136 = vrot.slane %v3139, 2
    %v5137 = vsel %vm5003, %v5045, %v5136
    %v5138 = vrot.slane %v3140, 2
    %v5139 = vsel %vm5003, %v5046, %v5138
    %v5140 = vrot.slane %v3141, 2
    %v5141 = vsel %vm5003, %v5047, %v5140
    %v5142 = vrot.slane %v3142, 2
    %v5143 = vsel %vm5003, %v5048, %v5142
    %v5144 = vrot.slane %v3143, 2
    %v5145 = vsel %vm5003, %v5049, %v5144
    %v5146 = vrot.slane %v3144, 2
    %v5147 = vsel %vm5003, %v5050, %v5146
    %v5148 = vrot.slane %v3145, 2
    %v5149 = vsel %vm5003, %v5051, %v5148
    %v5150 = vrot.slane %v3146, 2
    %v5151 = vsel %vm5003, %v5052, %v5150
    %v5152 = vrot.slane %v3147, 2
    %v5153 = vsel %vm5003, %v5053, %v5152
    %v5204 = vsel %vm3248, %v638, %v3249
    %v5205 = vsel %vm3248, %v639, %v3250
    %v5206 = vsel %vm3248, %v640, %v3251
    %v5207 = vsel %vm3248, %v641, %v3252
    %v5208 = vsel %vm3248, %v642, %v3253
    %v5209 = vsel %vm3248, %v643, %v3254
    %v5210 = vsel %vm3248, %v644, %v3255
    %v5211 = vsel %vm3248, %v645, %v3256
    %v5212 = vsel %vm3248, %v646, %v3257
    %v5213 = vsel %vm3248, %v647, %v3258
    %v5214 = vsel %vm3248, %v648, %v3259
    %v5215 = vsel %vm3248, %v649, %v3260
    %v5216 = vsel %vm3248, %v650, %v3261
    %v5217 = vsel %vm3248, %v651, %v3262
    %v5218 = vsel %vm3248, %v652, %v3263
    %v5219 = vsel %vm3248, %v653, %v3264
    %v5220 = vsel %vm3248, %v654, %v3265
    %v5221 = vsel %vm3248, %v655, %v3266
    %v5222 = vsel %vm3248, %v656, %v3267
    %v5223 = vsel %vm3248, %v657, %v3268
    %v5224 = vsel %vm3248, %v658, %v3269
    %v5225 = vsel %vm3248, %v659, %v3270
    %v5226 = vsel %vm3248, %v660, %v3271
    %v5227 = vsel %vm3248, %v661, %v3272
    %v5228 = vsel %vm3248, %v662, %v3273
    %v5229 = vsel %vm3248, %v663, %v3274
    %v5230 = vsel %vm3248, %v664, %v3275
    %v5231 = vsel %vm3248, %v665, %v3276
    %v5232 = vsel %vm3248, %v666, %v3277
    %v5233 = vsel %vm3248, %v667, %v3278
    %v5234 = vsel %vm3248, %v668, %v3279
    %v5235 = vsel %vm3248, %v669, %v3280
    %v5236 = vsel %vm3248, %v670, %v3281
    %v5237 = vsel %vm3248, %v671, %v3282
    %v5238 = vsel %vm3248, %v672, %v3283
    %v5239 = vsel %vm3248, %v673, %v3284
    %v5240 = vsel %vm3248, %v674, %v3285
    %v5241 = vsel %vm3248, %v675, %v3286
    %v5242 = vsel %vm3248, %v676, %v3287
    %v5243 = vsel %vm3248, %v677, %v3288
    %v5244 = vsel %vm3248, %v678, %v3289
    %v5245 = vsel %vm3248, %v679, %v3290
    %v5246 = vsel %vm3248, %v680, %v3291
    %v5247 = vsel %vm3248, %v681, %v3292
    %v5248 = vsel %vm3248, %v682, %v3293
    %v5249 = vsel %vm3248, %v683, %v3294
    %v5250 = vsel %vm3248, %v684, %v3295
    %v5251 = vsel %vm3248, %v685, %v3296
    %v5252 = vsel %vm3248, %v686, %v3297
    %v5253 = vsel %vm3248, %v687, %v3298
    %v5254 = vsel %vm3599, %v3300, %v3600
    %v5255 = vsel %vm3599, %v3302, %v3601
    %v5256 = vsel %vm3599, %v3304, %v3602
    %v5257 = vsel %vm3599, %v3306, %v3603
    %v5258 = vsel %vm3599, %v3308, %v3604
    %v5259 = vsel %vm3599, %v3310, %v3605
    %v5260 = vsel %vm3599, %v3312, %v3606
    %v5261 = vsel %vm3599, %v3314, %v3607
    %v5262 = vsel %vm3599, %v3316, %v3608
    %v5263 = vsel %vm3599, %v3318, %v3609
    %v5264 = vsel %vm3599, %v3320, %v3610
    %v5265 = vsel %vm3599, %v3322, %v3611
    %v5266 = vsel %vm3599, %v3324, %v3612
    %v5267 = vsel %vm3599, %v3326, %v3613
    %v5268 = vsel %vm3599, %v3328, %v3614
    %v5269 = vsel %vm3599, %v3330, %v3615
    %v5270 = vsel %vm3599, %v3332, %v3616
    %v5271 = vsel %vm3599, %v3334, %v3617
    %v5272 = vsel %vm3599, %v3336, %v3618
    %v5273 = vsel %vm3599, %v3338, %v3619
    %v5274 = vsel %vm3599, %v3340, %v3620
    %v5275 = vsel %vm3599, %v3342, %v3621
    %v5276 = vsel %vm3599, %v3344, %v3622
    %v5277 = vsel %vm3599, %v3346, %v3623
    %v5278 = vsel %vm3599, %v3348, %v3624
    %v5279 = vsel %vm3599, %v3350, %v3625
    %v5280 = vsel %vm3599, %v3352, %v3626
    %v5281 = vsel %vm3599, %v3354, %v3627
    %v5282 = vsel %vm3599, %v3356, %v3628
    %v5283 = vsel %vm3599, %v3358, %v3629
    %v5284 = vsel %vm3599, %v3360, %v3630
    %v5285 = vsel %vm3599, %v3362, %v3631
    %v5286 = vsel %vm3599, %v3364, %v3632
    %v5287 = vsel %vm3599, %v3366, %v3633
    %v5288 = vsel %vm3599, %v3368, %v3634
    %v5289 = vsel %vm3599, %v3370, %v3635
    %v5290 = vsel %vm3599, %v3372, %v3636
    %v5291 = vsel %vm3599, %v3374, %v3637
    %v5292 = vsel %vm3599, %v3376, %v3638
    %v5293 = vsel %vm3599, %v3378, %v3639
    %v5294 = vsel %vm3599, %v3380, %v3640
    %v5295 = vsel %vm3599, %v3382, %v3641
    %v5296 = vsel %vm3599, %v3384, %v3642
    %v5297 = vsel %vm3599, %v3386, %v3643
    %v5298 = vsel %vm3599, %v3388, %v3644
    %v5299 = vsel %vm3599, %v3390, %v3645
    %v5300 = vsel %vm3599, %v3392, %v3646
    %v5301 = vsel %vm3599, %v3394, %v3647
    %v5302 = vsel %vm3599, %v3396, %v3648
    %v5303 = vsel %vm3599, %v3398, %v3649
    %v5304 = vsel %vm3950, %v3651, %v3951
    %v5305 = vsel %vm3950, %v3653, %v3952
    %v5306 = vsel %vm3950, %v3655, %v3953
    %v5307 = vsel %vm3950, %v3657, %v3954
    %v5308 = vsel %vm3950, %v3659, %v3955
    %v5309 = vsel %vm3950, %v3661, %v3956
    %v5310 = vsel %vm3950, %v3663, %v3957
    %v5311 = vsel %vm3950, %v3665, %v3958
    %v5312 = vsel %vm3950, %v3667, %v3959
    %v5313 = vsel %vm3950, %v3669, %v3960
    %v5314 = vsel %vm3950, %v3671, %v3961
    %v5315 = vsel %vm3950, %v3673, %v3962
    %v5316 = vsel %vm3950, %v3675, %v3963
    %v5317 = vsel %vm3950, %v3677, %v3964
    %v5318 = vsel %vm3950, %v3679, %v3965
    %v5319 = vsel %vm3950, %v3681, %v3966
    %v5320 = vsel %vm3950, %v3683, %v3967
    %v5321 = vsel %vm3950, %v3685, %v3968
    %v5322 = vsel %vm3950, %v3687, %v3969
    %v5323 = vsel %vm3950, %v3689, %v3970
    %v5324 = vsel %vm3950, %v3691, %v3971
    %v5325 = vsel %vm3950, %v3693, %v3972
    %v5326 = vsel %vm3950, %v3695, %v3973
    %v5327 = vsel %vm3950, %v3697, %v3974
    %v5328 = vsel %vm3950, %v3699, %v3975
    %v5329 = vsel %vm3950, %v3701, %v3976
    %v5330 = vsel %vm3950, %v3703, %v3977
    %v5331 = vsel %vm3950, %v3705, %v3978
    %v5332 = vsel %vm3950, %v3707, %v3979
    %v5333 = vsel %vm3950, %v3709, %v3980
    %v5334 = vsel %vm3950, %v3711, %v3981
    %v5335 = vsel %vm3950, %v3713, %v3982
    %v5336 = vsel %vm3950, %v3715, %v3983
    %v5337 = vsel %vm3950, %v3717, %v3984
    %v5338 = vsel %vm3950, %v3719, %v3985
    %v5339 = vsel %vm3950, %v3721, %v3986
    %v5340 = vsel %vm3950, %v3723, %v3987
    %v5341 = vsel %vm3950, %v3725, %v3988
    %v5342 = vsel %vm3950, %v3727, %v3989
    %v5343 = vsel %vm3950, %v3729, %v3990
    %v5344 = vsel %vm3950, %v3731, %v3991
    %v5345 = vsel %vm3950, %v3733, %v3992
    %v5346 = vsel %vm3950, %v3735, %v3993
    %v5347 = vsel %vm3950, %v3737, %v3994
    %v5348 = vsel %vm3950, %v3739, %v3995
    %v5349 = vsel %vm3950, %v3741, %v3996
    %v5350 = vsel %vm3950, %v3743, %v3997
    %v5351 = vsel %vm3950, %v3745, %v3998
    %v5352 = vsel %vm3950, %v3747, %v3999
    %v5353 = vsel %vm3950, %v3749, %v4000
    %v5354 = vsel %vm4301, %v4002, %v4302
    %v5355 = vsel %vm4301, %v4004, %v4303
    %v5356 = vsel %vm4301, %v4006, %v4304
    %v5357 = vsel %vm4301, %v4008, %v4305
    %v5358 = vsel %vm4301, %v4010, %v4306
    %v5359 = vsel %vm4301, %v4012, %v4307
    %v5360 = vsel %vm4301, %v4014, %v4308
    %v5361 = vsel %vm4301, %v4016, %v4309
    %v5362 = vsel %vm4301, %v4018, %v4310
    %v5363 = vsel %vm4301, %v4020, %v4311
    %v5364 = vsel %vm4301, %v4022, %v4312
    %v5365 = vsel %vm4301, %v4024, %v4313
    %v5366 = vsel %vm4301, %v4026, %v4314
    %v5367 = vsel %vm4301, %v4028, %v4315
    %v5368 = vsel %vm4301, %v4030, %v4316
    %v5369 = vsel %vm4301, %v4032, %v4317
    %v5370 = vsel %vm4301, %v4034, %v4318
    %v5371 = vsel %vm4301, %v4036, %v4319
    %v5372 = vsel %vm4301, %v4038, %v4320
    %v5373 = vsel %vm4301, %v4040, %v4321
    %v5374 = vsel %vm4301, %v4042, %v4322
    %v5375 = vsel %vm4301, %v4044, %v4323
    %v5376 = vsel %vm4301, %v4046, %v4324
    %v5377 = vsel %vm4301, %v4048, %v4325
    %v5378 = vsel %vm4301, %v4050, %v4326
    %v5379 = vsel %vm4301, %v4052, %v4327
    %v5380 = vsel %vm4301, %v4054, %v4328
    %v5381 = vsel %vm4301, %v4056, %v4329
    %v5382 = vsel %vm4301, %v4058, %v4330
    %v5383 = vsel %vm4301, %v4060, %v4331
    %v5384 = vsel %vm4301, %v4062, %v4332
    %v5385 = vsel %vm4301, %v4064, %v4333
    %v5386 = vsel %vm4301, %v4066, %v4334
    %v5387 = vsel %vm4301, %v4068, %v4335
    %v5388 = vsel %vm4301, %v4070, %v4336
    %v5389 = vsel %vm4301, %v4072, %v4337
    %v5390 = vsel %vm4301, %v4074, %v4338
    %v5391 = vsel %vm4301, %v4076, %v4339
    %v5392 = vsel %vm4301, %v4078, %v4340
    %v5393 = vsel %vm4301, %v4080, %v4341
    %v5394 = vsel %vm4301, %v4082, %v4342
    %v5395 = vsel %vm4301, %v4084, %v4343
    %v5396 = vsel %vm4301, %v4086, %v4344
    %v5397 = vsel %vm4301, %v4088, %v4345
    %v5398 = vsel %vm4301, %v4090, %v4346
    %v5399 = vsel %vm4301, %v4092, %v4347
    %v5400 = vsel %vm4301, %v4094, %v4348
    %v5401 = vsel %vm4301, %v4096, %v4349
    %v5402 = vsel %vm4301, %v4098, %v4350
    %v5403 = vsel %vm4301, %v4100, %v4351
    %v5404 = vsel %vm4652, %v4353, %v4653
    %v5405 = vsel %vm4652, %v4355, %v4654
    %v5406 = vsel %vm4652, %v4357, %v4655
    %v5407 = vsel %vm4652, %v4359, %v4656
    %v5408 = vsel %vm4652, %v4361, %v4657
    %v5409 = vsel %vm4652, %v4363, %v4658
    %v5410 = vsel %vm4652, %v4365, %v4659
    %v5411 = vsel %vm4652, %v4367, %v4660
    %v5412 = vsel %vm4652, %v4369, %v4661
    %v5413 = vsel %vm4652, %v4371, %v4662
    %v5414 = vsel %vm4652, %v4373, %v4663
    %v5415 = vsel %vm4652, %v4375, %v4664
    %v5416 = vsel %vm4652, %v4377, %v4665
    %v5417 = vsel %vm4652, %v4379, %v4666
    %v5418 = vsel %vm4652, %v4381, %v4667
    %v5419 = vsel %vm4652, %v4383, %v4668
    %v5420 = vsel %vm4652, %v4385, %v4669
    %v5421 = vsel %vm4652, %v4387, %v4670
    %v5422 = vsel %vm4652, %v4389, %v4671
    %v5423 = vsel %vm4652, %v4391, %v4672
    %v5424 = vsel %vm4652, %v4393, %v4673
    %v5425 = vsel %vm4652, %v4395, %v4674
    %v5426 = vsel %vm4652, %v4397, %v4675
    %v5427 = vsel %vm4652, %v4399, %v4676
    %v5428 = vsel %vm4652, %v4401, %v4677
    %v5429 = vsel %vm4652, %v4403, %v4678
    %v5430 = vsel %vm4652, %v4405, %v4679
    %v5431 = vsel %vm4652, %v4407, %v4680
    %v5432 = vsel %vm4652, %v4409, %v4681
    %v5433 = vsel %vm4652, %v4411, %v4682
    %v5434 = vsel %vm4652, %v4413, %v4683
    %v5435 = vsel %vm4652, %v4415, %v4684
    %v5436 = vsel %vm4652, %v4417, %v4685
    %v5437 = vsel %vm4652, %v4419, %v4686
    %v5438 = vsel %vm4652, %v4421, %v4687
    %v5439 = vsel %vm4652, %v4423, %v4688
    %v5440 = vsel %vm4652, %v4425, %v4689
    %v5441 = vsel %vm4652, %v4427, %v4690
    %v5442 = vsel %vm4652, %v4429, %v4691
    %v5443 = vsel %vm4652, %v4431, %v4692
    %v5444 = vsel %vm4652, %v4433, %v4693
    %v5445 = vsel %vm4652, %v4435, %v4694
    %v5446 = vsel %vm4652, %v4437, %v4695
    %v5447 = vsel %vm4652, %v4439, %v4696
    %v5448 = vsel %vm4652, %v4441, %v4697
    %v5449 = vsel %vm4652, %v4443, %v4698
    %v5450 = vsel %vm4652, %v4445, %v4699
    %v5451 = vsel %vm4652, %v4447, %v4700
    %v5452 = vsel %vm4652, %v4449, %v4701
    %v5453 = vsel %vm4652, %v4451, %v4702
    %v5454 = vsel %vm5003, %v4704, %v5004
    %v5455 = vsel %vm5003, %v4706, %v5005
    %v5456 = vsel %vm5003, %v4708, %v5006
    %v5457 = vsel %vm5003, %v4710, %v5007
    %v5458 = vsel %vm5003, %v4712, %v5008
    %v5459 = vsel %vm5003, %v4714, %v5009
    %v5460 = vsel %vm5003, %v4716, %v5010
    %v5461 = vsel %vm5003, %v4718, %v5011
    %v5462 = vsel %vm5003, %v4720, %v5012
    %v5463 = vsel %vm5003, %v4722, %v5013
    %v5464 = vsel %vm5003, %v4724, %v5014
    %v5465 = vsel %vm5003, %v4726, %v5015
    %v5466 = vsel %vm5003, %v4728, %v5016
    %v5467 = vsel %vm5003, %v4730, %v5017
    %v5468 = vsel %vm5003, %v4732, %v5018
    %v5469 = vsel %vm5003, %v4734, %v5019
    %v5470 = vsel %vm5003, %v4736, %v5020
    %v5471 = vsel %vm5003, %v4738, %v5021
    %v5472 = vsel %vm5003, %v4740, %v5022
    %v5473 = vsel %vm5003, %v4742, %v5023
    %v5474 = vsel %vm5003, %v4744, %v5024
    %v5475 = vsel %vm5003, %v4746, %v5025
    %v5476 = vsel %vm5003, %v4748, %v5026
    %v5477 = vsel %vm5003, %v4750, %v5027
    %v5478 = vsel %vm5003, %v4752, %v5028
    %v5479 = vsel %vm5003, %v4754, %v5029
    %v5480 = vsel %vm5003, %v4756, %v5030
    %v5481 = vsel %vm5003, %v4758, %v5031
    %v5482 = vsel %vm5003, %v4760, %v5032
    %v5483 = vsel %vm5003, %v4762, %v5033
    %v5484 = vsel %vm5003, %v4764, %v5034
    %v5485 = vsel %vm5003, %v4766, %v5035
    %v5486 = vsel %vm5003, %v4768, %v5036
    %v5487 = vsel %vm5003, %v4770, %v5037
    %v5488 = vsel %vm5003, %v4772, %v5038
    %v5489 = vsel %vm5003, %v4774, %v5039
    %v5490 = vsel %vm5003, %v4776, %v5040
    %v5491 = vsel %vm5003, %v4778, %v5041
    %v5492 = vsel %vm5003, %v4780, %v5042
    %v5493 = vsel %vm5003, %v4782, %v5043
    %v5494 = vsel %vm5003, %v4784, %v5044
    %v5495 = vsel %vm5003, %v4786, %v5045
    %v5496 = vsel %vm5003, %v4788, %v5046
    %v5497 = vsel %vm5003, %v4790, %v5047
    %v5498 = vsel %vm5003, %v4792, %v5048
    %v5499 = vsel %vm5003, %v4794, %v5049
    %v5500 = vsel %vm5003, %v4796, %v5050
    %v5501 = vsel %vm5003, %v4798, %v5051
    %v5502 = vsel %vm5003, %v4800, %v5052
    %v5503 = vsel %vm5003, %v4802, %v5053
    %v5504 = vld [vmem:[%s3] sm:$0x7f]
    %v5505 = vld [vmem:[#allocation7] sm:$0x7f]
    %5507 = vset.pattern.permute.xlu0 2
    %5508 = vperm.xlu0 %5507, %v5505
    %v5509 = vpop.permute.xlu0 %5508
    %vm5511 = vcmask 515072
    %v5513 = vsel %vm5511, %v5504, 0
    %vm5515 = vcmask 1046528
    %v5516 = vsel %vm5515, %v5055, 0
    %v5518 = vsel %vm5515, %v5057, 0
    %v5520 = vsel %vm5515, %v5059, 0
    %v5522 = vsel %vm5515, %v5061, 0
    %v5524 = vsel %vm5515, %v5063, 0
    %v5526 = vsel %vm5515, %v5065, 0
    %v5528 = vsel %vm5515, %v5067, 0
    %v5530 = vsel %vm5515, %v5069, 0
    %v5532 = vsel %vm5515, %v5071, 0
    %v5534 = vsel %vm5515, %v5073, 0
    %v5536 = vsel %vm5515, %v5075, 0
    %v5538 = vsel %vm5515, %v5077, 0
    %v5540 = vsel %vm5515, %v5079, 0
    %v5542 = vsel %vm5515, %v5081, 0
    %v5544 = vsel %vm5515, %v5083, 0
    %v5546 = vsel %vm5515, %v5085, 0
    %v5548 = vsel %vm5515, %v5087, 0
    %v5550 = vsel %vm5515, %v5089, 0
    %v5552 = vsel %vm5515, %v5091, 0
    %v5554 = vsel %vm5515, %v5093, 0
    %v5556 = vsel %vm5515, %v5095, 0
    %v5558 = vsel %vm5515, %v5097, 0
    %v5560 = vsel %vm5515, %v5099, 0
    %v5562 = vsel %vm5515, %v5101, 0
    %v5564 = vsel %vm5515, %v5103, 0
    %v5566 = vsel %vm5515, %v5105, 0
    %v5568 = vsel %vm5515, %v5107, 0
    %v5570 = vsel %vm5515, %v5109, 0
    %v5572 = vsel %vm5515, %v5111, 0
    %v5574 = vsel %vm5515, %v5113, 0
    %v5576 = vsel %vm5515, %v5115, 0
    %v5578 = vsel %vm5515, %v5117, 0
    %v5580 = vsel %vm5515, %v5119, 0
    %v5582 = vsel %vm5515, %v5121, 0
    %v5584 = vsel %vm5515, %v5123, 0
    %v5586 = vsel %vm5515, %v5125, 0
    %v5588 = vsel %vm5515, %v5127, 0
    %v5590 = vsel %vm5515, %v5129, 0
    %v5592 = vsel %vm5515, %v5131, 0
    %v5594 = vsel %vm5515, %v5133, 0
    %v5596 = vsel %vm5515, %v5135, 0
    %v5598 = vsel %vm5515, %v5137, 0
    %v5600 = vsel %vm5515, %v5139, 0
    %v5602 = vsel %vm5515, %v5141, 0
    %v5604 = vsel %vm5515, %v5143, 0
    %v5606 = vsel %vm5515, %v5145, 0
    %v5608 = vsel %vm5515, %v5147, 0
    %v5610 = vsel %vm5515, %v5149, 0
    %v5612 = vsel %vm5515, %v5151, 0
    %v5614 = vsel %vm5515, %v5153, 0
    %5616 = vmatprep.subr.mxu0 %v589
    %5617 = vmatpush1.msra.mxu0 %v588
    %5618 = vmatprep.subr.mxu0 %v5205
    %5619 = vmatpush1.msra.mxu0 %v5204
    %5620 = vmatprep.subr.mxu0 %v5255
    %5621 = vmatpush1.msra.mxu0 %v5254
    %5622 = vmatprep.subr.mxu0 %v5305
    %5623 = vmatpush1.msra.mxu0 %v5304
    %5624 = vmatprep.subr.mxu0 %v5355
    %5625 = vmatpush1.msra.mxu0 %v5354
    %5626 = vmatprep.subr.mxu0 %v5405
    %5627 = vmatpush1.msra.mxu0 %v5404
    %5628 = vmatprep.subr.mxu0 %v5455
    %5629 = vmatpush1.msra.mxu0 %v5454
    %5630 = vmatprep.subr.mxu0 %v5518
    %5631 = vmatpush1.msra.mxu0 %v5516
    %5632 = vmatprep.subr.mxu0 0.0
    %5633 = vmatpush1.msra.mxu0 0.0
    %5634 = vmatprep.subr.mxu0 0.0
    %5635 = vmatpush1.msra.mxu0 0.0
    %5636 = vmatprep.subr.mxu0 0.0
    %5637 = vmatpush1.msra.mxu0 0.0
    %5638 = vmatprep.subr.mxu0 0.0
    %5639 = vmatpush1.msra.mxu0 0.0
    %5640 = vmatprep.subr.mxu0 0.0
    %5641 = vmatpush1.msra.mxu0 0.0
    %5642 = vmatprep.subr.mxu0 0.0
    %5643 = vmatpush1.msra.mxu0 0.0
    %5644 = vmatprep.subr.mxu0 0.0
    %5645 = vmatpush1.msra.mxu0 0.0
    %5646 = vmatprep.subr.mxu0 0.0
    %5647 = vmatpush1.msra.mxu0 0.0
    %5648 = vmatprep.subr.mxu0 0.0
    %5649 = vmatpush1.msra.mxu0 0.0
    %5650 = vmatprep.subr.mxu0 0.0
    %5651 = vmatpush1.msra.mxu0 0.0
    %5652 = vmatprep.subr.mxu0 0.0
    %5653 = vmatpush1.msra.mxu0 0.0
    %5654 = vmatprep.subr.mxu0 0.0
    %5655 = vmatpush1.msra.mxu0 0.0
    %5656 = vmatprep.subr.mxu0 0.0
    %5657 = vmatpush1.msra.mxu0 0.0
    %5658 = vmatprep.subr.mxu0 0.0
    %5659 = vmatpush1.msra.mxu0 0.0
    %5660 = vmatprep.subr.mxu0 0.0
    %5661 = vmatpush1.msra.mxu0 0.0
    %5662 = vmatprep.subr.mxu0 0.0
    %5663 = vmatpush1.msra.mxu0 0.0
    %5664 = vmatprep.subr.mxu0 0.0
    %5665 = vmatpush1.msra.mxu0 0.0
    %5666 = vmatprep.subr.mxu0 0.0
    %5667 = vmatpush1.msra.mxu0 0.0
    %5668 = vmatprep.subr.mxu0 0.0
    %5669 = vmatpush1.msra.mxu0 0.0
    %5670 = vmatprep.subr.mxu0 0.0
    %5671 = vmatpush1.msra.mxu0 0.0
    %5672 = vmatprep.subr.mxu0 0.0
    %5673 = vmatpush1.msra.mxu0 0.0
    %5674 = vmatprep.subr.mxu0 0.0
    %5675 = vmatpush1.msra.mxu0 0.0
    %5676 = vmatprep.subr.mxu0 0.0
    %5677 = vmatpush1.msra.mxu0 0.0
    %5678 = vmatprep.subr.mxu0 0.0
    %5679 = vmatpush1.msra.mxu0 0.0
    %5680 = vmatprep.mubr.f32.mxu0 0.0
    %5681 = vmatmul.mubr.f32.gmra.mrb[0].mxu0 %v5513
    %v5682 = vpop.f32.mrb[0].mxu0
    %v5683 = vadd.f32 %v5509, %v5682
    %v5684 = vpop.f32.mrb[0].mxu0
    %v5685 = vadd.f32 %v5509, %v5684
    %5686 = vdwg.mxu0
    %5687 = vmatprep.subr.mxu0 %v591
    %5688 = vmatpush1.msra.mxu0 %v590
    %5689 = vmatprep.subr.mxu0 %v5207
    %5690 = vmatpush1.msra.mxu0 %v5206
    %5691 = vmatprep.subr.mxu0 %v5257
    %5692 = vmatpush1.msra.mxu0 %v5256
    %5693 = vmatprep.subr.mxu0 %v5307
    %5694 = vmatpush1.msra.mxu0 %v5306
    %5695 = vmatprep.subr.mxu0 %v5357
    %5696 = vmatpush1.msra.mxu0 %v5356
    %5697 = vmatprep.subr.mxu0 %v5407
    %5698 = vmatpush1.msra.mxu0 %v5406
    %5699 = vmatprep.subr.mxu0 %v5457
    %5700 = vmatpush1.msra.mxu0 %v5456
    %5701 = vmatprep.subr.mxu0 %v5522
    %5702 = vmatpush1.msra.mxu0 %v5520
    %5703 = vmatprep.subr.mxu0 0.0
    %5704 = vmatpush1.msra.mxu0 0.0
    %5705 = vmatprep.subr.mxu0 0.0
    %5706 = vmatpush1.msra.mxu0 0.0
    %5707 = vmatprep.subr.mxu0 0.0
    %5708 = vmatpush1.msra.mxu0 0.0
    %5709 = vmatprep.subr.mxu0 0.0
    %5710 = vmatpush1.msra.mxu0 0.0
    %5711 = vmatprep.subr.mxu0 0.0
    %5712 = vmatpush1.msra.mxu0 0.0
    %5713 = vmatprep.subr.mxu0 0.0
    %5714 = vmatpush1.msra.mxu0 0.0
    %5715 = vmatprep.subr.mxu0 0.0
    %5716 = vmatpush1.msra.mxu0 0.0
    %5717 = vmatprep.subr.mxu0 0.0
    %5718 = vmatpush1.msra.mxu0 0.0
    %5719 = vmatprep.subr.mxu0 0.0
    %5720 = vmatpush1.msra.mxu0 0.0
    %5721 = vmatprep.subr.mxu0 0.0
    %5722 = vmatpush1.msra.mxu0 0.0
    %5723 = vmatprep.subr.mxu0 0.0
    %5724 = vmatpush1.msra.mxu0 0.0
    %5725 = vmatprep.subr.mxu0 0.0
    %5726 = vmatpush1.msra.mxu0 0.0
    %5727 = vmatprep.subr.mxu0 0.0
    %5728 = vmatpush1.msra.mxu0 0.0
    %5729 = vmatprep.subr.mxu0 0.0
    %5730 = vmatpush1.msra.mxu0 0.0
    %5731 = vmatprep.subr.mxu0 0.0
    %5732 = vmatpush1.msra.mxu0 0.0
    %5733 = vmatprep.subr.mxu0 0.0
    %5734 = vmatpush1.msra.mxu0 0.0
    %5735 = vmatprep.subr.mxu0 0.0
    %5736 = vmatpush1.msra.mxu0 0.0
    %5737 = vmatprep.subr.mxu0 0.0
    %5738 = vmatpush1.msra.mxu0 0.0
    %5739 = vmatprep.subr.mxu0 0.0
    %5740 = vmatpush1.msra.mxu0 0.0
    %5741 = vmatprep.subr.mxu0 0.0
    %5742 = vmatpush1.msra.mxu0 0.0
    %5743 = vmatprep.subr.mxu0 0.0
    %5744 = vmatpush1.msra.mxu0 0.0
    %5745 = vmatprep.subr.mxu0 0.0
    %5746 = vmatpush1.msra.mxu0 0.0
    %5747 = vmatprep.subr.mxu0 0.0
    %5748 = vmatpush1.msra.mxu0 0.0
    %5749 = vmatprep.subr.mxu0 0.0
    %5750 = vmatpush1.msra.mxu0 0.0
    %5751 = vmatprep.mubr.f32.mxu0 0.0
    %5752 = vmatmul.mubr.f32.gmra.mrb[0].mxu0 %v5513
    %v5753 = vpop.f32.mrb[0].mxu0
    %v5754 = vadd.f32 %v5509, %v5753
    %v5755 = vpop.f32.mrb[0].mxu0
    %v5756 = vadd.f32 %v5509, %v5755
    %5757 = vdwg.mxu0
    %5758 = vmatprep.subr.mxu0 %v593
    %5759 = vmatpush1.msra.mxu0 %v592
    %5760 = vmatprep.subr.mxu0 %v5209
    %5761 = vmatpush1.msra.mxu0 %v5208
    %5762 = vmatprep.subr.mxu0 %v5259
    %5763 = vmatpush1.msra.mxu0 %v5258
    %5764 = vmatprep.subr.mxu0 %v5309
    %5765 = vmatpush1.msra.mxu0 %v5308
    %5766 = vmatprep.subr.mxu0 %v5359
    %5767 = vmatpush1.msra.mxu0 %v5358
    %5768 = vmatprep.subr.mxu0 %v5409
    %5769 = vmatpush1.msra.mxu0 %v5408
    %5770 = vmatprep.subr.mxu0 %v5459
    %5771 = vmatpush1.msra.mxu0 %v5458
    %5772 = vmatprep.subr.mxu0 %v5526
    %5773 = vmatpush1.msra.mxu0 %v5524
    %5774 = vmatprep.subr.mxu0 0.0
    %5775 = vmatpush1.msra.mxu0 0.0
    %5776 = vmatprep.subr.mxu0 0.0
    %5777 = vmatpush1.msra.mxu0 0.0
    %5778 = vmatprep.subr.mxu0 0.0
    %5779 = vmatpush1.msra.mxu0 0.0
    %5780 = vmatprep.subr.mxu0 0.0
    %5781 = vmatpush1.msra.mxu0 0.0
    %5782 = vmatprep.subr.mxu0 0.0
    %5783 = vmatpush1.msra.mxu0 0.0
    %5784 = vmatprep.subr.mxu0 0.0
    %5785 = vmatpush1.msra.mxu0 0.0
    %5786 = vmatprep.subr.mxu0 0.0
    %5787 = vmatpush1.msra.mxu0 0.0
    %5788 = vmatprep.subr.mxu0 0.0
    %5789 = vmatpush1.msra.mxu0 0.0
    %5790 = vmatprep.subr.mxu0 0.0
    %5791 = vmatpush1.msra.mxu0 0.0
    %5792 = vmatprep.subr.mxu0 0.0
    %5793 = vmatpush1.msra.mxu0 0.0
    %5794 = vmatprep.subr.mxu0 0.0
    %5795 = vmatpush1.msra.mxu0 0.0
    %5796 = vmatprep.subr.mxu0 0.0
    %5797 = vmatpush1.msra.mxu0 0.0
    %5798 = vmatprep.subr.mxu0 0.0
    %5799 = vmatpush1.msra.mxu0 0.0
    %5800 = vmatprep.subr.mxu0 0.0
    %5801 = vmatpush1.msra.mxu0 0.0
    %5802 = vmatprep.subr.mxu0 0.0
    %5803 = vmatpush1.msra.mxu0 0.0
    %5804 = vmatprep.subr.mxu0 0.0
    %5805 = vmatpush1.msra.mxu0 0.0
    %5806 = vmatprep.subr.mxu0 0.0
    %5807 = vmatpush1.msra.mxu0 0.0
    %5808 = vmatprep.subr.mxu0 0.0
    %5809 = vmatpush1.msra.mxu0 0.0
    %5810 = vmatprep.subr.mxu0 0.0
    %5811 = vmatpush1.msra.mxu0 0.0
    %5812 = vmatprep.subr.mxu0 0.0
    %5813 = vmatpush1.msra.mxu0 0.0
    %5814 = vmatprep.subr.mxu0 0.0
    %5815 = vmatpush1.msra.mxu0 0.0
    %5816 = vmatprep.subr.mxu0 0.0
    %5817 = vmatpush1.msra.mxu0 0.0
    %5818 = vmatprep.subr.mxu0 0.0
    %5819 = vmatpush1.msra.mxu0 0.0
    %5820 = vmatprep.subr.mxu0 0.0
    %5821 = vmatpush1.msra.mxu0 0.0
    %5822 = vmatprep.mubr.f32.mxu0 0.0
    %5823 = vmatmul.mubr.f32.gmra.mrb[0].mxu0 %v5513
    %v5824 = vpop.f32.mrb[0].mxu0
    %v5825 = vadd.f32 %v5509, %v5824
    %v5826 = vpop.f32.mrb[0].mxu0
    %v5827 = vadd.f32 %v5509, %v5826
    %5828 = vdwg.mxu0
    %5829 = vmatprep.subr.mxu0 %v595
    %5830 = vmatpush1.msra.mxu0 %v594
    %5831 = vmatprep.subr.mxu0 %v5211
    %5832 = vmatpush1.msra.mxu0 %v5210
    %5833 = vmatprep.subr.mxu0 %v5261
    %5834 = vmatpush1.msra.mxu0 %v5260
    %5835 = vmatprep.subr.mxu0 %v5311
    %5836 = vmatpush1.msra.mxu0 %v5310
    %5837 = vmatprep.subr.mxu0 %v5361
    %5838 = vmatpush1.msra.mxu0 %v5360
    %5839 = vmatprep.subr.mxu0 %v5411
    %5840 = vmatpush1.msra.mxu0 %v5410
    %5841 = vmatprep.subr.mxu0 %v5461
    %5842 = vmatpush1.msra.mxu0 %v5460
    %5843 = vmatprep.subr.mxu0 %v5530
    %5844 = vmatpush1.msra.mxu0 %v5528
    %5845 = vmatprep.subr.mxu0 0.0
    %5846 = vmatpush1.msra.mxu0 0.0
    %5847 = vmatprep.subr.mxu0 0.0
    %5848 = vmatpush1.msra.mxu0 0.0
    %5849 = vmatprep.subr.mxu0 0.0
    %5850 = vmatpush1.msra.mxu0 0.0
    %5851 = vmatprep.subr.mxu0 0.0
    %5852 = vmatpush1.msra.mxu0 0.0
    %5853 = vmatprep.subr.mxu0 0.0
    %5854 = vmatpush1.msra.mxu0 0.0
    %5855 = vmatprep.subr.mxu0 0.0
    %5856 = vmatpush1.msra.mxu0 0.0
    %5857 = vmatprep.subr.mxu0 0.0
    %5858 = vmatpush1.msra.mxu0 0.0
    %5859 = vmatprep.subr.mxu0 0.0
    %5860 = vmatpush1.msra.mxu0 0.0
    %5861 = vmatprep.subr.mxu0 0.0
    %5862 = vmatpush1.msra.mxu0 0.0
    %5863 = vmatprep.subr.mxu0 0.0
    %5864 = vmatpush1.msra.mxu0 0.0
    %5865 = vmatprep.subr.mxu0 0.0
    %5866 = vmatpush1.msra.mxu0 0.0
    %5867 = vmatprep.subr.mxu0 0.0
    %5868 = vmatpush1.msra.mxu0 0.0
    %5869 = vmatprep.subr.mxu0 0.0
    %5870 = vmatpush1.msra.mxu0 0.0
    %5871 = vmatprep.subr.mxu0 0.0
    %5872 = vmatpush1.msra.mxu0 0.0
    %5873 = vmatprep.subr.mxu0 0.0
    %5874 = vmatpush1.msra.mxu0 0.0
    %5875 = vmatprep.subr.mxu0 0.0
    %5876 = vmatpush1.msra.mxu0 0.0
    %5877 = vmatprep.subr.mxu0 0.0
    %5878 = vmatpush1.msra.mxu0 0.0
    %5879 = vmatprep.subr.mxu0 0.0
    %5880 = vmatpush1.msra.mxu0 0.0
    %5881 = vmatprep.subr.mxu0 0.0
    %5882 = vmatpush1.msra.mxu0 0.0
    %5883 = vmatprep.subr.mxu0 0.0
    %5884 = vmatpush1.msra.mxu0 0.0
    %5885 = vmatprep.subr.mxu0 0.0
    %5886 = vmatpush1.msra.mxu0 0.0
    %5887 = vmatprep.subr.mxu0 0.0
    %5888 = vmatpush1.msra.mxu0 0.0
    %5889 = vmatprep.subr.mxu0 0.0
    %5890 = vmatpush1.msra.mxu0 0.0
    %5891 = vmatprep.subr.mxu0 0.0
    %5892 = vmatpush1.msra.mxu0 0.0
    %5893 = vmatprep.mubr.f32.mxu0 0.0
    %5894 = vmatmul.mubr.f32.gmra.mrb[0].mxu0 %v5513
    %v5895 = vpop.f32.mrb[0].mxu0
    %v5896 = vadd.f32 %v5509, %v5895
    %v5897 = vpop.f32.mrb[0].mxu0
    %v5898 = vadd.f32 %v5509, %v5897
    %5899 = vdwg.mxu0
    %5900 = vmatprep.subr.mxu0 %v597
    %5901 = vmatpush1.msra.mxu0 %v596
    %5902 = vmatprep.subr.mxu0 %v5213
    %5903 = vmatpush1.msra.mxu0 %v5212
    %5904 = vmatprep.subr.mxu0 %v5263
    %5905 = vmatpush1.msra.mxu0 %v5262
    %5906 = vmatprep.subr.mxu0 %v5313
    %5907 = vmatpush1.msra.mxu0 %v5312
    %5908 = vmatprep.subr.mxu0 %v5363
    %5909 = vmatpush1.msra.mxu0 %v5362
    %5910 = vmatprep.subr.mxu0 %v5413
    %5911 = vmatpush1.msra.mxu0 %v5412
    %5912 = vmatprep.subr.mxu0 %v5463
    %5913 = vmatpush1.msra.mxu0 %v5462
    %5914 = vmatprep.subr.mxu0 %v5534
    %5915 = vmatpush1.msra.mxu0 %v5532
    %5916 = vmatprep.subr.mxu0 0.0
    %5917 = vmatpush1.msra.mxu0 0.0
    %5918 = vmatprep.subr.mxu0 0.0
    %5919 = vmatpush1.msra.mxu0 0.0
    %5920 = vmatprep.subr.mxu0 0.0
    %5921 = vmatpush1.msra.mxu0 0.0
    %5922 = vmatprep.subr.mxu0 0.0
    %5923 = vmatpush1.msra.mxu0 0.0
    %5924 = vmatprep.subr.mxu0 0.0
    %5925 = vmatpush1.msra.mxu0 0.0
    %5926 = vmatprep.subr.mxu0 0.0
    %5927 = vmatpush1.msra.mxu0 0.0
    %5928 = vmatprep.subr.mxu0 0.0
    %5929 = vmatpush1.msra.mxu0 0.0
    %5930 = vmatprep.subr.mxu0 0.0
    %5931 = vmatpush1.msra.mxu0 0.0
    %5932 = vmatprep.subr.mxu0 0.0
    %5933 = vmatpush1.msra.mxu0 0.0
    %5934 = vmatprep.subr.mxu0 0.0
    %5935 = vmatpush1.msra.mxu0 0.0
    %5936 = vmatprep.subr.mxu0 0.0
    %5937 = vmatpush1.msra.mxu0 0.0
    %5938 = vmatprep.subr.mxu0 0.0
    %5939 = vmatpush1.msra.mxu0 0.0
    %5940 = vmatprep.subr.mxu0 0.0
    %5941 = vmatpush1.msra.mxu0 0.0
    %5942 = vmatprep.subr.mxu0 0.0
    %5943 = vmatpush1.msra.mxu0 0.0
    %5944 = vmatprep.subr.mxu0 0.0
    %5945 = vmatpush1.msra.mxu0 0.0
    %5946 = vmatprep.subr.mxu0 0.0
    %5947 = vmatpush1.msra.mxu0 0.0
    %5948 = vmatprep.subr.mxu0 0.0
    %5949 = vmatpush1.msra.mxu0 0.0
    %5950 = vmatprep.subr.mxu0 0.0
    %5951 = vmatpush1.msra.mxu0 0.0
    %5952 = vmatprep.subr.mxu0 0.0
    %5953 = vmatpush1.msra.mxu0 0.0
    %5954 = vmatprep.subr.mxu0 0.0
    %5955 = vmatpush1.msra.mxu0 0.0
    %5956 = vmatprep.subr.mxu0 0.0
    %5957 = vmatpush1.msra.mxu0 0.0
    %5958 = vmatprep.subr.mxu0 0.0
    %5959 = vmatpush1.msra.mxu0 0.0
    %5960 = vmatprep.subr.mxu0 0.0
    %5961 = vmatpush1.msra.mxu0 0.0
    %5962 = vmatprep.subr.mxu0 0.0
    %5963 = vmatpush1.msra.mxu0 0.0
    %5964 = vmatprep.mubr.f32.mxu0 0.0
    %5965 = vmatmul.mubr.f32.gmra.mrb[0].mxu0 %v5513
    %v5966 = vpop.f32.mrb[0].mxu0
    %v5967 = vadd.f32 %v5509, %v5966
    %v5968 = vpop.f32.mrb[0].mxu0
    %v5969 = vadd.f32 %v5509, %v5968
    %5970 = vdwg.mxu0
    %5971 = vmatprep.subr.mxu0 %v599
    %5972 = vmatpush1.msra.mxu0 %v598
    %5973 = vmatprep.subr.mxu0 %v5215
    %5974 = vmatpush1.msra.mxu0 %v5214
    %5975 = vmatprep.subr.mxu0 %v5265
    %5976 = vmatpush1.msra.mxu0 %v5264
    %5977 = vmatprep.subr.mxu0 %v5315
    %5978 = vmatpush1.msra.mxu0 %v5314
    %5979 = vmatprep.subr.mxu0 %v5365
    %5980 = vmatpush1.msra.mxu0 %v5364
    %5981 = vmatprep.subr.mxu0 %v5415
    %5982 = vmatpush1.msra.mxu0 %v5414
    %5983 = vmatprep.subr.mxu0 %v5465
    %5984 = vmatpush1.msra.mxu0 %v5464
    %5985 = vmatprep.subr.mxu0 %v5538
    %5986 = vmatpush1.msra.mxu0 %v5536
    %5987 = vmatprep.subr.mxu0 0.0
    %5988 = vmatpush1.msra.mxu0 0.0
    %5989 = vmatprep.subr.mxu0 0.0
    %5990 = vmatpush1.msra.mxu0 0.0
    %5991 = vmatprep.subr.mxu0 0.0
    %5992 = vmatpush1.msra.mxu0 0.0
    %5993 = vmatprep.subr.mxu0 0.0
    %5994 = vmatpush1.msra.mxu0 0.0
    %5995 = vmatprep.subr.mxu0 0.0
    %5996 = vmatpush1.msra.mxu0 0.0
    %5997 = vmatprep.subr.mxu0 0.0
    %5998 = vmatpush1.msra.mxu0 0.0
    %5999 = vmatprep.subr.mxu0 0.0
    %6000 = vmatpush1.msra.mxu0 0.0
    %6001 = vmatprep.subr.mxu0 0.0
    %6002 = vmatpush1.msra.mxu0 0.0
    %6003 = vmatprep.subr.mxu0 0.0
    %6004 = vmatpush1.msra.mxu0 0.0
    %6005 = vmatprep.subr.mxu0 0.0
    %6006 = vmatpush1.msra.mxu0 0.0
    %6007 = vmatprep.subr.mxu0 0.0
    %6008 = vmatpush1.msra.mxu0 0.0
    %6009 = vmatprep.subr.mxu0 0.0
    %6010 = vmatpush1.msra.mxu0 0.0
    %6011 = vmatprep.subr.mxu0 0.0
    %6012 = vmatpush1.msra.mxu0 0.0
    %6013 = vmatprep.subr.mxu0 0.0
    %6014 = vmatpush1.msra.mxu0 0.0
    %6015 = vmatprep.subr.mxu0 0.0
    %6016 = vmatpush1.msra.mxu0 0.0
    %6017 = vmatprep.subr.mxu0 0.0
    %6018 = vmatpush1.msra.mxu0 0.0
    %6019 = vmatprep.subr.mxu0 0.0
    %6020 = vmatpush1.msra.mxu0 0.0
    %6021 = vmatprep.subr.mxu0 0.0
    %6022 = vmatpush1.msra.mxu0 0.0
    %6023 = vmatprep.subr.mxu0 0.0
    %6024 = vmatpush1.msra.mxu0 0.0
    %6025 = vmatprep.subr.mxu0 0.0
    %6026 = vmatpush1.msra.mxu0 0.0
    %6027 = vmatprep.subr.mxu0 0.0
    %6028 = vmatpush1.msra.mxu0 0.0
    %6029 = vmatprep.subr.mxu0 0.0
    %6030 = vmatpush1.msra.mxu0 0.0
    %6031 = vmatprep.subr.mxu0 0.0
    %6032 = vmatpush1.msra.mxu0 0.0
    %6033 = vmatprep.subr.mxu0 0.0
    %6034 = vmatpush1.msra.mxu0 0.0
    %6035 = vmatprep.mubr.f32.mxu0 0.0
    %6036 = vmatmul.mubr.f32.gmra.mrb[0].mxu0 %v5513
    %v6037 = vpop.f32.mrb[0].mxu0
    %v6038 = vadd.f32 %v5509, %v6037
    %v6039 = vpop.f32.mrb[0].mxu0
    %v6040 = vadd.f32 %v5509, %v6039
    %6041 = vdwg.mxu0
    %6042 = vmatprep.subr.mxu0 %v601
    %6043 = vmatpush1.msra.mxu0 %v600
    %6044 = vmatprep.subr.mxu0 %v5217
    %6045 = vmatpush1.msra.mxu0 %v5216
    %6046 = vmatprep.subr.mxu0 %v5267
    %6047 = vmatpush1.msra.mxu0 %v5266
    %6048 = vmatprep.subr.mxu0 %v5317
    %6049 = vmatpush1.msra.mxu0 %v5316
    %6050 = vmatprep.subr.mxu0 %v5367
    %6051 = vmatpush1.msra.mxu0 %v5366
    %6052 = vmatprep.subr.mxu0 %v5417
    %6053 = vmatpush1.msra.mxu0 %v5416
    %6054 = vmatprep.subr.mxu0 %v5467
    %6055 = vmatpush1.msra.mxu0 %v5466
    %6056 = vmatprep.subr.mxu0 %v5542
    %6057 = vmatpush1.msra.mxu0 %v5540
    %6058 = vmatprep.subr.mxu0 0.0
    %6059 = vmatpush1.msra.mxu0 0.0
    %6060 = vmatprep.subr.mxu0 0.0
    %6061 = vmatpush1.msra.mxu0 0.0
    %6062 = vmatprep.subr.mxu0 0.0
    %6063 = vmatpush1.msra.mxu0 0.0
    %6064 = vmatprep.subr.mxu0 0.0
    %6065 = vmatpush1.msra.mxu0 0.0
    %6066 = vmatprep.subr.mxu0 0.0
    %6067 = vmatpush1.msra.mxu0 0.0
    %6068 = vmatprep.subr.mxu0 0.0
    %6069 = vmatpush1.msra.mxu0 0.0
    %6070 = vmatprep.subr.mxu0 0.0
    %6071 = vmatpush1.msra.mxu0 0.0
    %6072 = vmatprep.subr.mxu0 0.0
    %6073 = vmatpush1.msra.mxu0 0.0
    %6074 = vmatprep.subr.mxu0 0.0
    %6075 = vmatpush1.msra.mxu0 0.0
    %6076 = vmatprep.subr.mxu0 0.0
    %6077 = vmatpush1.msra.mxu0 0.0
    %6078 = vmatprep.subr.mxu0 0.0
    %6079 = vmatpush1.msra.mxu0 0.0
    %6080 = vmatprep.subr.mxu0 0.0
    %6081 = vmatpush1.msra.mxu0 0.0
    %6082 = vmatprep.subr.mxu0 0.0
    %6083 = vmatpush1.msra.mxu0 0.0
    %6084 = vmatprep.subr.mxu0 0.0
    %6085 = vmatpush1.msra.mxu0 0.0
    %6086 = vmatprep.subr.mxu0 0.0
    %6087 = vmatpush1.msra.mxu0 0.0
    %6088 = vmatprep.subr.mxu0 0.0
    %6089 = vmatpush1.msra.mxu0 0.0
    %6090 = vmatprep.subr.mxu0 0.0
    %6091 = vmatpush1.msra.mxu0 0.0
    %6092 = vmatprep.subr.mxu0 0.0
    %6093 = vmatpush1.msra.mxu0 0.0
    %6094 = vmatprep.subr.mxu0 0.0
    %6095 = vmatpush1.msra.mxu0 0.0
    %6096 = vmatprep.subr.mxu0 0.0
    %6097 = vmatpush1.msra.mxu0 0.0
    %6098 = vmatprep.subr.mxu0 0.0
    %6099 = vmatpush1.msra.mxu0 0.0
    %6100 = vmatprep.subr.mxu0 0.0
    %6101 = vmatpush1.msra.mxu0 0.0
    %6102 = vmatprep.subr.mxu0 0.0
    %6103 = vmatpush1.msra.mxu0 0.0
    %6104 = vmatprep.subr.mxu0 0.0
    %6105 = vmatpush1.msra.mxu0 0.0
    %6106 = vmatprep.mubr.f32.mxu0 0.0
    %6107 = vmatmul.mubr.f32.gmra.mrb[0].mxu0 %v5513
    %v6108 = vpop.f32.mrb[0].mxu0
    %v6109 = vadd.f32 %v5509, %v6108
    %v6110 = vpop.f32.mrb[0].mxu0
    %v6111 = vadd.f32 %v5509, %v6110
    %6112 = vdwg.mxu0
    %6113 = vmatprep.subr.mxu0 %v603
    %6114 = vmatpush1.msra.mxu0 %v602
    %6115 = vmatprep.subr.mxu0 %v5219
    %6116 = vmatpush1.msra.mxu0 %v5218
    %6117 = vmatprep.subr.mxu0 %v5269
    %6118 = vmatpush1.msra.mxu0 %v5268
    %6119 = vmatprep.subr.mxu0 %v5319
    %6120 = vmatpush1.msra.mxu0 %v5318
    %6121 = vmatprep.subr.mxu0 %v5369
    %6122 = vmatpush1.msra.mxu0 %v5368
    %6123 = vmatprep.subr.mxu0 %v5419
    %6124 = vmatpush1.msra.mxu0 %v5418
    %6125 = vmatprep.subr.mxu0 %v5469
    %6126 = vmatpush1.msra.mxu0 %v5468
    %6127 = vmatprep.subr.mxu0 %v5546
    %6128 = vmatpush1.msra.mxu0 %v5544
    %6129 = vmatprep.subr.mxu0 0.0
    %6130 = vmatpush1.msra.mxu0 0.0
    %6131 = vmatprep.subr.mxu0 0.0
    %6132 = vmatpush1.msra.mxu0 0.0
    %6133 = vmatprep.subr.mxu0 0.0
    %6134 = vmatpush1.msra.mxu0 0.0
    %6135 = vmatprep.subr.mxu0 0.0
    %6136 = vmatpush1.msra.mxu0 0.0
    %6137 = vmatprep.subr.mxu0 0.0
    %6138 = vmatpush1.msra.mxu0 0.0
    %6139 = vmatprep.subr.mxu0 0.0
    %6140 = vmatpush1.msra.mxu0 0.0
    %6141 = vmatprep.subr.mxu0 0.0
    %6142 = vmatpush1.msra.mxu0 0.0
    %6143 = vmatprep.subr.mxu0 0.0
    %6144 = vmatpush1.msra.mxu0 0.0
    %6145 = vmatprep.subr.mxu0 0.0
    %6146 = vmatpush1.msra.mxu0 0.0
    %6147 = vmatprep.subr.mxu0 0.0
    %6148 = vmatpush1.msra.mxu0 0.0
    %6149 = vmatprep.subr.mxu0 0.0
    %6150 = vmatpush1.msra.mxu0 0.0
    %6151 = vmatprep.subr.mxu0 0.0
    %6152 = vmatpush1.msra.mxu0 0.0
    %6153 = vmatprep.subr.mxu0 0.0
    %6154 = vmatpush1.msra.mxu0 0.0
    %6155 = vmatprep.subr.mxu0 0.0
    %6156 = vmatpush1.msra.mxu0 0.0
    %6157 = vmatprep.subr.mxu0 0.0
    %6158 = vmatpush1.msra.mxu0 0.0
    %6159 = vmatprep.subr.mxu0 0.0
    %6160 = vmatpush1.msra.mxu0 0.0
    %6161 = vmatprep.subr.mxu0 0.0
    %6162 = vmatpush1.msra.mxu0 0.0
    %6163 = vmatprep.subr.mxu0 0.0
    %6164 = vmatpush1.msra.mxu0 0.0
    %6165 = vmatprep.subr.mxu0 0.0
    %6166 = vmatpush1.msra.mxu0 0.0
    %6167 = vmatprep.subr.mxu0 0.0
    %6168 = vmatpush1.msra.mxu0 0.0
    %6169 = vmatprep.subr.mxu0 0.0
    %6170 = vmatpush1.msra.mxu0 0.0
    %6171 = vmatprep.subr.mxu0 0.0
    %6172 = vmatpush1.msra.mxu0 0.0
    %6173 = vmatprep.subr.mxu0 0.0
    %6174 = vmatpush1.msra.mxu0 0.0
    %6175 = vmatprep.subr.mxu0 0.0
    %6176 = vmatpush1.msra.mxu0 0.0
    %6177 = vmatprep.mubr.f32.mxu0 0.0
    %6178 = vmatmul.mubr.f32.gmra.mrb[0].mxu0 %v5513
    %v6179 = vpop.f32.mrb[0].mxu0
    %v6180 = vadd.f32 %v5509, %v6179
    %v6181 = vpop.f32.mrb[0].mxu0
    %v6182 = vadd.f32 %v5509, %v6181
    %6183 = vdwg.mxu0
    %6184 = vmatprep.subr.mxu0 %v605
    %6185 = vmatpush1.msra.mxu0 %v604
    %6186 = vmatprep.subr.mxu0 %v5221
    %6187 = vmatpush1.msra.mxu0 %v5220
    %6188 = vmatprep.subr.mxu0 %v5271
    %6189 = vmatpush1.msra.mxu0 %v5270
    %6190 = vmatprep.subr.mxu0 %v5321
    %6191 = vmatpush1.msra.mxu0 %v5320
    %6192 = vmatprep.subr.mxu0 %v5371
    %6193 = vmatpush1.msra.mxu0 %v5370
    %6194 = vmatprep.subr.mxu0 %v5421
    %6195 = vmatpush1.msra.mxu0 %v5420
    %6196 = vmatprep.subr.mxu0 %v5471
    %6197 = vmatpush1.msra.mxu0 %v5470
    %6198 = vmatprep.subr.mxu0 %v5550
    %6199 = vmatpush1.msra.mxu0 %v5548
    %6200 = vmatprep.subr.mxu0 0.0
    %6201 = vmatpush1.msra.mxu0 0.0
    %6202 = vmatprep.subr.mxu0 0.0
    %6203 = vmatpush1.msra.mxu0 0.0
    %6204 = vmatprep.subr.mxu0 0.0
    %6205 = vmatpush1.msra.mxu0 0.0
    %6206 = vmatprep.subr.mxu0 0.0
    %6207 = vmatpush1.msra.mxu0 0.0
    %6208 = vmatprep.subr.mxu0 0.0
    %6209 = vmatpush1.msra.mxu0 0.0
    %6210 = vmatprep.subr.mxu0 0.0
    %6211 = vmatpush1.msra.mxu0 0.0
    %6212 = vmatprep.subr.mxu0 0.0
    %6213 = vmatpush1.msra.mxu0 0.0
    %6214 = vmatprep.subr.mxu0 0.0
    %6215 = vmatpush1.msra.mxu0 0.0
    %6216 = vmatprep.subr.mxu0 0.0
    %6217 = vmatpush1.msra.mxu0 0.0
    %6218 = vmatprep.subr.mxu0 0.0
    %6219 = vmatpush1.msra.mxu0 0.0
    %6220 = vmatprep.subr.mxu0 0.0
    %6221 = vmatpush1.msra.mxu0 0.0
    %6222 = vmatprep.subr.mxu0 0.0
    %6223 = vmatpush1.msra.mxu0 0.0
    %6224 = vmatprep.subr.mxu0 0.0
    %6225 = vmatpush1.msra.mxu0 0.0
    %6226 = vmatprep.subr.mxu0 0.0
    %6227 = vmatpush1.msra.mxu0 0.0
    %6228 = vmatprep.subr.mxu0 0.0
    %6229 = vmatpush1.msra.mxu0 0.0
    %6230 = vmatprep.subr.mxu0 0.0
    %6231 = vmatpush1.msra.mxu0 0.0
    %6232 = vmatprep.subr.mxu0 0.0
    %6233 = vmatpush1.msra.mxu0 0.0
    %6234 = vmatprep.subr.mxu0 0.0
    %6235 = vmatpush1.msra.mxu0 0.0
    %6236 = vmatprep.subr.mxu0 0.0
    %6237 = vmatpush1.msra.mxu0 0.0
    %6238 = vmatprep.subr.mxu0 0.0
    %6239 = vmatpush1.msra.mxu0 0.0
    %6240 = vmatprep.subr.mxu0 0.0
    %6241 = vmatpush1.msra.mxu0 0.0
    %6242 = vmatprep.subr.mxu0 0.0
    %6243 = vmatpush1.msra.mxu0 0.0
    %6244 = vmatprep.subr.mxu0 0.0
    %6245 = vmatpush1.msra.mxu0 0.0
    %6246 = vmatprep.subr.mxu0 0.0
    %6247 = vmatpush1.msra.mxu0 0.0
    %6248 = vmatprep.mubr.f32.mxu0 0.0
    %6249 = vmatmul.mubr.f32.gmra.mrb[0].mxu0 %v5513
    %v6250 = vpop.f32.mrb[0].mxu0
    %v6251 = vadd.f32 %v5509, %v6250
    %v6252 = vpop.f32.mrb[0].mxu0
    %v6253 = vadd.f32 %v5509, %v6252
    %6254 = vdwg.mxu0
    %6255 = vmatprep.subr.mxu0 %v607
    %6256 = vmatpush1.msra.mxu0 %v606
    %6257 = vmatprep.subr.mxu0 %v5223
    %6258 = vmatpush1.msra.mxu0 %v5222
    %6259 = vmatprep.subr.mxu0 %v5273
    %6260 = vmatpush1.msra.mxu0 %v5272
    %6261 = vmatprep.subr.mxu0 %v5323
    %6262 = vmatpush1.msra.mxu0 %v5322
    %6263 = vmatprep.subr.mxu0 %v5373
    %6264 = vmatpush1.msra.mxu0 %v5372
    %6265 = vmatprep.subr.mxu0 %v5423
    %6266 = vmatpush1.msra.mxu0 %v5422
    %6267 = vmatprep.subr.mxu0 %v5473
    %6268 = vmatpush1.msra.mxu0 %v5472
    %6269 = vmatprep.subr.mxu0 %v5554
    %6270 = vmatpush1.msra.mxu0 %v5552
    %6271 = vmatprep.subr.mxu0 0.0
    %6272 = vmatpush1.msra.mxu0 0.0
    %6273 = vmatprep.subr.mxu0 0.0
    %6274 = vmatpush1.msra.mxu0 0.0
    %6275 = vmatprep.subr.mxu0 0.0
    %6276 = vmatpush1.msra.mxu0 0.0
    %6277 = vmatprep.subr.mxu0 0.0
    %6278 = vmatpush1.msra.mxu0 0.0
    %6279 = vmatprep.subr.mxu0 0.0
    %6280 = vmatpush1.msra.mxu0 0.0
    %6281 = vmatprep.subr.mxu0 0.0
    %6282 = vmatpush1.msra.mxu0 0.0
    %6283 = vmatprep.subr.mxu0 0.0
    %6284 = vmatpush1.msra.mxu0 0.0
    %6285 = vmatprep.subr.mxu0 0.0
    %6286 = vmatpush1.msra.mxu0 0.0
    %6287 = vmatprep.subr.mxu0 0.0
    %6288 = vmatpush1.msra.mxu0 0.0
    %6289 = vmatprep.subr.mxu0 0.0
    %6290 = vmatpush1.msra.mxu0 0.0
    %6291 = vmatprep.subr.mxu0 0.0
    %6292 = vmatpush1.msra.mxu0 0.0
    %6293 = vmatprep.subr.mxu0 0.0
    %6294 = vmatpush1.msra.mxu0 0.0
    %6295 = vmatprep.subr.mxu0 0.0
    %6296 = vmatpush1.msra.mxu0 0.0
    %6297 = vmatprep.subr.mxu0 0.0
    %6298 = vmatpush1.msra.mxu0 0.0
    %6299 = vmatprep.subr.mxu0 0.0
    %6300 = vmatpush1.msra.mxu0 0.0
    %6301 = vmatprep.subr.mxu0 0.0
    %6302 = vmatpush1.msra.mxu0 0.0
    %6303 = vmatprep.subr.mxu0 0.0
    %6304 = vmatpush1.msra.mxu0 0.0
    %6305 = vmatprep.subr.mxu0 0.0
    %6306 = vmatpush1.msra.mxu0 0.0
    %6307 = vmatprep.subr.mxu0 0.0
    %6308 = vmatpush1.msra.mxu0 0.0
    %6309 = vmatprep.subr.mxu0 0.0
    %6310 = vmatpush1.msra.mxu0 0.0
    %6311 = vmatprep.subr.mxu0 0.0
    %6312 = vmatpush1.msra.mxu0 0.0
    %6313 = vmatprep.subr.mxu0 0.0
    %6314 = vmatpush1.msra.mxu0 0.0
    %6315 = vmatprep.subr.mxu0 0.0
    %6316 = vmatpush1.msra.mxu0 0.0
    %6317 = vmatprep.subr.mxu0 0.0
    %6318 = vmatpush1.msra.mxu0 0.0
    %6319 = vmatprep.mubr.f32.mxu0 0.0
    %6320 = vmatmul.mubr.f32.gmra.mrb[0].mxu0 %v5513
    %v6321 = vpop.f32.mrb[0].mxu0
    %v6322 = vadd.f32 %v5509, %v6321
    %v6323 = vpop.f32.mrb[0].mxu0
    %v6324 = vadd.f32 %v5509, %v6323
    %6325 = vdwg.mxu0
    %6326 = vmatprep.subr.mxu0 %v609
    %6327 = vmatpush1.msra.mxu0 %v608
    %6328 = vmatprep.subr.mxu0 %v5225
    %6329 = vmatpush1.msra.mxu0 %v5224
    %6330 = vmatprep.subr.mxu0 %v5275
    %6331 = vmatpush1.msra.mxu0 %v5274
    %6332 = vmatprep.subr.mxu0 %v5325
    %6333 = vmatpush1.msra.mxu0 %v5324
    %6334 = vmatprep.subr.mxu0 %v5375
    %6335 = vmatpush1.msra.mxu0 %v5374
    %6336 = vmatprep.subr.mxu0 %v5425
    %6337 = vmatpush1.msra.mxu0 %v5424
    %6338 = vmatprep.subr.mxu0 %v5475
    %6339 = vmatpush1.msra.mxu0 %v5474
    %6340 = vmatprep.subr.mxu0 %v5558
    %6341 = vmatpush1.msra.mxu0 %v5556
    %6342 = vmatprep.subr.mxu0 0.0
    %6343 = vmatpush1.msra.mxu0 0.0
    %6344 = vmatprep.subr.mxu0 0.0
    %6345 = vmatpush1.msra.mxu0 0.0
    %6346 = vmatprep.subr.mxu0 0.0
    %6347 = vmatpush1.msra.mxu0 0.0
    %6348 = vmatprep.subr.mxu0 0.0
    %6349 = vmatpush1.msra.mxu0 0.0
    %6350 = vmatprep.subr.mxu0 0.0
    %6351 = vmatpush1.msra.mxu0 0.0
    %6352 = vmatprep.subr.mxu0 0.0
    %6353 = vmatpush1.msra.mxu0 0.0
    %6354 = vmatprep.subr.mxu0 0.0
    %6355 = vmatpush1.msra.mxu0 0.0
    %6356 = vmatprep.subr.mxu0 0.0
    %6357 = vmatpush1.msra.mxu0 0.0
    %6358 = vmatprep.subr.mxu0 0.0
    %6359 = vmatpush1.msra.mxu0 0.0
    %6360 = vmatprep.subr.mxu0 0.0
    %6361 = vmatpush1.msra.mxu0 0.0
    %6362 = vmatprep.subr.mxu0 0.0
    %6363 = vmatpush1.msra.mxu0 0.0
    %6364 = vmatprep.subr.mxu0 0.0
    %6365 = vmatpush1.msra.mxu0 0.0
    %6366 = vmatprep.subr.mxu0 0.0
    %6367 = vmatpush1.msra.mxu0 0.0
    %6368 = vmatprep.subr.mxu0 0.0
    %6369 = vmatpush1.msra.mxu0 0.0
    %6370 = vmatprep.subr.mxu0 0.0
    %6371 = vmatpush1.msra.mxu0 0.0
    %6372 = vmatprep.subr.mxu0 0.0
    %6373 = vmatpush1.msra.mxu0 0.0
    %6374 = vmatprep.subr.mxu0 0.0
    %6375 = vmatpush1.msra.mxu0 0.0
    %6376 = vmatprep.subr.mxu0 0.0
    %6377 = vmatpush1.msra.mxu0 0.0
    %6378 = vmatprep.subr.mxu0 0.0
    %6379 = vmatpush1.msra.mxu0 0.0
    %6380 = vmatprep.subr.mxu0 0.0
    %6381 = vmatpush1.msra.mxu0 0.0
    %6382 = vmatprep.subr.mxu0 0.0
    %6383 = vmatpush1.msra.mxu0 0.0
    %6384 = vmatprep.subr.mxu0 0.0
    %6385 = vmatpush1.msra.mxu0 0.0
    %6386 = vmatprep.subr.mxu0 0.0
    %6387 = vmatpush1.msra.mxu0 0.0
    %6388 = vmatprep.subr.mxu0 0.0
    %6389 = vmatpush1.msra.mxu0 0.0
    %6390 = vmatprep.mubr.f32.mxu0 0.0
    %6391 = vmatmul.mubr.f32.gmra.mrb[0].mxu0 %v5513
    %v6392 = vpop.f32.mrb[0].mxu0
    %v6393 = vadd.f32 %v5509, %v6392
    %v6394 = vpop.f32.mrb[0].mxu0
    %v6395 = vadd.f32 %v5509, %v6394
    %6396 = vdwg.mxu0
    %6397 = vmatprep.subr.mxu0 %v611
    %6398 = vmatpush1.msra.mxu0 %v610
    %6399 = vmatprep.subr.mxu0 %v5227
    %6400 = vmatpush1.msra.mxu0 %v5226
    %6401 = vmatprep.subr.mxu0 %v5277
    %6402 = vmatpush1.msra.mxu0 %v5276
    %6403 = vmatprep.subr.mxu0 %v5327
    %6404 = vmatpush1.msra.mxu0 %v5326
    %6405 = vmatprep.subr.mxu0 %v5377
    %6406 = vmatpush1.msra.mxu0 %v5376
    %6407 = vmatprep.subr.mxu0 %v5427
    %6408 = vmatpush1.msra.mxu0 %v5426
    %6409 = vmatprep.subr.mxu0 %v5477
    %6410 = vmatpush1.msra.mxu0 %v5476
    %6411 = vmatprep.subr.mxu0 %v5562
    %6412 = vmatpush1.msra.mxu0 %v5560
    %6413 = vmatprep.subr.mxu0 0.0
    %6414 = vmatpush1.msra.mxu0 0.0
    %6415 = vmatprep.subr.mxu0 0.0
    %6416 = vmatpush1.msra.mxu0 0.0
    %6417 = vmatprep.subr.mxu0 0.0
    %6418 = vmatpush1.msra.mxu0 0.0
    %6419 = vmatprep.subr.mxu0 0.0
    %6420 = vmatpush1.msra.mxu0 0.0
    %6421 = vmatprep.subr.mxu0 0.0
    %6422 = vmatpush1.msra.mxu0 0.0
    %6423 = vmatprep.subr.mxu0 0.0
    %6424 = vmatpush1.msra.mxu0 0.0
    %6425 = vmatprep.subr.mxu0 0.0
    %6426 = vmatpush1.msra.mxu0 0.0
    %6427 = vmatprep.subr.mxu0 0.0
    %6428 = vmatpush1.msra.mxu0 0.0
    %6429 = vmatprep.subr.mxu0 0.0
    %6430 = vmatpush1.msra.mxu0 0.0
    %6431 = vmatprep.subr.mxu0 0.0
    %6432 = vmatpush1.msra.mxu0 0.0
    %6433 = vmatprep.subr.mxu0 0.0
    %6434 = vmatpush1.msra.mxu0 0.0
    %6435 = vmatprep.subr.mxu0 0.0
    %6436 = vmatpush1.msra.mxu0 0.0
    %6437 = vmatprep.subr.mxu0 0.0
    %6438 = vmatpush1.msra.mxu0 0.0
    %6439 = vmatprep.subr.mxu0 0.0
    %6440 = vmatpush1.msra.mxu0 0.0
    %6441 = vmatprep.subr.mxu0 0.0
    %6442 = vmatpush1.msra.mxu0 0.0
    %6443 = vmatprep.subr.mxu0 0.0
    %6444 = vmatpush1.msra.mxu0 0.0
    %6445 = vmatprep.subr.mxu0 0.0
    %6446 = vmatpush1.msra.mxu0 0.0
    %6447 = vmatprep.subr.mxu0 0.0
    %6448 = vmatpush1.msra.mxu0 0.0
    %6449 = vmatprep.subr.mxu0 0.0
    %6450 = vmatpush1.msra.mxu0 0.0
    %6451 = vmatprep.subr.mxu0 0.0
    %6452 = vmatpush1.msra.mxu0 0.0
    %6453 = vmatprep.subr.mxu0 0.0
    %6454 = vmatpush1.msra.mxu0 0.0
    %6455 = vmatprep.subr.mxu0 0.0
    %6456 = vmatpush1.msra.mxu0 0.0
    %6457 = vmatprep.subr.mxu0 0.0
    %6458 = vmatpush1.msra.mxu0 0.0
    %6459 = vmatprep.subr.mxu0 0.0
    %6460 = vmatpush1.msra.mxu0 0.0
    %6461 = vmatprep.mubr.f32.mxu0 0.0
    %6462 = vmatmul.mubr.f32.gmra.mrb[0].mxu0 %v5513
    %v6463 = vpop.f32.mrb[0].mxu0
    %v6464 = vadd.f32 %v5509, %v6463
    %v6465 = vpop.f32.mrb[0].mxu0
    %v6466 = vadd.f32 %v5509, %v6465
    %6467 = vdwg.mxu0
    %6468 = vmatprep.subr.mxu0 %v613
    %6469 = vmatpush1.msra.mxu0 %v612
    %6470 = vmatprep.subr.mxu0 %v5229
    %6471 = vmatpush1.msra.mxu0 %v5228
    %6472 = vmatprep.subr.mxu0 %v5279
    %6473 = vmatpush1.msra.mxu0 %v5278
    %6474 = vmatprep.subr.mxu0 %v5329
    %6475 = vmatpush1.msra.mxu0 %v5328
    %6476 = vmatprep.subr.mxu0 %v5379
    %6477 = vmatpush1.msra.mxu0 %v5378
    %6478 = vmatprep.subr.mxu0 %v5429
    %6479 = vmatpush1.msra.mxu0 %v5428
    %6480 = vmatprep.subr.mxu0 %v5479
    %6481 = vmatpush1.msra.mxu0 %v5478
    %6482 = vmatprep.subr.mxu0 %v5566
    %6483 = vmatpush1.msra.mxu0 %v5564
    %6484 = vmatprep.subr.mxu0 0.0
    %6485 = vmatpush1.msra.mxu0 0.0
    %6486 = vmatprep.subr.mxu0 0.0
    %6487 = vmatpush1.msra.mxu0 0.0
    %6488 = vmatprep.subr.mxu0 0.0
    %6489 = vmatpush1.msra.mxu0 0.0
    %6490 = vmatprep.subr.mxu0 0.0
    %6491 = vmatpush1.msra.mxu0 0.0
    %6492 = vmatprep.subr.mxu0 0.0
    %6493 = vmatpush1.msra.mxu0 0.0
    %6494 = vmatprep.subr.mxu0 0.0
    %6495 = vmatpush1.msra.mxu0 0.0
    %6496 = vmatprep.subr.mxu0 0.0
    %6497 = vmatpush1.msra.mxu0 0.0
    %6498 = vmatprep.subr.mxu0 0.0
    %6499 = vmatpush1.msra.mxu0 0.0
    %6500 = vmatprep.subr.mxu0 0.0
    %6501 = vmatpush1.msra.mxu0 0.0
    %6502 = vmatprep.subr.mxu0 0.0
    %6503 = vmatpush1.msra.mxu0 0.0
    %6504 = vmatprep.subr.mxu0 0.0
    %6505 = vmatpush1.msra.mxu0 0.0
    %6506 = vmatprep.subr.mxu0 0.0
    %6507 = vmatpush1.msra.mxu0 0.0
    %6508 = vmatprep.subr.mxu0 0.0
    %6509 = vmatpush1.msra.mxu0 0.0
    %6510 = vmatprep.subr.mxu0 0.0
    %6511 = vmatpush1.msra.mxu0 0.0
    %6512 = vmatprep.subr.mxu0 0.0
    %6513 = vmatpush1.msra.mxu0 0.0
    %6514 = vmatprep.subr.mxu0 0.0
    %6515 = vmatpush1.msra.mxu0 0.0
    %6516 = vmatprep.subr.mxu0 0.0
    %6517 = vmatpush1.msra.mxu0 0.0
    %6518 = vmatprep.subr.mxu0 0.0
    %6519 = vmatpush1.msra.mxu0 0.0
    %6520 = vmatprep.subr.mxu0 0.0
    %6521 = vmatpush1.msra.mxu0 0.0
    %6522 = vmatprep.subr.mxu0 0.0
    %6523 = vmatpush1.msra.mxu0 0.0
    %6524 = vmatprep.subr.mxu0 0.0
    %6525 = vmatpush1.msra.mxu0 0.0
    %6526 = vmatprep.subr.mxu0 0.0
    %6527 = vmatpush1.msra.mxu0 0.0
    %6528 = vmatprep.subr.mxu0 0.0
    %6529 = vmatpush1.msra.mxu0 0.0
    %6530 = vmatprep.subr.mxu0 0.0
    %6531 = vmatpush1.msra.mxu0 0.0
    %6532 = vmatprep.mubr.f32.mxu0 0.0
    %6533 = vmatmul.mubr.f32.gmra.mrb[0].mxu0 %v5513
    %v6534 = vpop.f32.mrb[0].mxu0
    %v6535 = vadd.f32 %v5509, %v6534
    %v6536 = vpop.f32.mrb[0].mxu0
    %v6537 = vadd.f32 %v5509, %v6536
    %6538 = vdwg.mxu0
    %6539 = vmatprep.subr.mxu0 %v615
    %6540 = vmatpush1.msra.mxu0 %v614
    %6541 = vmatprep.subr.mxu0 %v5231
    %6542 = vmatpush1.msra.mxu0 %v5230
    %6543 = vmatprep.subr.mxu0 %v5281
    %6544 = vmatpush1.msra.mxu0 %v5280
    %6545 = vmatprep.subr.mxu0 %v5331
    %6546 = vmatpush1.msra.mxu0 %v5330
    %6547 = vmatprep.subr.mxu0 %v5381
    %6548 = vmatpush1.msra.mxu0 %v5380
    %6549 = vmatprep.subr.mxu0 %v5431
    %6550 = vmatpush1.msra.mxu0 %v5430
    %6551 = vmatprep.subr.mxu0 %v5481
    %6552 = vmatpush1.msra.mxu0 %v5480
    %6553 = vmatprep.subr.mxu0 %v5570
    %6554 = vmatpush1.msra.mxu0 %v5568
    %6555 = vmatprep.subr.mxu0 0.0
    %6556 = vmatpush1.msra.mxu0 0.0
    %6557 = vmatprep.subr.mxu0 0.0
    %6558 = vmatpush1.msra.mxu0 0.0
    %6559 = vmatprep.subr.mxu0 0.0
    %6560 = vmatpush1.msra.mxu0 0.0
    %6561 = vmatprep.subr.mxu0 0.0
    %6562 = vmatpush1.msra.mxu0 0.0
    %6563 = vmatprep.subr.mxu0 0.0
    %6564 = vmatpush1.msra.mxu0 0.0
    %6565 = vmatprep.subr.mxu0 0.0
    %6566 = vmatpush1.msra.mxu0 0.0
    %6567 = vmatprep.subr.mxu0 0.0
    %6568 = vmatpush1.msra.mxu0 0.0
    %6569 = vmatprep.subr.mxu0 0.0
    %6570 = vmatpush1.msra.mxu0 0.0
    %6571 = vmatprep.subr.mxu0 0.0
    %6572 = vmatpush1.msra.mxu0 0.0
    %6573 = vmatprep.subr.mxu0 0.0
    %6574 = vmatpush1.msra.mxu0 0.0
    %6575 = vmatprep.subr.mxu0 0.0
    %6576 = vmatpush1.msra.mxu0 0.0
    %6577 = vmatprep.subr.mxu0 0.0
    %6578 = vmatpush1.msra.mxu0 0.0
    %6579 = vmatprep.subr.mxu0 0.0
    %6580 = vmatpush1.msra.mxu0 0.0
    %6581 = vmatprep.subr.mxu0 0.0
    %6582 = vmatpush1.msra.mxu0 0.0
    %6583 = vmatprep.subr.mxu0 0.0
    %6584 = vmatpush1.msra.mxu0 0.0
    %6585 = vmatprep.subr.mxu0 0.0
    %6586 = vmatpush1.msra.mxu0 0.0
    %6587 = vmatprep.subr.mxu0 0.0
    %6588 = vmatpush1.msra.mxu0 0.0
    %6589 = vmatprep.subr.mxu0 0.0
    %6590 = vmatpush1.msra.mxu0 0.0
    %6591 = vmatprep.subr.mxu0 0.0
    %6592 = vmatpush1.msra.mxu0 0.0
    %6593 = vmatprep.subr.mxu0 0.0
    %6594 = vmatpush1.msra.mxu0 0.0
    %6595 = vmatprep.subr.mxu0 0.0
    %6596 = vmatpush1.msra.mxu0 0.0
    %6597 = vmatprep.subr.mxu0 0.0
    %6598 = vmatpush1.msra.mxu0 0.0
    %6599 = vmatprep.subr.mxu0 0.0
    %6600 = vmatpush1.msra.mxu0 0.0
    %6601 = vmatprep.subr.mxu0 0.0
    %6602 = vmatpush1.msra.mxu0 0.0
    %6603 = vmatprep.mubr.f32.mxu0 0.0
    %6604 = vmatmul.mubr.f32.gmra.mrb[0].mxu0 %v5513
    %v6605 = vpop.f32.mrb[0].mxu0
    %v6606 = vadd.f32 %v5509, %v6605
    %v6607 = vpop.f32.mrb[0].mxu0
    %v6608 = vadd.f32 %v5509, %v6607
    %6609 = vdwg.mxu0
    %6610 = vmatprep.subr.mxu0 %v617
    %6611 = vmatpush1.msra.mxu0 %v616
    %6612 = vmatprep.subr.mxu0 %v5233
    %6613 = vmatpush1.msra.mxu0 %v5232
    %6614 = vmatprep.subr.mxu0 %v5283
    %6615 = vmatpush1.msra.mxu0 %v5282
    %6616 = vmatprep.subr.mxu0 %v5333
    %6617 = vmatpush1.msra.mxu0 %v5332
    %6618 = vmatprep.subr.mxu0 %v5383
    %6619 = vmatpush1.msra.mxu0 %v5382
    %6620 = vmatprep.subr.mxu0 %v5433
    %6621 = vmatpush1.msra.mxu0 %v5432
    %6622 = vmatprep.subr.mxu0 %v5483
    %6623 = vmatpush1.msra.mxu0 %v5482
    %6624 = vmatprep.subr.mxu0 %v5574
    %6625 = vmatpush1.msra.mxu0 %v5572
    %6626 = vmatprep.subr.mxu0 0.0
    %6627 = vmatpush1.msra.mxu0 0.0
    %6628 = vmatprep.subr.mxu0 0.0
    %6629 = vmatpush1.msra.mxu0 0.0
    %6630 = vmatprep.subr.mxu0 0.0
    %6631 = vmatpush1.msra.mxu0 0.0
    %6632 = vmatprep.subr.mxu0 0.0
    %6633 = vmatpush1.msra.mxu0 0.0
    %6634 = vmatprep.subr.mxu0 0.0
    %6635 = vmatpush1.msra.mxu0 0.0
    %6636 = vmatprep.subr.mxu0 0.0
    %6637 = vmatpush1.msra.mxu0 0.0
    %6638 = vmatprep.subr.mxu0 0.0
    %6639 = vmatpush1.msra.mxu0 0.0
    %6640 = vmatprep.subr.mxu0 0.0
    %6641 = vmatpush1.msra.mxu0 0.0
    %6642 = vmatprep.subr.mxu0 0.0
    %6643 = vmatpush1.msra.mxu0 0.0
    %6644 = vmatprep.subr.mxu0 0.0
    %6645 = vmatpush1.msra.mxu0 0.0
    %6646 = vmatprep.subr.mxu0 0.0
    %6647 = vmatpush1.msra.mxu0 0.0
    %6648 = vmatprep.subr.mxu0 0.0
    %6649 = vmatpush1.msra.mxu0 0.0
    %6650 = vmatprep.subr.mxu0 0.0
    %6651 = vmatpush1.msra.mxu0 0.0
    %6652 = vmatprep.subr.mxu0 0.0
    %6653 = vmatpush1.msra.mxu0 0.0
    %6654 = vmatprep.subr.mxu0 0.0
    %6655 = vmatpush1.msra.mxu0 0.0
    %6656 = vmatprep.subr.mxu0 0.0
    %6657 = vmatpush1.msra.mxu0 0.0
    %6658 = vmatprep.subr.mxu0 0.0
    %6659 = vmatpush1.msra.mxu0 0.0
    %6660 = vmatprep.subr.mxu0 0.0
    %6661 = vmatpush1.msra.mxu0 0.0
    %6662 = vmatprep.subr.mxu0 0.0
    %6663 = vmatpush1.msra.mxu0 0.0
    %6664 = vmatprep.subr.mxu0 0.0
    %6665 = vmatpush1.msra.mxu0 0.0
    %6666 = vmatprep.subr.mxu0 0.0
    %6667 = vmatpush1.msra.mxu0 0.0
    %6668 = vmatprep.subr.mxu0 0.0
    %6669 = vmatpush1.msra.mxu0 0.0
    %6670 = vmatprep.subr.mxu0 0.0
    %6671 = vmatpush1.msra.mxu0 0.0
    %6672 = vmatprep.subr.mxu0 0.0
    %6673 = vmatpush1.msra.mxu0 0.0
    %6674 = vmatprep.mubr.f32.mxu0 0.0
    %6675 = vmatmul.mubr.f32.gmra.mrb[0].mxu0 %v5513
    %v6676 = vpop.f32.mrb[0].mxu0
    %v6677 = vadd.f32 %v5509, %v6676
    %v6678 = vpop.f32.mrb[0].mxu0
    %v6679 = vadd.f32 %v5509, %v6678
    %6680 = vdwg.mxu0
    %6681 = vmatprep.subr.mxu0 %v619
    %6682 = vmatpush1.msra.mxu0 %v618
    %6683 = vmatprep.subr.mxu0 %v5235
    %6684 = vmatpush1.msra.mxu0 %v5234
    %6685 = vmatprep.subr.mxu0 %v5285
    %6686 = vmatpush1.msra.mxu0 %v5284
    %6687 = vmatprep.subr.mxu0 %v5335
    %6688 = vmatpush1.msra.mxu0 %v5334
    %6689 = vmatprep.subr.mxu0 %v5385
    %6690 = vmatpush1.msra.mxu0 %v5384
    %6691 = vmatprep.subr.mxu0 %v5435
    %6692 = vmatpush1.msra.mxu0 %v5434
    %6693 = vmatprep.subr.mxu0 %v5485
    %6694 = vmatpush1.msra.mxu0 %v5484
    %6695 = vmatprep.subr.mxu0 %v5578
    %6696 = vmatpush1.msra.mxu0 %v5576
    %6697 = vmatprep.subr.mxu0 0.0
    %6698 = vmatpush1.msra.mxu0 0.0
    %6699 = vmatprep.subr.mxu0 0.0
    %6700 = vmatpush1.msra.mxu0 0.0
    %6701 = vmatprep.subr.mxu0 0.0
    %6702 = vmatpush1.msra.mxu0 0.0
    %6703 = vmatprep.subr.mxu0 0.0
    %6704 = vmatpush1.msra.mxu0 0.0
    %6705 = vmatprep.subr.mxu0 0.0
    %6706 = vmatpush1.msra.mxu0 0.0
    %6707 = vmatprep.subr.mxu0 0.0
    %6708 = vmatpush1.msra.mxu0 0.0
    %6709 = vmatprep.subr.mxu0 0.0
    %6710 = vmatpush1.msra.mxu0 0.0
    %6711 = vmatprep.subr.mxu0 0.0
    %6712 = vmatpush1.msra.mxu0 0.0
    %6713 = vmatprep.subr.mxu0 0.0
    %6714 = vmatpush1.msra.mxu0 0.0
    %6715 = vmatprep.subr.mxu0 0.0
    %6716 = vmatpush1.msra.mxu0 0.0
    %6717 = vmatprep.subr.mxu0 0.0
    %6718 = vmatpush1.msra.mxu0 0.0
    %6719 = vmatprep.subr.mxu0 0.0
    %6720 = vmatpush1.msra.mxu0 0.0
    %6721 = vmatprep.subr.mxu0 0.0
    %6722 = vmatpush1.msra.mxu0 0.0
    %6723 = vmatprep.subr.mxu0 0.0
    %6724 = vmatpush1.msra.mxu0 0.0
    %6725 = vmatprep.subr.mxu0 0.0
    %6726 = vmatpush1.msra.mxu0 0.0
    %6727 = vmatprep.subr.mxu0 0.0
    %6728 = vmatpush1.msra.mxu0 0.0
    %6729 = vmatprep.subr.mxu0 0.0
    %6730 = vmatpush1.msra.mxu0 0.0
    %6731 = vmatprep.subr.mxu0 0.0
    %6732 = vmatpush1.msra.mxu0 0.0
    %6733 = vmatprep.subr.mxu0 0.0
    %6734 = vmatpush1.msra.mxu0 0.0
    %6735 = vmatprep.subr.mxu0 0.0
    %6736 = vmatpush1.msra.mxu0 0.0
    %6737 = vmatprep.subr.mxu0 0.0
    %6738 = vmatpush1.msra.mxu0 0.0
    %6739 = vmatprep.subr.mxu0 0.0
    %6740 = vmatpush1.msra.mxu0 0.0
    %6741 = vmatprep.subr.mxu0 0.0
    %6742 = vmatpush1.msra.mxu0 0.0
    %6743 = vmatprep.subr.mxu0 0.0
    %6744 = vmatpush1.msra.mxu0 0.0
    %6745 = vmatprep.mubr.f32.mxu0 0.0
    %6746 = vmatmul.mubr.f32.gmra.mrb[0].mxu0 %v5513
    %v6747 = vpop.f32.mrb[0].mxu0
    %v6748 = vadd.f32 %v5509, %v6747
    %v6749 = vpop.f32.mrb[0].mxu0
    %v6750 = vadd.f32 %v5509, %v6749
    %6751 = vdwg.mxu0
    %6752 = vmatprep.subr.mxu0 %v621
    %6753 = vmatpush1.msra.mxu0 %v620
    %6754 = vmatprep.subr.mxu0 %v5237
    %6755 = vmatpush1.msra.mxu0 %v5236
    %6756 = vmatprep.subr.mxu0 %v5287
    %6757 = vmatpush1.msra.mxu0 %v5286
    %6758 = vmatprep.subr.mxu0 %v5337
    %6759 = vmatpush1.msra.mxu0 %v5336
    %6760 = vmatprep.subr.mxu0 %v5387
    %6761 = vmatpush1.msra.mxu0 %v5386
    %6762 = vmatprep.subr.mxu0 %v5437
    %6763 = vmatpush1.msra.mxu0 %v5436
    %6764 = vmatprep.subr.mxu0 %v5487
    %6765 = vmatpush1.msra.mxu0 %v5486
    %6766 = vmatprep.subr.mxu0 %v5582
    %6767 = vmatpush1.msra.mxu0 %v5580
    %6768 = vmatprep.subr.mxu0 0.0
    %6769 = vmatpush1.msra.mxu0 0.0
    %6770 = vmatprep.subr.mxu0 0.0
    %6771 = vmatpush1.msra.mxu0 0.0
    %6772 = vmatprep.subr.mxu0 0.0
    %6773 = vmatpush1.msra.mxu0 0.0
    %6774 = vmatprep.subr.mxu0 0.0
    %6775 = vmatpush1.msra.mxu0 0.0
    %6776 = vmatprep.subr.mxu0 0.0
    %6777 = vmatpush1.msra.mxu0 0.0
    %6778 = vmatprep.subr.mxu0 0.0
    %6779 = vmatpush1.msra.mxu0 0.0
    %6780 = vmatprep.subr.mxu0 0.0
    %6781 = vmatpush1.msra.mxu0 0.0
    %6782 = vmatprep.subr.mxu0 0.0
    %6783 = vmatpush1.msra.mxu0 0.0
    %6784 = vmatprep.subr.mxu0 0.0
    %6785 = vmatpush1.msra.mxu0 0.0
    %6786 = vmatprep.subr.mxu0 0.0
    %6787 = vmatpush1.msra.mxu0 0.0
    %6788 = vmatprep.subr.mxu0 0.0
    %6789 = vmatpush1.msra.mxu0 0.0
    %6790 = vmatprep.subr.mxu0 0.0
    %6791 = vmatpush1.msra.mxu0 0.0
    %6792 = vmatprep.subr.mxu0 0.0
    %6793 = vmatpush1.msra.mxu0 0.0
    %6794 = vmatprep.subr.mxu0 0.0
    %6795 = vmatpush1.msra.mxu0 0.0
    %6796 = vmatprep.subr.mxu0 0.0
    %6797 = vmatpush1.msra.mxu0 0.0
    %6798 = vmatprep.subr.mxu0 0.0
    %6799 = vmatpush1.msra.mxu0 0.0
    %6800 = vmatprep.subr.mxu0 0.0
    %6801 = vmatpush1.msra.mxu0 0.0
    %6802 = vmatprep.subr.mxu0 0.0
    %6803 = vmatpush1.msra.mxu0 0.0
    %6804 = vmatprep.subr.mxu0 0.0
    %6805 = vmatpush1.msra.mxu0 0.0
    %6806 = vmatprep.subr.mxu0 0.0
    %6807 = vmatpush1.msra.mxu0 0.0
    %6808 = vmatprep.subr.mxu0 0.0
    %6809 = vmatpush1.msra.mxu0 0.0
    %6810 = vmatprep.subr.mxu0 0.0
    %6811 = vmatpush1.msra.mxu0 0.0
    %6812 = vmatprep.subr.mxu0 0.0
    %6813 = vmatpush1.msra.mxu0 0.0
    %6814 = vmatprep.subr.mxu0 0.0
    %6815 = vmatpush1.msra.mxu0 0.0
    %6816 = vmatprep.mubr.f32.mxu0 0.0
    %6817 = vmatmul.mubr.f32.gmra.mrb[0].mxu0 %v5513
    %v6818 = vpop.f32.mrb[0].mxu0
    %v6819 = vadd.f32 %v5509, %v6818
    %v6820 = vpop.f32.mrb[0].mxu0
    %v6821 = vadd.f32 %v5509, %v6820
    %6822 = vdwg.mxu0
    %6823 = vmatprep.subr.mxu0 %v623
    %6824 = vmatpush1.msra.mxu0 %v622
    %6825 = vmatprep.subr.mxu0 %v5239
    %6826 = vmatpush1.msra.mxu0 %v5238
    %6827 = vmatprep.subr.mxu0 %v5289
    %6828 = vmatpush1.msra.mxu0 %v5288
    %6829 = vmatprep.subr.mxu0 %v5339
    %6830 = vmatpush1.msra.mxu0 %v5338
    %6831 = vmatprep.subr.mxu0 %v5389
    %6832 = vmatpush1.msra.mxu0 %v5388
    %6833 = vmatprep.subr.mxu0 %v5439
    %6834 = vmatpush1.msra.mxu0 %v5438
    %6835 = vmatprep.subr.mxu0 %v5489
    %6836 = vmatpush1.msra.mxu0 %v5488
    %6837 = vmatprep.subr.mxu0 %v5586
    %6838 = vmatpush1.msra.mxu0 %v5584
    %6839 = vmatprep.subr.mxu0 0.0
    %6840 = vmatpush1.msra.mxu0 0.0
    %6841 = vmatprep.subr.mxu0 0.0
    %6842 = vmatpush1.msra.mxu0 0.0
    %6843 = vmatprep.subr.mxu0 0.0
    %6844 = vmatpush1.msra.mxu0 0.0
    %6845 = vmatprep.subr.mxu0 0.0
    %6846 = vmatpush1.msra.mxu0 0.0
    %6847 = vmatprep.subr.mxu0 0.0
    %6848 = vmatpush1.msra.mxu0 0.0
    %6849 = vmatprep.subr.mxu0 0.0
    %6850 = vmatpush1.msra.mxu0 0.0
    %6851 = vmatprep.subr.mxu0 0.0
    %6852 = vmatpush1.msra.mxu0 0.0
    %6853 = vmatprep.subr.mxu0 0.0
    %6854 = vmatpush1.msra.mxu0 0.0
    %6855 = vmatprep.subr.mxu0 0.0
    %6856 = vmatpush1.msra.mxu0 0.0
    %6857 = vmatprep.subr.mxu0 0.0
    %6858 = vmatpush1.msra.mxu0 0.0
    %6859 = vmatprep.subr.mxu0 0.0
    %6860 = vmatpush1.msra.mxu0 0.0
    %6861 = vmatprep.subr.mxu0 0.0
    %6862 = vmatpush1.msra.mxu0 0.0
    %6863 = vmatprep.subr.mxu0 0.0
    %6864 = vmatpush1.msra.mxu0 0.0
    %6865 = vmatprep.subr.mxu0 0.0
    %6866 = vmatpush1.msra.mxu0 0.0
    %6867 = vmatprep.subr.mxu0 0.0
    %6868 = vmatpush1.msra.mxu0 0.0
    %6869 = vmatprep.subr.mxu0 0.0
    %6870 = vmatpush1.msra.mxu0 0.0
    %6871 = vmatprep.subr.mxu0 0.0
    %6872 = vmatpush1.msra.mxu0 0.0
    %6873 = vmatprep.subr.mxu0 0.0
    %6874 = vmatpush1.msra.mxu0 0.0
    %6875 = vmatprep.subr.mxu0 0.0
    %6876 = vmatpush1.msra.mxu0 0.0
    %6877 = vmatprep.subr.mxu0 0.0
    %6878 = vmatpush1.msra.mxu0 0.0
    %6879 = vmatprep.subr.mxu0 0.0
    %6880 = vmatpush1.msra.mxu0 0.0
    %6881 = vmatprep.subr.mxu0 0.0
    %6882 = vmatpush1.msra.mxu0 0.0
    %6883 = vmatprep.subr.mxu0 0.0
    %6884 = vmatpush1.msra.mxu0 0.0
    %6885 = vmatprep.subr.mxu0 0.0
    %6886 = vmatpush1.msra.mxu0 0.0
    %6887 = vmatprep.mubr.f32.mxu0 0.0
    %6888 = vmatmul.mubr.f32.gmra.mrb[0].mxu0 %v5513
    %v6889 = vpop.f32.mrb[0].mxu0
    %v6890 = vadd.f32 %v5509, %v6889
    %v6891 = vpop.f32.mrb[0].mxu0
    %v6892 = vadd.f32 %v5509, %v6891
    %6893 = vdwg.mxu0
    %6894 = vmatprep.subr.mxu0 %v625
    %6895 = vmatpush1.msra.mxu0 %v624
    %6896 = vmatprep.subr.mxu0 %v5241
    %6897 = vmatpush1.msra.mxu0 %v5240
    %6898 = vmatprep.subr.mxu0 %v5291
    %6899 = vmatpush1.msra.mxu0 %v5290
    %6900 = vmatprep.subr.mxu0 %v5341
    %6901 = vmatpush1.msra.mxu0 %v5340
    %6902 = vmatprep.subr.mxu0 %v5391
    %6903 = vmatpush1.msra.mxu0 %v5390
    %6904 = vmatprep.subr.mxu0 %v5441
    %6905 = vmatpush1.msra.mxu0 %v5440
    %6906 = vmatprep.subr.mxu0 %v5491
    %6907 = vmatpush1.msra.mxu0 %v5490
    %6908 = vmatprep.subr.mxu0 %v5590
    %6909 = vmatpush1.msra.mxu0 %v5588
    %6910 = vmatprep.subr.mxu0 0.0
    %6911 = vmatpush1.msra.mxu0 0.0
    %6912 = vmatprep.subr.mxu0 0.0
    %6913 = vmatpush1.msra.mxu0 0.0
    %6914 = vmatprep.subr.mxu0 0.0
    %6915 = vmatpush1.msra.mxu0 0.0
    %6916 = vmatprep.subr.mxu0 0.0
    %6917 = vmatpush1.msra.mxu0 0.0
    %6918 = vmatprep.subr.mxu0 0.0
    %6919 = vmatpush1.msra.mxu0 0.0
    %6920 = vmatprep.subr.mxu0 0.0
    %6921 = vmatpush1.msra.mxu0 0.0
    %6922 = vmatprep.subr.mxu0 0.0
    %6923 = vmatpush1.msra.mxu0 0.0
    %6924 = vmatprep.subr.mxu0 0.0
    %6925 = vmatpush1.msra.mxu0 0.0
    %6926 = vmatprep.subr.mxu0 0.0
    %6927 = vmatpush1.msra.mxu0 0.0
    %6928 = vmatprep.subr.mxu0 0.0
    %6929 = vmatpush1.msra.mxu0 0.0
    %6930 = vmatprep.subr.mxu0 0.0
    %6931 = vmatpush1.msra.mxu0 0.0
    %6932 = vmatprep.subr.mxu0 0.0
    %6933 = vmatpush1.msra.mxu0 0.0
    %6934 = vmatprep.subr.mxu0 0.0
    %6935 = vmatpush1.msra.mxu0 0.0
    %6936 = vmatprep.subr.mxu0 0.0
    %6937 = vmatpush1.msra.mxu0 0.0
    %6938 = vmatprep.subr.mxu0 0.0
    %6939 = vmatpush1.msra.mxu0 0.0
    %6940 = vmatprep.subr.mxu0 0.0
    %6941 = vmatpush1.msra.mxu0 0.0
    %6942 = vmatprep.subr.mxu0 0.0
    %6943 = vmatpush1.msra.mxu0 0.0
    %6944 = vmatprep.subr.mxu0 0.0
    %6945 = vmatpush1.msra.mxu0 0.0
    %6946 = vmatprep.subr.mxu0 0.0
    %6947 = vmatpush1.msra.mxu0 0.0
    %6948 = vmatprep.subr.mxu0 0.0
    %6949 = vmatpush1.msra.mxu0 0.0
    %6950 = vmatprep.subr.mxu0 0.0
    %6951 = vmatpush1.msra.mxu0 0.0
    %6952 = vmatprep.subr.mxu0 0.0
    %6953 = vmatpush1.msra.mxu0 0.0
    %6954 = vmatprep.subr.mxu0 0.0
    %6955 = vmatpush1.msra.mxu0 0.0
    %6956 = vmatprep.subr.mxu0 0.0
    %6957 = vmatpush1.msra.mxu0 0.0
    %6958 = vmatprep.mubr.f32.mxu0 0.0
    %6959 = vmatmul.mubr.f32.gmra.mrb[0].mxu0 %v5513
    %v6960 = vpop.f32.mrb[0].mxu0
    %v6961 = vadd.f32 %v5509, %v6960
    %v6962 = vpop.f32.mrb[0].mxu0
    %v6963 = vadd.f32 %v5509, %v6962
    %6964 = vdwg.mxu0
    %6965 = vmatprep.subr.mxu0 %v627
    %6966 = vmatpush1.msra.mxu0 %v626
    %6967 = vmatprep.subr.mxu0 %v5243
    %6968 = vmatpush1.msra.mxu0 %v5242
    %6969 = vmatprep.subr.mxu0 %v5293
    %6970 = vmatpush1.msra.mxu0 %v5292
    %6971 = vmatprep.subr.mxu0 %v5343
    %6972 = vmatpush1.msra.mxu0 %v5342
    %6973 = vmatprep.subr.mxu0 %v5393
    %6974 = vmatpush1.msra.mxu0 %v5392
    %6975 = vmatprep.subr.mxu0 %v5443
    %6976 = vmatpush1.msra.mxu0 %v5442
    %6977 = vmatprep.subr.mxu0 %v5493
    %6978 = vmatpush1.msra.mxu0 %v5492
    %6979 = vmatprep.subr.mxu0 %v5594
    %6980 = vmatpush1.msra.mxu0 %v5592
    %6981 = vmatprep.subr.mxu0 0.0
    %6982 = vmatpush1.msra.mxu0 0.0
    %6983 = vmatprep.subr.mxu0 0.0
    %6984 = vmatpush1.msra.mxu0 0.0
    %6985 = vmatprep.subr.mxu0 0.0
    %6986 = vmatpush1.msra.mxu0 0.0
    %6987 = vmatprep.subr.mxu0 0.0
    %6988 = vmatpush1.msra.mxu0 0.0
    %6989 = vmatprep.subr.mxu0 0.0
    %6990 = vmatpush1.msra.mxu0 0.0
    %6991 = vmatprep.subr.mxu0 0.0
    %6992 = vmatpush1.msra.mxu0 0.0
    %6993 = vmatprep.subr.mxu0 0.0
    %6994 = vmatpush1.msra.mxu0 0.0
    %6995 = vmatprep.subr.mxu0 0.0
    %6996 = vmatpush1.msra.mxu0 0.0
    %6997 = vmatprep.subr.mxu0 0.0
    %6998 = vmatpush1.msra.mxu0 0.0
    %6999 = vmatprep.subr.mxu0 0.0
    %7000 = vmatpush1.msra.mxu0 0.0
    %7001 = vmatprep.subr.mxu0 0.0
    %7002 = vmatpush1.msra.mxu0 0.0
    %7003 = vmatprep.subr.mxu0 0.0
    %7004 = vmatpush1.msra.mxu0 0.0
    %7005 = vmatprep.subr.mxu0 0.0
    %7006 = vmatpush1.msra.mxu0 0.0
    %7007 = vmatprep.subr.mxu0 0.0
    %7008 = vmatpush1.msra.mxu0 0.0
    %7009 = vmatprep.subr.mxu0 0.0
    %7010 = vmatpush1.msra.mxu0 0.0
    %7011 = vmatprep.subr.mxu0 0.0
    %7012 = vmatpush1.msra.mxu0 0.0
    %7013 = vmatprep.subr.mxu0 0.0
    %7014 = vmatpush1.msra.mxu0 0.0
    %7015 = vmatprep.subr.mxu0 0.0
    %7016 = vmatpush1.msra.mxu0 0.0
    %7017 = vmatprep.subr.mxu0 0.0
    %7018 = vmatpush1.msra.mxu0 0.0
    %7019 = vmatprep.subr.mxu0 0.0
    %7020 = vmatpush1.msra.mxu0 0.0
    %7021 = vmatprep.subr.mxu0 0.0
    %7022 = vmatpush1.msra.mxu0 0.0
    %7023 = vmatprep.subr.mxu0 0.0
    %7024 = vmatpush1.msra.mxu0 0.0
    %7025 = vmatprep.subr.mxu0 0.0
    %7026 = vmatpush1.msra.mxu0 0.0
    %7027 = vmatprep.subr.mxu0 0.0
    %7028 = vmatpush1.msra.mxu0 0.0
    %7029 = vmatprep.mubr.f32.mxu0 0.0
    %7030 = vmatmul.mubr.f32.gmra.mrb[0].mxu0 %v5513
    %v7031 = vpop.f32.mrb[0].mxu0
    %v7032 = vadd.f32 %v5509, %v7031
    %v7033 = vpop.f32.mrb[0].mxu0
    %v7034 = vadd.f32 %v5509, %v7033
    %7035 = vdwg.mxu0
    %7036 = vmatprep.subr.mxu0 %v629
    %7037 = vmatpush1.msra.mxu0 %v628
    %7038 = vmatprep.subr.mxu0 %v5245
    %7039 = vmatpush1.msra.mxu0 %v5244
    %7040 = vmatprep.subr.mxu0 %v5295
    %7041 = vmatpush1.msra.mxu0 %v5294
    %7042 = vmatprep.subr.mxu0 %v5345
    %7043 = vmatpush1.msra.mxu0 %v5344
    %7044 = vmatprep.subr.mxu0 %v5395
    %7045 = vmatpush1.msra.mxu0 %v5394
    %7046 = vmatprep.subr.mxu0 %v5445
    %7047 = vmatpush1.msra.mxu0 %v5444
    %7048 = vmatprep.subr.mxu0 %v5495
    %7049 = vmatpush1.msra.mxu0 %v5494
    %7050 = vmatprep.subr.mxu0 %v5598
    %7051 = vmatpush1.msra.mxu0 %v5596
    %7052 = vmatprep.subr.mxu0 0.0
    %7053 = vmatpush1.msra.mxu0 0.0
    %7054 = vmatprep.subr.mxu0 0.0
    %7055 = vmatpush1.msra.mxu0 0.0
    %7056 = vmatprep.subr.mxu0 0.0
    %7057 = vmatpush1.msra.mxu0 0.0
    %7058 = vmatprep.subr.mxu0 0.0
    %7059 = vmatpush1.msra.mxu0 0.0
    %7060 = vmatprep.subr.mxu0 0.0
    %7061 = vmatpush1.msra.mxu0 0.0
    %7062 = vmatprep.subr.mxu0 0.0
    %7063 = vmatpush1.msra.mxu0 0.0
    %7064 = vmatprep.subr.mxu0 0.0
    %7065 = vmatpush1.msra.mxu0 0.0
    %7066 = vmatprep.subr.mxu0 0.0
    %7067 = vmatpush1.msra.mxu0 0.0
    %7068 = vmatprep.subr.mxu0 0.0
    %7069 = vmatpush1.msra.mxu0 0.0
    %7070 = vmatprep.subr.mxu0 0.0
    %7071 = vmatpush1.msra.mxu0 0.0
    %7072 = vmatprep.subr.mxu0 0.0
    %7073 = vmatpush1.msra.mxu0 0.0
    %7074 = vmatprep.subr.mxu0 0.0
    %7075 = vmatpush1.msra.mxu0 0.0
    %7076 = vmatprep.subr.mxu0 0.0
    %7077 = vmatpush1.msra.mxu0 0.0
    %7078 = vmatprep.subr.mxu0 0.0
    %7079 = vmatpush1.msra.mxu0 0.0
    %7080 = vmatprep.subr.mxu0 0.0
    %7081 = vmatpush1.msra.mxu0 0.0
    %7082 = vmatprep.subr.mxu0 0.0
    %7083 = vmatpush1.msra.mxu0 0.0
    %7084 = vmatprep.subr.mxu0 0.0
    %7085 = vmatpush1.msra.mxu0 0.0
    %7086 = vmatprep.subr.mxu0 0.0
    %7087 = vmatpush1.msra.mxu0 0.0
    %7088 = vmatprep.subr.mxu0 0.0
    %7089 = vmatpush1.msra.mxu0 0.0
    %7090 = vmatprep.subr.mxu0 0.0
    %7091 = vmatpush1.msra.mxu0 0.0
    %7092 = vmatprep.subr.mxu0 0.0
    %7093 = vmatpush1.msra.mxu0 0.0
    %7094 = vmatprep.subr.mxu0 0.0
    %7095 = vmatpush1.msra.mxu0 0.0
    %7096 = vmatprep.subr.mxu0 0.0
    %7097 = vmatpush1.msra.mxu0 0.0
    %7098 = vmatprep.subr.mxu0 0.0
    %7099 = vmatpush1.msra.mxu0 0.0
    %7100 = vmatprep.mubr.f32.mxu0 0.0
    %7101 = vmatmul.mubr.f32.gmra.mrb[0].mxu0 %v5513
    %v7102 = vpop.f32.mrb[0].mxu0
    %v7103 = vadd.f32 %v5509, %v7102
    %v7104 = vpop.f32.mrb[0].mxu0
    %v7105 = vadd.f32 %v5509, %v7104
    %7106 = vdwg.mxu0
    %7107 = vmatprep.subr.mxu0 %v631
    %7108 = vmatpush1.msra.mxu0 %v630
    %7109 = vmatprep.subr.mxu0 %v5247
    %7110 = vmatpush1.msra.mxu0 %v5246
    %7111 = vmatprep.subr.mxu0 %v5297
    %7112 = vmatpush1.msra.mxu0 %v5296
    %7113 = vmatprep.subr.mxu0 %v5347
    %7114 = vmatpush1.msra.mxu0 %v5346
    %7115 = vmatprep.subr.mxu0 %v5397
    %7116 = vmatpush1.msra.mxu0 %v5396
    %7117 = vmatprep.subr.mxu0 %v5447
    %7118 = vmatpush1.msra.mxu0 %v5446
    %7119 = vmatprep.subr.mxu0 %v5497
    %7120 = vmatpush1.msra.mxu0 %v5496
    %7121 = vmatprep.subr.mxu0 %v5602
    %7122 = vmatpush1.msra.mxu0 %v5600
    %7123 = vmatprep.subr.mxu0 0.0
    %7124 = vmatpush1.msra.mxu0 0.0
    %7125 = vmatprep.subr.mxu0 0.0
    %7126 = vmatpush1.msra.mxu0 0.0
    %7127 = vmatprep.subr.mxu0 0.0
    %7128 = vmatpush1.msra.mxu0 0.0
    %7129 = vmatprep.subr.mxu0 0.0
    %7130 = vmatpush1.msra.mxu0 0.0
    %7131 = vmatprep.subr.mxu0 0.0
    %7132 = vmatpush1.msra.mxu0 0.0
    %7133 = vmatprep.subr.mxu0 0.0
    %7134 = vmatpush1.msra.mxu0 0.0
    %7135 = vmatprep.subr.mxu0 0.0
    %7136 = vmatpush1.msra.mxu0 0.0
    %7137 = vmatprep.subr.mxu0 0.0
    %7138 = vmatpush1.msra.mxu0 0.0
    %7139 = vmatprep.subr.mxu0 0.0
    %7140 = vmatpush1.msra.mxu0 0.0
    %7141 = vmatprep.subr.mxu0 0.0
    %7142 = vmatpush1.msra.mxu0 0.0
    %7143 = vmatprep.subr.mxu0 0.0
    %7144 = vmatpush1.msra.mxu0 0.0
    %7145 = vmatprep.subr.mxu0 0.0
    %7146 = vmatpush1.msra.mxu0 0.0
    %7147 = vmatprep.subr.mxu0 0.0
    %7148 = vmatpush1.msra.mxu0 0.0
    %7149 = vmatprep.subr.mxu0 0.0
    %7150 = vmatpush1.msra.mxu0 0.0
    %7151 = vmatprep.subr.mxu0 0.0
    %7152 = vmatpush1.msra.mxu0 0.0
    %7153 = vmatprep.subr.mxu0 0.0
    %7154 = vmatpush1.msra.mxu0 0.0
    %7155 = vmatprep.subr.mxu0 0.0
    %7156 = vmatpush1.msra.mxu0 0.0
    %7157 = vmatprep.subr.mxu0 0.0
    %7158 = vmatpush1.msra.mxu0 0.0
    %7159 = vmatprep.subr.mxu0 0.0
    %7160 = vmatpush1.msra.mxu0 0.0
    %7161 = vmatprep.subr.mxu0 0.0
    %7162 = vmatpush1.msra.mxu0 0.0
    %7163 = vmatprep.subr.mxu0 0.0
    %7164 = vmatpush1.msra.mxu0 0.0
    %7165 = vmatprep.subr.mxu0 0.0
    %7166 = vmatpush1.msra.mxu0 0.0
    %7167 = vmatprep.subr.mxu0 0.0
    %7168 = vmatpush1.msra.mxu0 0.0
    %7169 = vmatprep.subr.mxu0 0.0
    %7170 = vmatpush1.msra.mxu0 0.0
    %7171 = vmatprep.mubr.f32.mxu0 0.0
    %7172 = vmatmul.mubr.f32.gmra.mrb[0].mxu0 %v5513
    %v7173 = vpop.f32.mrb[0].mxu0
    %v7174 = vadd.f32 %v5509, %v7173
    %v7175 = vpop.f32.mrb[0].mxu0
    %v7176 = vadd.f32 %v5509, %v7175
    %7177 = vdwg.mxu0
    %7178 = vmatprep.subr.mxu0 %v633
    %7179 = vmatpush1.msra.mxu0 %v632
    %7180 = vmatprep.subr.mxu0 %v5249
    %7181 = vmatpush1.msra.mxu0 %v5248
    %7182 = vmatprep.subr.mxu0 %v5299
    %7183 = vmatpush1.msra.mxu0 %v5298
    %7184 = vmatprep.subr.mxu0 %v5349
    %7185 = vmatpush1.msra.mxu0 %v5348
    %7186 = vmatprep.subr.mxu0 %v5399
    %7187 = vmatpush1.msra.mxu0 %v5398
    %7188 = vmatprep.subr.mxu0 %v5449
    %7189 = vmatpush1.msra.mxu0 %v5448
    %7190 = vmatprep.subr.mxu0 %v5499
    %7191 = vmatpush1.msra.mxu0 %v5498
    %7192 = vmatprep.subr.mxu0 %v5606
    %7193 = vmatpush1.msra.mxu0 %v5604
    %7194 = vmatprep.subr.mxu0 0.0
    %7195 = vmatpush1.msra.mxu0 0.0
    %7196 = vmatprep.subr.mxu0 0.0
    %7197 = vmatpush1.msra.mxu0 0.0
    %7198 = vmatprep.subr.mxu0 0.0
    %7199 = vmatpush1.msra.mxu0 0.0
    %7200 = vmatprep.subr.mxu0 0.0
    %7201 = vmatpush1.msra.mxu0 0.0
    %7202 = vmatprep.subr.mxu0 0.0
    %7203 = vmatpush1.msra.mxu0 0.0
    %7204 = vmatprep.subr.mxu0 0.0
    %7205 = vmatpush1.msra.mxu0 0.0
    %7206 = vmatprep.subr.mxu0 0.0
    %7207 = vmatpush1.msra.mxu0 0.0
    %7208 = vmatprep.subr.mxu0 0.0
    %7209 = vmatpush1.msra.mxu0 0.0
    %7210 = vmatprep.subr.mxu0 0.0
    %7211 = vmatpush1.msra.mxu0 0.0
    %7212 = vmatprep.subr.mxu0 0.0
    %7213 = vmatpush1.msra.mxu0 0.0
    %7214 = vmatprep.subr.mxu0 0.0
    %7215 = vmatpush1.msra.mxu0 0.0
    %7216 = vmatprep.subr.mxu0 0.0
    %7217 = vmatpush1.msra.mxu0 0.0
    %7218 = vmatprep.subr.mxu0 0.0
    %7219 = vmatpush1.msra.mxu0 0.0
    %7220 = vmatprep.subr.mxu0 0.0
    %7221 = vmatpush1.msra.mxu0 0.0
    %7222 = vmatprep.subr.mxu0 0.0
    %7223 = vmatpush1.msra.mxu0 0.0
    %7224 = vmatprep.subr.mxu0 0.0
    %7225 = vmatpush1.msra.mxu0 0.0
    %7226 = vmatprep.subr.mxu0 0.0
    %7227 = vmatpush1.msra.mxu0 0.0
    %7228 = vmatprep.subr.mxu0 0.0
    %7229 = vmatpush1.msra.mxu0 0.0
    %7230 = vmatprep.subr.mxu0 0.0
    %7231 = vmatpush1.msra.mxu0 0.0
    %7232 = vmatprep.subr.mxu0 0.0
    %7233 = vmatpush1.msra.mxu0 0.0
    %7234 = vmatprep.subr.mxu0 0.0
    %7235 = vmatpush1.msra.mxu0 0.0
    %7236 = vmatprep.subr.mxu0 0.0
    %7237 = vmatpush1.msra.mxu0 0.0
    %7238 = vmatprep.subr.mxu0 0.0
    %7239 = vmatpush1.msra.mxu0 0.0
    %7240 = vmatprep.subr.mxu0 0.0
    %7241 = vmatpush1.msra.mxu0 0.0
    %7242 = vmatprep.mubr.f32.mxu0 0.0
    %7243 = vmatmul.mubr.f32.gmra.mrb[0].mxu0 %v5513
    %v7244 = vpop.f32.mrb[0].mxu0
    %v7245 = vadd.f32 %v5509, %v7244
    %v7246 = vpop.f32.mrb[0].mxu0
    %v7247 = vadd.f32 %v5509, %v7246
    %7248 = vdwg.mxu0
    %7249 = vmatprep.subr.mxu0 %v635
    %7250 = vmatpush1.msra.mxu0 %v634
    %7251 = vmatprep.subr.mxu0 %v5251
    %7252 = vmatpush1.msra.mxu0 %v5250
    %7253 = vmatprep.subr.mxu0 %v5301
    %7254 = vmatpush1.msra.mxu0 %v5300
    %7255 = vmatprep.subr.mxu0 %v5351
    %7256 = vmatpush1.msra.mxu0 %v5350
    %7257 = vmatprep.subr.mxu0 %v5401
    %7258 = vmatpush1.msra.mxu0 %v5400
    %7259 = vmatprep.subr.mxu0 %v5451
    %7260 = vmatpush1.msra.mxu0 %v5450
    %7261 = vmatprep.subr.mxu0 %v5501
    %7262 = vmatpush1.msra.mxu0 %v5500
    %7263 = vmatprep.subr.mxu0 %v5610
    %7264 = vmatpush1.msra.mxu0 %v5608
    %7265 = vmatprep.subr.mxu0 0.0
    %7266 = vmatpush1.msra.mxu0 0.0
    %7267 = vmatprep.subr.mxu0 0.0
    %7268 = vmatpush1.msra.mxu0 0.0
    %7269 = vmatprep.subr.mxu0 0.0
    %7270 = vmatpush1.msra.mxu0 0.0
    %7271 = vmatprep.subr.mxu0 0.0
    %7272 = vmatpush1.msra.mxu0 0.0
    %7273 = vmatprep.subr.mxu0 0.0
    %7274 = vmatpush1.msra.mxu0 0.0
    %7275 = vmatprep.subr.mxu0 0.0
    %7276 = vmatpush1.msra.mxu0 0.0
    %7277 = vmatprep.subr.mxu0 0.0
    %7278 = vmatpush1.msra.mxu0 0.0
    %7279 = vmatprep.subr.mxu0 0.0
    %7280 = vmatpush1.msra.mxu0 0.0
    %7281 = vmatprep.subr.mxu0 0.0
    %7282 = vmatpush1.msra.mxu0 0.0
    %7283 = vmatprep.subr.mxu0 0.0
    %7284 = vmatpush1.msra.mxu0 0.0
    %7285 = vmatprep.subr.mxu0 0.0
    %7286 = vmatpush1.msra.mxu0 0.0
    %7287 = vmatprep.subr.mxu0 0.0
    %7288 = vmatpush1.msra.mxu0 0.0
    %7289 = vmatprep.subr.mxu0 0.0
    %7290 = vmatpush1.msra.mxu0 0.0
    %7291 = vmatprep.subr.mxu0 0.0
    %7292 = vmatpush1.msra.mxu0 0.0
    %7293 = vmatprep.subr.mxu0 0.0
    %7294 = vmatpush1.msra.mxu0 0.0
    %7295 = vmatprep.subr.mxu0 0.0
    %7296 = vmatpush1.msra.mxu0 0.0
    %7297 = vmatprep.subr.mxu0 0.0
    %7298 = vmatpush1.msra.mxu0 0.0
    %7299 = vmatprep.subr.mxu0 0.0
    %7300 = vmatpush1.msra.mxu0 0.0
    %7301 = vmatprep.subr.mxu0 0.0
    %7302 = vmatpush1.msra.mxu0 0.0
    %7303 = vmatprep.subr.mxu0 0.0
    %7304 = vmatpush1.msra.mxu0 0.0
    %7305 = vmatprep.subr.mxu0 0.0
    %7306 = vmatpush1.msra.mxu0 0.0
    %7307 = vmatprep.subr.mxu0 0.0
    %7308 = vmatpush1.msra.mxu0 0.0
    %7309 = vmatprep.subr.mxu0 0.0
    %7310 = vmatpush1.msra.mxu0 0.0
    %7311 = vmatprep.subr.mxu0 0.0
    %7312 = vmatpush1.msra.mxu0 0.0
    %7313 = vmatprep.mubr.f32.mxu0 0.0
    %7314 = vmatmul.mubr.f32.gmra.mrb[0].mxu0 %v5513
    %v7315 = vpop.f32.mrb[0].mxu0
    %v7316 = vadd.f32 %v5509, %v7315
    %v7317 = vpop.f32.mrb[0].mxu0
    %v7318 = vadd.f32 %v5509, %v7317
    %7319 = vdwg.mxu0
    %7320 = vmatprep.subr.mxu0 %v637
    %7321 = vmatpush1.msra.mxu0 %v636
    %7322 = vmatprep.subr.mxu0 %v5253
    %7323 = vmatpush1.msra.mxu0 %v5252
    %7324 = vmatprep.subr.mxu0 %v5303
    %7325 = vmatpush1.msra.mxu0 %v5302
    %7326 = vmatprep.subr.mxu0 %v5353
    %7327 = vmatpush1.msra.mxu0 %v5352
    %7328 = vmatprep.subr.mxu0 %v5403
    %7329 = vmatpush1.msra.mxu0 %v5402
    %7330 = vmatprep.subr.mxu0 %v5453
    %7331 = vmatpush1.msra.mxu0 %v5452
    %7332 = vmatprep.subr.mxu0 %v5503
    %7333 = vmatpush1.msra.mxu0 %v5502
    %7334 = vmatprep.subr.mxu0 %v5614
    %7335 = vmatpush1.msra.mxu0 %v5612
    %7336 = vmatprep.subr.mxu0 0.0
    %7337 = vmatpush1.msra.mxu0 0.0
    %7338 = vmatprep.subr.mxu0 0.0
    %7339 = vmatpush1.msra.mxu0 0.0
    %7340 = vmatprep.subr.mxu0 0.0
    %7341 = vmatpush1.msra.mxu0 0.0
    %7342 = vmatprep.subr.mxu0 0.0
    %7343 = vmatpush1.msra.mxu0 0.0
    %7344 = vmatprep.subr.mxu0 0.0
    %7345 = vmatpush1.msra.mxu0 0.0
    %7346 = vmatprep.subr.mxu0 0.0
    %7347 = vmatpush1.msra.mxu0 0.0
    %7348 = vmatprep.subr.mxu0 0.0
    %7349 = vmatpush1.msra.mxu0 0.0
    %7350 = vmatprep.subr.mxu0 0.0
    %7351 = vmatpush1.msra.mxu0 0.0
    %7352 = vmatprep.subr.mxu0 0.0
    %7353 = vmatpush1.msra.mxu0 0.0
    %7354 = vmatprep.subr.mxu0 0.0
    %7355 = vmatpush1.msra.mxu0 0.0
    %7356 = vmatprep.subr.mxu0 0.0
    %7357 = vmatpush1.msra.mxu0 0.0
    %7358 = vmatprep.subr.mxu0 0.0
    %7359 = vmatpush1.msra.mxu0 0.0
    %7360 = vmatprep.subr.mxu0 0.0
    %7361 = vmatpush1.msra.mxu0 0.0
    %7362 = vmatprep.subr.mxu0 0.0
    %7363 = vmatpush1.msra.mxu0 0.0
    %7364 = vmatprep.subr.mxu0 0.0
    %7365 = vmatpush1.msra.mxu0 0.0
    %7366 = vmatprep.subr.mxu0 0.0
    %7367 = vmatpush1.msra.mxu0 0.0
    %7368 = vmatprep.subr.mxu0 0.0
    %7369 = vmatpush1.msra.mxu0 0.0
    %7370 = vmatprep.subr.mxu0 0.0
    %7371 = vmatpush1.msra.mxu0 0.0
    %7372 = vmatprep.subr.mxu0 0.0
    %7373 = vmatpush1.msra.mxu0 0.0
    %7374 = vmatprep.subr.mxu0 0.0
    %7375 = vmatpush1.msra.mxu0 0.0
    %7376 = vmatprep.subr.mxu0 0.0
    %7377 = vmatpush1.msra.mxu0 0.0
    %7378 = vmatprep.subr.mxu0 0.0
    %7379 = vmatpush1.msra.mxu0 0.0
    %7380 = vmatprep.subr.mxu0 0.0
    %7381 = vmatpush1.msra.mxu0 0.0
    %7382 = vmatprep.subr.mxu0 0.0
    %7383 = vmatpush1.msra.mxu0 0.0
    %7384 = vmatprep.mubr.f32.mxu0 0.0
    %7385 = vmatmul.mubr.f32.gmra.mrb[0].mxu0 %v5513
    %v7386 = vpop.f32.mrb[0].mxu0
    %v7387 = vadd.f32 %v5509, %v7386
    %v7388 = vpop.f32.mrb[0].mxu0
    %v7389 = vadd.f32 %v5509, %v7388
    %7390 = vdwg.mxu0
    %v7391 = vmax.f32 %v5683, 0.0
    %v7392 = vmax.f32 %v5685, 0.0
    %v7393 = vmax.f32 %v5754, 0.0
    %v7394 = vmax.f32 %v5756, 0.0
    %v7395 = vmax.f32 %v5825, 0.0
    %v7396 = vmax.f32 %v5827, 0.0
    %v7397 = vmax.f32 %v5896, 0.0
    %v7398 = vmax.f32 %v5898, 0.0
    %v7399 = vmax.f32 %v5967, 0.0
    %v7400 = vmax.f32 %v5969, 0.0
    %v7401 = vmax.f32 %v6038, 0.0
    %v7402 = vmax.f32 %v6040, 0.0
    %v7403 = vmax.f32 %v6109, 0.0
    %v7404 = vmax.f32 %v6111, 0.0
    %v7405 = vmax.f32 %v6180, 0.0
    %v7406 = vmax.f32 %v6182, 0.0
    %v7407 = vmax.f32 %v6251, 0.0
    %v7408 = vmax.f32 %v6253, 0.0
    %v7409 = vmax.f32 %v6322, 0.0
    %v7410 = vmax.f32 %v6324, 0.0
    %v7411 = vmax.f32 %v6393, 0.0
    %v7412 = vmax.f32 %v6395, 0.0
    %v7413 = vmax.f32 %v6464, 0.0
    %v7414 = vmax.f32 %v6466, 0.0
    %v7415 = vmax.f32 %v6535, 0.0
    %v7416 = vmax.f32 %v6537, 0.0
    %v7417 = vmax.f32 %v6606, 0.0
    %v7418 = vmax.f32 %v6608, 0.0
    %v7419 = vmax.f32 %v6677, 0.0
    %v7420 = vmax.f32 %v6679, 0.0
    %v7421 = vmax.f32 %v6748, 0.0
    %v7422 = vmax.f32 %v6750, 0.0
    %v7423 = vmax.f32 %v6819, 0.0
    %v7424 = vmax.f32 %v6821, 0.0
    %v7425 = vmax.f32 %v6890, 0.0
    %v7426 = vmax.f32 %v6892, 0.0
    %v7427 = vmax.f32 %v6961, 0.0
    %v7428 = vmax.f32 %v6963, 0.0
    %v7429 = vmax.f32 %v7032, 0.0
    %v7430 = vmax.f32 %v7034, 0.0
    %v7431 = vmax.f32 %v7103, 0.0
    %v7432 = vmax.f32 %v7105, 0.0
    %v7433 = vmax.f32 %v7174, 0.0
    %v7434 = vmax.f32 %v7176, 0.0
    %v7435 = vmax.f32 %v7245, 0.0
    %v7436 = vmax.f32 %v7247, 0.0
    %v7437 = vmax.f32 %v7316, 0.0
    %v7438 = vmax.f32 %v7318, 0.0
    %v7439 = vmax.f32 %v7387, 0.0
    %v7440 = vmax.f32 %v7389, 0.0
    %7441 = vset.pattern.permute.xlu0 3
    %7442 = vperm.xlu0 %7441, %v5505
    %v7443 = vpop.permute.xlu0 %7442
    %v7445 = vmul.f32 %v7391, %v7443
    %v7446 = vmul.f32 %v7392, %v7443
    %v7447 = vmul.f32 %v7393, %v7443
    %v7448 = vmul.f32 %v7394, %v7443
    %v7449 = vmul.f32 %v7395, %v7443
    %v7450 = vmul.f32 %v7396, %v7443
    %v7451 = vmul.f32 %v7397, %v7443
    %v7452 = vmul.f32 %v7398, %v7443
    %v7453 = vmul.f32 %v7399, %v7443
    %v7454 = vmul.f32 %v7400, %v7443
    %v7455 = vmul.f32 %v7401, %v7443
    %v7456 = vmul.f32 %v7402, %v7443
    %v7457 = vmul.f32 %v7403, %v7443
    %v7458 = vmul.f32 %v7404, %v7443
    %v7459 = vmul.f32 %v7405, %v7443
    %v7460 = vmul.f32 %v7406, %v7443
    %v7461 = vmul.f32 %v7407, %v7443
    %v7462 = vmul.f32 %v7408, %v7443
    %v7463 = vmul.f32 %v7409, %v7443
    %v7464 = vmul.f32 %v7410, %v7443
    %v7465 = vmul.f32 %v7411, %v7443
    %v7466 = vmul.f32 %v7412, %v7443
    %v7467 = vmul.f32 %v7413, %v7443
    %v7468 = vmul.f32 %v7414, %v7443
    %v7469 = vmul.f32 %v7415, %v7443
    %v7470 = vmul.f32 %v7416, %v7443
    %v7471 = vmul.f32 %v7417, %v7443
    %v7472 = vmul.f32 %v7418, %v7443
    %v7473 = vmul.f32 %v7419, %v7443
    %v7474 = vmul.f32 %v7420, %v7443
    %v7475 = vmul.f32 %v7421, %v7443
    %v7476 = vmul.f32 %v7422, %v7443
    %v7477 = vmul.f32 %v7423, %v7443
    %v7478 = vmul.f32 %v7424, %v7443
    %v7479 = vmul.f32 %v7425, %v7443
    %v7480 = vmul.f32 %v7426, %v7443
    %v7481 = vmul.f32 %v7427, %v7443
    %v7482 = vmul.f32 %v7428, %v7443
    %v7483 = vmul.f32 %v7429, %v7443
    %v7484 = vmul.f32 %v7430, %v7443
    %v7485 = vmul.f32 %v7431, %v7443
    %v7486 = vmul.f32 %v7432, %v7443
    %v7487 = vmul.f32 %v7433, %v7443
    %v7488 = vmul.f32 %v7434, %v7443
    %v7489 = vmul.f32 %v7435, %v7443
    %v7490 = vmul.f32 %v7436, %v7443
    %v7491 = vmul.f32 %v7437, %v7443
    %v7492 = vmul.f32 %v7438, %v7443
    %v7493 = vmul.f32 %v7439, %v7443
    %v7494 = vmul.f32 %v7440, %v7443
    %v7495 = vsel %vm5515, %v7445, 0.0
    %v7496 = vrot.slane %v7495, 4
    %v7497 = vadd.f32 %v7495, %v7496
    %v7498 = vrot.slane %v7497, 2
    %v7499 = vadd.f32 %v7497, %v7498
    %v7500 = vrot.slane %v7499, 1
    %v7501 = vadd.f32 %v7499, %v7500
    %v7502 = vsel %vm5515, %v7446, 0.0
    %v7503 = vrot.slane %v7502, 4
    %v7504 = vadd.f32 %v7502, %v7503
    %v7505 = vrot.slane %v7504, 2
    %v7506 = vadd.f32 %v7504, %v7505
    %v7507 = vrot.slane %v7506, 1
    %v7508 = vadd.f32 %v7506, %v7507
    %v7509 = vsel %vm5515, %v7447, 0.0
    %v7510 = vrot.slane %v7509, 4
    %v7511 = vadd.f32 %v7509, %v7510
    %v7512 = vrot.slane %v7511, 2
    %v7513 = vadd.f32 %v7511, %v7512
    %v7514 = vrot.slane %v7513, 1
    %v7515 = vadd.f32 %v7513, %v7514
    %v7516 = vsel %vm5515, %v7448, 0.0
    %v7517 = vrot.slane %v7516, 4
    %v7518 = vadd.f32 %v7516, %v7517
    %v7519 = vrot.slane %v7518, 2
    %v7520 = vadd.f32 %v7518, %v7519
    %v7521 = vrot.slane %v7520, 1
    %v7522 = vadd.f32 %v7520, %v7521
    %v7523 = vsel %vm5515, %v7449, 0.0
    %v7524 = vrot.slane %v7523, 4
    %v7525 = vadd.f32 %v7523, %v7524
    %v7526 = vrot.slane %v7525, 2
    %v7527 = vadd.f32 %v7525, %v7526
    %v7528 = vrot.slane %v7527, 1
    %v7529 = vadd.f32 %v7527, %v7528
    %v7530 = vsel %vm5515, %v7450, 0.0
    %v7531 = vrot.slane %v7530, 4
    %v7532 = vadd.f32 %v7530, %v7531
    %v7533 = vrot.slane %v7532, 2
    %v7534 = vadd.f32 %v7532, %v7533
    %v7535 = vrot.slane %v7534, 1
    %v7536 = vadd.f32 %v7534, %v7535
    %v7537 = vsel %vm5515, %v7451, 0.0
    %v7538 = vrot.slane %v7537, 4
    %v7539 = vadd.f32 %v7537, %v7538
    %v7540 = vrot.slane %v7539, 2
    %v7541 = vadd.f32 %v7539, %v7540
    %v7542 = vrot.slane %v7541, 1
    %v7543 = vadd.f32 %v7541, %v7542
    %v7544 = vsel %vm5515, %v7452, 0.0
    %v7545 = vrot.slane %v7544, 4
    %v7546 = vadd.f32 %v7544, %v7545
    %v7547 = vrot.slane %v7546, 2
    %v7548 = vadd.f32 %v7546, %v7547
    %v7549 = vrot.slane %v7548, 1
    %v7550 = vadd.f32 %v7548, %v7549
    %v7551 = vsel %vm5515, %v7453, 0.0
    %v7552 = vrot.slane %v7551, 4
    %v7553 = vadd.f32 %v7551, %v7552
    %v7554 = vrot.slane %v7553, 2
    %v7555 = vadd.f32 %v7553, %v7554
    %v7556 = vrot.slane %v7555, 1
    %v7557 = vadd.f32 %v7555, %v7556
    %v7558 = vsel %vm5515, %v7454, 0.0
    %v7559 = vrot.slane %v7558, 4
    %v7560 = vadd.f32 %v7558, %v7559
    %v7561 = vrot.slane %v7560, 2
    %v7562 = vadd.f32 %v7560, %v7561
    %v7563 = vrot.slane %v7562, 1
    %v7564 = vadd.f32 %v7562, %v7563
    %v7565 = vsel %vm5515, %v7455, 0.0
    %v7566 = vrot.slane %v7565, 4
    %v7567 = vadd.f32 %v7565, %v7566
    %v7568 = vrot.slane %v7567, 2
    %v7569 = vadd.f32 %v7567, %v7568
    %v7570 = vrot.slane %v7569, 1
    %v7571 = vadd.f32 %v7569, %v7570
    %v7572 = vsel %vm5515, %v7456, 0.0
    %v7573 = vrot.slane %v7572, 4
    %v7574 = vadd.f32 %v7572, %v7573
    %v7575 = vrot.slane %v7574, 2
    %v7576 = vadd.f32 %v7574, %v7575
    %v7577 = vrot.slane %v7576, 1
    %v7578 = vadd.f32 %v7576, %v7577
    %v7579 = vsel %vm5515, %v7457, 0.0
    %v7580 = vrot.slane %v7579, 4
    %v7581 = vadd.f32 %v7579, %v7580
    %v7582 = vrot.slane %v7581, 2
    %v7583 = vadd.f32 %v7581, %v7582
    %v7584 = vrot.slane %v7583, 1
    %v7585 = vadd.f32 %v7583, %v7584
    %v7586 = vsel %vm5515, %v7458, 0.0
    %v7587 = vrot.slane %v7586, 4
    %v7588 = vadd.f32 %v7586, %v7587
    %v7589 = vrot.slane %v7588, 2
    %v7590 = vadd.f32 %v7588, %v7589
    %v7591 = vrot.slane %v7590, 1
    %v7592 = vadd.f32 %v7590, %v7591
    %v7593 = vsel %vm5515, %v7459, 0.0
    %v7594 = vrot.slane %v7593, 4
    %v7595 = vadd.f32 %v7593, %v7594
    %v7596 = vrot.slane %v7595, 2
    %v7597 = vadd.f32 %v7595, %v7596
    %v7598 = vrot.slane %v7597, 1
    %v7599 = vadd.f32 %v7597, %v7598
    %v7600 = vsel %vm5515, %v7460, 0.0
    %v7601 = vrot.slane %v7600, 4
    %v7602 = vadd.f32 %v7600, %v7601
    %v7603 = vrot.slane %v7602, 2
    %v7604 = vadd.f32 %v7602, %v7603
    %v7605 = vrot.slane %v7604, 1
    %v7606 = vadd.f32 %v7604, %v7605
    %v7607 = vsel %vm5515, %v7461, 0.0
    %v7608 = vrot.slane %v7607, 4
    %v7609 = vadd.f32 %v7607, %v7608
    %v7610 = vrot.slane %v7609, 2
    %v7611 = vadd.f32 %v7609, %v7610
    %v7612 = vrot.slane %v7611, 1
    %v7613 = vadd.f32 %v7611, %v7612
    %v7614 = vsel %vm5515, %v7462, 0.0
    %v7615 = vrot.slane %v7614, 4
    %v7616 = vadd.f32 %v7614, %v7615
    %v7617 = vrot.slane %v7616, 2
    %v7618 = vadd.f32 %v7616, %v7617
    %v7619 = vrot.slane %v7618, 1
    %v7620 = vadd.f32 %v7618, %v7619
    %v7621 = vsel %vm5515, %v7463, 0.0
    %v7622 = vrot.slane %v7621, 4
    %v7623 = vadd.f32 %v7621, %v7622
    %v7624 = vrot.slane %v7623, 2
    %v7625 = vadd.f32 %v7623, %v7624
    %v7626 = vrot.slane %v7625, 1
    %v7627 = vadd.f32 %v7625, %v7626
    %v7628 = vsel %vm5515, %v7464, 0.0
    %v7629 = vrot.slane %v7628, 4
    %v7630 = vadd.f32 %v7628, %v7629
    %v7631 = vrot.slane %v7630, 2
    %v7632 = vadd.f32 %v7630, %v7631
    %v7633 = vrot.slane %v7632, 1
    %v7634 = vadd.f32 %v7632, %v7633
    %v7635 = vsel %vm5515, %v7465, 0.0
    %v7636 = vrot.slane %v7635, 4
    %v7637 = vadd.f32 %v7635, %v7636
    %v7638 = vrot.slane %v7637, 2
    %v7639 = vadd.f32 %v7637, %v7638
    %v7640 = vrot.slane %v7639, 1
    %v7641 = vadd.f32 %v7639, %v7640
    %v7642 = vsel %vm5515, %v7466, 0.0
    %v7643 = vrot.slane %v7642, 4
    %v7644 = vadd.f32 %v7642, %v7643
    %v7645 = vrot.slane %v7644, 2
    %v7646 = vadd.f32 %v7644, %v7645
    %v7647 = vrot.slane %v7646, 1
    %v7648 = vadd.f32 %v7646, %v7647
    %v7649 = vsel %vm5515, %v7467, 0.0
    %v7650 = vrot.slane %v7649, 4
    %v7651 = vadd.f32 %v7649, %v7650
    %v7652 = vrot.slane %v7651, 2
    %v7653 = vadd.f32 %v7651, %v7652
    %v7654 = vrot.slane %v7653, 1
    %v7655 = vadd.f32 %v7653, %v7654
    %v7656 = vsel %vm5515, %v7468, 0.0
    %v7657 = vrot.slane %v7656, 4
    %v7658 = vadd.f32 %v7656, %v7657
    %v7659 = vrot.slane %v7658, 2
    %v7660 = vadd.f32 %v7658, %v7659
    %v7661 = vrot.slane %v7660, 1
    %v7662 = vadd.f32 %v7660, %v7661
    %v7663 = vsel %vm5515, %v7469, 0.0
    %v7664 = vrot.slane %v7663, 4
    %v7665 = vadd.f32 %v7663, %v7664
    %v7666 = vrot.slane %v7665, 2
    %v7667 = vadd.f32 %v7665, %v7666
    %v7668 = vrot.slane %v7667, 1
    %v7669 = vadd.f32 %v7667, %v7668
    %v7670 = vsel %vm5515, %v7470, 0.0
    %v7671 = vrot.slane %v7670, 4
    %v7672 = vadd.f32 %v7670, %v7671
    %v7673 = vrot.slane %v7672, 2
    %v7674 = vadd.f32 %v7672, %v7673
    %v7675 = vrot.slane %v7674, 1
    %v7676 = vadd.f32 %v7674, %v7675
    %v7677 = vsel %vm5515, %v7471, 0.0
    %v7678 = vrot.slane %v7677, 4
    %v7679 = vadd.f32 %v7677, %v7678
    %v7680 = vrot.slane %v7679, 2
    %v7681 = vadd.f32 %v7679, %v7680
    %v7682 = vrot.slane %v7681, 1
    %v7683 = vadd.f32 %v7681, %v7682
    %v7684 = vsel %vm5515, %v7472, 0.0
    %v7685 = vrot.slane %v7684, 4
    %v7686 = vadd.f32 %v7684, %v7685
    %v7687 = vrot.slane %v7686, 2
    %v7688 = vadd.f32 %v7686, %v7687
    %v7689 = vrot.slane %v7688, 1
    %v7690 = vadd.f32 %v7688, %v7689
    %v7691 = vsel %vm5515, %v7473, 0.0
    %v7692 = vrot.slane %v7691, 4
    %v7693 = vadd.f32 %v7691, %v7692
    %v7694 = vrot.slane %v7693, 2
    %v7695 = vadd.f32 %v7693, %v7694
    %v7696 = vrot.slane %v7695, 1
    %v7697 = vadd.f32 %v7695, %v7696
    %v7698 = vsel %vm5515, %v7474, 0.0
    %v7699 = vrot.slane %v7698, 4
    %v7700 = vadd.f32 %v7698, %v7699
    %v7701 = vrot.slane %v7700, 2
    %v7702 = vadd.f32 %v7700, %v7701
    %v7703 = vrot.slane %v7702, 1
    %v7704 = vadd.f32 %v7702, %v7703
    %v7705 = vsel %vm5515, %v7475, 0.0
    %v7706 = vrot.slane %v7705, 4
    %v7707 = vadd.f32 %v7705, %v7706
    %v7708 = vrot.slane %v7707, 2
    %v7709 = vadd.f32 %v7707, %v7708
    %v7710 = vrot.slane %v7709, 1
    %v7711 = vadd.f32 %v7709, %v7710
    %v7712 = vsel %vm5515, %v7476, 0.0
    %v7713 = vrot.slane %v7712, 4
    %v7714 = vadd.f32 %v7712, %v7713
    %v7715 = vrot.slane %v7714, 2
    %v7716 = vadd.f32 %v7714, %v7715
    %v7717 = vrot.slane %v7716, 1
    %v7718 = vadd.f32 %v7716, %v7717
    %v7719 = vsel %vm5515, %v7477, 0.0
    %v7720 = vrot.slane %v7719, 4
    %v7721 = vadd.f32 %v7719, %v7720
    %v7722 = vrot.slane %v7721, 2
    %v7723 = vadd.f32 %v7721, %v7722
    %v7724 = vrot.slane %v7723, 1
    %v7725 = vadd.f32 %v7723, %v7724
    %v7726 = vsel %vm5515, %v7478, 0.0
    %v7727 = vrot.slane %v7726, 4
    %v7728 = vadd.f32 %v7726, %v7727
    %v7729 = vrot.slane %v7728, 2
    %v7730 = vadd.f32 %v7728, %v7729
    %v7731 = vrot.slane %v7730, 1
    %v7732 = vadd.f32 %v7730, %v7731
    %v7733 = vsel %vm5515, %v7479, 0.0
    %v7734 = vrot.slane %v7733, 4
    %v7735 = vadd.f32 %v7733, %v7734
    %v7736 = vrot.slane %v7735, 2
    %v7737 = vadd.f32 %v7735, %v7736
    %v7738 = vrot.slane %v7737, 1
    %v7739 = vadd.f32 %v7737, %v7738
    %v7740 = vsel %vm5515, %v7480, 0.0
    %v7741 = vrot.slane %v7740, 4
    %v7742 = vadd.f32 %v7740, %v7741
    %v7743 = vrot.slane %v7742, 2
    %v7744 = vadd.f32 %v7742, %v7743
    %v7745 = vrot.slane %v7744, 1
    %v7746 = vadd.f32 %v7744, %v7745
    %v7747 = vsel %vm5515, %v7481, 0.0
    %v7748 = vrot.slane %v7747, 4
    %v7749 = vadd.f32 %v7747, %v7748
    %v7750 = vrot.slane %v7749, 2
    %v7751 = vadd.f32 %v7749, %v7750
    %v7752 = vrot.slane %v7751, 1
    %v7753 = vadd.f32 %v7751, %v7752
    %v7754 = vsel %vm5515, %v7482, 0.0
    %v7755 = vrot.slane %v7754, 4
    %v7756 = vadd.f32 %v7754, %v7755
    %v7757 = vrot.slane %v7756, 2
    %v7758 = vadd.f32 %v7756, %v7757
    %v7759 = vrot.slane %v7758, 1
    %v7760 = vadd.f32 %v7758, %v7759
    %v7761 = vsel %vm5515, %v7483, 0.0
    %v7762 = vrot.slane %v7761, 4
    %v7763 = vadd.f32 %v7761, %v7762
    %v7764 = vrot.slane %v7763, 2
    %v7765 = vadd.f32 %v7763, %v7764
    %v7766 = vrot.slane %v7765, 1
    %v7767 = vadd.f32 %v7765, %v7766
    %v7768 = vsel %vm5515, %v7484, 0.0
    %v7769 = vrot.slane %v7768, 4
    %v7770 = vadd.f32 %v7768, %v7769
    %v7771 = vrot.slane %v7770, 2
    %v7772 = vadd.f32 %v7770, %v7771
    %v7773 = vrot.slane %v7772, 1
    %v7774 = vadd.f32 %v7772, %v7773
    %v7775 = vsel %vm5515, %v7485, 0.0
    %v7776 = vrot.slane %v7775, 4
    %v7777 = vadd.f32 %v7775, %v7776
    %v7778 = vrot.slane %v7777, 2
    %v7779 = vadd.f32 %v7777, %v7778
    %v7780 = vrot.slane %v7779, 1
    %v7781 = vadd.f32 %v7779, %v7780
    %v7782 = vsel %vm5515, %v7486, 0.0
    %v7783 = vrot.slane %v7782, 4
    %v7784 = vadd.f32 %v7782, %v7783
    %v7785 = vrot.slane %v7784, 2
    %v7786 = vadd.f32 %v7784, %v7785
    %v7787 = vrot.slane %v7786, 1
    %v7788 = vadd.f32 %v7786, %v7787
    %v7789 = vsel %vm5515, %v7487, 0.0
    %v7790 = vrot.slane %v7789, 4
    %v7791 = vadd.f32 %v7789, %v7790
    %v7792 = vrot.slane %v7791, 2
    %v7793 = vadd.f32 %v7791, %v7792
    %v7794 = vrot.slane %v7793, 1
    %v7795 = vadd.f32 %v7793, %v7794
    %v7796 = vsel %vm5515, %v7488, 0.0
    %v7797 = vrot.slane %v7796, 4
    %v7798 = vadd.f32 %v7796, %v7797
    %v7799 = vrot.slane %v7798, 2
    %v7800 = vadd.f32 %v7798, %v7799
    %v7801 = vrot.slane %v7800, 1
    %v7802 = vadd.f32 %v7800, %v7801
    %v7803 = vsel %vm5515, %v7489, 0.0
    %v7804 = vrot.slane %v7803, 4
    %v7805 = vadd.f32 %v7803, %v7804
    %v7806 = vrot.slane %v7805, 2
    %v7807 = vadd.f32 %v7805, %v7806
    %v7808 = vrot.slane %v7807, 1
    %v7809 = vadd.f32 %v7807, %v7808
    %v7810 = vsel %vm5515, %v7490, 0.0
    %v7811 = vrot.slane %v7810, 4
    %v7812 = vadd.f32 %v7810, %v7811
    %v7813 = vrot.slane %v7812, 2
    %v7814 = vadd.f32 %v7812, %v7813
    %v7815 = vrot.slane %v7814, 1
    %v7816 = vadd.f32 %v7814, %v7815
    %v7817 = vsel %vm5515, %v7491, 0.0
    %v7818 = vrot.slane %v7817, 4
    %v7819 = vadd.f32 %v7817, %v7818
    %v7820 = vrot.slane %v7819, 2
    %v7821 = vadd.f32 %v7819, %v7820
    %v7822 = vrot.slane %v7821, 1
    %v7823 = vadd.f32 %v7821, %v7822
    %v7824 = vsel %vm5515, %v7492, 0.0
    %v7825 = vrot.slane %v7824, 4
    %v7826 = vadd.f32 %v7824, %v7825
    %v7827 = vrot.slane %v7826, 2
    %v7828 = vadd.f32 %v7826, %v7827
    %v7829 = vrot.slane %v7828, 1
    %v7830 = vadd.f32 %v7828, %v7829
    %v7831 = vsel %vm5515, %v7493, 0.0
    %v7832 = vrot.slane %v7831, 4
    %v7833 = vadd.f32 %v7831, %v7832
    %v7834 = vrot.slane %v7833, 2
    %v7835 = vadd.f32 %v7833, %v7834
    %v7836 = vrot.slane %v7835, 1
    %v7837 = vadd.f32 %v7835, %v7836
    %v7838 = vsel %vm5515, %v7494, 0.0
    %v7839 = vrot.slane %v7838, 4
    %v7840 = vadd.f32 %v7838, %v7839
    %v7841 = vrot.slane %v7840, 2
    %v7842 = vadd.f32 %v7840, %v7841
    %v7843 = vrot.slane %v7842, 1
    %v7844 = vadd.f32 %v7842, %v7843
    %v7845 = vld [vmem:[%s6] sm:$0x1]
    %7847 = vset.pattern.permute.xlu0 0
    %7848 = vperm.xlu0 %7847, %v7845
    %v7849 = vpop.permute.xlu0 %7848
    %v7851 = vlaneseq
    %v7852 = vshrl.u32 %v7851, 7
    %v7853 = vsub.s32 0, %v7852
    %v7854 = vrot.slane %v7849, %v7853
    %v7855 = vmul.f32 %v78, %v7854
    %v7856 = vmul.f32 %v79, %v7854
    %v7857 = vmul.f32 %v80, %v7854
    %v7858 = vmul.f32 %v81, %v7854
    %v7859 = vmul.f32 %v82, %v7854
    %v7860 = vmul.f32 %v83, %v7854
    %v7861 = vmul.f32 %v84, %v7854
    %v7862 = vmul.f32 %v85, %v7854
    %v7863 = vmul.f32 %v86, %v7854
    %v7864 = vmul.f32 %v87, %v7854
    %v7865 = vmul.f32 %v88, %v7854
    %v7866 = vmul.f32 %v89, %v7854
    %v7867 = vmul.f32 %v90, %v7854
    %v7868 = vmul.f32 %v91, %v7854
    %v7869 = vmul.f32 %v92, %v7854
    %v7870 = vmul.f32 %v93, %v7854
    %v7871 = vmul.f32 %v94, %v7854
    %v7872 = vmul.f32 %v95, %v7854
    %v7873 = vmul.f32 %v96, %v7854
    %v7874 = vmul.f32 %v97, %v7854
    %v7875 = vmul.f32 %v98, %v7854
    %v7876 = vmul.f32 %v99, %v7854
    %v7877 = vmul.f32 %v100, %v7854
    %v7878 = vmul.f32 %v101, %v7854
    %v7879 = vmul.f32 %v102, %v7854
    %v7880 = vmul.f32 %v103, %v7854
    %v7881 = vmul.f32 %v104, %v7854
    %v7882 = vmul.f32 %v105, %v7854
    %v7883 = vmul.f32 %v106, %v7854
    %v7884 = vmul.f32 %v107, %v7854
    %v7885 = vmul.f32 %v108, %v7854
    %v7886 = vmul.f32 %v109, %v7854
    %v7887 = vmul.f32 %v110, %v7854
    %v7888 = vmul.f32 %v111, %v7854
    %v7889 = vmul.f32 %v112, %v7854
    %v7890 = vmul.f32 %v113, %v7854
    %v7891 = vmul.f32 %v114, %v7854
    %v7892 = vmul.f32 %v115, %v7854
    %v7893 = vmul.f32 %v116, %v7854
    %v7894 = vmul.f32 %v117, %v7854
    %v7895 = vmul.f32 %v118, %v7854
    %v7896 = vmul.f32 %v119, %v7854
    %v7897 = vmul.f32 %v120, %v7854
    %v7898 = vmul.f32 %v121, %v7854
    %v7899 = vmul.f32 %v122, %v7854
    %v7900 = vmul.f32 %v123, %v7854
    %v7901 = vmul.f32 %v124, %v7854
    %v7902 = vmul.f32 %v125, %v7854
    %v7903 = vmul.f32 %v126, %v7854
    %v7904 = vmul.f32 %v127, %v7854
    %v7905 = vadd.f32 %v7501, %v7855
    %v7906 = vadd.f32 %v7508, %v7856
    %v7907 = vadd.f32 %v7515, %v7857
    %v7908 = vadd.f32 %v7522, %v7858
    %v7909 = vadd.f32 %v7529, %v7859
    %v7910 = vadd.f32 %v7536, %v7860
    %v7911 = vadd.f32 %v7543, %v7861
    %v7912 = vadd.f32 %v7550, %v7862
    %v7913 = vadd.f32 %v7557, %v7863
    %v7914 = vadd.f32 %v7564, %v7864
    %v7915 = vadd.f32 %v7571, %v7865
    %v7916 = vadd.f32 %v7578, %v7866
    %v7917 = vadd.f32 %v7585, %v7867
    %v7918 = vadd.f32 %v7592, %v7868
    %v7919 = vadd.f32 %v7599, %v7869
    %v7920 = vadd.f32 %v7606, %v7870
    %v7921 = vadd.f32 %v7613, %v7871
    %v7922 = vadd.f32 %v7620, %v7872
    %v7923 = vadd.f32 %v7627, %v7873
    %v7924 = vadd.f32 %v7634, %v7874
    %v7925 = vadd.f32 %v7641, %v7875
    %v7926 = vadd.f32 %v7648, %v7876
    %v7927 = vadd.f32 %v7655, %v7877
    %v7928 = vadd.f32 %v7662, %v7878
    %v7929 = vadd.f32 %v7669, %v7879
    %v7930 = vadd.f32 %v7676, %v7880
    %v7931 = vadd.f32 %v7683, %v7881
    %v7932 = vadd.f32 %v7690, %v7882
    %v7933 = vadd.f32 %v7697, %v7883
    %v7934 = vadd.f32 %v7704, %v7884
    %v7935 = vadd.f32 %v7711, %v7885
    %v7936 = vadd.f32 %v7718, %v7886
    %v7937 = vadd.f32 %v7725, %v7887
    %v7938 = vadd.f32 %v7732, %v7888
    %v7939 = vadd.f32 %v7739, %v7889
    %v7940 = vadd.f32 %v7746, %v7890
    %v7941 = vadd.f32 %v7753, %v7891
    %v7942 = vadd.f32 %v7760, %v7892
    %v7943 = vadd.f32 %v7767, %v7893
    %v7944 = vadd.f32 %v7774, %v7894
    %v7945 = vadd.f32 %v7781, %v7895
    %v7946 = vadd.f32 %v7788, %v7896
    %v7947 = vadd.f32 %v7795, %v7897
    %v7948 = vadd.f32 %v7802, %v7898
    %v7949 = vadd.f32 %v7809, %v7899
    %v7950 = vadd.f32 %v7816, %v7900
    %v7951 = vadd.f32 %v7823, %v7901
    %v7952 = vadd.f32 %v7830, %v7902
    %v7953 = vadd.f32 %v7837, %v7903
    %v7954 = vadd.f32 %v7844, %v7904
    %7955 = vset.pattern.permute.xlu0 1
    %7956 = vperm.xlu0 %7955, %v7845
    %v7957 = vpop.permute.xlu0 %7956
    %v7959 = vlaneseq
    %v7960 = vshrl.u32 %v7959, 7
    %v7961 = vsub.s32 0, %v7960
    %v7962 = vrot.slane %v7957, %v7961
    %v7963 = vadd.f32 %v7905, %v7962
    %v7964 = vadd.f32 %v7906, %v7962
    %v7965 = vadd.f32 %v7907, %v7962
    %v7966 = vadd.f32 %v7908, %v7962
    %v7967 = vadd.f32 %v7909, %v7962
    %v7968 = vadd.f32 %v7910, %v7962
    %v7969 = vadd.f32 %v7911, %v7962
    %v7970 = vadd.f32 %v7912, %v7962
    %v7971 = vadd.f32 %v7913, %v7962
    %v7972 = vadd.f32 %v7914, %v7962
    %v7973 = vadd.f32 %v7915, %v7962
    %v7974 = vadd.f32 %v7916, %v7962
    %v7975 = vadd.f32 %v7917, %v7962
    %v7976 = vadd.f32 %v7918, %v7962
    %v7977 = vadd.f32 %v7919, %v7962
    %v7978 = vadd.f32 %v7920, %v7962
    %v7979 = vadd.f32 %v7921, %v7962
    %v7980 = vadd.f32 %v7922, %v7962
    %v7981 = vadd.f32 %v7923, %v7962
    %v7982 = vadd.f32 %v7924, %v7962
    %v7983 = vadd.f32 %v7925, %v7962
    %v7984 = vadd.f32 %v7926, %v7962
    %v7985 = vadd.f32 %v7927, %v7962
    %v7986 = vadd.f32 %v7928, %v7962
    %v7987 = vadd.f32 %v7929, %v7962
    %v7988 = vadd.f32 %v7930, %v7962
    %v7989 = vadd.f32 %v7931, %v7962
    %v7990 = vadd.f32 %v7932, %v7962
    %v7991 = vadd.f32 %v7933, %v7962
    %v7992 = vadd.f32 %v7934, %v7962
    %v7993 = vadd.f32 %v7935, %v7962
    %v7994 = vadd.f32 %v7936, %v7962
    %v7995 = vadd.f32 %v7937, %v7962
    %v7996 = vadd.f32 %v7938, %v7962
    %v7997 = vadd.f32 %v7939, %v7962
    %v7998 = vadd.f32 %v7940, %v7962
    %v7999 = vadd.f32 %v7941, %v7962
    %v8000 = vadd.f32 %v7942, %v7962
    %v8001 = vadd.f32 %v7943, %v7962
    %v8002 = vadd.f32 %v7944, %v7962
    %v8003 = vadd.f32 %v7945, %v7962
    %v8004 = vadd.f32 %v7946, %v7962
    %v8005 = vadd.f32 %v7947, %v7962
    %v8006 = vadd.f32 %v7948, %v7962
    %v8007 = vadd.f32 %v7949, %v7962
    %v8008 = vadd.f32 %v7950, %v7962
    %v8009 = vadd.f32 %v7951, %v7962
    %v8010 = vadd.f32 %v7952, %v7962
    %v8011 = vadd.f32 %v7953, %v7962
    %v8012 = vadd.f32 %v7954, %v7962
    %v8013 = vmax.f32 %v7963, 0.0
    %v8014 = vmax.f32 %v7964, 0.0
    %v8015 = vmax.f32 %v7965, 0.0
    %v8016 = vmax.f32 %v7966, 0.0
    %v8017 = vmax.f32 %v7967, 0.0
    %v8018 = vmax.f32 %v7968, 0.0
    %v8019 = vmax.f32 %v7969, 0.0
    %v8020 = vmax.f32 %v7970, 0.0
    %v8021 = vmax.f32 %v7971, 0.0
    %v8022 = vmax.f32 %v7972, 0.0
    %v8023 = vmax.f32 %v7973, 0.0
    %v8024 = vmax.f32 %v7974, 0.0
    %v8025 = vmax.f32 %v7975, 0.0
    %v8026 = vmax.f32 %v7976, 0.0
    %v8027 = vmax.f32 %v7977, 0.0
    %v8028 = vmax.f32 %v7978, 0.0
    %v8029 = vmax.f32 %v7979, 0.0
    %v8030 = vmax.f32 %v7980, 0.0
    %v8031 = vmax.f32 %v7981, 0.0
    %v8032 = vmax.f32 %v7982, 0.0
    %v8033 = vmax.f32 %v7983, 0.0
    %v8034 = vmax.f32 %v7984, 0.0
    %v8035 = vmax.f32 %v7985, 0.0
    %v8036 = vmax.f32 %v7986, 0.0
    %v8037 = vmax.f32 %v7987, 0.0
    %v8038 = vmax.f32 %v7988, 0.0
    %v8039 = vmax.f32 %v7989, 0.0
    %v8040 = vmax.f32 %v7990, 0.0
    %v8041 = vmax.f32 %v7991, 0.0
    %v8042 = vmax.f32 %v7992, 0.0
    %v8043 = vmax.f32 %v7993, 0.0
    %v8044 = vmax.f32 %v7994, 0.0
    %v8045 = vmax.f32 %v7995, 0.0
    %v8046 = vmax.f32 %v7996, 0.0
    %v8047 = vmax.f32 %v7997, 0.0
    %v8048 = vmax.f32 %v7998, 0.0
    %v8049 = vmax.f32 %v7999, 0.0
    %v8050 = vmax.f32 %v8000, 0.0
    %v8051 = vmax.f32 %v8001, 0.0
    %v8052 = vmax.f32 %v8002, 0.0
    %v8053 = vmax.f32 %v8003, 0.0
    %v8054 = vmax.f32 %v8004, 0.0
    %v8055 = vmax.f32 %v8005, 0.0
    %v8056 = vmax.f32 %v8006, 0.0
    %v8057 = vmax.f32 %v8007, 0.0
    %v8058 = vmax.f32 %v8008, 0.0
    %v8059 = vmax.f32 %v8009, 0.0
    %v8060 = vmax.f32 %v8010, 0.0
    %v8061 = vmax.f32 %v8011, 0.0
    %v8062 = vmax.f32 %v8012, 0.0
    %v8063 = vld [vmem:[#allocation8] sm:$0x7f]
    %8065 = vset.pattern.permute.xlu0 0
    %8066 = vperm.xlu0 %8065, %v8063
    %v8067 = vpop.permute.xlu0 %8066
    %v8069 = vlaneseq
    %v8070 = vshrl.u32 %v8069, 7
    %v8071 = vsub.s32 4, %v8070
    %v8072 = vrot.slane %v8013, %v8071
    %v8073 = vlaneseq
    %v8074 = vshrl.u32 %v8073, 7
    %v8075 = vsub.s32 4, %v8074
    %v8076 = vrot.slane %v8014, %v8075
    %v8077 = vmul.f32 %v8067, %v8072
    %v8078 = vmul.f32 %v8067, %v8076
    %v8079 = vadd.f32 %v8077, 0.0
    %v8080 = vadd.f32 %v8078, 0.0
    %8081 = vset.pattern.permute.xlu0 1
    %8082 = vperm.xlu0 %8081, %v8063
    %v8083 = vpop.permute.xlu0 %8082
    %v8085 = vlaneseq
    %v8086 = vshrl.u32 %v8085, 7
    %v8087 = vsub.s32 4, %v8086
    %v8088 = vrot.slane %v8015, %v8087
    %v8089 = vlaneseq
    %v8090 = vshrl.u32 %v8089, 7
    %v8091 = vsub.s32 4, %v8090
    %v8092 = vrot.slane %v8016, %v8091
    %v8093 = vmul.f32 %v8083, %v8088
    %v8094 = vmul.f32 %v8083, %v8092
    %v8095 = vadd.f32 %v8079, %v8093
    %v8096 = vadd.f32 %v8080, %v8094
    %8097 = vset.pattern.permute.xlu0 2
    %8098 = vperm.xlu0 %8097, %v8063
    %v8099 = vpop.permute.xlu0 %8098
    %v8101 = vlaneseq
    %v8102 = vshrl.u32 %v8101, 7
    %v8103 = vsub.s32 4, %v8102
    %v8104 = vrot.slane %v8017, %v8103
    %v8105 = vlaneseq
    %v8106 = vshrl.u32 %v8105, 7
    %v8107 = vsub.s32 4, %v8106
    %v8108 = vrot.slane %v8018, %v8107
    %v8109 = vmul.f32 %v8099, %v8104
    %v8110 = vmul.f32 %v8099, %v8108
    %v8111 = vadd.f32 %v8095, %v8109
    %v8112 = vadd.f32 %v8096, %v8110
    %8113 = vset.pattern.permute.xlu0 3
    %8114 = vperm.xlu0 %8113, %v8063
    %v8115 = vpop.permute.xlu0 %8114
    %v8117 = vlaneseq
    %v8118 = vshrl.u32 %v8117, 7
    %v8119 = vsub.s32 4, %v8118
    %v8120 = vrot.slane %v8019, %v8119
    %v8121 = vlaneseq
    %v8122 = vshrl.u32 %v8121, 7
    %v8123 = vsub.s32 4, %v8122
    %v8124 = vrot.slane %v8020, %v8123
    %v8125 = vmul.f32 %v8115, %v8120
    %v8126 = vmul.f32 %v8115, %v8124
    %v8127 = vadd.f32 %v8111, %v8125
    %v8128 = vadd.f32 %v8112, %v8126
    %8129 = vset.pattern.permute.xlu0 4
    %8130 = vperm.xlu0 %8129, %v8063
    %v8131 = vpop.permute.xlu0 %8130
    %v8133 = vlaneseq
    %v8134 = vshrl.u32 %v8133, 7
    %v8135 = vsub.s32 4, %v8134
    %v8136 = vrot.slane %v8021, %v8135
    %v8137 = vlaneseq
    %v8138 = vshrl.u32 %v8137, 7
    %v8139 = vsub.s32 4, %v8138
    %v8140 = vrot.slane %v8022, %v8139
    %v8141 = vmul.f32 %v8131, %v8136
    %v8142 = vmul.f32 %v8131, %v8140
    %v8143 = vadd.f32 %v8127, %v8141
    %v8144 = vadd.f32 %v8128, %v8142
    %8145 = vset.pattern.permute.xlu0 5
    %8146 = vperm.xlu0 %8145, %v8063
    %v8147 = vpop.permute.xlu0 %8146
    %v8149 = vlaneseq
    %v8150 = vshrl.u32 %v8149, 7
    %v8151 = vsub.s32 4, %v8150
    %v8152 = vrot.slane %v8023, %v8151
    %v8153 = vlaneseq
    %v8154 = vshrl.u32 %v8153, 7
    %v8155 = vsub.s32 4, %v8154
    %v8156 = vrot.slane %v8024, %v8155
    %v8157 = vmul.f32 %v8147, %v8152
    %v8158 = vmul.f32 %v8147, %v8156
    %v8159 = vadd.f32 %v8143, %v8157
    %v8160 = vadd.f32 %v8144, %v8158
    %8161 = vset.pattern.permute.xlu0 6
    %8162 = vperm.xlu0 %8161, %v8063
    %v8163 = vpop.permute.xlu0 %8162
    %v8165 = vlaneseq
    %v8166 = vshrl.u32 %v8165, 7
    %v8167 = vsub.s32 4, %v8166
    %v8168 = vrot.slane %v8025, %v8167
    %v8169 = vlaneseq
    %v8170 = vshrl.u32 %v8169, 7
    %v8171 = vsub.s32 4, %v8170
    %v8172 = vrot.slane %v8026, %v8171
    %v8173 = vmul.f32 %v8163, %v8168
    %v8174 = vmul.f32 %v8163, %v8172
    %v8175 = vadd.f32 %v8159, %v8173
    %v8176 = vadd.f32 %v8160, %v8174
    %8177 = vset.pattern.permute.xlu0 7
    %8178 = vperm.xlu0 %8177, %v8063
    %v8179 = vpop.permute.xlu0 %8178
    %v8181 = vlaneseq
    %v8182 = vshrl.u32 %v8181, 7
    %v8183 = vsub.s32 4, %v8182
    %v8184 = vrot.slane %v8027, %v8183
    %v8185 = vlaneseq
    %v8186 = vshrl.u32 %v8185, 7
    %v8187 = vsub.s32 4, %v8186
    %v8188 = vrot.slane %v8028, %v8187
    %v8189 = vmul.f32 %v8179, %v8184
    %v8190 = vmul.f32 %v8179, %v8188
    %v8191 = vadd.f32 %v8175, %v8189
    %v8192 = vadd.f32 %v8176, %v8190
    %8193 = vset.pattern.permute.xlu0 8
    %8194 = vperm.xlu0 %8193, %v8063
    %v8195 = vpop.permute.xlu0 %8194
    %v8197 = vlaneseq
    %v8198 = vshrl.u32 %v8197, 7
    %v8199 = vsub.s32 4, %v8198
    %v8200 = vrot.slane %v8029, %v8199
    %v8201 = vlaneseq
    %v8202 = vshrl.u32 %v8201, 7
    %v8203 = vsub.s32 4, %v8202
    %v8204 = vrot.slane %v8030, %v8203
    %v8205 = vmul.f32 %v8195, %v8200
    %v8206 = vmul.f32 %v8195, %v8204
    %v8207 = vadd.f32 %v8191, %v8205
    %v8208 = vadd.f32 %v8192, %v8206
    %8209 = vset.pattern.permute.xlu0 9
    %8210 = vperm.xlu0 %8209, %v8063
    %v8211 = vpop.permute.xlu0 %8210
    %v8213 = vlaneseq
    %v8214 = vshrl.u32 %v8213, 7
    %v8215 = vsub.s32 4, %v8214
    %v8216 = vrot.slane %v8031, %v8215
    %v8217 = vlaneseq
    %v8218 = vshrl.u32 %v8217, 7
    %v8219 = vsub.s32 4, %v8218
    %v8220 = vrot.slane %v8032, %v8219
    %v8221 = vmul.f32 %v8211, %v8216
    %v8222 = vmul.f32 %v8211, %v8220
    %v8223 = vadd.f32 %v8207, %v8221
    %v8224 = vadd.f32 %v8208, %v8222
    %8225 = vset.pattern.permute.xlu0 10
    %8226 = vperm.xlu0 %8225, %v8063
    %v8227 = vpop.permute.xlu0 %8226
    %v8229 = vlaneseq
    %v8230 = vshrl.u32 %v8229, 7
    %v8231 = vsub.s32 4, %v8230
    %v8232 = vrot.slane %v8033, %v8231
    %v8233 = vlaneseq
    %v8234 = vshrl.u32 %v8233, 7
    %v8235 = vsub.s32 4, %v8234
    %v8236 = vrot.slane %v8034, %v8235
    %v8237 = vmul.f32 %v8227, %v8232
    %v8238 = vmul.f32 %v8227, %v8236
    %v8239 = vadd.f32 %v8223, %v8237
    %v8240 = vadd.f32 %v8224, %v8238
    %8241 = vset.pattern.permute.xlu0 11
    %8242 = vperm.xlu0 %8241, %v8063
    %v8243 = vpop.permute.xlu0 %8242
    %v8245 = vlaneseq
    %v8246 = vshrl.u32 %v8245, 7
    %v8247 = vsub.s32 4, %v8246
    %v8248 = vrot.slane %v8035, %v8247
    %v8249 = vlaneseq
    %v8250 = vshrl.u32 %v8249, 7
    %v8251 = vsub.s32 4, %v8250
    %v8252 = vrot.slane %v8036, %v8251
    %v8253 = vmul.f32 %v8243, %v8248
    %v8254 = vmul.f32 %v8243, %v8252
    %v8255 = vadd.f32 %v8239, %v8253
    %v8256 = vadd.f32 %v8240, %v8254
    %8257 = vset.pattern.permute.xlu0 12
    %8258 = vperm.xlu0 %8257, %v8063
    %v8259 = vpop.permute.xlu0 %8258
    %v8261 = vlaneseq
    %v8262 = vshrl.u32 %v8261, 7
    %v8263 = vsub.s32 4, %v8262
    %v8264 = vrot.slane %v8037, %v8263
    %v8265 = vlaneseq
    %v8266 = vshrl.u32 %v8265, 7
    %v8267 = vsub.s32 4, %v8266
    %v8268 = vrot.slane %v8038, %v8267
    %v8269 = vmul.f32 %v8259, %v8264
    %v8270 = vmul.f32 %v8259, %v8268
    %v8271 = vadd.f32 %v8255, %v8269
    %v8272 = vadd.f32 %v8256, %v8270
    %8273 = vset.pattern.permute.xlu0 13
    %8274 = vperm.xlu0 %8273, %v8063
    %v8275 = vpop.permute.xlu0 %8274
    %v8277 = vlaneseq
    %v8278 = vshrl.u32 %v8277, 7
    %v8279 = vsub.s32 4, %v8278
    %v8280 = vrot.slane %v8039, %v8279
    %v8281 = vlaneseq
    %v8282 = vshrl.u32 %v8281, 7
    %v8283 = vsub.s32 4, %v8282
    %v8284 = vrot.slane %v8040, %v8283
    %v8285 = vmul.f32 %v8275, %v8280
    %v8286 = vmul.f32 %v8275, %v8284
    %v8287 = vadd.f32 %v8271, %v8285
    %v8288 = vadd.f32 %v8272, %v8286
    %8289 = vset.pattern.permute.xlu0 14
    %8290 = vperm.xlu0 %8289, %v8063
    %v8291 = vpop.permute.xlu0 %8290
    %v8293 = vlaneseq
    %v8294 = vshrl.u32 %v8293, 7
    %v8295 = vsub.s32 4, %v8294
    %v8296 = vrot.slane %v8041, %v8295
    %v8297 = vlaneseq
    %v8298 = vshrl.u32 %v8297, 7
    %v8299 = vsub.s32 4, %v8298
    %v8300 = vrot.slane %v8042, %v8299
    %v8301 = vmul.f32 %v8291, %v8296
    %v8302 = vmul.f32 %v8291, %v8300
    %v8303 = vadd.f32 %v8287, %v8301
    %v8304 = vadd.f32 %v8288, %v8302
    %8305 = vset.pattern.permute.xlu0 15
    %8306 = vperm.xlu0 %8305, %v8063
    %v8307 = vpop.permute.xlu0 %8306
    %v8309 = vlaneseq
    %v8310 = vshrl.u32 %v8309, 7
    %v8311 = vsub.s32 4, %v8310
    %v8312 = vrot.slane %v8043, %v8311
    %v8313 = vlaneseq
    %v8314 = vshrl.u32 %v8313, 7
    %v8315 = vsub.s32 4, %v8314
    %v8316 = vrot.slane %v8044, %v8315
    %v8317 = vmul.f32 %v8307, %v8312
    %v8318 = vmul.f32 %v8307, %v8316
    %v8319 = vadd.f32 %v8303, %v8317
    %v8320 = vadd.f32 %v8304, %v8318
    %8321 = vset.pattern.permute.xlu0 16
    %8322 = vperm.xlu0 %8321, %v8063
    %v8323 = vpop.permute.xlu0 %8322
    %v8325 = vlaneseq
    %v8326 = vshrl.u32 %v8325, 7
    %v8327 = vsub.s32 4, %v8326
    %v8328 = vrot.slane %v8045, %v8327
    %v8329 = vlaneseq
    %v8330 = vshrl.u32 %v8329, 7
    %v8331 = vsub.s32 4, %v8330
    %v8332 = vrot.slane %v8046, %v8331
    %v8333 = vmul.f32 %v8323, %v8328
    %v8334 = vmul.f32 %v8323, %v8332
    %v8335 = vadd.f32 %v8319, %v8333
    %v8336 = vadd.f32 %v8320, %v8334
    %8337 = vset.pattern.permute.xlu0 17
    %8338 = vperm.xlu0 %8337, %v8063
    %v8339 = vpop.permute.xlu0 %8338
    %v8341 = vlaneseq
    %v8342 = vshrl.u32 %v8341, 7
    %v8343 = vsub.s32 4, %v8342
    %v8344 = vrot.slane %v8047, %v8343
    %v8345 = vlaneseq
    %v8346 = vshrl.u32 %v8345, 7
    %v8347 = vsub.s32 4, %v8346
    %v8348 = vrot.slane %v8048, %v8347
    %v8349 = vmul.f32 %v8339, %v8344
    %v8350 = vmul.f32 %v8339, %v8348
    %v8351 = vadd.f32 %v8335, %v8349
    %v8352 = vadd.f32 %v8336, %v8350
    %8353 = vset.pattern.permute.xlu0 18
    %8354 = vperm.xlu0 %8353, %v8063
    %v8355 = vpop.permute.xlu0 %8354
    %v8357 = vlaneseq
    %v8358 = vshrl.u32 %v8357, 7
    %v8359 = vsub.s32 4, %v8358
    %v8360 = vrot.slane %v8049, %v8359
    %v8361 = vlaneseq
    %v8362 = vshrl.u32 %v8361, 7
    %v8363 = vsub.s32 4, %v8362
    %v8364 = vrot.slane %v8050, %v8363
    %v8365 = vmul.f32 %v8355, %v8360
    %v8366 = vmul.f32 %v8355, %v8364
    %v8367 = vadd.f32 %v8351, %v8365
    %v8368 = vadd.f32 %v8352, %v8366
    %8369 = vset.pattern.permute.xlu0 19
    %8370 = vperm.xlu0 %8369, %v8063
    %v8371 = vpop.permute.xlu0 %8370
    %v8373 = vlaneseq
    %v8374 = vshrl.u32 %v8373, 7
    %v8375 = vsub.s32 4, %v8374
    %v8376 = vrot.slane %v8051, %v8375
    %v8377 = vlaneseq
    %v8378 = vshrl.u32 %v8377, 7
    %v8379 = vsub.s32 4, %v8378
    %v8380 = vrot.slane %v8052, %v8379
    %v8381 = vmul.f32 %v8371, %v8376
    %v8382 = vmul.f32 %v8371, %v8380
    %v8383 = vadd.f32 %v8367, %v8381
    %v8384 = vadd.f32 %v8368, %v8382
    %8385 = vset.pattern.permute.xlu0 20
    %8386 = vperm.xlu0 %8385, %v8063
    %v8387 = vpop.permute.xlu0 %8386
    %v8389 = vlaneseq
    %v8390 = vshrl.u32 %v8389, 7
    %v8391 = vsub.s32 4, %v8390
    %v8392 = vrot.slane %v8053, %v8391
    %v8393 = vlaneseq
    %v8394 = vshrl.u32 %v8393, 7
    %v8395 = vsub.s32 4, %v8394
    %v8396 = vrot.slane %v8054, %v8395
    %v8397 = vmul.f32 %v8387, %v8392
    %v8398 = vmul.f32 %v8387, %v8396
    %v8399 = vadd.f32 %v8383, %v8397
    %v8400 = vadd.f32 %v8384, %v8398
    %8401 = vset.pattern.permute.xlu0 21
    %8402 = vperm.xlu0 %8401, %v8063
    %v8403 = vpop.permute.xlu0 %8402
    %v8405 = vlaneseq
    %v8406 = vshrl.u32 %v8405, 7
    %v8407 = vsub.s32 4, %v8406
    %v8408 = vrot.slane %v8055, %v8407
    %v8409 = vlaneseq
    %v8410 = vshrl.u32 %v8409, 7
    %v8411 = vsub.s32 4, %v8410
    %v8412 = vrot.slane %v8056, %v8411
    %v8413 = vmul.f32 %v8403, %v8408
    %v8414 = vmul.f32 %v8403, %v8412
    %v8415 = vadd.f32 %v8399, %v8413
    %v8416 = vadd.f32 %v8400, %v8414
    %8417 = vset.pattern.permute.xlu0 22
    %8418 = vperm.xlu0 %8417, %v8063
    %v8419 = vpop.permute.xlu0 %8418
    %v8421 = vlaneseq
    %v8422 = vshrl.u32 %v8421, 7
    %v8423 = vsub.s32 4, %v8422
    %v8424 = vrot.slane %v8057, %v8423
    %v8425 = vlaneseq
    %v8426 = vshrl.u32 %v8425, 7
    %v8427 = vsub.s32 4, %v8426
    %v8428 = vrot.slane %v8058, %v8427
    %v8429 = vmul.f32 %v8419, %v8424
    %v8430 = vmul.f32 %v8419, %v8428
    %v8431 = vadd.f32 %v8415, %v8429
    %v8432 = vadd.f32 %v8416, %v8430
    %8433 = vset.pattern.permute.xlu0 23
    %8434 = vperm.xlu0 %8433, %v8063
    %v8435 = vpop.permute.xlu0 %8434
    %v8437 = vlaneseq
    %v8438 = vshrl.u32 %v8437, 7
    %v8439 = vsub.s32 4, %v8438
    %v8440 = vrot.slane %v8059, %v8439
    %v8441 = vlaneseq
    %v8442 = vshrl.u32 %v8441, 7
    %v8443 = vsub.s32 4, %v8442
    %v8444 = vrot.slane %v8060, %v8443
    %v8445 = vmul.f32 %v8435, %v8440
    %v8446 = vmul.f32 %v8435, %v8444
    %v8447 = vadd.f32 %v8431, %v8445
    %v8448 = vadd.f32 %v8432, %v8446
    %8449 = vset.pattern.permute.xlu0 24
    %8450 = vperm.xlu0 %8449, %v8063
    %v8451 = vpop.permute.xlu0 %8450
    %v8453 = vlaneseq
    %v8454 = vshrl.u32 %v8453, 7
    %v8455 = vsub.s32 4, %v8454
    %v8456 = vrot.slane %v8061, %v8455
    %v8457 = vlaneseq
    %v8458 = vshrl.u32 %v8457, 7
    %v8459 = vsub.s32 4, %v8458
    %v8460 = vrot.slane %v8062, %v8459
    %v8461 = vmul.f32 %v8451, %v8456
    %v8462 = vmul.f32 %v8451, %v8460
    %v8463 = vadd.f32 %v8447, %v8461
    %v8464 = vadd.f32 %v8448, %v8462
    %8465 = vset.pattern.permute.xlu0 4
    %8466 = vperm.xlu0 %8465, %v5505
    %v8467 = vpop.permute.xlu0 %8466
    %v8469 = vadd.f32 %v8463, %v8467
    %v8470 = vadd.f32 %v8464, %v8467
    %v8471 = vmax.f32 %v8469, 0.0
    %v8472 = vmax.f32 %v8470, 0.0
    %v8473 = vld [vmem:[%s5] sm:$0xf]
    %8475 = vset.pattern.permute.xlu0 7
    %8476 = vperm.xlu0 %8475, %v8473
    %v8477 = vpop.permute.xlu0 %8476
    %vm8479 = vcmask 56320
    %v8480 = vsel %vm8479, %v8473, 0
    %v8483 = vsel %vm5515, %v8471, 0
    %v8486 = vsel %vm5515, %v8472, 0
    %8488 = vmatprep.subr.mxu0 %v8486
    %8489 = vmatpush1.msra.mxu0 %v8483
    %8490 = vmatprep.subr.mxu0 0.0
    %8491 = vmatpush1.msra.mxu0 0.0
    %8492 = vmatprep.subr.mxu0 0.0
    %8493 = vmatpush1.msra.mxu0 0.0
    %8494 = vmatprep.subr.mxu0 0.0
    %8495 = vmatpush1.msra.mxu0 0.0
    %8496 = vmatprep.subr.mxu0 0.0
    %8497 = vmatpush1.msra.mxu0 0.0
    %8498 = vmatprep.subr.mxu0 0.0
    %8499 = vmatpush1.msra.mxu0 0.0
    %8500 = vmatprep.subr.mxu0 0.0
    %8501 = vmatpush1.msra.mxu0 0.0
    %8502 = vmatprep.subr.mxu0 0.0
    %8503 = vmatpush1.msra.mxu0 0.0
    %8504 = vmatprep.subr.mxu0 0.0
    %8505 = vmatpush1.msra.mxu0 0.0
    %8506 = vmatprep.subr.mxu0 0.0
    %8507 = vmatpush1.msra.mxu0 0.0
    %8508 = vmatprep.subr.mxu0 0.0
    %8509 = vmatpush1.msra.mxu0 0.0
    %8510 = vmatprep.subr.mxu0 0.0
    %8511 = vmatpush1.msra.mxu0 0.0
    %8512 = vmatprep.subr.mxu0 0.0
    %8513 = vmatpush1.msra.mxu0 0.0
    %8514 = vmatprep.subr.mxu0 0.0
    %8515 = vmatpush1.msra.mxu0 0.0
    %8516 = vmatprep.subr.mxu0 0.0
    %8517 = vmatpush1.msra.mxu0 0.0
    %8518 = vmatprep.subr.mxu0 0.0
    %8519 = vmatpush1.msra.mxu0 0.0
    %8520 = vmatprep.subr.mxu0 0.0
    %8521 = vmatpush1.msra.mxu0 0.0
    %8522 = vmatprep.subr.mxu0 0.0
    %8523 = vmatpush1.msra.mxu0 0.0
    %8524 = vmatprep.subr.mxu0 0.0
    %8525 = vmatpush1.msra.mxu0 0.0
    %8526 = vmatprep.subr.mxu0 0.0
    %8527 = vmatpush1.msra.mxu0 0.0
    %8528 = vmatprep.subr.mxu0 0.0
    %8529 = vmatpush1.msra.mxu0 0.0
    %8530 = vmatprep.subr.mxu0 0.0
    %8531 = vmatpush1.msra.mxu0 0.0
    %8532 = vmatprep.subr.mxu0 0.0
    %8533 = vmatpush1.msra.mxu0 0.0
    %8534 = vmatprep.subr.mxu0 0.0
    %8535 = vmatpush1.msra.mxu0 0.0
    %8536 = vmatprep.subr.mxu0 0.0
    %8537 = vmatpush1.msra.mxu0 0.0
    %8538 = vmatprep.subr.mxu0 0.0
    %8539 = vmatpush1.msra.mxu0 0.0
    %8540 = vmatprep.subr.mxu0 0.0
    %8541 = vmatpush1.msra.mxu0 0.0
    %8542 = vmatprep.subr.mxu0 0.0
    %8543 = vmatpush1.msra.mxu0 0.0
    %8544 = vmatprep.subr.mxu0 0.0
    %8545 = vmatpush1.msra.mxu0 0.0
    %8546 = vmatprep.subr.mxu0 0.0
    %8547 = vmatpush1.msra.mxu0 0.0
    %8548 = vmatprep.subr.mxu0 0.0
    %8549 = vmatpush1.msra.mxu0 0.0
    %8550 = vmatprep.subr.mxu0 0.0
    %8551 = vmatpush1.msra.mxu0 0.0
    %8552 = vmatprep.mubr.f32.mxu0 0.0
    %8553 = vmatmul.mubr.f32.gmra.mrb[0].mxu0 %v8480
    %v8554 = vpop.f32.mrb[0].mxu0
    %v8555 = vadd.f32 %v8477, %v8554
    %v8556 = vpop.f32.mrb[0].mxu0
    %v8557 = vadd.f32 %v8477, %v8556
    %8558 = vdwg.mxu0
    %v8561 = vcombine.low %v8555, %v8557
    %8563 = vst [vmem:[#allocation10] sm:$0xff] %v8561
    // Predicated region
    $region46: #{tpu_custom_call.1} parent=1 // pred_check
      _
    $region47: #{tpu_custom_call.1} parent=1 // pred_check_branch
      %8565 = sbr.rel (0) target = $region49
    $region48: #{tpu_custom_call.1} parent=1 // pred_region
      %s8567 = ssub.s32 128, 128
      %8568 = vsyncadd [#allocation4], %s8567
      %s8570 = sshll.u32 [#allocation10], 4
      %s8571 = int_to_ptr.vmem [resolvable:$true] %s8570
      %8573 = dma.vmem_to_hbm [thread:$0]  %s8571, 128, %s7, [#allocation4]
    $region49: #{tpu_custom_call.1} parent=1 // pred_fallthru
      _
    // Predicated region
    $region50: #{tpu_custom_call.1} parent=1 // pred_check
      _
    $region51: #{tpu_custom_call.1} parent=1 // pred_check_branch
      %8575 = sbr.rel (0) target = $region53
    $region52: #{tpu_custom_call.1} parent=1 // pred_region
      %8576 = dma.done [#allocation4], 128
    $region53: #{tpu_custom_call.1} parent=1 // pred_fallthru
      _
    %8577 = vsyncpa [#allocation3], 1
    %8578 = vsyncpa [#allocation6], 1
    %8579 = vsyncpa [#allocation9], 1
    %8580 = vsyncpa [#allocation4], 1

</llo_original>
